<compile_context>
chip_gen: v7x
topology: tpu7x:2x2x1
jax: 0.10.0
libtpu: 0.0.40
codegen_flags: <defaults>
</compile_context>

<pallas_src>
import functools
import math

import jax
import jax.numpy as jnp
from jax import lax
from jax.experimental import pallas as pl
from jax.experimental.pallas import tpu as pltpu

# --------------------------------------------------------------------------
# Configuration (mirrors AxialDiffAttn(dim=32, num_heads=4, row_attn=True,
# col_attn=False, depth=1) with DiffAttn2d defaults dim_head=8, dropout=0.0)
# --------------------------------------------------------------------------
DIM = 32
NUM_HEADS = 4
DIM_HEAD = 8
DEPTH = 1
INNER_DIM = DIM_HEAD * NUM_HEADS * 2          # 64
FUSED_DIM = 4 * INNER_DIM                     # 256 = [q | k | v | gate]
LN_EPS = 1e-5
SCALE = DIM_HEAD ** -0.5
LAMBDA_INIT = 0.8 - 0.6 * math.exp(-0.3 * DEPTH)

FOLD = 128 // DIM                             # 4 folded rows per 128-lane row
_VMEM_BLOCK_BUDGET = 14 * 2**20               # per-grid-step working-set target


# --------------------------------------------------------------------------
# Kernel helpers (traced inside the kernel body; all element-wise math f32)
# --------------------------------------------------------------------------
def _ln(x, g, b):
    """LayerNorm over the last axis; g, b broadcast."""
    mu = jnp.mean(x, axis=-1, keepdims=True)
    var = jnp.mean((x - mu) ** 2, axis=-1, keepdims=True)
    return (x - mu) * lax.rsqrt(var + LN_EPS) * g + b


def _softmax(x):
    # Exact denominator: the two softmaxes are subtracted downstream and an
    # approximate reciprocal can amplify near-cancellation (review concern).
    m = jnp.max(x, axis=-1, keepdims=True)
    e = jnp.exp(x - m)
    return e / jnp.sum(e, axis=-1, keepdims=True)


def _sigmoid(x):
    # logistic built from tanh: EUP-mapped and numerically robust.
    return 0.5 * (jnp.tanh(0.5 * x) + 1.0)


def _heads_batched(q, k, v, lam_full, ln2g, ln2b, bblk, seq):
    """All 2H heads handled by single batched einsums (one relayout each way)."""
    H, H2, dh = NUM_HEADS, 2 * NUM_HEADS, DIM_HEAD
    M = bblk * seq

    # (M, 64) -> (head*bblk, seq, dh): one lane-split reshape + one
    # head-to-batch transpose per tensor, done once per block.
    qh = jnp.transpose(q.reshape(M, H2, dh), (1, 0, 2)).reshape(H2 * bblk, seq, dh)
    kh = jnp.transpose(k.reshape(M, H2, dh), (1, 0, 2)).reshape(H2 * bblk, seq, dh)
    vh = jnp.transpose(v.reshape(M, H, 2 * dh), (1, 0, 2)).reshape(H * bblk, seq, 2 * dh)
    qh = qh.astype(jnp.bfloat16)
    kh = kh.astype(jnp.bfloat16)
    vh = vh.astype(jnp.bfloat16)

    s = jnp.einsum("bid,bjd->bij", qh, kh, preferred_element_type=jnp.float32)
    sm = _softmax(s)                                  # (2H*bblk, seq, seq)

    # Batch order is head-major (g = h2*bblk + b); the two softmaxes of a head
    # pair are the [:M] and [M:] row bands after this free reshape.
    smp = sm.reshape(H, 2 * M, seq)
    attn = smp[:, :M, :] - lam_full * smp[:, M:, :]   # (H, M, seq)
    attn = attn.reshape(H * bblk, seq, seq)

    oh = jnp.einsum("bij,bjd->bid", attn.astype(jnp.bfloat16), vh,
                    preferred_element_type=jnp.float32)        # (H*bblk, seq, 2dh)
    oh = _ln(oh, ln2g, ln2b) * (1.0 - LAMBDA_INIT)             # batched per-head LN

    # inverse relayout: (H*bblk, seq, 2dh) -> (M, H*2dh) == 'b n (h d)'
    out = jnp.transpose(oh.reshape(H, M, 2 * dh), (1, 0, 2)).reshape(M, INNER_DIM)
    return out


def _heads_unrolled(q, k, v, lam_full, ln2g, ln2b, bblk, seq):
    """Fallback: previously-validated per-head-pair unrolled path."""
    dh = DIM_HEAD
    M = bblk * seq
    outs = []
    for hp in range(NUM_HEADS):
        c0 = 2 * hp * dh
        q1 = q[:, c0:c0 + dh].reshape(bblk, seq, dh).astype(jnp.bfloat16)
        q2 = q[:, c0 + dh:c0 + 2 * dh].reshape(bblk, seq, dh).astype(jnp.bfloat16)
        k1 = k[:, c0:c0 + dh].reshape(bblk, seq, dh).astype(jnp.bfloat16)
        k2 = k[:, c0 + dh:c0 + 2 * dh].reshape(bblk, seq, dh).astype(jnp.bfloat16)
        vh = v[:, c0:c0 + 2 * dh].reshape(bblk, seq, 2 * dh).astype(jnp.bfloat16)

        s1 = jnp.einsum("bid,bjd->bij", q1, k1, preferred_element_type=jnp.float32)
        s2 = jnp.einsum("bid,bjd->bij", q2, k2, preferred_element_type=jnp.float32)
        attn = _softmax(s1) - lam_full * _softmax(s2)

        oh = jnp.einsum("bij,bjd->bid", attn.astype(jnp.bfloat16), vh,
                        preferred_element_type=jnp.float32)
        oh = _ln(oh, ln2g, ln2b) * (1.0 - LAMBDA_INIT)
        outs.append(oh.reshape(M, 2 * dh))
    return jnp.concatenate(outs, axis=-1)


# --------------------------------------------------------------------------
# Pallas kernel: one block of bblk folded-batch rows (M = bblk*seq) per step
# --------------------------------------------------------------------------
def axial_diff_attn_kernel(
    scalars_ref,          # SMEM (1,) f32: lambda_full       (scalar prefetch)
    x_ref,                # (M//fold, fold*DIM) lane-dense input slab
    ln1g_ref, ln1b_ref,   # (1, DIM)            outer LayerNorm
    w_all_ref,            # (DIM, FUSED_DIM)    bf16 fused [q*scale | k | v | gate]
    bg_ref,               # (1, INNER_DIM)      gating bias
    ln2g_ref, ln2b_ref,   # (1, 2*DIM_HEAD)     per-head LayerNorm
    wo_ref, bo_ref,       # (INNER_DIM, DIM) bf16, (1, DIM)   to_out
    o_ref,                # (M//fold, fold*DIM) lane-dense output slab
    *, bblk, seq, head_batched,
):
    lam_full = scalars_ref[0]
    M = bblk * seq

    # one lane->sublane relayout per block; every subsequent op is lane-dense
    x = x_ref[...].reshape(M, DIM)
    xn = _ln(x, ln1g_ref[...], ln1b_ref[...])

    # One fused 256-lane bf16 projection matmul (q scale folded into weights).
    big = jnp.dot(xn.astype(jnp.bfloat16), w_all_ref[...],
                  preferred_element_type=jnp.float32)           # (M, 256) f32
    q = big[:, 0 * INNER_DIM:1 * INNER_DIM]
    k = big[:, 1 * INNER_DIM:2 * INNER_DIM]
    v = big[:, 2 * INNER_DIM:3 * INNER_DIM]
    gates = big[:, 3 * INNER_DIM:4 * INNER_DIM] + bg_ref[...]

    ln2g, ln2b = ln2g_ref[...], ln2b_ref[...]
    if head_batched:
        out = _heads_batched(q, k, v, lam_full, ln2g, ln2b, bblk, seq)
    else:
        out = _heads_unrolled(q, k, v, lam_full, ln2g, ln2b, bblk, seq)

    out = out * _sigmoid(gates)
    out = jnp.dot(out.astype(jnp.bfloat16), wo_ref[...],
                  preferred_element_type=jnp.float32) + bo_ref[...]
    o_ref[...] = out.reshape(o_ref.shape).astype(o_ref.dtype)   # lane-dense store


# --------------------------------------------------------------------------
# Block sizing from a VMEM budget
# --------------------------------------------------------------------------
def _block_vmem_bytes(bblk, seq):
    """Rough per-grid-step VMEM working-set estimate (bytes)."""
    M = bblk * seq
    per_row = (
        2 * 2 * DIM * 4                    # x + o tiles, double-buffered, f32
        + FUSED_DIM * 4                    # `big` projection result (f32)
        + FUSED_DIM * 2                    # bf16 staging of q/k/v/xn
        + 2 * NUM_HEADS * seq * 4 * 3      # scores + exp + softmax (f32)
        + NUM_HEADS * seq * (4 + 2)        # differential attn (f32 + bf16 copy)
        + 3 * INNER_DIM * 4                # head outputs / gated output staging
    )
    weights = (DIM * FUSED_DIM + INNER_DIM * DIM) * 2 \
        + (4 * DIM + INNER_DIM + 4 * DIM_HEAD) * 4
    return M * per_row + weights


def _prefer_multi_step():
    """True on parts with 2 TensorCores per chip (v7x, and v4/v5p megacore)."""
    try:
        kind = jax.devices()[0].device_kind.lower()
    except Exception:
        return False
    return any(tag in kind for tag in ("v7", "v4", "v5p"))


def _pick_bblk(B, N, fold, prefer_multi_step):
    """Largest divisor of B whose block fits the VMEM budget (and is a legal
    BlockSpec shape); on 2-TC parts prefer >= 2 grid steps."""
    def legal(bb):
        if B % bb:
            return False
        M = bb * N
        if M % fold:
            return False
        if bb == B:
            return True                    # full-dim block is always legal
        return (M // fold) % 8 == 0        # f32 sublane (8) rule for partial blocks

    divisors = [d_ for d_ in range(1, B + 1) if legal(d_)]
    fitting = [d_ for d_ in divisors if _block_vmem_bytes(d_, N) <= _VMEM_BLOCK_BUDGET]
    if not fitting:
        fitting = divisors[:1]             # smallest legal block; may spill
    bblk = fitting[-1]
    if prefer_multi_step and B // bblk < 2:
        multi = [d_ for d_ in fitting if B // d_ >= 2]
        if multi:
            bblk = multi[-1]
    return bblk


# --------------------------------------------------------------------------
# Wrapper (fold/unfold, weight fusion, lambda, block sizing, fallback)
# --------------------------------------------------------------------------
def axial_diff_attn(x, params):
    b, hsp, wsp, d = x.shape
    assert d == DIM
    B, N = b * hsp, wsp
    total = B * N

    lam1 = jnp.exp(jnp.sum(params["lambda_q1"] * params["lambda_k1"]))
    lam2 = jnp.exp(jnp.sum(params["lambda_q2"] * params["lambda_k2"]))
    scalars = (lam1 - lam2 + LAMBDA_INIT).astype(jnp.float32).reshape(1)

    # PyTorch Linear stores W as (out, in); kernel consumes x @ W^T.
    # Fuse q/kv/gating projections into one 256-wide bf16 weight; fold q scale in.
    w_all = jnp.concatenate(
        [params["wq"].T * SCALE, params["wkv"].T, params["wg"].T],
        axis=1).astype(jnp.bfloat16)                              # (d, 256)
    wo = params["wo"].T.astype(jnp.bfloat16)                      # (64, d)

    common = (
        params["ln1_g"].reshape(1, d), params["ln1_b"].reshape(1, d),
        w_all,
        params["bg"].reshape(1, INNER_DIM),
        params["ln2_g"].reshape(1, 2 * DIM_HEAD), params["ln2_b"].reshape(1, 2 * DIM_HEAD),
        wo, params["bo"].reshape(1, d),
    )

    def build_and_run(fold, head_batched):
        bblk = _pick_bblk(B, N, fold, _prefer_multi_step())
        grid_b = B // bblk
        M = bblk * N
        x_f = x.reshape(total // fold, fold * d)                  # free, row-major
        blk = (M // fold, fold * d)

        def full(shape):
            nd = len(shape)
            return pl.BlockSpec(shape, lambda i, s, _nd=nd: (0,) * _nd)

        in_specs = [
            pl.BlockSpec(blk, lambda i, s: (i, 0)),               # x rows, lane-dense
            full((1, d)), full((1, d)),                           # ln1
            full((d, FUSED_DIM)),                                 # fused projection
            full((1, INNER_DIM)),                                 # gating bias
            full((1, 2 * DIM_HEAD)), full((1, 2 * DIM_HEAD)),     # ln2
            full((INNER_DIM, d)), full((1, d)),                   # wo, bo
        ]

        kernel = functools.partial(axial_diff_attn_kernel,
                                   bblk=bblk, seq=N, head_batched=head_batched)
        vmem_limit = int(min(60 * 2**20,
                             max(32 * 2**20, 2 * _block_vmem_bytes(bblk, N))))

        out = pl.pallas_call(
            kernel,
            out_shape=jax.ShapeDtypeStruct((total // fold, fold * d), x.dtype),
            grid_spec=pltpu.PrefetchScalarGridSpec(
                num_scalar_prefetch=1,
                grid=(grid_b,),
                in_specs=in_specs,
                out_specs=pl.BlockSpec(blk, lambda i, s: (i, 0)),
            ),
            compiler_params=pltpu.CompilerParams(
                dimension_semantics=("parallel",),
                vmem_limit_bytes=vmem_limit),
        )(scalars, x_f, *common)
        return jax.block_until_ready(out)

    fold = FOLD if (total % FOLD == 0 and FOLD * DIM == 128) else 1
    try:
        out = build_and_run(fold, head_batched=True)
    except Exception:
        # Relayout-heavy fast path rejected by this Mosaic version; fall back to
        # the previously-validated layout (lane-masked I/O, unrolled heads).
        out = build_and_run(1, head_batched=False)
    return out.reshape(b, hsp, wsp, d)


# --------------------------------------------------------------------------
# Pure-JAX reference (mirrors the PyTorch forward, mask/edges/context = None)
# --------------------------------------------------------------------------
def reference(x, params):
    b, hsp, wsp, d = x.shape
    B, N, H, dh = b * hsp, wsp, NUM_HEADS, DIM_HEAD
    x_f = x.reshape(B, N, d)

    mu = jnp.mean(x_f, -1, keepdims=True)
    var = jnp.mean((x_f - mu) ** 2, -1, keepdims=True)
    xn = (x_f - mu) * lax.rsqrt(var + LN_EPS) * params["ln1_g"] + params["ln1_b"]

    q = xn @ params["wq"].T
    kv = xn @ params["wkv"].T
    k, v = kv[..., :INNER_DIM], kv[..., INNER_DIM:]

    q = q.reshape(B, N, 2 * H, dh).transpose(0, 2, 1, 3) * SCALE
    k = k.reshape(B, N, 2 * H, dh).transpose(0, 2, 1, 3)
    v = v.reshape(B, N, H, 2 * dh).transpose(0, 2, 1, 3)

    dots = jnp.einsum("bhid,bhjd->bhij", q, k)
    lam1 = jnp.exp(jnp.sum(params["lambda_q1"] * params["lambda_k1"]))
    lam2 = jnp.exp(jnp.sum(params["lambda_q2"] * params["lambda_k2"]))
    lam_full = lam1 - lam2 + LAMBDA_INIT

    attn = jax.nn.softmax(dots, axis=-1).reshape(B, H, 2, N, N)
    attn = attn[:, :, 0] - lam_full * attn[:, :, 1]

    out = jnp.einsum("bhij,bhjd->bhid", attn, v)
    mu2 = jnp.mean(out, -1, keepdims=True)
    var2 = jnp.mean((out - mu2) ** 2, -1, keepdims=True)
    out = (out - mu2) * lax.rsqrt(var2 + LN_EPS) * params["ln2_g"] + params["ln2_b"]
    out = out * (1.0 - LAMBDA_INIT)
    out = out.transpose(0, 2, 1, 3).reshape(B, N, INNER_DIM)

    gates = xn @ params["wg"].T + params["bg"]
    out = out * jax.nn.sigmoid(gates)
    out = out @ params["wo"].T + params["bo"]
    return out.reshape(b, hsp, wsp, d)


# --------------------------------------------------------------------------
# Deterministic parameter init
# --------------------------------------------------------------------------
def init_params(key):
    ks = jax.random.split(key, 10)
    n = lambda k, shape, s=0.05: jax.random.normal(k, shape, jnp.float32) * s
    return dict(
        ln1_g=jnp.ones((DIM,), jnp.float32),
        ln1_b=jnp.zeros((DIM,), jnp.float32),
        wq=n(ks[0], (INNER_DIM, DIM)),
        wkv=n(ks[1], (2 * INNER_DIM, DIM)),
        wg=n(ks[2], (INNER_DIM, DIM)),
        bg=n(ks[3], (INNER_DIM,)),
        ln2_g=jnp.ones((2 * DIM_HEAD,), jnp.float32),
        ln2_b=jnp.zeros((2 * DIM_HEAD,), jnp.float32),
        wo=n(ks[4], (DIM, INNER_DIM)),
        bo=n(ks[5], (DIM,)),
        lambda_q1=n(ks[6], (DIM_HEAD,), 0.1),
        lambda_k1=n(ks[7], (DIM_HEAD,), 0.1),
        lambda_q2=n(ks[8], (DIM_HEAD,), 0.1),
        lambda_k2=n(ks[9], (DIM_HEAD,), 0.1),
    )


if __name__ == "__main__":
    key = jax.random.PRNGKey(0)
    kx, kp = jax.random.split(key)
    x = jax.random.normal(kx, (2, 4, 16, DIM), jnp.float32)   # (b, h, w, d)
    params = init_params(kp)

    out = jax.block_until_ready(axial_diff_attn(x, params))
    ref = reference(x, params)

    assert out.shape == x.shape
    err = float(jnp.max(jnp.abs(out - ref)))
    # bf16 MXU operands (f32 accumulation) vs an f32 reference, amplified by the
    # per-head LayerNorm, accounts for this tolerance.
    assert err < 2e-2, f"mismatch vs reference: max abs err = {err}"
    print("KERNEL_OK")
</pallas_src>

<mosaic_0001>
module attributes {stable_mosaic.version = 11 : i64} {
  func.func @axial_diff_attn_kernel(%arg0: i32, %arg1: memref<1xf32, #tpu.memory_space<smem>>, %arg2: memref<32x128xf32, #tpu.memory_space<vmem>>, %arg3: memref<1x32xf32, #tpu.memory_space<vmem>>, %arg4: memref<1x32xf32, #tpu.memory_space<vmem>>, %arg5: memref<32x256xbf16, #tpu.memory_space<vmem>>, %arg6: memref<1x64xf32, #tpu.memory_space<vmem>>, %arg7: memref<1x16xf32, #tpu.memory_space<vmem>>, %arg8: memref<1x16xf32, #tpu.memory_space<vmem>>, %arg9: memref<64x32xbf16, #tpu.memory_space<vmem>>, %arg10: memref<1x32xf32, #tpu.memory_space<vmem>>, %arg11: memref<32x128xf32, #tpu.memory_space<vmem>>) attributes {dimension_semantics = [#tpu.dimension_semantics<parallel>], iteration_bounds = array<i64: 1>, scalar_prefetch = 1 : i64, scratch_operands = 0 : i64, tpu.core_type = #tpu.core_type<tc>, window_params = [{transform_indices = @transform_0, window_bounds = array<i64: 32, 128>}, {pipeline_mode = #tpu.pipeline_mode<synchronous>, transform_indices = @transform_1, window_bounds = array<i64: 1, 32>}, {pipeline_mode = #tpu.pipeline_mode<synchronous>, transform_indices = @transform_2, window_bounds = array<i64: 1, 32>}, {pipeline_mode = #tpu.pipeline_mode<synchronous>, transform_indices = @transform_3, window_bounds = array<i64: 32, 256>}, {pipeline_mode = #tpu.pipeline_mode<synchronous>, transform_indices = @transform_4, window_bounds = array<i64: 1, 64>}, {pipeline_mode = #tpu.pipeline_mode<synchronous>, transform_indices = @transform_5, window_bounds = array<i64: 1, 16>}, {pipeline_mode = #tpu.pipeline_mode<synchronous>, transform_indices = @transform_6, window_bounds = array<i64: 1, 16>}, {pipeline_mode = #tpu.pipeline_mode<synchronous>, transform_indices = @transform_7, window_bounds = array<i64: 64, 32>}, {pipeline_mode = #tpu.pipeline_mode<synchronous>, transform_indices = @transform_8, window_bounds = array<i64: 1, 32>}, {transform_indices = @transform_9, window_bounds = array<i64: 32, 128>}]} {
    %c0 = arith.constant 0 : index
    %0 = memref.load %arg1[%c0] : memref<1xf32, #tpu.memory_space<smem>>
    %c0_0 = arith.constant 0 : index
    %c0_1 = arith.constant 0 : index
    %1 = vector.load %arg2[%c0_0, %c0_1] : memref<32x128xf32, #tpu.memory_space<vmem>>, vector<32x128xf32>
    %2 = vector.shape_cast %1 : vector<32x128xf32> to vector<128x32xf32>
    %c0_2 = arith.constant 0 : index
    %c0_3 = arith.constant 0 : index
    %3 = vector.load %arg3[%c0_2, %c0_3] : memref<1x32xf32, #tpu.memory_space<vmem>>, vector<1x32xf32>
    %c0_4 = arith.constant 0 : index
    %c0_5 = arith.constant 0 : index
    %4 = vector.load %arg4[%c0_4, %c0_5] : memref<1x32xf32, #tpu.memory_space<vmem>>, vector<1x32xf32>
    %cst = arith.constant dense<0.000000e+00> : vector<128xf32>
    %5 = vector.multi_reduction <add>, %2, %cst [1] : vector<128x32xf32> to vector<128xf32>
    %6 = vector.shape_cast %5 : vector<128xf32> to vector<128x1xf32>
    %cst_6 = arith.constant 3.200000e+01 : f32
    %7 = vector.broadcast %cst_6 : f32 to vector<128x1xf32>
    %8 = arith.divf %6, %7 : vector<128x1xf32>
    %9 = vector.broadcast %8 : vector<128x1xf32> to vector<128x32xf32>
    %10 = arith.subf %2, %9 : vector<128x32xf32>
    %11 = arith.mulf %10, %10 : vector<128x32xf32>
    %cst_7 = arith.constant dense<0.000000e+00> : vector<128xf32>
    %12 = vector.multi_reduction <add>, %11, %cst_7 [1] : vector<128x32xf32> to vector<128xf32>
    %13 = vector.shape_cast %12 : vector<128xf32> to vector<128x1xf32>
    %cst_8 = arith.constant 3.200000e+01 : f32
    %14 = vector.broadcast %cst_8 : f32 to vector<128x1xf32>
    %15 = arith.divf %13, %14 : vector<128x1xf32>
    %16 = vector.broadcast %8 : vector<128x1xf32> to vector<128x32xf32>
    %17 = arith.subf %2, %16 : vector<128x32xf32>
    %cst_9 = arith.constant 9.99999974E-6 : f32
    %18 = vector.broadcast %cst_9 : f32 to vector<128x1xf32>
    %19 = arith.addf %15, %18 : vector<128x1xf32>
    %20 = math.rsqrt %19 : vector<128x1xf32>
    %21 = vector.broadcast %20 : vector<128x1xf32> to vector<128x32xf32>
    %22 = arith.mulf %17, %21 : vector<128x32xf32>
    %23 = vector.broadcast %3 : vector<1x32xf32> to vector<128x32xf32>
    %24 = arith.mulf %22, %23 : vector<128x32xf32>
    %25 = vector.broadcast %4 : vector<1x32xf32> to vector<128x32xf32>
    %26 = arith.addf %24, %25 : vector<128x32xf32>
    %27 = arith.truncf %26 : vector<128x32xf32> to vector<128x32xbf16>
    %c0_10 = arith.constant 0 : index
    %c0_11 = arith.constant 0 : index
    %28 = vector.load %arg5[%c0_10, %c0_11] : memref<32x256xbf16, #tpu.memory_space<vmem>>, vector<32x256xbf16>
    %cst_12 = arith.constant dense<0.000000e+00> : vector<128x256xf32>
    %29 = tpu.matmul %27, %28, %cst_12 {dimension_numbers = #tpu.dot_dimension_numbers<[1], [0], [0], [1], [0, 0, 1, 1], [], []>} : vector<128x32xbf16>, vector<32x256xbf16>, vector<128x256xf32> -> vector<128x256xf32>
    %30 = vector.extract_strided_slice %29 {offsets = [0, 0], sizes = [128, 64], strides = [1, 1]} : vector<128x256xf32> to vector<128x64xf32>
    %31 = vector.extract_strided_slice %29 {offsets = [0, 64], sizes = [128, 64], strides = [1, 1]} : vector<128x256xf32> to vector<128x64xf32>
    %32 = vector.extract_strided_slice %29 {offsets = [0, 128], sizes = [128, 64], strides = [1, 1]} : vector<128x256xf32> to vector<128x64xf32>
    %33 = vector.extract_strided_slice %29 {offsets = [0, 192], sizes = [128, 64], strides = [1, 1]} : vector<128x256xf32> to vector<128x64xf32>
    %c0_13 = arith.constant 0 : index
    %c0_14 = arith.constant 0 : index
    %34 = vector.load %arg6[%c0_13, %c0_14] : memref<1x64xf32, #tpu.memory_space<vmem>>, vector<1x64xf32>
    %35 = vector.broadcast %34 : vector<1x64xf32> to vector<128x64xf32>
    %36 = arith.addf %33, %35 : vector<128x64xf32>
    %c0_15 = arith.constant 0 : index
    %c0_16 = arith.constant 0 : index
    %37 = vector.load %arg7[%c0_15, %c0_16] : memref<1x16xf32, #tpu.memory_space<vmem>>, vector<1x16xf32>
    %c0_17 = arith.constant 0 : index
    %c0_18 = arith.constant 0 : index
    %38 = vector.load %arg8[%c0_17, %c0_18] : memref<1x16xf32, #tpu.memory_space<vmem>>, vector<1x16xf32>
    %39 = vector.shape_cast %30 : vector<128x64xf32> to vector<128x8x8xf32>
    %40 = tpu.transpose %39, [1, 0, 2] : vector<128x8x8xf32> -> vector<8x128x8xf32>
    %41 = vector.shape_cast %40 : vector<8x128x8xf32> to vector<64x16x8xf32>
    %42 = vector.shape_cast %31 : vector<128x64xf32> to vector<128x8x8xf32>
    %43 = tpu.transpose %42, [1, 0, 2] : vector<128x8x8xf32> -> vector<8x128x8xf32>
    %44 = vector.shape_cast %43 : vector<8x128x8xf32> to vector<64x16x8xf32>
    %45 = vector.shape_cast %32 : vector<128x64xf32> to vector<128x4x16xf32>
    %46 = tpu.transpose %45, [1, 0, 2] : vector<128x4x16xf32> -> vector<4x128x16xf32>
    %47 = vector.shape_cast %46 : vector<4x128x16xf32> to vector<32x16x16xf32>
    %48 = arith.truncf %41 : vector<64x16x8xf32> to vector<64x16x8xbf16>
    %49 = arith.truncf %44 : vector<64x16x8xf32> to vector<64x16x8xbf16>
    %50 = arith.truncf %47 : vector<32x16x16xf32> to vector<32x16x16xbf16>
    "tpu.trace_start"() <{level = 10 : i32, message = "bid,bjd->bij"}> : () -> ()
    %cst_19 = arith.constant dense<0.000000e+00> : vector<64x16x16xf32>
    %51 = tpu.matmul %48, %49, %cst_19 {dimension_numbers = #tpu.dot_dimension_numbers<[2], [2], [1], [1], [0, 0, 0, 1, 1, 1], [0], [0]>} : vector<64x16x8xbf16>, vector<64x16x8xbf16>, vector<64x16x16xf32> -> vector<64x16x16xf32>
    "tpu.trace_stop"() : () -> ()
    %cst_20 = arith.constant dense<0xFF800000> : vector<64x16xf32>
    %52 = vector.multi_reduction <maximumf>, %51, %cst_20 [2] : vector<64x16x16xf32> to vector<64x16xf32>
    %53 = vector.shape_cast %52 : vector<64x16xf32> to vector<64x16x1xf32>
    %54 = vector.broadcast %53 : vector<64x16x1xf32> to vector<64x16x16xf32>
    %55 = arith.subf %51, %54 : vector<64x16x16xf32>
    %56 = math.exp %55 : vector<64x16x16xf32>
    %cst_21 = arith.constant dense<0.000000e+00> : vector<64x16xf32>
    %57 = vector.multi_reduction <add>, %56, %cst_21 [2] : vector<64x16x16xf32> to vector<64x16xf32>
    %58 = vector.shape_cast %57 : vector<64x16xf32> to vector<64x16x1xf32>
    %59 = vector.broadcast %58 : vector<64x16x1xf32> to vector<64x16x16xf32>
    %60 = arith.divf %56, %59 : vector<64x16x16xf32>
    %61 = vector.shape_cast %60 : vector<64x16x16xf32> to vector<4x256x16xf32>
    %62 = vector.extract_strided_slice %61 {offsets = [0, 0, 0], sizes = [4, 128, 16], strides = [1, 1, 1]} : vector<4x256x16xf32> to vector<4x128x16xf32>
    %63 = vector.extract_strided_slice %61 {offsets = [0, 128, 0], sizes = [4, 128, 16], strides = [1, 1, 1]} : vector<4x256x16xf32> to vector<4x128x16xf32>
    %64 = vector.broadcast %0 : f32 to vector<4x128x16xf32>
    %65 = arith.mulf %64, %63 : vector<4x128x16xf32>
    %66 = arith.subf %62, %65 : vector<4x128x16xf32>
    %67 = vector.shape_cast %66 : vector<4x128x16xf32> to vector<32x16x16xf32>
    %68 = arith.truncf %67 : vector<32x16x16xf32> to vector<32x16x16xbf16>
    "tpu.trace_start"() <{level = 10 : i32, message = "bij,bjd->bid"}> : () -> ()
    %cst_22 = arith.constant dense<0.000000e+00> : vector<32x16x16xf32>
    %69 = tpu.matmul %68, %50, %cst_22 {dimension_numbers = #tpu.dot_dimension_numbers<[2], [1], [1], [2], [0, 0, 0, 1, 1, 2], [0], [0]>} : vector<32x16x16xbf16>, vector<32x16x16xbf16>, vector<32x16x16xf32> -> vector<32x16x16xf32>
    "tpu.trace_stop"() : () -> ()
    %cst_23 = arith.constant dense<0.000000e+00> : vector<32x16xf32>
    %70 = vector.multi_reduction <add>, %69, %cst_23 [2] : vector<32x16x16xf32> to vector<32x16xf32>
    %71 = vector.shape_cast %70 : vector<32x16xf32> to vector<32x16x1xf32>
    %cst_24 = arith.constant 1.600000e+01 : f32
    %72 = vector.broadcast %cst_24 : f32 to vector<32x16x1xf32>
    %73 = arith.divf %71, %72 : vector<32x16x1xf32>
    %74 = vector.broadcast %73 : vector<32x16x1xf32> to vector<32x16x16xf32>
    %75 = arith.subf %69, %74 : vector<32x16x16xf32>
    %76 = arith.mulf %75, %75 : vector<32x16x16xf32>
    %cst_25 = arith.constant dense<0.000000e+00> : vector<32x16xf32>
    %77 = vector.multi_reduction <add>, %76, %cst_25 [2] : vector<32x16x16xf32> to vector<32x16xf32>
    %78 = vector.shape_cast %77 : vector<32x16xf32> to vector<32x16x1xf32>
    %cst_26 = arith.constant 1.600000e+01 : f32
    %79 = vector.broadcast %cst_26 : f32 to vector<32x16x1xf32>
    %80 = arith.divf %78, %79 : vector<32x16x1xf32>
    %81 = vector.broadcast %73 : vector<32x16x1xf32> to vector<32x16x16xf32>
    %82 = arith.subf %69, %81 : vector<32x16x16xf32>
    %cst_27 = arith.constant 9.99999974E-6 : f32
    %83 = vector.broadcast %cst_27 : f32 to vector<32x16x1xf32>
    %84 = arith.addf %80, %83 : vector<32x16x1xf32>
    %85 = math.rsqrt %84 : vector<32x16x1xf32>
    %86 = vector.broadcast %85 : vector<32x16x1xf32> to vector<32x16x16xf32>
    %87 = arith.mulf %82, %86 : vector<32x16x16xf32>
    %88 = vector.shape_cast %37 : vector<1x16xf32> to vector<1x1x16xf32>
    %89 = vector.broadcast %88 : vector<1x1x16xf32> to vector<32x16x16xf32>
    %90 = arith.mulf %87, %89 : vector<32x16x16xf32>
    %91 = vector.shape_cast %38 : vector<1x16xf32> to vector<1x1x16xf32>
    %92 = vector.broadcast %91 : vector<1x1x16xf32> to vector<32x16x16xf32>
    %93 = arith.addf %90, %92 : vector<32x16x16xf32>
    %cst_28 = arith.constant 0.644490957 : f32
    %94 = vector.broadcast %cst_28 : f32 to vector<32x16x16xf32>
    %95 = arith.mulf %93, %94 : vector<32x16x16xf32>
    %96 = vector.shape_cast %95 : vector<32x16x16xf32> to vector<4x128x16xf32>
    %97 = tpu.transpose %96, [1, 0, 2] : vector<4x128x16xf32> -> vector<128x4x16xf32>
    %98 = vector.shape_cast %97 : vector<128x4x16xf32> to vector<128x64xf32>
    %cst_29 = arith.constant 5.000000e-01 : f32
    %99 = vector.broadcast %cst_29 : f32 to vector<128x64xf32>
    %100 = arith.mulf %99, %36 : vector<128x64xf32>
    %101 = math.tanh %100 : vector<128x64xf32>
    %cst_30 = arith.constant 1.000000e+00 : f32
    %102 = vector.broadcast %cst_30 : f32 to vector<128x64xf32>
    %103 = arith.addf %101, %102 : vector<128x64xf32>
    %cst_31 = arith.constant 5.000000e-01 : f32
    %104 = vector.broadcast %cst_31 : f32 to vector<128x64xf32>
    %105 = arith.mulf %104, %103 : vector<128x64xf32>
    %106 = arith.mulf %98, %105 : vector<128x64xf32>
    %107 = arith.truncf %106 : vector<128x64xf32> to vector<128x64xbf16>
    %c0_32 = arith.constant 0 : index
    %c0_33 = arith.constant 0 : index
    %108 = vector.load %arg9[%c0_32, %c0_33] : memref<64x32xbf16, #tpu.memory_space<vmem>>, vector<64x32xbf16>
    %cst_34 = arith.constant dense<0.000000e+00> : vector<128x32xf32>
    %109 = tpu.matmul %107, %108, %cst_34 {dimension_numbers = #tpu.dot_dimension_numbers<[1], [0], [0], [1], [0, 0, 1, 1], [], []>} : vector<128x64xbf16>, vector<64x32xbf16>, vector<128x32xf32> -> vector<128x32xf32>
    %c0_35 = arith.constant 0 : index
    %c0_36 = arith.constant 0 : index
    %110 = vector.load %arg10[%c0_35, %c0_36] : memref<1x32xf32, #tpu.memory_space<vmem>>, vector<1x32xf32>
    %111 = vector.broadcast %110 : vector<1x32xf32> to vector<128x32xf32>
    %112 = arith.addf %109, %111 : vector<128x32xf32>
    %113 = vector.shape_cast %112 : vector<128x32xf32> to vector<32x128xf32>
    %c0_37 = arith.constant 0 : index
    %c0_38 = arith.constant 0 : index
    %114 = vector.load %arg11[%c0_37, %c0_38] : memref<32x128xf32, #tpu.memory_space<vmem>>, vector<32x128xf32>
    tpu.vector_store %arg11[%c0_37, %c0_38], %113 {strides = array<i32>} : memref<32x128xf32, #tpu.memory_space<vmem>>, vector<32x128xf32>,
    return
  }
  func.func @transform_0(%arg0: i32, %arg1: memref<1xf32, #tpu.memory_space<smem>>) -> (i32, i32) {
    %c0_i32 = arith.constant 0 : i32
    %c0_i32_0 = arith.constant 0 : i32
    return %arg0, %c0_i32 : i32, i32
  }
  func.func @transform_1(%arg0: i32, %arg1: memref<1xf32, #tpu.memory_space<smem>>) -> (i32, i32) {
    %c0_i32 = arith.constant 0 : i32
    %c0_i32_0 = arith.constant 0 : i32
    %c0_i32_1 = arith.constant 0 : i32
    return %c0_i32, %c0_i32_0 : i32, i32
  }
  func.func @transform_2(%arg0: i32, %arg1: memref<1xf32, #tpu.memory_space<smem>>) -> (i32, i32) {
    %c0_i32 = arith.constant 0 : i32
    %c0_i32_0 = arith.constant 0 : i32
    %c0_i32_1 = arith.constant 0 : i32
    return %c0_i32, %c0_i32_0 : i32, i32
  }
  func.func @transform_3(%arg0: i32, %arg1: memref<1xf32, #tpu.memory_space<smem>>) -> (i32, i32) {
    %c0_i32 = arith.constant 0 : i32
    %c0_i32_0 = arith.constant 0 : i32
    %c0_i32_1 = arith.constant 0 : i32
    return %c0_i32, %c0_i32_0 : i32, i32
  }
  func.func @transform_4(%arg0: i32, %arg1: memref<1xf32, #tpu.memory_space<smem>>) -> (i32, i32) {
    %c0_i32 = arith.constant 0 : i32
    %c0_i32_0 = arith.constant 0 : i32
    %c0_i32_1 = arith.constant 0 : i32
    return %c0_i32, %c0_i32_0 : i32, i32
  }
  func.func @transform_5(%arg0: i32, %arg1: memref<1xf32, #tpu.memory_space<smem>>) -> (i32, i32) {
    %c0_i32 = arith.constant 0 : i32
    %c0_i32_0 = arith.constant 0 : i32
    %c0_i32_1 = arith.constant 0 : i32
    return %c0_i32, %c0_i32_0 : i32, i32
  }
  func.func @transform_6(%arg0: i32, %arg1: memref<1xf32, #tpu.memory_space<smem>>) -> (i32, i32) {
    %c0_i32 = arith.constant 0 : i32
    %c0_i32_0 = arith.constant 0 : i32
    %c0_i32_1 = arith.constant 0 : i32
    return %c0_i32, %c0_i32_0 : i32, i32
  }
  func.func @transform_7(%arg0: i32, %arg1: memref<1xf32, #tpu.memory_space<smem>>) -> (i32, i32) {
    %c0_i32 = arith.constant 0 : i32
    %c0_i32_0 = arith.constant 0 : i32
    %c0_i32_1 = arith.constant 0 : i32
    return %c0_i32, %c0_i32_0 : i32, i32
  }
  func.func @transform_8(%arg0: i32, %arg1: memref<1xf32, #tpu.memory_space<smem>>) -> (i32, i32) {
    %c0_i32 = arith.constant 0 : i32
    %c0_i32_0 = arith.constant 0 : i32
    %c0_i32_1 = arith.constant 0 : i32
    return %c0_i32, %c0_i32_0 : i32, i32
  }
  func.func @transform_9(%arg0: i32, %arg1: memref<1xf32, #tpu.memory_space<smem>>) -> (i32, i32) {
    %c0_i32 = arith.constant 0 : i32
    %c0_i32_0 = arith.constant 0 : i32
    return %arg0, %c0_i32 : i32, i32
  }
}

module attributes {stable_mosaic.version = 11 : i64} {
  func.func @axial_diff_attn_kernel(%arg0: i32, %arg1: memref<1xf32, #tpu.memory_space<smem>>, %arg2: memref<128x32xf32, #tpu.memory_space<vmem>>, %arg3: memref<1x32xf32, #tpu.memory_space<vmem>>, %arg4: memref<1x32xf32, #tpu.memory_space<vmem>>, %arg5: memref<32x256xbf16, #tpu.memory_space<vmem>>, %arg6: memref<1x64xf32, #tpu.memory_space<vmem>>, %arg7: memref<1x16xf32, #tpu.memory_space<vmem>>, %arg8: memref<1x16xf32, #tpu.memory_space<vmem>>, %arg9: memref<64x32xbf16, #tpu.memory_space<vmem>>, %arg10: memref<1x32xf32, #tpu.memory_space<vmem>>, %arg11: memref<128x32xf32, #tpu.memory_space<vmem>>) attributes {dimension_semantics = [#tpu.dimension_semantics<parallel>], iteration_bounds = array<i64: 1>, scalar_prefetch = 1 : i64, scratch_operands = 0 : i64, tpu.core_type = #tpu.core_type<tc>, window_params = [{transform_indices = @transform_0, window_bounds = array<i64: 128, 32>}, {pipeline_mode = #tpu.pipeline_mode<synchronous>, transform_indices = @transform_1, window_bounds = array<i64: 1, 32>}, {pipeline_mode = #tpu.pipeline_mode<synchronous>, transform_indices = @transform_2, window_bounds = array<i64: 1, 32>}, {pipeline_mode = #tpu.pipeline_mode<synchronous>, transform_indices = @transform_3, window_bounds = array<i64: 32, 256>}, {pipeline_mode = #tpu.pipeline_mode<synchronous>, transform_indices = @transform_4, window_bounds = array<i64: 1, 64>}, {pipeline_mode = #tpu.pipeline_mode<synchronous>, transform_indices = @transform_5, window_bounds = array<i64: 1, 16>}, {pipeline_mode = #tpu.pipeline_mode<synchronous>, transform_indices = @transform_6, window_bounds = array<i64: 1, 16>}, {pipeline_mode = #tpu.pipeline_mode<synchronous>, transform_indices = @transform_7, window_bounds = array<i64: 64, 32>}, {pipeline_mode = #tpu.pipeline_mode<synchronous>, transform_indices = @transform_8, window_bounds = array<i64: 1, 32>}, {transform_indices = @transform_9, window_bounds = array<i64: 128, 32>}]} {
    %c0 = arith.constant 0 : index
    %0 = memref.load %arg1[%c0] : memref<1xf32, #tpu.memory_space<smem>>
    %c0_0 = arith.constant 0 : index
    %c0_1 = arith.constant 0 : index
    %1 = vector.load %arg2[%c0_0, %c0_1] : memref<128x32xf32, #tpu.memory_space<vmem>>, vector<128x32xf32>
    %c0_2 = arith.constant 0 : index
    %c0_3 = arith.constant 0 : index
    %2 = vector.load %arg3[%c0_2, %c0_3] : memref<1x32xf32, #tpu.memory_space<vmem>>, vector<1x32xf32>
    %c0_4 = arith.constant 0 : index
    %c0_5 = arith.constant 0 : index
    %3 = vector.load %arg4[%c0_4, %c0_5] : memref<1x32xf32, #tpu.memory_space<vmem>>, vector<1x32xf32>
    %cst = arith.constant dense<0.000000e+00> : vector<128xf32>
    %4 = vector.multi_reduction <add>, %1, %cst [1] : vector<128x32xf32> to vector<128xf32>
    %5 = vector.shape_cast %4 : vector<128xf32> to vector<128x1xf32>
    %cst_6 = arith.constant 3.200000e+01 : f32
    %6 = vector.broadcast %cst_6 : f32 to vector<128x1xf32>
    %7 = arith.divf %5, %6 : vector<128x1xf32>
    %8 = vector.broadcast %7 : vector<128x1xf32> to vector<128x32xf32>
    %9 = arith.subf %1, %8 : vector<128x32xf32>
    %10 = arith.mulf %9, %9 : vector<128x32xf32>
    %cst_7 = arith.constant dense<0.000000e+00> : vector<128xf32>
    %11 = vector.multi_reduction <add>, %10, %cst_7 [1] : vector<128x32xf32> to vector<128xf32>
    %12 = vector.shape_cast %11 : vector<128xf32> to vector<128x1xf32>
    %cst_8 = arith.constant 3.200000e+01 : f32
    %13 = vector.broadcast %cst_8 : f32 to vector<128x1xf32>
    %14 = arith.divf %12, %13 : vector<128x1xf32>
    %15 = vector.broadcast %7 : vector<128x1xf32> to vector<128x32xf32>
    %16 = arith.subf %1, %15 : vector<128x32xf32>
    %cst_9 = arith.constant 9.99999974E-6 : f32
    %17 = vector.broadcast %cst_9 : f32 to vector<128x1xf32>
    %18 = arith.addf %14, %17 : vector<128x1xf32>
    %19 = math.rsqrt %18 : vector<128x1xf32>
    %20 = vector.broadcast %19 : vector<128x1xf32> to vector<128x32xf32>
    %21 = arith.mulf %16, %20 : vector<128x32xf32>
    %22 = vector.broadcast %2 : vector<1x32xf32> to vector<128x32xf32>
    %23 = arith.mulf %21, %22 : vector<128x32xf32>
    %24 = vector.broadcast %3 : vector<1x32xf32> to vector<128x32xf32>
    %25 = arith.addf %23, %24 : vector<128x32xf32>
    %26 = arith.truncf %25 : vector<128x32xf32> to vector<128x32xbf16>
    %c0_10 = arith.constant 0 : index
    %c0_11 = arith.constant 0 : index
    %27 = vector.load %arg5[%c0_10, %c0_11] : memref<32x256xbf16, #tpu.memory_space<vmem>>, vector<32x256xbf16>
    %cst_12 = arith.constant dense<0.000000e+00> : vector<128x256xf32>
    %28 = tpu.matmul %26, %27, %cst_12 {dimension_numbers = #tpu.dot_dimension_numbers<[1], [0], [0], [1], [0, 0, 1, 1], [], []>} : vector<128x32xbf16>, vector<32x256xbf16>, vector<128x256xf32> -> vector<128x256xf32>
    %29 = vector.extract_strided_slice %28 {offsets = [0, 0], sizes = [128, 64], strides = [1, 1]} : vector<128x256xf32> to vector<128x64xf32>
    %30 = vector.extract_strided_slice %28 {offsets = [0, 64], sizes = [128, 64], strides = [1, 1]} : vector<128x256xf32> to vector<128x64xf32>
    %31 = vector.extract_strided_slice %28 {offsets = [0, 128], sizes = [128, 64], strides = [1, 1]} : vector<128x256xf32> to vector<128x64xf32>
    %32 = vector.extract_strided_slice %28 {offsets = [0, 192], sizes = [128, 64], strides = [1, 1]} : vector<128x256xf32> to vector<128x64xf32>
    %c0_13 = arith.constant 0 : index
    %c0_14 = arith.constant 0 : index
    %33 = vector.load %arg6[%c0_13, %c0_14] : memref<1x64xf32, #tpu.memory_space<vmem>>, vector<1x64xf32>
    %34 = vector.broadcast %33 : vector<1x64xf32> to vector<128x64xf32>
    %35 = arith.addf %32, %34 : vector<128x64xf32>
    %c0_15 = arith.constant 0 : index
    %c0_16 = arith.constant 0 : index
    %36 = vector.load %arg7[%c0_15, %c0_16] : memref<1x16xf32, #tpu.memory_space<vmem>>, vector<1x16xf32>
    %c0_17 = arith.constant 0 : index
    %c0_18 = arith.constant 0 : index
    %37 = vector.load %arg8[%c0_17, %c0_18] : memref<1x16xf32, #tpu.memory_space<vmem>>, vector<1x16xf32>
    %38 = vector.extract_strided_slice %29 {offsets = [0, 0], sizes = [128, 8], strides = [1, 1]} : vector<128x64xf32> to vector<128x8xf32>
    %39 = vector.shape_cast %38 : vector<128x8xf32> to vector<8x16x8xf32>
    %40 = arith.truncf %39 : vector<8x16x8xf32> to vector<8x16x8xbf16>
    %41 = vector.extract_strided_slice %29 {offsets = [0, 8], sizes = [128, 8], strides = [1, 1]} : vector<128x64xf32> to vector<128x8xf32>
    %42 = vector.shape_cast %41 : vector<128x8xf32> to vector<8x16x8xf32>
    %43 = arith.truncf %42 : vector<8x16x8xf32> to vector<8x16x8xbf16>
    %44 = vector.extract_strided_slice %30 {offsets = [0, 0], sizes = [128, 8], strides = [1, 1]} : vector<128x64xf32> to vector<128x8xf32>
    %45 = vector.shape_cast %44 : vector<128x8xf32> to vector<8x16x8xf32>
    %46 = arith.truncf %45 : vector<8x16x8xf32> to vector<8x16x8xbf16>
    %47 = vector.extract_strided_slice %30 {offsets = [0, 8], sizes = [128, 8], strides = [1, 1]} : vector<128x64xf32> to vector<128x8xf32>
    %48 = vector.shape_cast %47 : vector<128x8xf32> to vector<8x16x8xf32>
    %49 = arith.truncf %48 : vector<8x16x8xf32> to vector<8x16x8xbf16>
    %50 = vector.extract_strided_slice %31 {offsets = [0, 0], sizes = [128, 16], strides = [1, 1]} : vector<128x64xf32> to vector<128x16xf32>
    %51 = vector.shape_cast %50 : vector<128x16xf32> to vector<8x16x16xf32>
    %52 = arith.truncf %51 : vector<8x16x16xf32> to vector<8x16x16xbf16>
    "tpu.trace_start"() <{level = 10 : i32, message = "bid,bjd->bij"}> : () -> ()
    %cst_19 = arith.constant dense<0.000000e+00> : vector<8x16x16xf32>
    %53 = tpu.matmul %40, %46, %cst_19 {dimension_numbers = #tpu.dot_dimension_numbers<[2], [2], [1], [1], [0, 0, 0, 1, 1, 1], [0], [0]>} : vector<8x16x8xbf16>, vector<8x16x8xbf16>, vector<8x16x16xf32> -> vector<8x16x16xf32>
    %cst_20 = arith.constant dense<0.000000e+00> : vector<8x16x16xf32>
    %54 = tpu.matmul %43, %49, %cst_20 {dimension_numbers = #tpu.dot_dimension_numbers<[2], [2], [1], [1], [0, 0, 0, 1, 1, 1], [0], [0]>} : vector<8x16x8xbf16>, vector<8x16x8xbf16>, vector<8x16x16xf32> -> vector<8x16x16xf32>
    "tpu.trace_stop"() : () -> ()
    %cst_21 = arith.constant dense<0xFF800000> : vector<8x16xf32>
    %55 = vector.multi_reduction <maximumf>, %53, %cst_21 [2] : vector<8x16x16xf32> to vector<8x16xf32>
    %56 = vector.shape_cast %55 : vector<8x16xf32> to vector<8x16x1xf32>
    %57 = vector.broadcast %56 : vector<8x16x1xf32> to vector<8x16x16xf32>
    %58 = arith.subf %53, %57 : vector<8x16x16xf32>
    %59 = math.exp %58 : vector<8x16x16xf32>
    %cst_22 = arith.constant dense<0.000000e+00> : vector<8x16xf32>
    %60 = vector.multi_reduction <add>, %59, %cst_22 [2] : vector<8x16x16xf32> to vector<8x16xf32>
    %61 = vector.shape_cast %60 : vector<8x16xf32> to vector<8x16x1xf32>
    %62 = vector.broadcast %61 : vector<8x16x1xf32> to vector<8x16x16xf32>
    %63 = arith.divf %59, %62 : vector<8x16x16xf32>
    %cst_23 = arith.constant dense<0xFF800000> : vector<8x16xf32>
    %64 = vector.multi_reduction <maximumf>, %54, %cst_23 [2] : vector<8x16x16xf32> to vector<8x16xf32>
    %65 = vector.shape_cast %64 : vector<8x16xf32> to vector<8x16x1xf32>
    %66 = vector.broadcast %65 : vector<8x16x1xf32> to vector<8x16x16xf32>
    %67 = arith.subf %54, %66 : vector<8x16x16xf32>
    %68 = math.exp %67 : vector<8x16x16xf32>
    %cst_24 = arith.constant dense<0.000000e+00> : vector<8x16xf32>
    %69 = vector.multi_reduction <add>, %68, %cst_24 [2] : vector<8x16x16xf32> to vector<8x16xf32>
    %70 = vector.shape_cast %69 : vector<8x16xf32> to vector<8x16x1xf32>
    %71 = vector.broadcast %70 : vector<8x16x1xf32> to vector<8x16x16xf32>
    %72 = arith.divf %68, %71 : vector<8x16x16xf32>
    %73 = vector.broadcast %0 : f32 to vector<8x16x16xf32>
    %74 = arith.mulf %73, %72 : vector<8x16x16xf32>
    %75 = arith.subf %63, %74 : vector<8x16x16xf32>
    %76 = arith.truncf %75 : vector<8x16x16xf32> to vector<8x16x16xbf16>
    "tpu.trace_start"() <{level = 10 : i32, message = "bij,bjd->bid"}> : () -> ()
    %cst_25 = arith.constant dense<0.000000e+00> : vector<8x16x16xf32>
    %77 = tpu.matmul %76, %52, %cst_25 {dimension_numbers = #tpu.dot_dimension_numbers<[2], [1], [1], [2], [0, 0, 0, 1, 1, 2], [0], [0]>} : vector<8x16x16xbf16>, vector<8x16x16xbf16>, vector<8x16x16xf32> -> vector<8x16x16xf32>
    "tpu.trace_stop"() : () -> ()
    %cst_26 = arith.constant dense<0.000000e+00> : vector<8x16xf32>
    %78 = vector.multi_reduction <add>, %77, %cst_26 [2] : vector<8x16x16xf32> to vector<8x16xf32>
    %79 = vector.shape_cast %78 : vector<8x16xf32> to vector<8x16x1xf32>
    %cst_27 = arith.constant 1.600000e+01 : f32
    %80 = vector.broadcast %cst_27 : f32 to vector<8x16x1xf32>
    %81 = arith.divf %79, %80 : vector<8x16x1xf32>
    %82 = vector.broadcast %81 : vector<8x16x1xf32> to vector<8x16x16xf32>
    %83 = arith.subf %77, %82 : vector<8x16x16xf32>
    %84 = arith.mulf %83, %83 : vector<8x16x16xf32>
    %cst_28 = arith.constant dense<0.000000e+00> : vector<8x16xf32>
    %85 = vector.multi_reduction <add>, %84, %cst_28 [2] : vector<8x16x16xf32> to vector<8x16xf32>
    %86 = vector.shape_cast %85 : vector<8x16xf32> to vector<8x16x1xf32>
    %cst_29 = arith.constant 1.600000e+01 : f32
    %87 = vector.broadcast %cst_29 : f32 to vector<8x16x1xf32>
    %88 = arith.divf %86, %87 : vector<8x16x1xf32>
    %89 = vector.broadcast %81 : vector<8x16x1xf32> to vector<8x16x16xf32>
    %90 = arith.subf %77, %89 : vector<8x16x16xf32>
    %cst_30 = arith.constant 9.99999974E-6 : f32
    %91 = vector.broadcast %cst_30 : f32 to vector<8x16x1xf32>
    %92 = arith.addf %88, %91 : vector<8x16x1xf32>
    %93 = math.rsqrt %92 : vector<8x16x1xf32>
    %94 = vector.broadcast %93 : vector<8x16x1xf32> to vector<8x16x16xf32>
    %95 = arith.mulf %90, %94 : vector<8x16x16xf32>
    %96 = vector.shape_cast %36 : vector<1x16xf32> to vector<1x1x16xf32>
    %97 = vector.broadcast %96 : vector<1x1x16xf32> to vector<8x16x16xf32>
    %98 = arith.mulf %95, %97 : vector<8x16x16xf32>
    %99 = vector.shape_cast %37 : vector<1x16xf32> to vector<1x1x16xf32>
    %100 = vector.broadcast %99 : vector<1x1x16xf32> to vector<8x16x16xf32>
    %101 = arith.addf %98, %100 : vector<8x16x16xf32>
    %cst_31 = arith.constant 0.644490957 : f32
    %102 = vector.broadcast %cst_31 : f32 to vector<8x16x16xf32>
    %103 = arith.mulf %101, %102 : vector<8x16x16xf32>
    %104 = vector.shape_cast %103 : vector<8x16x16xf32> to vector<128x16xf32>
    %105 = vector.extract_strided_slice %29 {offsets = [0, 16], sizes = [128, 8], strides = [1, 1]} : vector<128x64xf32> to vector<128x8xf32>
    %106 = vector.shape_cast %105 : vector<128x8xf32> to vector<8x16x8xf32>
    %107 = arith.truncf %106 : vector<8x16x8xf32> to vector<8x16x8xbf16>
    %108 = vector.extract_strided_slice %29 {offsets = [0, 24], sizes = [128, 8], strides = [1, 1]} : vector<128x64xf32> to vector<128x8xf32>
    %109 = vector.shape_cast %108 : vector<128x8xf32> to vector<8x16x8xf32>
    %110 = arith.truncf %109 : vector<8x16x8xf32> to vector<8x16x8xbf16>
    %111 = vector.extract_strided_slice %30 {offsets = [0, 16], sizes = [128, 8], strides = [1, 1]} : vector<128x64xf32> to vector<128x8xf32>
    %112 = vector.shape_cast %111 : vector<128x8xf32> to vector<8x16x8xf32>
    %113 = arith.truncf %112 : vector<8x16x8xf32> to vector<8x16x8xbf16>
    %114 = vector.extract_strided_slice %30 {offsets = [0, 24], sizes = [128, 8], strides = [1, 1]} : vector<128x64xf32> to vector<128x8xf32>
    %115 = vector.shape_cast %114 : vector<128x8xf32> to vector<8x16x8xf32>
    %116 = arith.truncf %115 : vector<8x16x8xf32> to vector<8x16x8xbf16>
    %117 = vector.extract_strided_slice %31 {offsets = [0, 16], sizes = [128, 16], strides = [1, 1]} : vector<128x64xf32> to vector<128x16xf32>
    %118 = vector.shape_cast %117 : vector<128x16xf32> to vector<8x16x16xf32>
    %119 = arith.truncf %118 : vector<8x16x16xf32> to vector<8x16x16xbf16>
    "tpu.trace_start"() <{level = 10 : i32, message = "bid,bjd->bij"}> : () -> ()
    %cst_32 = arith.constant dense<0.000000e+00> : vector<8x16x16xf32>
    %120 = tpu.matmul %107, %113, %cst_32 {dimension_numbers = #tpu.dot_dimension_numbers<[2], [2], [1], [1], [0, 0, 0, 1, 1, 1], [0], [0]>} : vector<8x16x8xbf16>, vector<8x16x8xbf16>, vector<8x16x16xf32> -> vector<8x16x16xf32>
    %cst_33 = arith.constant dense<0.000000e+00> : vector<8x16x16xf32>
    %121 = tpu.matmul %110, %116, %cst_33 {dimension_numbers = #tpu.dot_dimension_numbers<[2], [2], [1], [1], [0, 0, 0, 1, 1, 1], [0], [0]>} : vector<8x16x8xbf16>, vector<8x16x8xbf16>, vector<8x16x16xf32> -> vector<8x16x16xf32>
    "tpu.trace_stop"() : () -> ()
    %cst_34 = arith.constant dense<0xFF800000> : vector<8x16xf32>
    %122 = vector.multi_reduction <maximumf>, %120, %cst_34 [2] : vector<8x16x16xf32> to vector<8x16xf32>
    %123 = vector.shape_cast %122 : vector<8x16xf32> to vector<8x16x1xf32>
    %124 = vector.broadcast %123 : vector<8x16x1xf32> to vector<8x16x16xf32>
    %125 = arith.subf %120, %124 : vector<8x16x16xf32>
    %126 = math.exp %125 : vector<8x16x16xf32>
    %cst_35 = arith.constant dense<0.000000e+00> : vector<8x16xf32>
    %127 = vector.multi_reduction <add>, %126, %cst_35 [2] : vector<8x16x16xf32> to vector<8x16xf32>
    %128 = vector.shape_cast %127 : vector<8x16xf32> to vector<8x16x1xf32>
    %129 = vector.broadcast %128 : vector<8x16x1xf32> to vector<8x16x16xf32>
    %130 = arith.divf %126, %129 : vector<8x16x16xf32>
    %cst_36 = arith.constant dense<0xFF800000> : vector<8x16xf32>
    %131 = vector.multi_reduction <maximumf>, %121, %cst_36 [2] : vector<8x16x16xf32> to vector<8x16xf32>
    %132 = vector.shape_cast %131 : vector<8x16xf32> to vector<8x16x1xf32>
    %133 = vector.broadcast %132 : vector<8x16x1xf32> to vector<8x16x16xf32>
    %134 = arith.subf %121, %133 : vector<8x16x16xf32>
    %135 = math.exp %134 : vector<8x16x16xf32>
    %cst_37 = arith.constant dense<0.000000e+00> : vector<8x16xf32>
    %136 = vector.multi_reduction <add>, %135, %cst_37 [2] : vector<8x16x16xf32> to vector<8x16xf32>
    %137 = vector.shape_cast %136 : vector<8x16xf32> to vector<8x16x1xf32>
    %138 = vector.broadcast %137 : vector<8x16x1xf32> to vector<8x16x16xf32>
    %139 = arith.divf %135, %138 : vector<8x16x16xf32>
    %140 = vector.broadcast %0 : f32 to vector<8x16x16xf32>
    %141 = arith.mulf %140, %139 : vector<8x16x16xf32>
    %142 = arith.subf %130, %141 : vector<8x16x16xf32>
    %143 = arith.truncf %142 : vector<8x16x16xf32> to vector<8x16x16xbf16>
    "tpu.trace_start"() <{level = 10 : i32, message = "bij,bjd->bid"}> : () -> ()
    %cst_38 = arith.constant dense<0.000000e+00> : vector<8x16x16xf32>
    %144 = tpu.matmul %143, %119, %cst_38 {dimension_numbers = #tpu.dot_dimension_numbers<[2], [1], [1], [2], [0, 0, 0, 1, 1, 2], [0], [0]>} : vector<8x16x16xbf16>, vector<8x16x16xbf16>, vector<8x16x16xf32> -> vector<8x16x16xf32>
    "tpu.trace_stop"() : () -> ()
    %cst_39 = arith.constant dense<0.000000e+00> : vector<8x16xf32>
    %145 = vector.multi_reduction <add>, %144, %cst_39 [2] : vector<8x16x16xf32> to vector<8x16xf32>
    %146 = vector.shape_cast %145 : vector<8x16xf32> to vector<8x16x1xf32>
    %cst_40 = arith.constant 1.600000e+01 : f32
    %147 = vector.broadcast %cst_40 : f32 to vector<8x16x1xf32>
    %148 = arith.divf %146, %147 : vector<8x16x1xf32>
    %149 = vector.broadcast %148 : vector<8x16x1xf32> to vector<8x16x16xf32>
    %150 = arith.subf %144, %149 : vector<8x16x16xf32>
    %151 = arith.mulf %150, %150 : vector<8x16x16xf32>
    %cst_41 = arith.constant dense<0.000000e+00> : vector<8x16xf32>
    %152 = vector.multi_reduction <add>, %151, %cst_41 [2] : vector<8x16x16xf32> to vector<8x16xf32>
    %153 = vector.shape_cast %152 : vector<8x16xf32> to vector<8x16x1xf32>
    %cst_42 = arith.constant 1.600000e+01 : f32
    %154 = vector.broadcast %cst_42 : f32 to vector<8x16x1xf32>
    %155 = arith.divf %153, %154 : vector<8x16x1xf32>
    %156 = vector.broadcast %148 : vector<8x16x1xf32> to vector<8x16x16xf32>
    %157 = arith.subf %144, %156 : vector<8x16x16xf32>
    %cst_43 = arith.constant 9.99999974E-6 : f32
    %158 = vector.broadcast %cst_43 : f32 to vector<8x16x1xf32>
    %159 = arith.addf %155, %158 : vector<8x16x1xf32>
    %160 = math.rsqrt %159 : vector<8x16x1xf32>
    %161 = vector.broadcast %160 : vector<8x16x1xf32> to vector<8x16x16xf32>
    %162 = arith.mulf %157, %161 : vector<8x16x16xf32>
    %163 = vector.shape_cast %36 : vector<1x16xf32> to vector<1x1x16xf32>
    %164 = vector.broadcast %163 : vector<1x1x16xf32> to vector<8x16x16xf32>
    %165 = arith.mulf %162, %164 : vector<8x16x16xf32>
    %166 = vector.shape_cast %37 : vector<1x16xf32> to vector<1x1x16xf32>
    %167 = vector.broadcast %166 : vector<1x1x16xf32> to vector<8x16x16xf32>
    %168 = arith.addf %165, %167 : vector<8x16x16xf32>
    %cst_44 = arith.constant 0.644490957 : f32
    %169 = vector.broadcast %cst_44 : f32 to vector<8x16x16xf32>
    %170 = arith.mulf %168, %169 : vector<8x16x16xf32>
    %171 = vector.shape_cast %170 : vector<8x16x16xf32> to vector<128x16xf32>
    %172 = vector.extract_strided_slice %29 {offsets = [0, 32], sizes = [128, 8], strides = [1, 1]} : vector<128x64xf32> to vector<128x8xf32>
    %173 = vector.shape_cast %172 : vector<128x8xf32> to vector<8x16x8xf32>
    %174 = arith.truncf %173 : vector<8x16x8xf32> to vector<8x16x8xbf16>
    %175 = vector.extract_strided_slice %29 {offsets = [0, 40], sizes = [128, 8], strides = [1, 1]} : vector<128x64xf32> to vector<128x8xf32>
    %176 = vector.shape_cast %175 : vector<128x8xf32> to vector<8x16x8xf32>
    %177 = arith.truncf %176 : vector<8x16x8xf32> to vector<8x16x8xbf16>
    %178 = vector.extract_strided_slice %30 {offsets = [0, 32], sizes = [128, 8], strides = [1, 1]} : vector<128x64xf32> to vector<128x8xf32>
    %179 = vector.shape_cast %178 : vector<128x8xf32> to vector<8x16x8xf32>
    %180 = arith.truncf %179 : vector<8x16x8xf32> to vector<8x16x8xbf16>
    %181 = vector.extract_strided_slice %30 {offsets = [0, 40], sizes = [128, 8], strides = [1, 1]} : vector<128x64xf32> to vector<128x8xf32>
    %182 = vector.shape_cast %181 : vector<128x8xf32> to vector<8x16x8xf32>
    %183 = arith.truncf %182 : vector<8x16x8xf32> to vector<8x16x8xbf16>
    %184 = vector.extract_strided_slice %31 {offsets = [0, 32], sizes = [128, 16], strides = [1, 1]} : vector<128x64xf32> to vector<128x16xf32>
    %185 = vector.shape_cast %184 : vector<128x16xf32> to vector<8x16x16xf32>
    %186 = arith.truncf %185 : vector<8x16x16xf32> to vector<8x16x16xbf16>
    "tpu.trace_start"() <{level = 10 : i32, message = "bid,bjd->bij"}> : () -> ()
    %cst_45 = arith.constant dense<0.000000e+00> : vector<8x16x16xf32>
    %187 = tpu.matmul %174, %180, %cst_45 {dimension_numbers = #tpu.dot_dimension_numbers<[2], [2], [1], [1], [0, 0, 0, 1, 1, 1], [0], [0]>} : vector<8x16x8xbf16>, vector<8x16x8xbf16>, vector<8x16x16xf32> -> vector<8x16x16xf32>
    %cst_46 = arith.constant dense<0.000000e+00> : vector<8x16x16xf32>
    %188 = tpu.matmul %177, %183, %cst_46 {dimension_numbers = #tpu.dot_dimension_numbers<[2], [2], [1], [1], [0, 0, 0, 1, 1, 1], [0], [0]>} : vector<8x16x8xbf16>, vector<8x16x8xbf16>, vector<8x16x16xf32> -> vector<8x16x16xf32>
    "tpu.trace_stop"() : () -> ()
    %cst_47 = arith.constant dense<0xFF800000> : vector<8x16xf32>
    %189 = vector.multi_reduction <maximumf>, %187, %cst_47 [2] : vector<8x16x16xf32> to vector<8x16xf32>
    %190 = vector.shape_cast %189 : vector<8x16xf32> to vector<8x16x1xf32>
    %191 = vector.broadcast %190 : vector<8x16x1xf32> to vector<8x16x16xf32>
    %192 = arith.subf %187, %191 : vector<8x16x16xf32>
    %193 = math.exp %192 : vector<8x16x16xf32>
    %cst_48 = arith.constant dense<0.000000e+00> : vector<8x16xf32>
    %194 = vector.multi_reduction <add>, %193, %cst_48 [2] : vector<8x16x16xf32> to vector<8x16xf32>
    %195 = vector.shape_cast %194 : vector<8x16xf32> to vector<8x16x1xf32>
    %196 = vector.broadcast %195 : vector<8x16x1xf32> to vector<8x16x16xf32>
    %197 = arith.divf %193, %196 : vector<8x16x16xf32>
    %cst_49 = arith.constant dense<0xFF800000> : vector<8x16xf32>
    %198 = vector.multi_reduction <maximumf>, %188, %cst_49 [2] : vector<8x16x16xf32> to vector<8x16xf32>
    %199 = vector.shape_cast %198 : vector<8x16xf32> to vector<8x16x1xf32>
    %200 = vector.broadcast %199 : vector<8x16x1xf32> to vector<8x16x16xf32>
    %201 = arith.subf %188, %200 : vector<8x16x16xf32>
    %202 = math.exp %201 : vector<8x16x16xf32>
    %cst_50 = arith.constant dense<0.000000e+00> : vector<8x16xf32>
    %203 = vector.multi_reduction <add>, %202, %cst_50 [2] : vector<8x16x16xf32> to vector<8x16xf32>
    %204 = vector.shape_cast %203 : vector<8x16xf32> to vector<8x16x1xf32>
    %205 = vector.broadcast %204 : vector<8x16x1xf32> to vector<8x16x16xf32>
    %206 = arith.divf %202, %205 : vector<8x16x16xf32>
    %207 = vector.broadcast %0 : f32 to vector<8x16x16xf32>
    %208 = arith.mulf %207, %206 : vector<8x16x16xf32>
    %209 = arith.subf %197, %208 : vector<8x16x16xf32>
    %210 = arith.truncf %209 : vector<8x16x16xf32> to vector<8x16x16xbf16>
    "tpu.trace_start"() <{level = 10 : i32, message = "bij,bjd->bid"}> : () -> ()
    %cst_51 = arith.constant dense<0.000000e+00> : vector<8x16x16xf32>
    %211 = tpu.matmul %210, %186, %cst_51 {dimension_numbers = #tpu.dot_dimension_numbers<[2], [1], [1], [2], [0, 0, 0, 1, 1, 2], [0], [0]>} : vector<8x16x16xbf16>, vector<8x16x16xbf16>, vector<8x16x16xf32> -> vector<8x16x16xf32>
    "tpu.trace_stop"() : () -> ()
    %cst_52 = arith.constant dense<0.000000e+00> : vector<8x16xf32>
    %212 = vector.multi_reduction <add>, %211, %cst_52 [2] : vector<8x16x16xf32> to vector<8x16xf32>
    %213 = vector.shape_cast %212 : vector<8x16xf32> to vector<8x16x1xf32>
    %cst_53 = arith.constant 1.600000e+01 : f32
    %214 = vector.broadcast %cst_53 : f32 to vector<8x16x1xf32>
    %215 = arith.divf %213, %214 : vector<8x16x1xf32>
    %216 = vector.broadcast %215 : vector<8x16x1xf32> to vector<8x16x16xf32>
    %217 = arith.subf %211, %216 : vector<8x16x16xf32>
    %218 = arith.mulf %217, %217 : vector<8x16x16xf32>
    %cst_54 = arith.constant dense<0.000000e+00> : vector<8x16xf32>
    %219 = vector.multi_reduction <add>, %218, %cst_54 [2] : vector<8x16x16xf32> to vector<8x16xf32>
    %220 = vector.shape_cast %219 : vector<8x16xf32> to vector<8x16x1xf32>
    %cst_55 = arith.constant 1.600000e+01 : f32
    %221 = vector.broadcast %cst_55 : f32 to vector<8x16x1xf32>
    %222 = arith.divf %220, %221 : vector<8x16x1xf32>
    %223 = vector.broadcast %215 : vector<8x16x1xf32> to vector<8x16x16xf32>
    %224 = arith.subf %211, %223 : vector<8x16x16xf32>
    %cst_56 = arith.constant 9.99999974E-6 : f32
    %225 = vector.broadcast %cst_56 : f32 to vector<8x16x1xf32>
    %226 = arith.addf %222, %225 : vector<8x16x1xf32>
    %227 = math.rsqrt %226 : vector<8x16x1xf32>
    %228 = vector.broadcast %227 : vector<8x16x1xf32> to vector<8x16x16xf32>
    %229 = arith.mulf %224, %228 : vector<8x16x16xf32>
    %230 = vector.shape_cast %36 : vector<1x16xf32> to vector<1x1x16xf32>
    %231 = vector.broadcast %230 : vector<1x1x16xf32> to vector<8x16x16xf32>
    %232 = arith.mulf %229, %231 : vector<8x16x16xf32>
    %233 = vector.shape_cast %37 : vector<1x16xf32> to vector<1x1x16xf32>
    %234 = vector.broadcast %233 : vector<1x1x16xf32> to vector<8x16x16xf32>
    %235 = arith.addf %232, %234 : vector<8x16x16xf32>
    %cst_57 = arith.constant 0.644490957 : f32
    %236 = vector.broadcast %cst_57 : f32 to vector<8x16x16xf32>
    %237 = arith.mulf %235, %236 : vector<8x16x16xf32>
    %238 = vector.shape_cast %237 : vector<8x16x16xf32> to vector<128x16xf32>
    %239 = vector.extract_strided_slice %29 {offsets = [0, 48], sizes = [128, 8], strides = [1, 1]} : vector<128x64xf32> to vector<128x8xf32>
    %240 = vector.shape_cast %239 : vector<128x8xf32> to vector<8x16x8xf32>
    %241 = arith.truncf %240 : vector<8x16x8xf32> to vector<8x16x8xbf16>
    %242 = vector.extract_strided_slice %29 {offsets = [0, 56], sizes = [128, 8], strides = [1, 1]} : vector<128x64xf32> to vector<128x8xf32>
    %243 = vector.shape_cast %242 : vector<128x8xf32> to vector<8x16x8xf32>
    %244 = arith.truncf %243 : vector<8x16x8xf32> to vector<8x16x8xbf16>
    %245 = vector.extract_strided_slice %30 {offsets = [0, 48], sizes = [128, 8], strides = [1, 1]} : vector<128x64xf32> to vector<128x8xf32>
    %246 = vector.shape_cast %245 : vector<128x8xf32> to vector<8x16x8xf32>
    %247 = arith.truncf %246 : vector<8x16x8xf32> to vector<8x16x8xbf16>
    %248 = vector.extract_strided_slice %30 {offsets = [0, 56], sizes = [128, 8], strides = [1, 1]} : vector<128x64xf32> to vector<128x8xf32>
    %249 = vector.shape_cast %248 : vector<128x8xf32> to vector<8x16x8xf32>
    %250 = arith.truncf %249 : vector<8x16x8xf32> to vector<8x16x8xbf16>
    %251 = vector.extract_strided_slice %31 {offsets = [0, 48], sizes = [128, 16], strides = [1, 1]} : vector<128x64xf32> to vector<128x16xf32>
    %252 = vector.shape_cast %251 : vector<128x16xf32> to vector<8x16x16xf32>
    %253 = arith.truncf %252 : vector<8x16x16xf32> to vector<8x16x16xbf16>
    "tpu.trace_start"() <{level = 10 : i32, message = "bid,bjd->bij"}> : () -> ()
    %cst_58 = arith.constant dense<0.000000e+00> : vector<8x16x16xf32>
    %254 = tpu.matmul %241, %247, %cst_58 {dimension_numbers = #tpu.dot_dimension_numbers<[2], [2], [1], [1], [0, 0, 0, 1, 1, 1], [0], [0]>} : vector<8x16x8xbf16>, vector<8x16x8xbf16>, vector<8x16x16xf32> -> vector<8x16x16xf32>
    %cst_59 = arith.constant dense<0.000000e+00> : vector<8x16x16xf32>
    %255 = tpu.matmul %244, %250, %cst_59 {dimension_numbers = #tpu.dot_dimension_numbers<[2], [2], [1], [1], [0, 0, 0, 1, 1, 1], [0], [0]>} : vector<8x16x8xbf16>, vector<8x16x8xbf16>, vector<8x16x16xf32> -> vector<8x16x16xf32>
    "tpu.trace_stop"() : () -> ()
    %cst_60 = arith.constant dense<0xFF800000> : vector<8x16xf32>
    %256 = vector.multi_reduction <maximumf>, %254, %cst_60 [2] : vector<8x16x16xf32> to vector<8x16xf32>
    %257 = vector.shape_cast %256 : vector<8x16xf32> to vector<8x16x1xf32>
    %258 = vector.broadcast %257 : vector<8x16x1xf32> to vector<8x16x16xf32>
    %259 = arith.subf %254, %258 : vector<8x16x16xf32>
    %260 = math.exp %259 : vector<8x16x16xf32>
    %cst_61 = arith.constant dense<0.000000e+00> : vector<8x16xf32>
    %261 = vector.multi_reduction <add>, %260, %cst_61 [2] : vector<8x16x16xf32> to vector<8x16xf32>
    %262 = vector.shape_cast %261 : vector<8x16xf32> to vector<8x16x1xf32>
    %263 = vector.broadcast %262 : vector<8x16x1xf32> to vector<8x16x16xf32>
    %264 = arith.divf %260, %263 : vector<8x16x16xf32>
    %cst_62 = arith.constant dense<0xFF800000> : vector<8x16xf32>
    %265 = vector.multi_reduction <maximumf>, %255, %cst_62 [2] : vector<8x16x16xf32> to vector<8x16xf32>
    %266 = vector.shape_cast %265 : vector<8x16xf32> to vector<8x16x1xf32>
    %267 = vector.broadcast %266 : vector<8x16x1xf32> to vector<8x16x16xf32>
    %268 = arith.subf %255, %267 : vector<8x16x16xf32>
    %269 = math.exp %268 : vector<8x16x16xf32>
    %cst_63 = arith.constant dense<0.000000e+00> : vector<8x16xf32>
    %270 = vector.multi_reduction <add>, %269, %cst_63 [2] : vector<8x16x16xf32> to vector<8x16xf32>
    %271 = vector.shape_cast %270 : vector<8x16xf32> to vector<8x16x1xf32>
    %272 = vector.broadcast %271 : vector<8x16x1xf32> to vector<8x16x16xf32>
    %273 = arith.divf %269, %272 : vector<8x16x16xf32>
    %274 = vector.broadcast %0 : f32 to vector<8x16x16xf32>
    %275 = arith.mulf %274, %273 : vector<8x16x16xf32>
    %276 = arith.subf %264, %275 : vector<8x16x16xf32>
    %277 = arith.truncf %276 : vector<8x16x16xf32> to vector<8x16x16xbf16>
    "tpu.trace_start"() <{level = 10 : i32, message = "bij,bjd->bid"}> : () -> ()
    %cst_64 = arith.constant dense<0.000000e+00> : vector<8x16x16xf32>
    %278 = tpu.matmul %277, %253, %cst_64 {dimension_numbers = #tpu.dot_dimension_numbers<[2], [1], [1], [2], [0, 0, 0, 1, 1, 2], [0], [0]>} : vector<8x16x16xbf16>, vector<8x16x16xbf16>, vector<8x16x16xf32> -> vector<8x16x16xf32>
    "tpu.trace_stop"() : () -> ()
    %cst_65 = arith.constant dense<0.000000e+00> : vector<8x16xf32>
    %279 = vector.multi_reduction <add>, %278, %cst_65 [2] : vector<8x16x16xf32> to vector<8x16xf32>
    %280 = vector.shape_cast %279 : vector<8x16xf32> to vector<8x16x1xf32>
    %cst_66 = arith.constant 1.600000e+01 : f32
    %281 = vector.broadcast %cst_66 : f32 to vector<8x16x1xf32>
    %282 = arith.divf %280, %281 : vector<8x16x1xf32>
    %283 = vector.broadcast %282 : vector<8x16x1xf32> to vector<8x16x16xf32>
    %284 = arith.subf %278, %283 : vector<8x16x16xf32>
    %285 = arith.mulf %284, %284 : vector<8x16x16xf32>
    %cst_67 = arith.constant dense<0.000000e+00> : vector<8x16xf32>
    %286 = vector.multi_reduction <add>, %285, %cst_67 [2] : vector<8x16x16xf32> to vector<8x16xf32>
    %287 = vector.shape_cast %286 : vector<8x16xf32> to vector<8x16x1xf32>
    %cst_68 = arith.constant 1.600000e+01 : f32
    %288 = vector.broadcast %cst_68 : f32 to vector<8x16x1xf32>
    %289 = arith.divf %287, %288 : vector<8x16x1xf32>
    %290 = vector.broadcast %282 : vector<8x16x1xf32> to vector<8x16x16xf32>
    %291 = arith.subf %278, %290 : vector<8x16x16xf32>
    %cst_69 = arith.constant 9.99999974E-6 : f32
    %292 = vector.broadcast %cst_69 : f32 to vector<8x16x1xf32>
    %293 = arith.addf %289, %292 : vector<8x16x1xf32>
    %294 = math.rsqrt %293 : vector<8x16x1xf32>
    %295 = vector.broadcast %294 : vector<8x16x1xf32> to vector<8x16x16xf32>
    %296 = arith.mulf %291, %295 : vector<8x16x16xf32>
    %297 = vector.shape_cast %36 : vector<1x16xf32> to vector<1x1x16xf32>
    %298 = vector.broadcast %297 : vector<1x1x16xf32> to vector<8x16x16xf32>
    %299 = arith.mulf %296, %298 : vector<8x16x16xf32>
    %300 = vector.shape_cast %37 : vector<1x16xf32> to vector<1x1x16xf32>
    %301 = vector.broadcast %300 : vector<1x1x16xf32> to vector<8x16x16xf32>
    %302 = arith.addf %299, %301 : vector<8x16x16xf32>
    %cst_70 = arith.constant 0.644490957 : f32
    %303 = vector.broadcast %cst_70 : f32 to vector<8x16x16xf32>
    %304 = arith.mulf %302, %303 : vector<8x16x16xf32>
    %305 = vector.shape_cast %304 : vector<8x16x16xf32> to vector<128x16xf32>
    %306 = tpu.concatenate %104, %171, %238, %305 in 1 : vector<128x16xf32>, vector<128x16xf32>, vector<128x16xf32>, vector<128x16xf32> -> vector<128x64xf32>
    %cst_71 = arith.constant 5.000000e-01 : f32
    %307 = vector.broadcast %cst_71 : f32 to vector<128x64xf32>
    %308 = arith.mulf %307, %35 : vector<128x64xf32>
    %309 = math.tanh %308 : vector<128x64xf32>
    %cst_72 = arith.constant 1.000000e+00 : f32
    %310 = vector.broadcast %cst_72 : f32 to vector<128x64xf32>
    %311 = arith.addf %309, %310 : vector<128x64xf32>
    %cst_73 = arith.constant 5.000000e-01 : f32
    %312 = vector.broadcast %cst_73 : f32 to vector<128x64xf32>
    %313 = arith.mulf %312, %311 : vector<128x64xf32>
    %314 = arith.mulf %306, %313 : vector<128x64xf32>
    %315 = arith.truncf %314 : vector<128x64xf32> to vector<128x64xbf16>
    %c0_74 = arith.constant 0 : index
    %c0_75 = arith.constant 0 : index
    %316 = vector.load %arg9[%c0_74, %c0_75] : memref<64x32xbf16, #tpu.memory_space<vmem>>, vector<64x32xbf16>
    %cst_76 = arith.constant dense<0.000000e+00> : vector<128x32xf32>
    %317 = tpu.matmul %315, %316, %cst_76 {dimension_numbers = #tpu.dot_dimension_numbers<[1], [0], [0], [1], [0, 0, 1, 1], [], []>} : vector<128x64xbf16>, vector<64x32xbf16>, vector<128x32xf32> -> vector<128x32xf32>
    %c0_77 = arith.constant 0 : index
    %c0_78 = arith.constant 0 : index
    %318 = vector.load %arg10[%c0_77, %c0_78] : memref<1x32xf32, #tpu.memory_space<vmem>>, vector<1x32xf32>
    %319 = vector.broadcast %318 : vector<1x32xf32> to vector<128x32xf32>
    %320 = arith.addf %317, %319 : vector<128x32xf32>
    %c0_79 = arith.constant 0 : index
    %c0_80 = arith.constant 0 : index
    %321 = vector.load %arg11[%c0_79, %c0_80] : memref<128x32xf32, #tpu.memory_space<vmem>>, vector<128x32xf32>
    tpu.vector_store %arg11[%c0_79, %c0_80], %320 {strides = array<i32>} : memref<128x32xf32, #tpu.memory_space<vmem>>, vector<128x32xf32>,
    return
  }
  func.func @transform_0(%arg0: i32, %arg1: memref<1xf32, #tpu.memory_space<smem>>) -> (i32, i32) {
    %c0_i32 = arith.constant 0 : i32
    %c0_i32_0 = arith.constant 0 : i32
    return %arg0, %c0_i32 : i32, i32
  }
  func.func @transform_1(%arg0: i32, %arg1: memref<1xf32, #tpu.memory_space<smem>>) -> (i32, i32) {
    %c0_i32 = arith.constant 0 : i32
    %c0_i32_0 = arith.constant 0 : i32
    %c0_i32_1 = arith.constant 0 : i32
    return %c0_i32, %c0_i32_0 : i32, i32
  }
  func.func @transform_2(%arg0: i32, %arg1: memref<1xf32, #tpu.memory_space<smem>>) -> (i32, i32) {
    %c0_i32 = arith.constant 0 : i32
    %c0_i32_0 = arith.constant 0 : i32
    %c0_i32_1 = arith.constant 0 : i32
    return %c0_i32, %c0_i32_0 : i32, i32
  }
  func.func @transform_3(%arg0: i32, %arg1: memref<1xf32, #tpu.memory_space<smem>>) -> (i32, i32) {
    %c0_i32 = arith.constant 0 : i32
    %c0_i32_0 = arith.constant 0 : i32
    %c0_i32_1 = arith.constant 0 : i32
    return %c0_i32, %c0_i32_0 : i32, i32
  }
  func.func @transform_4(%arg0: i32, %arg1: memref<1xf32, #tpu.memory_space<smem>>) -> (i32, i32) {
    %c0_i32 = arith.constant 0 : i32
    %c0_i32_0 = arith.constant 0 : i32
    %c0_i32_1 = arith.constant 0 : i32
    return %c0_i32, %c0_i32_0 : i32, i32
  }
  func.func @transform_5(%arg0: i32, %arg1: memref<1xf32, #tpu.memory_space<smem>>) -> (i32, i32) {
    %c0_i32 = arith.constant 0 : i32
    %c0_i32_0 = arith.constant 0 : i32
    %c0_i32_1 = arith.constant 0 : i32
    return %c0_i32, %c0_i32_0 : i32, i32
  }
  func.func @transform_6(%arg0: i32, %arg1: memref<1xf32, #tpu.memory_space<smem>>) -> (i32, i32) {
    %c0_i32 = arith.constant 0 : i32
    %c0_i32_0 = arith.constant 0 : i32
    %c0_i32_1 = arith.constant 0 : i32
    return %c0_i32, %c0_i32_0 : i32, i32
  }
  func.func @transform_7(%arg0: i32, %arg1: memref<1xf32, #tpu.memory_space<smem>>) -> (i32, i32) {
    %c0_i32 = arith.constant 0 : i32
    %c0_i32_0 = arith.constant 0 : i32
    %c0_i32_1 = arith.constant 0 : i32
    return %c0_i32, %c0_i32_0 : i32, i32
  }
  func.func @transform_8(%arg0: i32, %arg1: memref<1xf32, #tpu.memory_space<smem>>) -> (i32, i32) {
    %c0_i32 = arith.constant 0 : i32
    %c0_i32_0 = arith.constant 0 : i32
    %c0_i32_1 = arith.constant 0 : i32
    return %c0_i32, %c0_i32_0 : i32, i32
  }
  func.func @transform_9(%arg0: i32, %arg1: memref<1xf32, #tpu.memory_space<smem>>) -> (i32, i32) {
    %c0_i32 = arith.constant 0 : i32
    %c0_i32_0 = arith.constant 0 : i32
    return %arg0, %c0_i32 : i32, i32
  }
}

</mosaic_0001>

<llo_original>
// kernel: tpu_custom_call.1
$region0: #{tpu_custom_call.1}
  #allocation0 [shape = 'u32[]', space=smem, size = 0x4, offset = 0x4, fixed_abs, tag = 'smem constant byte address 0x4 - core index']
  #allocation1 [shape = 'u32[144,128]{1,0:T(1,128)}', space=vmem, size = 0x12000, scoped, tag = 'internal scratch']
  #allocation2 [shape = 's32[1]{0}', space=sflag, size = 0x4, scoped, tag = 'scoped memory for tpu_custom_call.1']
  #allocation3 [shape = 'f32[1]{0:T(128)S(6)}', space=smem, size = 0x200, scoped, tag = 'prefetched SMEM operand 0']
  %s0 = inlined_call_operand.<no memory space> [shape: f32[1], index: 0, kind: input, shape index: {}]
  %s1 = inlined_call_operand.vmem [shape: f32[128,32], index: 1, kind: input, shape index: {}]
  %s2 = inlined_call_operand.vmem [shape: f32[1,32], index: 2, kind: input, shape index: {}]
  %s3 = inlined_call_operand.vmem [shape: f32[1,32], index: 3, kind: input, shape index: {}]
  %s4 = inlined_call_operand.vmem [shape: bf16[32,256], index: 4, kind: input, shape index: {}]
  %s5 = inlined_call_operand.vmem [shape: f32[1,64], index: 5, kind: input, shape index: {}]
  %s6 = inlined_call_operand.vmem [shape: f32[1,16], index: 6, kind: input, shape index: {}]
  %s7 = inlined_call_operand.vmem [shape: f32[1,16], index: 7, kind: input, shape index: {}]
  %s8 = inlined_call_operand.vmem [shape: bf16[64,32], index: 8, kind: input, shape index: {}]
  %s9 = inlined_call_operand.vmem [shape: f32[1,32], index: 9, kind: input, shape index: {}]
  %s10 = inlined_call_operand.vmem [shape: f32[128,32], index: 10, kind: output, shape index: {}]
  %s11 = sld [smem:[#allocation0]]
  $region46: #{tpu_custom_call.1} parent=0
    _
  %s13 = ssub.s32 1, %s11
  %s14 = scalar_select 0, %s13, %s11
  %15 = sst [smem:[#allocation3]] %s0
  // Predicated region
  $region2: #{tpu_custom_call.1} parent=0 // pred_check
    _
  $region3: #{tpu_custom_call.1} parent=0 // pred_check_branch
    %17 = sbr.rel (0) target = $region5
  $region4: #{tpu_custom_call.1} parent=0 // pred_region
    _
  $region5: #{tpu_custom_call.1} parent=0 // pred_fallthru
    _
  // Predicated region
  $region6: #{tpu_custom_call.1} parent=0 // pred_check
    _
  $region7: #{tpu_custom_call.1} parent=0 // pred_check_branch
    %19 = sbr.rel (0) target = $region9
  $region8: #{tpu_custom_call.1} parent=0 // pred_region
    _
  $region9: #{tpu_custom_call.1} parent=0 // pred_fallthru
    _
  // Predicated region
  $region10: #{tpu_custom_call.1} parent=0 // pred_check
    _
  $region11: #{tpu_custom_call.1} parent=0 // pred_check_branch
    %21 = sbr.rel (0) target = $region13
  $region12: #{tpu_custom_call.1} parent=0 // pred_region
    _
  $region13: #{tpu_custom_call.1} parent=0 // pred_fallthru
    _
  // Predicated region
  $region14: #{tpu_custom_call.1} parent=0 // pred_check
    _
  $region15: #{tpu_custom_call.1} parent=0 // pred_check_branch
    %23 = sbr.rel (0) target = $region17
  $region16: #{tpu_custom_call.1} parent=0 // pred_region
    _
  $region17: #{tpu_custom_call.1} parent=0 // pred_fallthru
    _
  // Predicated region
  $region18: #{tpu_custom_call.1} parent=0 // pred_check
    _
  $region19: #{tpu_custom_call.1} parent=0 // pred_check_branch
    %25 = sbr.rel (0) target = $region21
  $region20: #{tpu_custom_call.1} parent=0 // pred_region
    _
  $region21: #{tpu_custom_call.1} parent=0 // pred_fallthru
    _
  // Predicated region
  $region22: #{tpu_custom_call.1} parent=0 // pred_check
    _
  $region23: #{tpu_custom_call.1} parent=0 // pred_check_branch
    %27 = sbr.rel (0) target = $region25
  $region24: #{tpu_custom_call.1} parent=0 // pred_region
    _
  $region25: #{tpu_custom_call.1} parent=0 // pred_fallthru
    _
  // Predicated region
  $region26: #{tpu_custom_call.1} parent=0 // pred_check
    _
  $region27: #{tpu_custom_call.1} parent=0 // pred_check_branch
    %29 = sbr.rel (0) target = $region29
  $region28: #{tpu_custom_call.1} parent=0 // pred_region
    _
  $region29: #{tpu_custom_call.1} parent=0 // pred_fallthru
    _
  // Predicated region
  $region30: #{tpu_custom_call.1} parent=0 // pred_check
    _
  $region31: #{tpu_custom_call.1} parent=0 // pred_check_branch
    %31 = sbr.rel (0) target = $region33
  $region32: #{tpu_custom_call.1} parent=0 // pred_region
    _
  $region33: #{tpu_custom_call.1} parent=0 // pred_fallthru
    _
  // Predicated region
  $region34: #{tpu_custom_call.1} parent=0 // pred_check
    _
  $region35: #{tpu_custom_call.1} parent=0 // pred_check_branch
    %33 = sbr.rel (0) target = $region37
  $region36: #{tpu_custom_call.1} parent=0 // pred_region
    _
  $region37: #{tpu_custom_call.1} parent=0 // pred_fallthru
    _
  %s35 = sld [smem:[#allocation3]]
  %v36 = vld [vmem:[%s1] sm:$0xff]
  %v37 = vld [vmem:[%s1 + $0x8] sm:$0xff]
  %v38 = vld [vmem:[%s1 + $0x10] sm:$0xff]
  %v39 = vld [vmem:[%s1 + $0x18] sm:$0xff]
  %v40 = vld [vmem:[%s1 + $0x20] sm:$0xff]
  %v41 = vld [vmem:[%s1 + $0x28] sm:$0xff]
  %v42 = vld [vmem:[%s1 + $0x30] sm:$0xff]
  %v43 = vld [vmem:[%s1 + $0x38] sm:$0xff]
  %v44 = vld [vmem:[%s1 + $0x40] sm:$0xff]
  %v45 = vld [vmem:[%s1 + $0x48] sm:$0xff]
  %v46 = vld [vmem:[%s1 + $0x50] sm:$0xff]
  %v47 = vld [vmem:[%s1 + $0x58] sm:$0xff]
  %v48 = vld [vmem:[%s1 + $0x60] sm:$0xff]
  %v49 = vld [vmem:[%s1 + $0x68] sm:$0xff]
  %v50 = vld [vmem:[%s1 + $0x70] sm:$0xff]
  %v51 = vld [vmem:[%s1 + $0x78] sm:$0xff]
  %v52 = vld [vmem:[%s2] sm:$0x1]
  %v53 = vld [vmem:[%s3] sm:$0x1]
  %vm54 = vcmask 261120
  %v55 = vsel %vm54, %v36, 0.0
  %56 = vadd.xlane.f32.xlu0 %v55
  %v57 = vpop.xlane.xlu0 %56
  %v58 = vsel %vm54, %v37, 0.0
  %59 = vadd.xlane.f32.xlu0 %v58
  %v60 = vpop.xlane.xlu0 %59
  %v61 = vsel %vm54, %v38, 0.0
  %62 = vadd.xlane.f32.xlu0 %v61
  %v63 = vpop.xlane.xlu0 %62
  %v64 = vsel %vm54, %v39, 0.0
  %65 = vadd.xlane.f32.xlu0 %v64
  %v66 = vpop.xlane.xlu0 %65
  %v67 = vsel %vm54, %v40, 0.0
  %68 = vadd.xlane.f32.xlu0 %v67
  %v69 = vpop.xlane.xlu0 %68
  %v70 = vsel %vm54, %v41, 0.0
  %71 = vadd.xlane.f32.xlu0 %v70
  %v72 = vpop.xlane.xlu0 %71
  %v73 = vsel %vm54, %v42, 0.0
  %74 = vadd.xlane.f32.xlu0 %v73
  %v75 = vpop.xlane.xlu0 %74
  %v76 = vsel %vm54, %v43, 0.0
  %77 = vadd.xlane.f32.xlu0 %v76
  %v78 = vpop.xlane.xlu0 %77
  %v79 = vsel %vm54, %v44, 0.0
  %80 = vadd.xlane.f32.xlu0 %v79
  %v81 = vpop.xlane.xlu0 %80
  %v82 = vsel %vm54, %v45, 0.0
  %83 = vadd.xlane.f32.xlu0 %v82
  %v84 = vpop.xlane.xlu0 %83
  %v85 = vsel %vm54, %v46, 0.0
  %86 = vadd.xlane.f32.xlu0 %v85
  %v87 = vpop.xlane.xlu0 %86
  %v88 = vsel %vm54, %v47, 0.0
  %89 = vadd.xlane.f32.xlu0 %v88
  %v90 = vpop.xlane.xlu0 %89
  %v91 = vsel %vm54, %v48, 0.0
  %92 = vadd.xlane.f32.xlu0 %v91
  %v93 = vpop.xlane.xlu0 %92
  %v94 = vsel %vm54, %v49, 0.0
  %95 = vadd.xlane.f32.xlu0 %v94
  %v96 = vpop.xlane.xlu0 %95
  %v97 = vsel %vm54, %v50, 0.0
  %98 = vadd.xlane.f32.xlu0 %v97
  %v99 = vpop.xlane.xlu0 %98
  %v100 = vsel %vm54, %v51, 0.0
  %101 = vadd.xlane.f32.xlu0 %v100
  %v102 = vpop.xlane.xlu0 %101
  %v103 = vrcp.pop 32.0
  %v104 = vmul.f32 %v57, %v103
  %v105 = vmul.f32 %v60, %v103
  %v106 = vmul.f32 %v63, %v103
  %v107 = vmul.f32 %v66, %v103
  %v108 = vmul.f32 %v69, %v103
  %v109 = vmul.f32 %v72, %v103
  %v110 = vmul.f32 %v75, %v103
  %v111 = vmul.f32 %v78, %v103
  %v112 = vmul.f32 %v81, %v103
  %v113 = vmul.f32 %v84, %v103
  %v114 = vmul.f32 %v87, %v103
  %v115 = vmul.f32 %v90, %v103
  %v116 = vmul.f32 %v93, %v103
  %v117 = vmul.f32 %v96, %v103
  %v118 = vmul.f32 %v99, %v103
  %v119 = vmul.f32 %v102, %v103
  %v120 = vsub.f32 %v36, %v104
  %v121 = vsub.f32 %v37, %v105
  %v122 = vsub.f32 %v38, %v106
  %v123 = vsub.f32 %v39, %v107
  %v124 = vsub.f32 %v40, %v108
  %v125 = vsub.f32 %v41, %v109
  %v126 = vsub.f32 %v42, %v110
  %v127 = vsub.f32 %v43, %v111
  %v128 = vsub.f32 %v44, %v112
  %v129 = vsub.f32 %v45, %v113
  %v130 = vsub.f32 %v46, %v114
  %v131 = vsub.f32 %v47, %v115
  %v132 = vsub.f32 %v48, %v116
  %v133 = vsub.f32 %v49, %v117
  %v134 = vsub.f32 %v50, %v118
  %v135 = vsub.f32 %v51, %v119
  %v136 = vmul.f32 %v120, %v120
  %v137 = vmul.f32 %v121, %v121
  %v138 = vmul.f32 %v122, %v122
  %v139 = vmul.f32 %v123, %v123
  %v140 = vmul.f32 %v124, %v124
  %v141 = vmul.f32 %v125, %v125
  %v142 = vmul.f32 %v126, %v126
  %v143 = vmul.f32 %v127, %v127
  %v144 = vmul.f32 %v128, %v128
  %v145 = vmul.f32 %v129, %v129
  %v146 = vmul.f32 %v130, %v130
  %v147 = vmul.f32 %v131, %v131
  %v148 = vmul.f32 %v132, %v132
  %v149 = vmul.f32 %v133, %v133
  %v150 = vmul.f32 %v134, %v134
  %v151 = vmul.f32 %v135, %v135
  %v152 = vsel %vm54, %v136, 0.0
  %153 = vadd.xlane.f32.xlu0 %v152
  %v154 = vpop.xlane.xlu0 %153
  %v155 = vsel %vm54, %v137, 0.0
  %156 = vadd.xlane.f32.xlu0 %v155
  %v157 = vpop.xlane.xlu0 %156
  %v158 = vsel %vm54, %v138, 0.0
  %159 = vadd.xlane.f32.xlu0 %v158
  %v160 = vpop.xlane.xlu0 %159
  %v161 = vsel %vm54, %v139, 0.0
  %162 = vadd.xlane.f32.xlu0 %v161
  %v163 = vpop.xlane.xlu0 %162
  %v164 = vsel %vm54, %v140, 0.0
  %165 = vadd.xlane.f32.xlu0 %v164
  %v166 = vpop.xlane.xlu0 %165
  %v167 = vsel %vm54, %v141, 0.0
  %168 = vadd.xlane.f32.xlu0 %v167
  %v169 = vpop.xlane.xlu0 %168
  %v170 = vsel %vm54, %v142, 0.0
  %171 = vadd.xlane.f32.xlu0 %v170
  %v172 = vpop.xlane.xlu0 %171
  %v173 = vsel %vm54, %v143, 0.0
  %174 = vadd.xlane.f32.xlu0 %v173
  %v175 = vpop.xlane.xlu0 %174
  %v176 = vsel %vm54, %v144, 0.0
  %177 = vadd.xlane.f32.xlu0 %v176
  %v178 = vpop.xlane.xlu0 %177
  %v179 = vsel %vm54, %v145, 0.0
  %180 = vadd.xlane.f32.xlu0 %v179
  %v181 = vpop.xlane.xlu0 %180
  %v182 = vsel %vm54, %v146, 0.0
  %183 = vadd.xlane.f32.xlu0 %v182
  %v184 = vpop.xlane.xlu0 %183
  %v185 = vsel %vm54, %v147, 0.0
  %186 = vadd.xlane.f32.xlu0 %v185
  %v187 = vpop.xlane.xlu0 %186
  %v188 = vsel %vm54, %v148, 0.0
  %189 = vadd.xlane.f32.xlu0 %v188
  %v190 = vpop.xlane.xlu0 %189
  %v191 = vsel %vm54, %v149, 0.0
  %192 = vadd.xlane.f32.xlu0 %v191
  %v193 = vpop.xlane.xlu0 %192
  %v194 = vsel %vm54, %v150, 0.0
  %195 = vadd.xlane.f32.xlu0 %v194
  %v196 = vpop.xlane.xlu0 %195
  %v197 = vsel %vm54, %v151, 0.0
  %198 = vadd.xlane.f32.xlu0 %v197
  %v199 = vpop.xlane.xlu0 %198
  %v200 = vmul.f32 %v154, %v103
  %v201 = vmul.f32 %v157, %v103
  %v202 = vmul.f32 %v160, %v103
  %v203 = vmul.f32 %v163, %v103
  %v204 = vmul.f32 %v166, %v103
  %v205 = vmul.f32 %v169, %v103
  %v206 = vmul.f32 %v172, %v103
  %v207 = vmul.f32 %v175, %v103
  %v208 = vmul.f32 %v178, %v103
  %v209 = vmul.f32 %v181, %v103
  %v210 = vmul.f32 %v184, %v103
  %v211 = vmul.f32 %v187, %v103
  %v212 = vmul.f32 %v190, %v103
  %v213 = vmul.f32 %v193, %v103
  %v214 = vmul.f32 %v196, %v103
  %v215 = vmul.f32 %v199, %v103
  %v216 = vadd.f32 %v200, 1e-05
  %v217 = vadd.f32 %v201, 1e-05
  %v218 = vadd.f32 %v202, 1e-05
  %v219 = vadd.f32 %v203, 1e-05
  %v220 = vadd.f32 %v204, 1e-05
  %v221 = vadd.f32 %v205, 1e-05
  %v222 = vadd.f32 %v206, 1e-05
  %v223 = vadd.f32 %v207, 1e-05
  %v224 = vadd.f32 %v208, 1e-05
  %v225 = vadd.f32 %v209, 1e-05
  %v226 = vadd.f32 %v210, 1e-05
  %v227 = vadd.f32 %v211, 1e-05
  %v228 = vadd.f32 %v212, 1e-05
  %v229 = vadd.f32 %v213, 1e-05
  %v230 = vadd.f32 %v214, 1e-05
  %v231 = vadd.f32 %v215, 1e-05
  %v232 = vrsqrt.pop %v216
  %v233 = vrsqrt.pop %v217
  %v234 = vrsqrt.pop %v218
  %v235 = vrsqrt.pop %v219
  %v236 = vrsqrt.pop %v220
  %v237 = vrsqrt.pop %v221
  %v238 = vrsqrt.pop %v222
  %v239 = vrsqrt.pop %v223
  %v240 = vrsqrt.pop %v224
  %v241 = vrsqrt.pop %v225
  %v242 = vrsqrt.pop %v226
  %v243 = vrsqrt.pop %v227
  %v244 = vrsqrt.pop %v228
  %v245 = vrsqrt.pop %v229
  %v246 = vrsqrt.pop %v230
  %v247 = vrsqrt.pop %v231
  %v248 = vmul.f32 %v120, %v232
  %v249 = vmul.f32 %v121, %v233
  %v250 = vmul.f32 %v122, %v234
  %v251 = vmul.f32 %v123, %v235
  %v252 = vmul.f32 %v124, %v236
  %v253 = vmul.f32 %v125, %v237
  %v254 = vmul.f32 %v126, %v238
  %v255 = vmul.f32 %v127, %v239
  %v256 = vmul.f32 %v128, %v240
  %v257 = vmul.f32 %v129, %v241
  %v258 = vmul.f32 %v130, %v242
  %v259 = vmul.f32 %v131, %v243
  %v260 = vmul.f32 %v132, %v244
  %v261 = vmul.f32 %v133, %v245
  %v262 = vmul.f32 %v134, %v246
  %v263 = vmul.f32 %v135, %v247
  %v265 = vlaneseq
  %v266 = vshrl.u32 %v265, 7
  %v267 = vsub.s32 0, %v266
  %v268 = vrot.slane %v52, %v267
  %v270 = vmul.f32 %v248, %v268
  %v271 = vmul.f32 %v249, %v268
  %v272 = vmul.f32 %v250, %v268
  %v273 = vmul.f32 %v251, %v268
  %v274 = vmul.f32 %v252, %v268
  %v275 = vmul.f32 %v253, %v268
  %v276 = vmul.f32 %v254, %v268
  %v277 = vmul.f32 %v255, %v268
  %v278 = vmul.f32 %v256, %v268
  %v279 = vmul.f32 %v257, %v268
  %v280 = vmul.f32 %v258, %v268
  %v281 = vmul.f32 %v259, %v268
  %v282 = vmul.f32 %v260, %v268
  %v283 = vmul.f32 %v261, %v268
  %v284 = vmul.f32 %v262, %v268
  %v285 = vmul.f32 %v263, %v268
  %v287 = vlaneseq
  %v288 = vshrl.u32 %v287, 7
  %v289 = vsub.s32 0, %v288
  %v290 = vrot.slane %v53, %v289
  %v292 = vadd.f32 %v270, %v290
  %v293 = vadd.f32 %v271, %v290
  %v294 = vadd.f32 %v272, %v290
  %v295 = vadd.f32 %v273, %v290
  %v296 = vadd.f32 %v274, %v290
  %v297 = vadd.f32 %v275, %v290
  %v298 = vadd.f32 %v276, %v290
  %v299 = vadd.f32 %v277, %v290
  %v300 = vadd.f32 %v278, %v290
  %v301 = vadd.f32 %v279, %v290
  %v302 = vadd.f32 %v280, %v290
  %v303 = vadd.f32 %v281, %v290
  %v304 = vadd.f32 %v282, %v290
  %v305 = vadd.f32 %v283, %v290
  %v306 = vadd.f32 %v284, %v290
  %v307 = vadd.f32 %v285, %v290
  %v308 = vpack.c.bf16 %v293, %v292
  %v309 = vpack.c.bf16 %v295, %v294
  %v310 = vpack.c.bf16 %v297, %v296
  %v311 = vpack.c.bf16 %v299, %v298
  %v312 = vpack.c.bf16 %v301, %v300
  %v313 = vpack.c.bf16 %v303, %v302
  %v314 = vpack.c.bf16 %v305, %v304
  %v315 = vpack.c.bf16 %v307, %v306
  %v316 = vld [vmem:[%s4] sm:$0xff]
  %v317 = vld [vmem:[%s4 + $0x8] sm:$0xff]
  %v318 = vld [vmem:[%s4 + $0x10] sm:$0xff]
  %v319 = vld [vmem:[%s4 + $0x18] sm:$0xff]
  %v324 = vunpack.c.l.b16 %v316
  %v325 = vunpack.c.h.b16 %v316
  %v326 = vunpack.c.l.b16 %v317
  %v327 = vunpack.c.h.b16 %v317
  %v328 = vunpack.c.l.b16 %v318
  %v329 = vunpack.c.h.b16 %v318
  %v330 = vunpack.c.l.b16 %v319
  %v331 = vunpack.c.h.b16 %v319
  %v332 = vpack.c.b16 %v326, %v324
  %v333 = vpack.c.b16 %v327, %v325
  %v334 = vpack.c.b16 %v330, %v328
  %v335 = vpack.c.b16 %v331, %v329
  %v341 = vsel %vm54, %v308, 0
  %v344 = vsel %vm54, %v309, 0
  %v347 = vsel %vm54, %v310, 0
  %v350 = vsel %vm54, %v311, 0
  %v353 = vsel %vm54, %v312, 0
  %v356 = vsel %vm54, %v313, 0
  %v359 = vsel %vm54, %v314, 0
  %v362 = vsel %vm54, %v315, 0
  %364 = vmatprep.subr.bf16.mxu0 %v333
  %365 = vmatpush1.bf16.msra.mxu0 %v332
  %366 = vmatprep.subr.bf16.mxu0 %v335
  %367 = vmatpush1.bf16.msra.mxu0 %v334
  %368 = vmatprep.subr.bf16.mxu0 0
  %369 = vmatpush1.bf16.msra.mxu0 0
  %370 = vmatprep.subr.bf16.mxu0 0
  %371 = vmatpush1.bf16.msra.mxu0 0
  %372 = vmatprep.subr.bf16.mxu0 0
  %373 = vmatpush1.bf16.msra.mxu0 0
  %374 = vmatprep.subr.bf16.mxu0 0
  %375 = vmatpush1.bf16.msra.mxu0 0
  %376 = vmatprep.subr.bf16.mxu0 0
  %377 = vmatpush1.bf16.msra.mxu0 0
  %378 = vmatprep.subr.bf16.mxu0 0
  %379 = vmatpush1.bf16.msra.mxu0 0
  %380 = vmatprep.subr.bf16.mxu0 0
  %381 = vmatpush1.bf16.msra.mxu0 0
  %382 = vmatprep.subr.bf16.mxu0 0
  %383 = vmatpush1.bf16.msra.mxu0 0
  %384 = vmatprep.subr.bf16.mxu0 0
  %385 = vmatpush1.bf16.msra.mxu0 0
  %386 = vmatprep.subr.bf16.mxu0 0
  %387 = vmatpush1.bf16.msra.mxu0 0
  %388 = vmatprep.subr.bf16.mxu0 0
  %389 = vmatpush1.bf16.msra.mxu0 0
  %390 = vmatprep.subr.bf16.mxu0 0
  %391 = vmatpush1.bf16.msra.mxu0 0
  %392 = vmatprep.subr.bf16.mxu0 0
  %393 = vmatpush1.bf16.msra.mxu0 0
  %394 = vmatprep.subr.bf16.mxu0 0
  %395 = vmatpush1.bf16.msra.mxu0 0
  %396 = vmatprep.mubr.bf16.mxu0 0
  %397 = vmatmul.mubr.bf16.gmra.mrb[0].mxu0 %v341
  %v398 = vpop.f32.mrb[0].mxu0
  %v399 = vadd.f32 0.0, %v398
  %v400 = vpop.f32.mrb[0].mxu0
  %v401 = vadd.f32 0.0, %v400
  %v402 = vpop.f32.mrb[0].mxu0
  %v403 = vadd.f32 0.0, %v402
  %v404 = vpop.f32.mrb[0].mxu0
  %v405 = vadd.f32 0.0, %v404
  %406 = vmatprep.mubr.bf16.mxu0 0
  %407 = vmatmul.mubr.bf16.gmra.mrb[0].mxu0 %v344
  %v408 = vpop.f32.mrb[0].mxu0
  %v409 = vadd.f32 0.0, %v408
  %v410 = vpop.f32.mrb[0].mxu0
  %v411 = vadd.f32 0.0, %v410
  %v412 = vpop.f32.mrb[0].mxu0
  %v413 = vadd.f32 0.0, %v412
  %v414 = vpop.f32.mrb[0].mxu0
  %v415 = vadd.f32 0.0, %v414
  %416 = vmatprep.mubr.bf16.mxu0 0
  %417 = vmatmul.mubr.bf16.gmra.mrb[0].mxu0 %v347
  %v418 = vpop.f32.mrb[0].mxu0
  %v419 = vadd.f32 0.0, %v418
  %v420 = vpop.f32.mrb[0].mxu0
  %v421 = vadd.f32 0.0, %v420
  %v422 = vpop.f32.mrb[0].mxu0
  %v423 = vadd.f32 0.0, %v422
  %v424 = vpop.f32.mrb[0].mxu0
  %v425 = vadd.f32 0.0, %v424
  %426 = vmatprep.mubr.bf16.mxu0 0
  %427 = vmatmul.mubr.bf16.gmra.mrb[0].mxu0 %v350
  %v428 = vpop.f32.mrb[0].mxu0
  %v429 = vadd.f32 0.0, %v428
  %v430 = vpop.f32.mrb[0].mxu0
  %v431 = vadd.f32 0.0, %v430
  %v432 = vpop.f32.mrb[0].mxu0
  %v433 = vadd.f32 0.0, %v432
  %v434 = vpop.f32.mrb[0].mxu0
  %v435 = vadd.f32 0.0, %v434
  %436 = vmatprep.mubr.bf16.mxu0 0
  %437 = vmatmul.mubr.bf16.gmra.mrb[0].mxu0 %v353
  %v438 = vpop.f32.mrb[0].mxu0
  %v439 = vadd.f32 0.0, %v438
  %v440 = vpop.f32.mrb[0].mxu0
  %v441 = vadd.f32 0.0, %v440
  %v442 = vpop.f32.mrb[0].mxu0
  %v443 = vadd.f32 0.0, %v442
  %v444 = vpop.f32.mrb[0].mxu0
  %v445 = vadd.f32 0.0, %v444
  %446 = vmatprep.mubr.bf16.mxu0 0
  %447 = vmatmul.mubr.bf16.gmra.mrb[0].mxu0 %v356
  %v448 = vpop.f32.mrb[0].mxu0
  %v449 = vadd.f32 0.0, %v448
  %v450 = vpop.f32.mrb[0].mxu0
  %v451 = vadd.f32 0.0, %v450
  %v452 = vpop.f32.mrb[0].mxu0
  %v453 = vadd.f32 0.0, %v452
  %v454 = vpop.f32.mrb[0].mxu0
  %v455 = vadd.f32 0.0, %v454
  %456 = vmatprep.mubr.bf16.mxu0 0
  %457 = vmatmul.mubr.bf16.gmra.mrb[0].mxu0 %v359
  %v458 = vpop.f32.mrb[0].mxu0
  %v459 = vadd.f32 0.0, %v458
  %v460 = vpop.f32.mrb[0].mxu0
  %v461 = vadd.f32 0.0, %v460
  %v462 = vpop.f32.mrb[0].mxu0
  %v463 = vadd.f32 0.0, %v462
  %v464 = vpop.f32.mrb[0].mxu0
  %v465 = vadd.f32 0.0, %v464
  %466 = vmatprep.mubr.bf16.mxu0 0
  %467 = vmatmul.mubr.bf16.gmra.mrb[0].mxu0 %v362
  %v468 = vpop.f32.mrb[0].mxu0
  %v469 = vadd.f32 0.0, %v468
  %v470 = vpop.f32.mrb[0].mxu0
  %v471 = vadd.f32 0.0, %v470
  %v472 = vpop.f32.mrb[0].mxu0
  %v473 = vadd.f32 0.0, %v472
  %v474 = vpop.f32.mrb[0].mxu0
  %v475 = vadd.f32 0.0, %v474
  %476 = vdwg.mxu0
  %v477 = vld [vmem:[%s5] sm:$0x1]
  %v479 = vlaneseq
  %v480 = vshrl.u32 %v479, 7
  %v481 = vsub.s32 0, %v480
  %v482 = vrot.slane %v477, %v481
  %483 = vrot.lane.b32.xlu0 %v482, 64
  %v484 = vpop.permute.xlu0 %483
  %v486 = vadd.f32 %v401, %v484
  %v487 = vadd.f32 %v405, %v484
  %v488 = vadd.f32 %v411, %v484
  %v489 = vadd.f32 %v415, %v484
  %v490 = vadd.f32 %v421, %v484
  %v491 = vadd.f32 %v425, %v484
  %v492 = vadd.f32 %v431, %v484
  %v493 = vadd.f32 %v435, %v484
  %v494 = vadd.f32 %v441, %v484
  %v495 = vadd.f32 %v445, %v484
  %v496 = vadd.f32 %v451, %v484
  %v497 = vadd.f32 %v455, %v484
  %v498 = vadd.f32 %v461, %v484
  %v499 = vadd.f32 %v465, %v484
  %v500 = vadd.f32 %v471, %v484
  %v501 = vadd.f32 %v475, %v484
  %v502 = vld [vmem:[%s6] sm:$0x1]
  %v503 = vld [vmem:[%s7] sm:$0x1]
  %v504 = vpack.c.bf16 %v403, %v399
  %v505 = vpack.c.bf16 %v413, %v409
  %v506 = vpack.c.bf16 %v423, %v419
  %v507 = vpack.c.bf16 %v433, %v429
  %v508 = vpack.c.bf16 %v443, %v439
  %v509 = vpack.c.bf16 %v453, %v449
  %v510 = vpack.c.bf16 %v463, %v459
  %v511 = vpack.c.bf16 %v473, %v469
  %v512 = vpack.c.bf16 %v405, %v401
  %v513 = vpack.c.bf16 %v415, %v411
  %v514 = vpack.c.bf16 %v425, %v421
  %v515 = vpack.c.bf16 %v435, %v431
  %v516 = vpack.c.bf16 %v445, %v441
  %v517 = vpack.c.bf16 %v455, %v451
  %v518 = vpack.c.bf16 %v465, %v461
  %v519 = vpack.c.bf16 %v475, %v471
  %521 = vrot.lane.b32.xlu0 %v504, 64
  %v522 = vpop.permute.xlu0 %521
  %vm523 = vcmask 64512
  %v525 = vsel %vm523, %v504, 0
  %v528 = vsel %vm523, %v522, 0
  %530 = vmatprep.subr.bf16.mxu0 0
  %531 = vmatpush1.bf16.xpose.msra.mxu0 %v528
  %532 = vmatprep.subr.bf16.mxu0 0
  %533 = vmatpush1.bf16.xpose.msra.mxu0 0
  %534 = vmatprep.subr.bf16.mxu0 0
  %535 = vmatpush1.bf16.xpose.msra.mxu0 0
  %536 = vmatprep.subr.bf16.mxu0 0
  %537 = vmatpush1.bf16.xpose.msra.mxu0 0
  %538 = vmatprep.subr.bf16.mxu0 0
  %539 = vmatpush1.bf16.xpose.msra.mxu0 0
  %540 = vmatprep.subr.bf16.mxu0 0
  %541 = vmatpush1.bf16.xpose.msra.mxu0 0
  %542 = vmatprep.subr.bf16.mxu0 0
  %543 = vmatpush1.bf16.xpose.msra.mxu0 0
  %544 = vmatprep.subr.bf16.mxu0 0
  %545 = vmatpush1.bf16.xpose.msra.mxu0 0
  %546 = vmatprep.subr.bf16.mxu0 0
  %547 = vmatpush1.bf16.xpose.msra.mxu0 0
  %548 = vmatprep.subr.bf16.mxu0 0
  %549 = vmatpush1.bf16.xpose.msra.mxu0 0
  %550 = vmatprep.subr.bf16.mxu0 0
  %551 = vmatpush1.bf16.xpose.msra.mxu0 0
  %552 = vmatprep.subr.bf16.mxu0 0
  %553 = vmatpush1.bf16.xpose.msra.mxu0 0
  %554 = vmatprep.subr.bf16.mxu0 0
  %555 = vmatpush1.bf16.xpose.msra.mxu0 0
  %556 = vmatprep.subr.bf16.mxu0 0
  %557 = vmatpush1.bf16.xpose.msra.mxu0 0
  %558 = vmatprep.subr.bf16.mxu0 0
  %559 = vmatpush1.bf16.xpose.msra.mxu0 0
  %560 = vmatprep.subr.bf16.mxu0 0
  %561 = vmatpush1.bf16.xpose.msra.mxu0 0
  %562 = vmatprep.mubr.bf16.mxu0 0
  %563 = vmatmul.mubr.bf16.gmra.mrb[0].mxu0 %v525
  %v564 = vpop.f32.mrb[0].mxu0
  %v565 = vadd.f32 0.0, %v564
  %v566 = vpop.f32.mrb[0].mxu0
  %v567 = vpop.f32.mrb[0].mxu0
  %v568 = vadd.f32 0.0, %v567
  %v569 = vpop.f32.mrb[0].mxu0
  %570 = vdwg.mxu0
  %572 = vrot.lane.b32.xlu0 %v505, 64
  %v573 = vpop.permute.xlu0 %572
  %v575 = vsel %vm523, %v505, 0
  %v578 = vsel %vm523, %v573, 0
  %580 = vmatprep.subr.bf16.mxu0 0
  %581 = vmatpush1.bf16.xpose.msra.mxu0 %v578
  %582 = vmatprep.subr.bf16.mxu0 0
  %583 = vmatpush1.bf16.xpose.msra.mxu0 0
  %584 = vmatprep.subr.bf16.mxu0 0
  %585 = vmatpush1.bf16.xpose.msra.mxu0 0
  %586 = vmatprep.subr.bf16.mxu0 0
  %587 = vmatpush1.bf16.xpose.msra.mxu0 0
  %588 = vmatprep.subr.bf16.mxu0 0
  %589 = vmatpush1.bf16.xpose.msra.mxu0 0
  %590 = vmatprep.subr.bf16.mxu0 0
  %591 = vmatpush1.bf16.xpose.msra.mxu0 0
  %592 = vmatprep.subr.bf16.mxu0 0
  %593 = vmatpush1.bf16.xpose.msra.mxu0 0
  %594 = vmatprep.subr.bf16.mxu0 0
  %595 = vmatpush1.bf16.xpose.msra.mxu0 0
  %596 = vmatprep.subr.bf16.mxu0 0
  %597 = vmatpush1.bf16.xpose.msra.mxu0 0
  %598 = vmatprep.subr.bf16.mxu0 0
  %599 = vmatpush1.bf16.xpose.msra.mxu0 0
  %600 = vmatprep.subr.bf16.mxu0 0
  %601 = vmatpush1.bf16.xpose.msra.mxu0 0
  %602 = vmatprep.subr.bf16.mxu0 0
  %603 = vmatpush1.bf16.xpose.msra.mxu0 0
  %604 = vmatprep.subr.bf16.mxu0 0
  %605 = vmatpush1.bf16.xpose.msra.mxu0 0
  %606 = vmatprep.subr.bf16.mxu0 0
  %607 = vmatpush1.bf16.xpose.msra.mxu0 0
  %608 = vmatprep.subr.bf16.mxu0 0
  %609 = vmatpush1.bf16.xpose.msra.mxu0 0
  %610 = vmatprep.subr.bf16.mxu0 0
  %611 = vmatpush1.bf16.xpose.msra.mxu0 0
  %612 = vmatprep.mubr.bf16.mxu0 0
  %613 = vmatmul.mubr.bf16.gmra.mrb[0].mxu0 %v575
  %v614 = vpop.f32.mrb[0].mxu0
  %v615 = vadd.f32 0.0, %v614
  %v616 = vpop.f32.mrb[0].mxu0
  %v617 = vpop.f32.mrb[0].mxu0
  %v618 = vadd.f32 0.0, %v617
  %v619 = vpop.f32.mrb[0].mxu0
  %620 = vdwg.mxu0
  %622 = vrot.lane.b32.xlu0 %v506, 64
  %v623 = vpop.permute.xlu0 %622
  %v625 = vsel %vm523, %v506, 0
  %v628 = vsel %vm523, %v623, 0
  %630 = vmatprep.subr.bf16.mxu0 0
  %631 = vmatpush1.bf16.xpose.msra.mxu0 %v628
  %632 = vmatprep.subr.bf16.mxu0 0
  %633 = vmatpush1.bf16.xpose.msra.mxu0 0
  %634 = vmatprep.subr.bf16.mxu0 0
  %635 = vmatpush1.bf16.xpose.msra.mxu0 0
  %636 = vmatprep.subr.bf16.mxu0 0
  %637 = vmatpush1.bf16.xpose.msra.mxu0 0
  %638 = vmatprep.subr.bf16.mxu0 0
  %639 = vmatpush1.bf16.xpose.msra.mxu0 0
  %640 = vmatprep.subr.bf16.mxu0 0
  %641 = vmatpush1.bf16.xpose.msra.mxu0 0
  %642 = vmatprep.subr.bf16.mxu0 0
  %643 = vmatpush1.bf16.xpose.msra.mxu0 0
  %644 = vmatprep.subr.bf16.mxu0 0
  %645 = vmatpush1.bf16.xpose.msra.mxu0 0
  %646 = vmatprep.subr.bf16.mxu0 0
  %647 = vmatpush1.bf16.xpose.msra.mxu0 0
  %648 = vmatprep.subr.bf16.mxu0 0
  %649 = vmatpush1.bf16.xpose.msra.mxu0 0
  %650 = vmatprep.subr.bf16.mxu0 0
  %651 = vmatpush1.bf16.xpose.msra.mxu0 0
  %652 = vmatprep.subr.bf16.mxu0 0
  %653 = vmatpush1.bf16.xpose.msra.mxu0 0
  %654 = vmatprep.subr.bf16.mxu0 0
  %655 = vmatpush1.bf16.xpose.msra.mxu0 0
  %656 = vmatprep.subr.bf16.mxu0 0
  %657 = vmatpush1.bf16.xpose.msra.mxu0 0
  %658 = vmatprep.subr.bf16.mxu0 0
  %659 = vmatpush1.bf16.xpose.msra.mxu0 0
  %660 = vmatprep.subr.bf16.mxu0 0
  %661 = vmatpush1.bf16.xpose.msra.mxu0 0
  %662 = vmatprep.mubr.bf16.mxu0 0
  %663 = vmatmul.mubr.bf16.gmra.mrb[0].mxu0 %v625
  %v664 = vpop.f32.mrb[0].mxu0
  %v665 = vadd.f32 0.0, %v664
  %v666 = vpop.f32.mrb[0].mxu0
  %v667 = vpop.f32.mrb[0].mxu0
  %v668 = vadd.f32 0.0, %v667
  %v669 = vpop.f32.mrb[0].mxu0
  %670 = vdwg.mxu0
  %672 = vrot.lane.b32.xlu0 %v507, 64
  %v673 = vpop.permute.xlu0 %672
  %v675 = vsel %vm523, %v507, 0
  %v678 = vsel %vm523, %v673, 0
  %680 = vmatprep.subr.bf16.mxu0 0
  %681 = vmatpush1.bf16.xpose.msra.mxu0 %v678
  %682 = vmatprep.subr.bf16.mxu0 0
  %683 = vmatpush1.bf16.xpose.msra.mxu0 0
  %684 = vmatprep.subr.bf16.mxu0 0
  %685 = vmatpush1.bf16.xpose.msra.mxu0 0
  %686 = vmatprep.subr.bf16.mxu0 0
  %687 = vmatpush1.bf16.xpose.msra.mxu0 0
  %688 = vmatprep.subr.bf16.mxu0 0
  %689 = vmatpush1.bf16.xpose.msra.mxu0 0
  %690 = vmatprep.subr.bf16.mxu0 0
  %691 = vmatpush1.bf16.xpose.msra.mxu0 0
  %692 = vmatprep.subr.bf16.mxu0 0
  %693 = vmatpush1.bf16.xpose.msra.mxu0 0
  %694 = vmatprep.subr.bf16.mxu0 0
  %695 = vmatpush1.bf16.xpose.msra.mxu0 0
  %696 = vmatprep.subr.bf16.mxu0 0
  %697 = vmatpush1.bf16.xpose.msra.mxu0 0
  %698 = vmatprep.subr.bf16.mxu0 0
  %699 = vmatpush1.bf16.xpose.msra.mxu0 0
  %700 = vmatprep.subr.bf16.mxu0 0
  %701 = vmatpush1.bf16.xpose.msra.mxu0 0
  %702 = vmatprep.subr.bf16.mxu0 0
  %703 = vmatpush1.bf16.xpose.msra.mxu0 0
  %704 = vmatprep.subr.bf16.mxu0 0
  %705 = vmatpush1.bf16.xpose.msra.mxu0 0
  %706 = vmatprep.subr.bf16.mxu0 0
  %707 = vmatpush1.bf16.xpose.msra.mxu0 0
  %708 = vmatprep.subr.bf16.mxu0 0
  %709 = vmatpush1.bf16.xpose.msra.mxu0 0
  %710 = vmatprep.subr.bf16.mxu0 0
  %711 = vmatpush1.bf16.xpose.msra.mxu0 0
  %712 = vmatprep.mubr.bf16.mxu0 0
  %713 = vmatmul.mubr.bf16.gmra.mrb[0].mxu0 %v675
  %v714 = vpop.f32.mrb[0].mxu0
  %v715 = vadd.f32 0.0, %v714
  %v716 = vpop.f32.mrb[0].mxu0
  %v717 = vpop.f32.mrb[0].mxu0
  %v718 = vadd.f32 0.0, %v717
  %v719 = vpop.f32.mrb[0].mxu0
  %720 = vdwg.mxu0
  %722 = vrot.lane.b32.xlu0 %v508, 64
  %v723 = vpop.permute.xlu0 %722
  %v725 = vsel %vm523, %v508, 0
  %v728 = vsel %vm523, %v723, 0
  %730 = vmatprep.subr.bf16.mxu0 0
  %731 = vmatpush1.bf16.xpose.msra.mxu0 %v728
  %732 = vmatprep.subr.bf16.mxu0 0
  %733 = vmatpush1.bf16.xpose.msra.mxu0 0
  %734 = vmatprep.subr.bf16.mxu0 0
  %735 = vmatpush1.bf16.xpose.msra.mxu0 0
  %736 = vmatprep.subr.bf16.mxu0 0
  %737 = vmatpush1.bf16.xpose.msra.mxu0 0
  %738 = vmatprep.subr.bf16.mxu0 0
  %739 = vmatpush1.bf16.xpose.msra.mxu0 0
  %740 = vmatprep.subr.bf16.mxu0 0
  %741 = vmatpush1.bf16.xpose.msra.mxu0 0
  %742 = vmatprep.subr.bf16.mxu0 0
  %743 = vmatpush1.bf16.xpose.msra.mxu0 0
  %744 = vmatprep.subr.bf16.mxu0 0
  %745 = vmatpush1.bf16.xpose.msra.mxu0 0
  %746 = vmatprep.subr.bf16.mxu0 0
  %747 = vmatpush1.bf16.xpose.msra.mxu0 0
  %748 = vmatprep.subr.bf16.mxu0 0
  %749 = vmatpush1.bf16.xpose.msra.mxu0 0
  %750 = vmatprep.subr.bf16.mxu0 0
  %751 = vmatpush1.bf16.xpose.msra.mxu0 0
  %752 = vmatprep.subr.bf16.mxu0 0
  %753 = vmatpush1.bf16.xpose.msra.mxu0 0
  %754 = vmatprep.subr.bf16.mxu0 0
  %755 = vmatpush1.bf16.xpose.msra.mxu0 0
  %756 = vmatprep.subr.bf16.mxu0 0
  %757 = vmatpush1.bf16.xpose.msra.mxu0 0
  %758 = vmatprep.subr.bf16.mxu0 0
  %759 = vmatpush1.bf16.xpose.msra.mxu0 0
  %760 = vmatprep.subr.bf16.mxu0 0
  %761 = vmatpush1.bf16.xpose.msra.mxu0 0
  %762 = vmatprep.mubr.bf16.mxu0 0
  %763 = vmatmul.mubr.bf16.gmra.mrb[0].mxu0 %v725
  %v764 = vpop.f32.mrb[0].mxu0
  %v765 = vadd.f32 0.0, %v764
  %v766 = vpop.f32.mrb[0].mxu0
  %v767 = vpop.f32.mrb[0].mxu0
  %v768 = vadd.f32 0.0, %v767
  %v769 = vpop.f32.mrb[0].mxu0
  %770 = vdwg.mxu0
  %772 = vrot.lane.b32.xlu0 %v509, 64
  %v773 = vpop.permute.xlu0 %772
  %v775 = vsel %vm523, %v509, 0
  %v778 = vsel %vm523, %v773, 0
  %780 = vmatprep.subr.bf16.mxu0 0
  %781 = vmatpush1.bf16.xpose.msra.mxu0 %v778
  %782 = vmatprep.subr.bf16.mxu0 0
  %783 = vmatpush1.bf16.xpose.msra.mxu0 0
  %784 = vmatprep.subr.bf16.mxu0 0
  %785 = vmatpush1.bf16.xpose.msra.mxu0 0
  %786 = vmatprep.subr.bf16.mxu0 0
  %787 = vmatpush1.bf16.xpose.msra.mxu0 0
  %788 = vmatprep.subr.bf16.mxu0 0
  %789 = vmatpush1.bf16.xpose.msra.mxu0 0
  %790 = vmatprep.subr.bf16.mxu0 0
  %791 = vmatpush1.bf16.xpose.msra.mxu0 0
  %792 = vmatprep.subr.bf16.mxu0 0
  %793 = vmatpush1.bf16.xpose.msra.mxu0 0
  %794 = vmatprep.subr.bf16.mxu0 0
  %795 = vmatpush1.bf16.xpose.msra.mxu0 0
  %796 = vmatprep.subr.bf16.mxu0 0
  %797 = vmatpush1.bf16.xpose.msra.mxu0 0
  %798 = vmatprep.subr.bf16.mxu0 0
  %799 = vmatpush1.bf16.xpose.msra.mxu0 0
  %800 = vmatprep.subr.bf16.mxu0 0
  %801 = vmatpush1.bf16.xpose.msra.mxu0 0
  %802 = vmatprep.subr.bf16.mxu0 0
  %803 = vmatpush1.bf16.xpose.msra.mxu0 0
  %804 = vmatprep.subr.bf16.mxu0 0
  %805 = vmatpush1.bf16.xpose.msra.mxu0 0
  %806 = vmatprep.subr.bf16.mxu0 0
  %807 = vmatpush1.bf16.xpose.msra.mxu0 0
  %808 = vmatprep.subr.bf16.mxu0 0
  %809 = vmatpush1.bf16.xpose.msra.mxu0 0
  %810 = vmatprep.subr.bf16.mxu0 0
  %811 = vmatpush1.bf16.xpose.msra.mxu0 0
  %812 = vmatprep.mubr.bf16.mxu0 0
  %813 = vmatmul.mubr.bf16.gmra.mrb[0].mxu0 %v775
  %v814 = vpop.f32.mrb[0].mxu0
  %v815 = vadd.f32 0.0, %v814
  %v816 = vpop.f32.mrb[0].mxu0
  %v817 = vpop.f32.mrb[0].mxu0
  %v818 = vadd.f32 0.0, %v817
  %v819 = vpop.f32.mrb[0].mxu0
  %820 = vdwg.mxu0
  %822 = vrot.lane.b32.xlu0 %v510, 64
  %v823 = vpop.permute.xlu0 %822
  %v825 = vsel %vm523, %v510, 0
  %v828 = vsel %vm523, %v823, 0
  %830 = vmatprep.subr.bf16.mxu0 0
  %831 = vmatpush1.bf16.xpose.msra.mxu0 %v828
  %832 = vmatprep.subr.bf16.mxu0 0
  %833 = vmatpush1.bf16.xpose.msra.mxu0 0
  %834 = vmatprep.subr.bf16.mxu0 0
  %835 = vmatpush1.bf16.xpose.msra.mxu0 0
  %836 = vmatprep.subr.bf16.mxu0 0
  %837 = vmatpush1.bf16.xpose.msra.mxu0 0
  %838 = vmatprep.subr.bf16.mxu0 0
  %839 = vmatpush1.bf16.xpose.msra.mxu0 0
  %840 = vmatprep.subr.bf16.mxu0 0
  %841 = vmatpush1.bf16.xpose.msra.mxu0 0
  %842 = vmatprep.subr.bf16.mxu0 0
  %843 = vmatpush1.bf16.xpose.msra.mxu0 0
  %844 = vmatprep.subr.bf16.mxu0 0
  %845 = vmatpush1.bf16.xpose.msra.mxu0 0
  %846 = vmatprep.subr.bf16.mxu0 0
  %847 = vmatpush1.bf16.xpose.msra.mxu0 0
  %848 = vmatprep.subr.bf16.mxu0 0
  %849 = vmatpush1.bf16.xpose.msra.mxu0 0
  %850 = vmatprep.subr.bf16.mxu0 0
  %851 = vmatpush1.bf16.xpose.msra.mxu0 0
  %852 = vmatprep.subr.bf16.mxu0 0
  %853 = vmatpush1.bf16.xpose.msra.mxu0 0
  %854 = vmatprep.subr.bf16.mxu0 0
  %855 = vmatpush1.bf16.xpose.msra.mxu0 0
  %856 = vmatprep.subr.bf16.mxu0 0
  %857 = vmatpush1.bf16.xpose.msra.mxu0 0
  %858 = vmatprep.subr.bf16.mxu0 0
  %859 = vmatpush1.bf16.xpose.msra.mxu0 0
  %860 = vmatprep.subr.bf16.mxu0 0
  %861 = vmatpush1.bf16.xpose.msra.mxu0 0
  %862 = vmatprep.mubr.bf16.mxu0 0
  %863 = vmatmul.mubr.bf16.gmra.mrb[0].mxu0 %v825
  %v864 = vpop.f32.mrb[0].mxu0
  %v865 = vadd.f32 0.0, %v864
  %v866 = vpop.f32.mrb[0].mxu0
  %v867 = vpop.f32.mrb[0].mxu0
  %v868 = vadd.f32 0.0, %v867
  %v869 = vpop.f32.mrb[0].mxu0
  %870 = vdwg.mxu0
  %872 = vrot.lane.b32.xlu0 %v511, 64
  %v873 = vpop.permute.xlu0 %872
  %v875 = vsel %vm523, %v511, 0
  %v878 = vsel %vm523, %v873, 0
  %880 = vmatprep.subr.bf16.mxu0 0
  %881 = vmatpush1.bf16.xpose.msra.mxu0 %v878
  %882 = vmatprep.subr.bf16.mxu0 0
  %883 = vmatpush1.bf16.xpose.msra.mxu0 0
  %884 = vmatprep.subr.bf16.mxu0 0
  %885 = vmatpush1.bf16.xpose.msra.mxu0 0
  %886 = vmatprep.subr.bf16.mxu0 0
  %887 = vmatpush1.bf16.xpose.msra.mxu0 0
  %888 = vmatprep.subr.bf16.mxu0 0
  %889 = vmatpush1.bf16.xpose.msra.mxu0 0
  %890 = vmatprep.subr.bf16.mxu0 0
  %891 = vmatpush1.bf16.xpose.msra.mxu0 0
  %892 = vmatprep.subr.bf16.mxu0 0
  %893 = vmatpush1.bf16.xpose.msra.mxu0 0
  %894 = vmatprep.subr.bf16.mxu0 0
  %895 = vmatpush1.bf16.xpose.msra.mxu0 0
  %896 = vmatprep.subr.bf16.mxu0 0
  %897 = vmatpush1.bf16.xpose.msra.mxu0 0
  %898 = vmatprep.subr.bf16.mxu0 0
  %899 = vmatpush1.bf16.xpose.msra.mxu0 0
  %900 = vmatprep.subr.bf16.mxu0 0
  %901 = vmatpush1.bf16.xpose.msra.mxu0 0
  %902 = vmatprep.subr.bf16.mxu0 0
  %903 = vmatpush1.bf16.xpose.msra.mxu0 0
  %904 = vmatprep.subr.bf16.mxu0 0
  %905 = vmatpush1.bf16.xpose.msra.mxu0 0
  %906 = vmatprep.subr.bf16.mxu0 0
  %907 = vmatpush1.bf16.xpose.msra.mxu0 0
  %908 = vmatprep.subr.bf16.mxu0 0
  %909 = vmatpush1.bf16.xpose.msra.mxu0 0
  %910 = vmatprep.subr.bf16.mxu0 0
  %911 = vmatpush1.bf16.xpose.msra.mxu0 0
  %912 = vmatprep.mubr.bf16.mxu0 0
  %913 = vmatmul.mubr.bf16.gmra.mrb[0].mxu0 %v875
  %v914 = vpop.f32.mrb[0].mxu0
  %v915 = vadd.f32 0.0, %v914
  %v916 = vpop.f32.mrb[0].mxu0
  %v917 = vpop.f32.mrb[0].mxu0
  %v918 = vadd.f32 0.0, %v917
  %v919 = vpop.f32.mrb[0].mxu0
  %920 = vdwg.mxu0
  %921 = vrot.lane.b32.xlu0 %v504, 120
  %v922 = vpop.permute.xlu0 %921
  %923 = vrot.lane.b32.xlu0 %v504, 56
  %v924 = vpop.permute.xlu0 %923
  %v926 = vsel %vm523, %v922, 0
  %v929 = vsel %vm523, %v924, 0
  %931 = vmatprep.subr.bf16.mxu0 0
  %932 = vmatpush1.bf16.xpose.msra.mxu0 %v929
  %933 = vmatprep.subr.bf16.mxu0 0
  %934 = vmatpush1.bf16.xpose.msra.mxu0 0
  %935 = vmatprep.subr.bf16.mxu0 0
  %936 = vmatpush1.bf16.xpose.msra.mxu0 0
  %937 = vmatprep.subr.bf16.mxu0 0
  %938 = vmatpush1.bf16.xpose.msra.mxu0 0
  %939 = vmatprep.subr.bf16.mxu0 0
  %940 = vmatpush1.bf16.xpose.msra.mxu0 0
  %941 = vmatprep.subr.bf16.mxu0 0
  %942 = vmatpush1.bf16.xpose.msra.mxu0 0
  %943 = vmatprep.subr.bf16.mxu0 0
  %944 = vmatpush1.bf16.xpose.msra.mxu0 0
  %945 = vmatprep.subr.bf16.mxu0 0
  %946 = vmatpush1.bf16.xpose.msra.mxu0 0
  %947 = vmatprep.subr.bf16.mxu0 0
  %948 = vmatpush1.bf16.xpose.msra.mxu0 0
  %949 = vmatprep.subr.bf16.mxu0 0
  %950 = vmatpush1.bf16.xpose.msra.mxu0 0
  %951 = vmatprep.subr.bf16.mxu0 0
  %952 = vmatpush1.bf16.xpose.msra.mxu0 0
  %953 = vmatprep.subr.bf16.mxu0 0
  %954 = vmatpush1.bf16.xpose.msra.mxu0 0
  %955 = vmatprep.subr.bf16.mxu0 0
  %956 = vmatpush1.bf16.xpose.msra.mxu0 0
  %957 = vmatprep.subr.bf16.mxu0 0
  %958 = vmatpush1.bf16.xpose.msra.mxu0 0
  %959 = vmatprep.subr.bf16.mxu0 0
  %960 = vmatpush1.bf16.xpose.msra.mxu0 0
  %961 = vmatprep.subr.bf16.mxu0 0
  %962 = vmatpush1.bf16.xpose.msra.mxu0 0
  %963 = vmatprep.mubr.bf16.mxu0 0
  %964 = vmatmul.mubr.bf16.gmra.mrb[0].mxu0 %v926
  %v965 = vpop.f32.mrb[0].mxu0
  %v966 = vadd.f32 0.0, %v965
  %v967 = vpop.f32.mrb[0].mxu0
  %v968 = vpop.f32.mrb[0].mxu0
  %v969 = vadd.f32 0.0, %v968
  %v970 = vpop.f32.mrb[0].mxu0
  %971 = vdwg.mxu0
  %972 = vrot.lane.b32.xlu0 %v505, 120
  %v973 = vpop.permute.xlu0 %972
  %974 = vrot.lane.b32.xlu0 %v505, 56
  %v975 = vpop.permute.xlu0 %974
  %v977 = vsel %vm523, %v973, 0
  %v980 = vsel %vm523, %v975, 0
  %982 = vmatprep.subr.bf16.mxu0 0
  %983 = vmatpush1.bf16.xpose.msra.mxu0 %v980
  %984 = vmatprep.subr.bf16.mxu0 0
  %985 = vmatpush1.bf16.xpose.msra.mxu0 0
  %986 = vmatprep.subr.bf16.mxu0 0
  %987 = vmatpush1.bf16.xpose.msra.mxu0 0
  %988 = vmatprep.subr.bf16.mxu0 0
  %989 = vmatpush1.bf16.xpose.msra.mxu0 0
  %990 = vmatprep.subr.bf16.mxu0 0
  %991 = vmatpush1.bf16.xpose.msra.mxu0 0
  %992 = vmatprep.subr.bf16.mxu0 0
  %993 = vmatpush1.bf16.xpose.msra.mxu0 0
  %994 = vmatprep.subr.bf16.mxu0 0
  %995 = vmatpush1.bf16.xpose.msra.mxu0 0
  %996 = vmatprep.subr.bf16.mxu0 0
  %997 = vmatpush1.bf16.xpose.msra.mxu0 0
  %998 = vmatprep.subr.bf16.mxu0 0
  %999 = vmatpush1.bf16.xpose.msra.mxu0 0
  %1000 = vmatprep.subr.bf16.mxu0 0
  %1001 = vmatpush1.bf16.xpose.msra.mxu0 0
  %1002 = vmatprep.subr.bf16.mxu0 0
  %1003 = vmatpush1.bf16.xpose.msra.mxu0 0
  %1004 = vmatprep.subr.bf16.mxu0 0
  %1005 = vmatpush1.bf16.xpose.msra.mxu0 0
  %1006 = vmatprep.subr.bf16.mxu0 0
  %1007 = vmatpush1.bf16.xpose.msra.mxu0 0
  %1008 = vmatprep.subr.bf16.mxu0 0
  %1009 = vmatpush1.bf16.xpose.msra.mxu0 0
  %1010 = vmatprep.subr.bf16.mxu0 0
  %1011 = vmatpush1.bf16.xpose.msra.mxu0 0
  %1012 = vmatprep.subr.bf16.mxu0 0
  %1013 = vmatpush1.bf16.xpose.msra.mxu0 0
  %1014 = vmatprep.mubr.bf16.mxu0 0
  %1015 = vmatmul.mubr.bf16.gmra.mrb[0].mxu0 %v977
  %v1016 = vpop.f32.mrb[0].mxu0
  %v1017 = vadd.f32 0.0, %v1016
  %v1018 = vpop.f32.mrb[0].mxu0
  %v1019 = vpop.f32.mrb[0].mxu0
  %v1020 = vadd.f32 0.0, %v1019
  %v1021 = vpop.f32.mrb[0].mxu0
  %1022 = vdwg.mxu0
  %1023 = vrot.lane.b32.xlu0 %v506, 120
  %v1024 = vpop.permute.xlu0 %1023
  %1025 = vrot.lane.b32.xlu0 %v506, 56
  %v1026 = vpop.permute.xlu0 %1025
  %v1028 = vsel %vm523, %v1024, 0
  %v1031 = vsel %vm523, %v1026, 0
  %1033 = vmatprep.subr.bf16.mxu0 0
  %1034 = vmatpush1.bf16.xpose.msra.mxu0 %v1031
  %1035 = vmatprep.subr.bf16.mxu0 0
  %1036 = vmatpush1.bf16.xpose.msra.mxu0 0
  %1037 = vmatprep.subr.bf16.mxu0 0
  %1038 = vmatpush1.bf16.xpose.msra.mxu0 0
  %1039 = vmatprep.subr.bf16.mxu0 0
  %1040 = vmatpush1.bf16.xpose.msra.mxu0 0
  %1041 = vmatprep.subr.bf16.mxu0 0
  %1042 = vmatpush1.bf16.xpose.msra.mxu0 0
  %1043 = vmatprep.subr.bf16.mxu0 0
  %1044 = vmatpush1.bf16.xpose.msra.mxu0 0
  %1045 = vmatprep.subr.bf16.mxu0 0
  %1046 = vmatpush1.bf16.xpose.msra.mxu0 0
  %1047 = vmatprep.subr.bf16.mxu0 0
  %1048 = vmatpush1.bf16.xpose.msra.mxu0 0
  %1049 = vmatprep.subr.bf16.mxu0 0
  %1050 = vmatpush1.bf16.xpose.msra.mxu0 0
  %1051 = vmatprep.subr.bf16.mxu0 0
  %1052 = vmatpush1.bf16.xpose.msra.mxu0 0
  %1053 = vmatprep.subr.bf16.mxu0 0
  %1054 = vmatpush1.bf16.xpose.msra.mxu0 0
  %1055 = vmatprep.subr.bf16.mxu0 0
  %1056 = vmatpush1.bf16.xpose.msra.mxu0 0
  %1057 = vmatprep.subr.bf16.mxu0 0
  %1058 = vmatpush1.bf16.xpose.msra.mxu0 0
  %1059 = vmatprep.subr.bf16.mxu0 0
  %1060 = vmatpush1.bf16.xpose.msra.mxu0 0
  %1061 = vmatprep.subr.bf16.mxu0 0
  %1062 = vmatpush1.bf16.xpose.msra.mxu0 0
  %1063 = vmatprep.subr.bf16.mxu0 0
  %1064 = vmatpush1.bf16.xpose.msra.mxu0 0
  %1065 = vmatprep.mubr.bf16.mxu0 0
  %1066 = vmatmul.mubr.bf16.gmra.mrb[0].mxu0 %v1028
  %v1067 = vpop.f32.mrb[0].mxu0
  %v1068 = vadd.f32 0.0, %v1067
  %v1069 = vpop.f32.mrb[0].mxu0
  %v1070 = vpop.f32.mrb[0].mxu0
  %v1071 = vadd.f32 0.0, %v1070
  %v1072 = vpop.f32.mrb[0].mxu0
  %1073 = vdwg.mxu0
  %1074 = vrot.lane.b32.xlu0 %v507, 120
  %v1075 = vpop.permute.xlu0 %1074
  %1076 = vrot.lane.b32.xlu0 %v507, 56
  %v1077 = vpop.permute.xlu0 %1076
  %v1079 = vsel %vm523, %v1075, 0
  %v1082 = vsel %vm523, %v1077, 0
  %1084 = vmatprep.subr.bf16.mxu0 0
  %1085 = vmatpush1.bf16.xpose.msra.mxu0 %v1082
  %1086 = vmatprep.subr.bf16.mxu0 0
  %1087 = vmatpush1.bf16.xpose.msra.mxu0 0
  %1088 = vmatprep.subr.bf16.mxu0 0
  %1089 = vmatpush1.bf16.xpose.msra.mxu0 0
  %1090 = vmatprep.subr.bf16.mxu0 0
  %1091 = vmatpush1.bf16.xpose.msra.mxu0 0
  %1092 = vmatprep.subr.bf16.mxu0 0
  %1093 = vmatpush1.bf16.xpose.msra.mxu0 0
  %1094 = vmatprep.subr.bf16.mxu0 0
  %1095 = vmatpush1.bf16.xpose.msra.mxu0 0
  %1096 = vmatprep.subr.bf16.mxu0 0
  %1097 = vmatpush1.bf16.xpose.msra.mxu0 0
  %1098 = vmatprep.subr.bf16.mxu0 0
  %1099 = vmatpush1.bf16.xpose.msra.mxu0 0
  %1100 = vmatprep.subr.bf16.mxu0 0
  %1101 = vmatpush1.bf16.xpose.msra.mxu0 0
  %1102 = vmatprep.subr.bf16.mxu0 0
  %1103 = vmatpush1.bf16.xpose.msra.mxu0 0
  %1104 = vmatprep.subr.bf16.mxu0 0
  %1105 = vmatpush1.bf16.xpose.msra.mxu0 0
  %1106 = vmatprep.subr.bf16.mxu0 0
  %1107 = vmatpush1.bf16.xpose.msra.mxu0 0
  %1108 = vmatprep.subr.bf16.mxu0 0
  %1109 = vmatpush1.bf16.xpose.msra.mxu0 0
  %1110 = vmatprep.subr.bf16.mxu0 0
  %1111 = vmatpush1.bf16.xpose.msra.mxu0 0
  %1112 = vmatprep.subr.bf16.mxu0 0
  %1113 = vmatpush1.bf16.xpose.msra.mxu0 0
  %1114 = vmatprep.subr.bf16.mxu0 0
  %1115 = vmatpush1.bf16.xpose.msra.mxu0 0
  %1116 = vmatprep.mubr.bf16.mxu0 0
  %1117 = vmatmul.mubr.bf16.gmra.mrb[0].mxu0 %v1079
  %v1118 = vpop.f32.mrb[0].mxu0
  %v1119 = vadd.f32 0.0, %v1118
  %v1120 = vpop.f32.mrb[0].mxu0
  %v1121 = vpop.f32.mrb[0].mxu0
  %v1122 = vadd.f32 0.0, %v1121
  %v1123 = vpop.f32.mrb[0].mxu0
  %1124 = vdwg.mxu0
  %1125 = vrot.lane.b32.xlu0 %v508, 120
  %v1126 = vpop.permute.xlu0 %1125
  %1127 = vrot.lane.b32.xlu0 %v508, 56
  %v1128 = vpop.permute.xlu0 %1127
  %v1130 = vsel %vm523, %v1126, 0
  %v1133 = vsel %vm523, %v1128, 0
  %1135 = vmatprep.subr.bf16.mxu0 0
  %1136 = vmatpush1.bf16.xpose.msra.mxu0 %v1133
  %1137 = vmatprep.subr.bf16.mxu0 0
  %1138 = vmatpush1.bf16.xpose.msra.mxu0 0
  %1139 = vmatprep.subr.bf16.mxu0 0
  %1140 = vmatpush1.bf16.xpose.msra.mxu0 0
  %1141 = vmatprep.subr.bf16.mxu0 0
  %1142 = vmatpush1.bf16.xpose.msra.mxu0 0
  %1143 = vmatprep.subr.bf16.mxu0 0
  %1144 = vmatpush1.bf16.xpose.msra.mxu0 0
  %1145 = vmatprep.subr.bf16.mxu0 0
  %1146 = vmatpush1.bf16.xpose.msra.mxu0 0
  %1147 = vmatprep.subr.bf16.mxu0 0
  %1148 = vmatpush1.bf16.xpose.msra.mxu0 0
  %1149 = vmatprep.subr.bf16.mxu0 0
  %1150 = vmatpush1.bf16.xpose.msra.mxu0 0
  %1151 = vmatprep.subr.bf16.mxu0 0
  %1152 = vmatpush1.bf16.xpose.msra.mxu0 0
  %1153 = vmatprep.subr.bf16.mxu0 0
  %1154 = vmatpush1.bf16.xpose.msra.mxu0 0
  %1155 = vmatprep.subr.bf16.mxu0 0
  %1156 = vmatpush1.bf16.xpose.msra.mxu0 0
  %1157 = vmatprep.subr.bf16.mxu0 0
  %1158 = vmatpush1.bf16.xpose.msra.mxu0 0
  %1159 = vmatprep.subr.bf16.mxu0 0
  %1160 = vmatpush1.bf16.xpose.msra.mxu0 0
  %1161 = vmatprep.subr.bf16.mxu0 0
  %1162 = vmatpush1.bf16.xpose.msra.mxu0 0
  %1163 = vmatprep.subr.bf16.mxu0 0
  %1164 = vmatpush1.bf16.xpose.msra.mxu0 0
  %1165 = vmatprep.subr.bf16.mxu0 0
  %1166 = vmatpush1.bf16.xpose.msra.mxu0 0
  %1167 = vmatprep.mubr.bf16.mxu0 0
  %1168 = vmatmul.mubr.bf16.gmra.mrb[0].mxu0 %v1130
  %v1169 = vpop.f32.mrb[0].mxu0
  %v1170 = vadd.f32 0.0, %v1169
  %v1171 = vpop.f32.mrb[0].mxu0
  %v1172 = vpop.f32.mrb[0].mxu0
  %v1173 = vadd.f32 0.0, %v1172
  %v1174 = vpop.f32.mrb[0].mxu0
  %1175 = vdwg.mxu0
  %1176 = vrot.lane.b32.xlu0 %v509, 120
  %v1177 = vpop.permute.xlu0 %1176
  %1178 = vrot.lane.b32.xlu0 %v509, 56
  %v1179 = vpop.permute.xlu0 %1178
  %v1181 = vsel %vm523, %v1177, 0
  %v1184 = vsel %vm523, %v1179, 0
  %1186 = vmatprep.subr.bf16.mxu0 0
  %1187 = vmatpush1.bf16.xpose.msra.mxu0 %v1184
  %1188 = vmatprep.subr.bf16.mxu0 0
  %1189 = vmatpush1.bf16.xpose.msra.mxu0 0
  %1190 = vmatprep.subr.bf16.mxu0 0
  %1191 = vmatpush1.bf16.xpose.msra.mxu0 0
  %1192 = vmatprep.subr.bf16.mxu0 0
  %1193 = vmatpush1.bf16.xpose.msra.mxu0 0
  %1194 = vmatprep.subr.bf16.mxu0 0
  %1195 = vmatpush1.bf16.xpose.msra.mxu0 0
  %1196 = vmatprep.subr.bf16.mxu0 0
  %1197 = vmatpush1.bf16.xpose.msra.mxu0 0
  %1198 = vmatprep.subr.bf16.mxu0 0
  %1199 = vmatpush1.bf16.xpose.msra.mxu0 0
  %1200 = vmatprep.subr.bf16.mxu0 0
  %1201 = vmatpush1.bf16.xpose.msra.mxu0 0
  %1202 = vmatprep.subr.bf16.mxu0 0
  %1203 = vmatpush1.bf16.xpose.msra.mxu0 0
  %1204 = vmatprep.subr.bf16.mxu0 0
  %1205 = vmatpush1.bf16.xpose.msra.mxu0 0
  %1206 = vmatprep.subr.bf16.mxu0 0
  %1207 = vmatpush1.bf16.xpose.msra.mxu0 0
  %1208 = vmatprep.subr.bf16.mxu0 0
  %1209 = vmatpush1.bf16.xpose.msra.mxu0 0
  %1210 = vmatprep.subr.bf16.mxu0 0
  %1211 = vmatpush1.bf16.xpose.msra.mxu0 0
  %1212 = vmatprep.subr.bf16.mxu0 0
  %1213 = vmatpush1.bf16.xpose.msra.mxu0 0
  %1214 = vmatprep.subr.bf16.mxu0 0
  %1215 = vmatpush1.bf16.xpose.msra.mxu0 0
  %1216 = vmatprep.subr.bf16.mxu0 0
  %1217 = vmatpush1.bf16.xpose.msra.mxu0 0
  %1218 = vmatprep.mubr.bf16.mxu0 0
  %1219 = vmatmul.mubr.bf16.gmra.mrb[0].mxu0 %v1181
  %v1220 = vpop.f32.mrb[0].mxu0
  %v1221 = vadd.f32 0.0, %v1220
  %v1222 = vpop.f32.mrb[0].mxu0
  %v1223 = vpop.f32.mrb[0].mxu0
  %v1224 = vadd.f32 0.0, %v1223
  %v1225 = vpop.f32.mrb[0].mxu0
  %1226 = vdwg.mxu0
  %1227 = vrot.lane.b32.xlu0 %v510, 120
  %v1228 = vpop.permute.xlu0 %1227
  %1229 = vrot.lane.b32.xlu0 %v510, 56
  %v1230 = vpop.permute.xlu0 %1229
  %v1232 = vsel %vm523, %v1228, 0
  %v1235 = vsel %vm523, %v1230, 0
  %1237 = vmatprep.subr.bf16.mxu0 0
  %1238 = vmatpush1.bf16.xpose.msra.mxu0 %v1235
  %1239 = vmatprep.subr.bf16.mxu0 0
  %1240 = vmatpush1.bf16.xpose.msra.mxu0 0
  %1241 = vmatprep.subr.bf16.mxu0 0
  %1242 = vmatpush1.bf16.xpose.msra.mxu0 0
  %1243 = vmatprep.subr.bf16.mxu0 0
  %1244 = vmatpush1.bf16.xpose.msra.mxu0 0
  %1245 = vmatprep.subr.bf16.mxu0 0
  %1246 = vmatpush1.bf16.xpose.msra.mxu0 0
  %1247 = vmatprep.subr.bf16.mxu0 0
  %1248 = vmatpush1.bf16.xpose.msra.mxu0 0
  %1249 = vmatprep.subr.bf16.mxu0 0
  %1250 = vmatpush1.bf16.xpose.msra.mxu0 0
  %1251 = vmatprep.subr.bf16.mxu0 0
  %1252 = vmatpush1.bf16.xpose.msra.mxu0 0
  %1253 = vmatprep.subr.bf16.mxu0 0
  %1254 = vmatpush1.bf16.xpose.msra.mxu0 0
  %1255 = vmatprep.subr.bf16.mxu0 0
  %1256 = vmatpush1.bf16.xpose.msra.mxu0 0
  %1257 = vmatprep.subr.bf16.mxu0 0
  %1258 = vmatpush1.bf16.xpose.msra.mxu0 0
  %1259 = vmatprep.subr.bf16.mxu0 0
  %1260 = vmatpush1.bf16.xpose.msra.mxu0 0
  %1261 = vmatprep.subr.bf16.mxu0 0
  %1262 = vmatpush1.bf16.xpose.msra.mxu0 0
  %1263 = vmatprep.subr.bf16.mxu0 0
  %1264 = vmatpush1.bf16.xpose.msra.mxu0 0
  %1265 = vmatprep.subr.bf16.mxu0 0
  %1266 = vmatpush1.bf16.xpose.msra.mxu0 0
  %1267 = vmatprep.subr.bf16.mxu0 0
  %1268 = vmatpush1.bf16.xpose.msra.mxu0 0
  %1269 = vmatprep.mubr.bf16.mxu0 0
  %1270 = vmatmul.mubr.bf16.gmra.mrb[0].mxu0 %v1232
  %v1271 = vpop.f32.mrb[0].mxu0
  %v1272 = vadd.f32 0.0, %v1271
  %v1273 = vpop.f32.mrb[0].mxu0
  %v1274 = vpop.f32.mrb[0].mxu0
  %v1275 = vadd.f32 0.0, %v1274
  %v1276 = vpop.f32.mrb[0].mxu0
  %1277 = vdwg.mxu0
  %1278 = vrot.lane.b32.xlu0 %v511, 120
  %v1279 = vpop.permute.xlu0 %1278
  %1280 = vrot.lane.b32.xlu0 %v511, 56
  %v1281 = vpop.permute.xlu0 %1280
  %v1283 = vsel %vm523, %v1279, 0
  %v1286 = vsel %vm523, %v1281, 0
  %1288 = vmatprep.subr.bf16.mxu0 0
  %1289 = vmatpush1.bf16.xpose.msra.mxu0 %v1286
  %1290 = vmatprep.subr.bf16.mxu0 0
  %1291 = vmatpush1.bf16.xpose.msra.mxu0 0
  %1292 = vmatprep.subr.bf16.mxu0 0
  %1293 = vmatpush1.bf16.xpose.msra.mxu0 0
  %1294 = vmatprep.subr.bf16.mxu0 0
  %1295 = vmatpush1.bf16.xpose.msra.mxu0 0
  %1296 = vmatprep.subr.bf16.mxu0 0
  %1297 = vmatpush1.bf16.xpose.msra.mxu0 0
  %1298 = vmatprep.subr.bf16.mxu0 0
  %1299 = vmatpush1.bf16.xpose.msra.mxu0 0
  %1300 = vmatprep.subr.bf16.mxu0 0
  %1301 = vmatpush1.bf16.xpose.msra.mxu0 0
  %1302 = vmatprep.subr.bf16.mxu0 0
  %1303 = vmatpush1.bf16.xpose.msra.mxu0 0
  %1304 = vmatprep.subr.bf16.mxu0 0
  %1305 = vmatpush1.bf16.xpose.msra.mxu0 0
  %1306 = vmatprep.subr.bf16.mxu0 0
  %1307 = vmatpush1.bf16.xpose.msra.mxu0 0
  %1308 = vmatprep.subr.bf16.mxu0 0
  %1309 = vmatpush1.bf16.xpose.msra.mxu0 0
  %1310 = vmatprep.subr.bf16.mxu0 0
  %1311 = vmatpush1.bf16.xpose.msra.mxu0 0
  %1312 = vmatprep.subr.bf16.mxu0 0
  %1313 = vmatpush1.bf16.xpose.msra.mxu0 0
  %1314 = vmatprep.subr.bf16.mxu0 0
  %1315 = vmatpush1.bf16.xpose.msra.mxu0 0
  %1316 = vmatprep.subr.bf16.mxu0 0
  %1317 = vmatpush1.bf16.xpose.msra.mxu0 0
  %1318 = vmatprep.subr.bf16.mxu0 0
  %1319 = vmatpush1.bf16.xpose.msra.mxu0 0
  %1320 = vmatprep.mubr.bf16.mxu0 0
  %1321 = vmatmul.mubr.bf16.gmra.mrb[0].mxu0 %v1283
  %v1322 = vpop.f32.mrb[0].mxu0
  %v1323 = vadd.f32 0.0, %v1322
  %v1324 = vpop.f32.mrb[0].mxu0
  %v1325 = vpop.f32.mrb[0].mxu0
  %v1326 = vadd.f32 0.0, %v1325
  %v1327 = vpop.f32.mrb[0].mxu0
  %1328 = vdwg.mxu0
  %vm1329 = vcmask 130048
  %v1330 = vsel %vm1329, %v565, -inf
  %1331 = vmax.xlane.f32.xlu0 %v1330
  %v1332 = vpop.xlane.xlu0 %1331
  %v1333 = vsel %vm1329, %v568, -inf
  %1334 = vmax.xlane.f32.xlu0 %v1333
  %v1335 = vpop.xlane.xlu0 %1334
  %v1336 = vsel %vm1329, %v615, -inf
  %1337 = vmax.xlane.f32.xlu0 %v1336
  %v1338 = vpop.xlane.xlu0 %1337
  %v1339 = vsel %vm1329, %v618, -inf
  %1340 = vmax.xlane.f32.xlu0 %v1339
  %v1341 = vpop.xlane.xlu0 %1340
  %v1342 = vsel %vm1329, %v665, -inf
  %1343 = vmax.xlane.f32.xlu0 %v1342
  %v1344 = vpop.xlane.xlu0 %1343
  %v1345 = vsel %vm1329, %v668, -inf
  %1346 = vmax.xlane.f32.xlu0 %v1345
  %v1347 = vpop.xlane.xlu0 %1346
  %v1348 = vsel %vm1329, %v715, -inf
  %1349 = vmax.xlane.f32.xlu0 %v1348
  %v1350 = vpop.xlane.xlu0 %1349
  %v1351 = vsel %vm1329, %v718, -inf
  %1352 = vmax.xlane.f32.xlu0 %v1351
  %v1353 = vpop.xlane.xlu0 %1352
  %v1354 = vsel %vm1329, %v765, -inf
  %1355 = vmax.xlane.f32.xlu0 %v1354
  %v1356 = vpop.xlane.xlu0 %1355
  %v1357 = vsel %vm1329, %v768, -inf
  %1358 = vmax.xlane.f32.xlu0 %v1357
  %v1359 = vpop.xlane.xlu0 %1358
  %v1360 = vsel %vm1329, %v815, -inf
  %1361 = vmax.xlane.f32.xlu0 %v1360
  %v1362 = vpop.xlane.xlu0 %1361
  %v1363 = vsel %vm1329, %v818, -inf
  %1364 = vmax.xlane.f32.xlu0 %v1363
  %v1365 = vpop.xlane.xlu0 %1364
  %v1366 = vsel %vm1329, %v865, -inf
  %1367 = vmax.xlane.f32.xlu0 %v1366
  %v1368 = vpop.xlane.xlu0 %1367
  %v1369 = vsel %vm1329, %v868, -inf
  %1370 = vmax.xlane.f32.xlu0 %v1369
  %v1371 = vpop.xlane.xlu0 %1370
  %v1372 = vsel %vm1329, %v915, -inf
  %1373 = vmax.xlane.f32.xlu0 %v1372
  %v1374 = vpop.xlane.xlu0 %1373
  %v1375 = vsel %vm1329, %v918, -inf
  %1376 = vmax.xlane.f32.xlu0 %v1375
  %v1377 = vpop.xlane.xlu0 %1376
  %v1378 = vsub.f32 %v565, %v1332
  %v1379 = vsub.f32 %v568, %v1335
  %v1380 = vsub.f32 %v615, %v1338
  %v1381 = vsub.f32 %v618, %v1341
  %v1382 = vsub.f32 %v665, %v1344
  %v1383 = vsub.f32 %v668, %v1347
  %v1384 = vsub.f32 %v715, %v1350
  %v1385 = vsub.f32 %v718, %v1353
  %v1386 = vsub.f32 %v765, %v1356
  %v1387 = vsub.f32 %v768, %v1359
  %v1388 = vsub.f32 %v815, %v1362
  %v1389 = vsub.f32 %v818, %v1365
  %v1390 = vsub.f32 %v865, %v1368
  %v1391 = vsub.f32 %v868, %v1371
  %v1392 = vsub.f32 %v915, %v1374
  %v1393 = vsub.f32 %v918, %v1377
  %v1394 = vmul.f32 %v1378, 1.442695
  %v1395 = vpow.pop %v1394
  %v1396 = vmul.f32 %v1379, 1.442695
  %v1397 = vpow.pop %v1396
  %v1398 = vmul.f32 %v1380, 1.442695
  %v1399 = vpow.pop %v1398
  %v1400 = vmul.f32 %v1381, 1.442695
  %v1401 = vpow.pop %v1400
  %v1402 = vmul.f32 %v1382, 1.442695
  %v1403 = vpow.pop %v1402
  %v1404 = vmul.f32 %v1383, 1.442695
  %v1405 = vpow.pop %v1404
  %v1406 = vmul.f32 %v1384, 1.442695
  %v1407 = vpow.pop %v1406
  %v1408 = vmul.f32 %v1385, 1.442695
  %v1409 = vpow.pop %v1408
  %v1410 = vmul.f32 %v1386, 1.442695
  %v1411 = vpow.pop %v1410
  %v1412 = vmul.f32 %v1387, 1.442695
  %v1413 = vpow.pop %v1412
  %v1414 = vmul.f32 %v1388, 1.442695
  %v1415 = vpow.pop %v1414
  %v1416 = vmul.f32 %v1389, 1.442695
  %v1417 = vpow.pop %v1416
  %v1418 = vmul.f32 %v1390, 1.442695
  %v1419 = vpow.pop %v1418
  %v1420 = vmul.f32 %v1391, 1.442695
  %v1421 = vpow.pop %v1420
  %v1422 = vmul.f32 %v1392, 1.442695
  %v1423 = vpow.pop %v1422
  %v1424 = vmul.f32 %v1393, 1.442695
  %v1425 = vpow.pop %v1424
  %v1426 = vsel %vm1329, %v1395, 0.0
  %1427 = vadd.xlane.f32.xlu0 %v1426
  %v1428 = vpop.xlane.xlu0 %1427
  %v1429 = vsel %vm1329, %v1397, 0.0
  %1430 = vadd.xlane.f32.xlu0 %v1429
  %v1431 = vpop.xlane.xlu0 %1430
  %v1432 = vsel %vm1329, %v1399, 0.0
  %1433 = vadd.xlane.f32.xlu0 %v1432
  %v1434 = vpop.xlane.xlu0 %1433
  %v1435 = vsel %vm1329, %v1401, 0.0
  %1436 = vadd.xlane.f32.xlu0 %v1435
  %v1437 = vpop.xlane.xlu0 %1436
  %v1438 = vsel %vm1329, %v1403, 0.0
  %1439 = vadd.xlane.f32.xlu0 %v1438
  %v1440 = vpop.xlane.xlu0 %1439
  %v1441 = vsel %vm1329, %v1405, 0.0
  %1442 = vadd.xlane.f32.xlu0 %v1441
  %v1443 = vpop.xlane.xlu0 %1442
  %v1444 = vsel %vm1329, %v1407, 0.0
  %1445 = vadd.xlane.f32.xlu0 %v1444
  %v1446 = vpop.xlane.xlu0 %1445
  %v1447 = vsel %vm1329, %v1409, 0.0
  %1448 = vadd.xlane.f32.xlu0 %v1447
  %v1449 = vpop.xlane.xlu0 %1448
  %v1450 = vsel %vm1329, %v1411, 0.0
  %1451 = vadd.xlane.f32.xlu0 %v1450
  %v1452 = vpop.xlane.xlu0 %1451
  %v1453 = vsel %vm1329, %v1413, 0.0
  %1454 = vadd.xlane.f32.xlu0 %v1453
  %v1455 = vpop.xlane.xlu0 %1454
  %v1456 = vsel %vm1329, %v1415, 0.0
  %1457 = vadd.xlane.f32.xlu0 %v1456
  %v1458 = vpop.xlane.xlu0 %1457
  %v1459 = vsel %vm1329, %v1417, 0.0
  %1460 = vadd.xlane.f32.xlu0 %v1459
  %v1461 = vpop.xlane.xlu0 %1460
  %v1462 = vsel %vm1329, %v1419, 0.0
  %1463 = vadd.xlane.f32.xlu0 %v1462
  %v1464 = vpop.xlane.xlu0 %1463
  %v1465 = vsel %vm1329, %v1421, 0.0
  %1466 = vadd.xlane.f32.xlu0 %v1465
  %v1467 = vpop.xlane.xlu0 %1466
  %v1468 = vsel %vm1329, %v1423, 0.0
  %1469 = vadd.xlane.f32.xlu0 %v1468
  %v1470 = vpop.xlane.xlu0 %1469
  %v1471 = vsel %vm1329, %v1425, 0.0
  %1472 = vadd.xlane.f32.xlu0 %v1471
  %v1473 = vpop.xlane.xlu0 %1472
  %v1474 = vrcp.pop %v1428
  %v1475 = vmul.f32 %v1395, %v1474
  %v1476 = vrcp.pop %v1431
  %v1477 = vmul.f32 %v1397, %v1476
  %v1478 = vrcp.pop %v1434
  %v1479 = vmul.f32 %v1399, %v1478
  %v1480 = vrcp.pop %v1437
  %v1481 = vmul.f32 %v1401, %v1480
  %v1482 = vrcp.pop %v1440
  %v1483 = vmul.f32 %v1403, %v1482
  %v1484 = vrcp.pop %v1443
  %v1485 = vmul.f32 %v1405, %v1484
  %v1486 = vrcp.pop %v1446
  %v1487 = vmul.f32 %v1407, %v1486
  %v1488 = vrcp.pop %v1449
  %v1489 = vmul.f32 %v1409, %v1488
  %v1490 = vrcp.pop %v1452
  %v1491 = vmul.f32 %v1411, %v1490
  %v1492 = vrcp.pop %v1455
  %v1493 = vmul.f32 %v1413, %v1492
  %v1494 = vrcp.pop %v1458
  %v1495 = vmul.f32 %v1415, %v1494
  %v1496 = vrcp.pop %v1461
  %v1497 = vmul.f32 %v1417, %v1496
  %v1498 = vrcp.pop %v1464
  %v1499 = vmul.f32 %v1419, %v1498
  %v1500 = vrcp.pop %v1467
  %v1501 = vmul.f32 %v1421, %v1500
  %v1502 = vrcp.pop %v1470
  %v1503 = vmul.f32 %v1423, %v1502
  %v1504 = vrcp.pop %v1473
  %v1505 = vmul.f32 %v1425, %v1504
  %v1506 = vsel %vm1329, %v966, -inf
  %1507 = vmax.xlane.f32.xlu0 %v1506
  %v1508 = vpop.xlane.xlu0 %1507
  %v1509 = vsel %vm1329, %v969, -inf
  %1510 = vmax.xlane.f32.xlu0 %v1509
  %v1511 = vpop.xlane.xlu0 %1510
  %v1512 = vsel %vm1329, %v1017, -inf
  %1513 = vmax.xlane.f32.xlu0 %v1512
  %v1514 = vpop.xlane.xlu0 %1513
  %v1515 = vsel %vm1329, %v1020, -inf
  %1516 = vmax.xlane.f32.xlu0 %v1515
  %v1517 = vpop.xlane.xlu0 %1516
  %v1518 = vsel %vm1329, %v1068, -inf
  %1519 = vmax.xlane.f32.xlu0 %v1518
  %v1520 = vpop.xlane.xlu0 %1519
  %v1521 = vsel %vm1329, %v1071, -inf
  %1522 = vmax.xlane.f32.xlu0 %v1521
  %v1523 = vpop.xlane.xlu0 %1522
  %v1524 = vsel %vm1329, %v1119, -inf
  %1525 = vmax.xlane.f32.xlu0 %v1524
  %v1526 = vpop.xlane.xlu0 %1525
  %v1527 = vsel %vm1329, %v1122, -inf
  %1528 = vmax.xlane.f32.xlu0 %v1527
  %v1529 = vpop.xlane.xlu0 %1528
  %v1530 = vsel %vm1329, %v1170, -inf
  %1531 = vmax.xlane.f32.xlu0 %v1530
  %v1532 = vpop.xlane.xlu0 %1531
  %v1533 = vsel %vm1329, %v1173, -inf
  %1534 = vmax.xlane.f32.xlu0 %v1533
  %v1535 = vpop.xlane.xlu0 %1534
  %v1536 = vsel %vm1329, %v1221, -inf
  %1537 = vmax.xlane.f32.xlu0 %v1536
  %v1538 = vpop.xlane.xlu0 %1537
  %v1539 = vsel %vm1329, %v1224, -inf
  %1540 = vmax.xlane.f32.xlu0 %v1539
  %v1541 = vpop.xlane.xlu0 %1540
  %v1542 = vsel %vm1329, %v1272, -inf
  %1543 = vmax.xlane.f32.xlu0 %v1542
  %v1544 = vpop.xlane.xlu0 %1543
  %v1545 = vsel %vm1329, %v1275, -inf
  %1546 = vmax.xlane.f32.xlu0 %v1545
  %v1547 = vpop.xlane.xlu0 %1546
  %v1548 = vsel %vm1329, %v1323, -inf
  %1549 = vmax.xlane.f32.xlu0 %v1548
  %v1550 = vpop.xlane.xlu0 %1549
  %v1551 = vsel %vm1329, %v1326, -inf
  %1552 = vmax.xlane.f32.xlu0 %v1551
  %v1553 = vpop.xlane.xlu0 %1552
  %v1554 = vsub.f32 %v966, %v1508
  %v1555 = vsub.f32 %v969, %v1511
  %v1556 = vsub.f32 %v1017, %v1514
  %v1557 = vsub.f32 %v1020, %v1517
  %v1558 = vsub.f32 %v1068, %v1520
  %v1559 = vsub.f32 %v1071, %v1523
  %v1560 = vsub.f32 %v1119, %v1526
  %v1561 = vsub.f32 %v1122, %v1529
  %v1562 = vsub.f32 %v1170, %v1532
  %v1563 = vsub.f32 %v1173, %v1535
  %v1564 = vsub.f32 %v1221, %v1538
  %v1565 = vsub.f32 %v1224, %v1541
  %v1566 = vsub.f32 %v1272, %v1544
  %v1567 = vsub.f32 %v1275, %v1547
  %v1568 = vsub.f32 %v1323, %v1550
  %v1569 = vsub.f32 %v1326, %v1553
  %v1570 = vmul.f32 %v1554, 1.442695
  %v1571 = vpow.pop %v1570
  %v1572 = vmul.f32 %v1555, 1.442695
  %v1573 = vpow.pop %v1572
  %v1574 = vmul.f32 %v1556, 1.442695
  %v1575 = vpow.pop %v1574
  %v1576 = vmul.f32 %v1557, 1.442695
  %v1577 = vpow.pop %v1576
  %v1578 = vmul.f32 %v1558, 1.442695
  %v1579 = vpow.pop %v1578
  %v1580 = vmul.f32 %v1559, 1.442695
  %v1581 = vpow.pop %v1580
  %v1582 = vmul.f32 %v1560, 1.442695
  %v1583 = vpow.pop %v1582
  %v1584 = vmul.f32 %v1561, 1.442695
  %v1585 = vpow.pop %v1584
  %v1586 = vmul.f32 %v1562, 1.442695
  %v1587 = vpow.pop %v1586
  %v1588 = vmul.f32 %v1563, 1.442695
  %v1589 = vpow.pop %v1588
  %v1590 = vmul.f32 %v1564, 1.442695
  %v1591 = vpow.pop %v1590
  %v1592 = vmul.f32 %v1565, 1.442695
  %v1593 = vpow.pop %v1592
  %v1594 = vmul.f32 %v1566, 1.442695
  %v1595 = vpow.pop %v1594
  %v1596 = vmul.f32 %v1567, 1.442695
  %v1597 = vpow.pop %v1596
  %v1598 = vmul.f32 %v1568, 1.442695
  %v1599 = vpow.pop %v1598
  %v1600 = vmul.f32 %v1569, 1.442695
  %v1601 = vpow.pop %v1600
  %v1602 = vsel %vm1329, %v1571, 0.0
  %1603 = vadd.xlane.f32.xlu0 %v1602
  %v1604 = vpop.xlane.xlu0 %1603
  %v1605 = vsel %vm1329, %v1573, 0.0
  %1606 = vadd.xlane.f32.xlu0 %v1605
  %v1607 = vpop.xlane.xlu0 %1606
  %v1608 = vsel %vm1329, %v1575, 0.0
  %1609 = vadd.xlane.f32.xlu0 %v1608
  %v1610 = vpop.xlane.xlu0 %1609
  %v1611 = vsel %vm1329, %v1577, 0.0
  %1612 = vadd.xlane.f32.xlu0 %v1611
  %v1613 = vpop.xlane.xlu0 %1612
  %v1614 = vsel %vm1329, %v1579, 0.0
  %1615 = vadd.xlane.f32.xlu0 %v1614
  %v1616 = vpop.xlane.xlu0 %1615
  %v1617 = vsel %vm1329, %v1581, 0.0
  %1618 = vadd.xlane.f32.xlu0 %v1617
  %v1619 = vpop.xlane.xlu0 %1618
  %v1620 = vsel %vm1329, %v1583, 0.0
  %1621 = vadd.xlane.f32.xlu0 %v1620
  %v1622 = vpop.xlane.xlu0 %1621
  %v1623 = vsel %vm1329, %v1585, 0.0
  %1624 = vadd.xlane.f32.xlu0 %v1623
  %v1625 = vpop.xlane.xlu0 %1624
  %v1626 = vsel %vm1329, %v1587, 0.0
  %1627 = vadd.xlane.f32.xlu0 %v1626
  %v1628 = vpop.xlane.xlu0 %1627
  %v1629 = vsel %vm1329, %v1589, 0.0
  %1630 = vadd.xlane.f32.xlu0 %v1629
  %v1631 = vpop.xlane.xlu0 %1630
  %v1632 = vsel %vm1329, %v1591, 0.0
  %1633 = vadd.xlane.f32.xlu0 %v1632
  %v1634 = vpop.xlane.xlu0 %1633
  %v1635 = vsel %vm1329, %v1593, 0.0
  %1636 = vadd.xlane.f32.xlu0 %v1635
  %v1637 = vpop.xlane.xlu0 %1636
  %v1638 = vsel %vm1329, %v1595, 0.0
  %1639 = vadd.xlane.f32.xlu0 %v1638
  %v1640 = vpop.xlane.xlu0 %1639
  %v1641 = vsel %vm1329, %v1597, 0.0
  %1642 = vadd.xlane.f32.xlu0 %v1641
  %v1643 = vpop.xlane.xlu0 %1642
  %v1644 = vsel %vm1329, %v1599, 0.0
  %1645 = vadd.xlane.f32.xlu0 %v1644
  %v1646 = vpop.xlane.xlu0 %1645
  %v1647 = vsel %vm1329, %v1601, 0.0
  %1648 = vadd.xlane.f32.xlu0 %v1647
  %v1649 = vpop.xlane.xlu0 %1648
  %v1650 = vrcp.pop %v1604
  %v1651 = vmul.f32 %v1571, %v1650
  %v1652 = vrcp.pop %v1607
  %v1653 = vmul.f32 %v1573, %v1652
  %v1654 = vrcp.pop %v1610
  %v1655 = vmul.f32 %v1575, %v1654
  %v1656 = vrcp.pop %v1613
  %v1657 = vmul.f32 %v1577, %v1656
  %v1658 = vrcp.pop %v1616
  %v1659 = vmul.f32 %v1579, %v1658
  %v1660 = vrcp.pop %v1619
  %v1661 = vmul.f32 %v1581, %v1660
  %v1662 = vrcp.pop %v1622
  %v1663 = vmul.f32 %v1583, %v1662
  %v1664 = vrcp.pop %v1625
  %v1665 = vmul.f32 %v1585, %v1664
  %v1666 = vrcp.pop %v1628
  %v1667 = vmul.f32 %v1587, %v1666
  %v1668 = vrcp.pop %v1631
  %v1669 = vmul.f32 %v1589, %v1668
  %v1670 = vrcp.pop %v1634
  %v1671 = vmul.f32 %v1591, %v1670
  %v1672 = vrcp.pop %v1637
  %v1673 = vmul.f32 %v1593, %v1672
  %v1674 = vrcp.pop %v1640
  %v1675 = vmul.f32 %v1595, %v1674
  %v1676 = vrcp.pop %v1643
  %v1677 = vmul.f32 %v1597, %v1676
  %v1678 = vrcp.pop %v1646
  %v1679 = vmul.f32 %v1599, %v1678
  %v1680 = vrcp.pop %v1649
  %v1681 = vmul.f32 %v1601, %v1680
  %v1682 = vstv %s35
  %v1683 = vmul.f32 %v1682, %v1651
  %v1684 = vmul.f32 %v1682, %v1653
  %v1685 = vmul.f32 %v1682, %v1655
  %v1686 = vmul.f32 %v1682, %v1657
  %v1687 = vmul.f32 %v1682, %v1659
  %v1688 = vmul.f32 %v1682, %v1661
  %v1689 = vmul.f32 %v1682, %v1663
  %v1690 = vmul.f32 %v1682, %v1665
  %v1691 = vmul.f32 %v1682, %v1667
  %v1692 = vmul.f32 %v1682, %v1669
  %v1693 = vmul.f32 %v1682, %v1671
  %v1694 = vmul.f32 %v1682, %v1673
  %v1695 = vmul.f32 %v1682, %v1675
  %v1696 = vmul.f32 %v1682, %v1677
  %v1697 = vmul.f32 %v1682, %v1679
  %v1698 = vmul.f32 %v1682, %v1681
  %v1699 = vsub.f32 %v1475, %v1683
  %v1700 = vsub.f32 %v1477, %v1684
  %v1701 = vsub.f32 %v1479, %v1685
  %v1702 = vsub.f32 %v1481, %v1686
  %v1703 = vsub.f32 %v1483, %v1687
  %v1704 = vsub.f32 %v1485, %v1688
  %v1705 = vsub.f32 %v1487, %v1689
  %v1706 = vsub.f32 %v1489, %v1690
  %v1707 = vsub.f32 %v1491, %v1691
  %v1708 = vsub.f32 %v1493, %v1692
  %v1709 = vsub.f32 %v1495, %v1693
  %v1710 = vsub.f32 %v1497, %v1694
  %v1711 = vsub.f32 %v1499, %v1695
  %v1712 = vsub.f32 %v1501, %v1696
  %v1713 = vsub.f32 %v1503, %v1697
  %v1714 = vsub.f32 %v1505, %v1698
  %v1715 = vpack.c.bf16 %v1700, %v1699
  %v1716 = vpack.c.bf16 %v1702, %v1701
  %v1717 = vpack.c.bf16 %v1704, %v1703
  %v1718 = vpack.c.bf16 %v1706, %v1705
  %v1719 = vpack.c.bf16 %v1708, %v1707
  %v1720 = vpack.c.bf16 %v1710, %v1709
  %v1721 = vpack.c.bf16 %v1712, %v1711
  %v1722 = vpack.c.bf16 %v1714, %v1713
  %v1724 = vsel %vm1329, %v1715, 0
  %1726 = vmatprep.subr.bf16.mxu0 0
  %1727 = vmatpush1.bf16.msra.mxu0 %v512
  %1728 = vmatprep.subr.bf16.mxu0 0
  %1729 = vmatpush1.bf16.msra.mxu0 0
  %1730 = vmatprep.subr.bf16.mxu0 0
  %1731 = vmatpush1.bf16.msra.mxu0 0
  %1732 = vmatprep.subr.bf16.mxu0 0
  %1733 = vmatpush1.bf16.msra.mxu0 0
  %1734 = vmatprep.subr.bf16.mxu0 0
  %1735 = vmatpush1.bf16.msra.mxu0 0
  %1736 = vmatprep.subr.bf16.mxu0 0
  %1737 = vmatpush1.bf16.msra.mxu0 0
  %1738 = vmatprep.subr.bf16.mxu0 0
  %1739 = vmatpush1.bf16.msra.mxu0 0
  %1740 = vmatprep.subr.bf16.mxu0 0
  %1741 = vmatpush1.bf16.msra.mxu0 0
  %1742 = vmatprep.subr.bf16.mxu0 0
  %1743 = vmatpush1.bf16.msra.mxu0 0
  %1744 = vmatprep.subr.bf16.mxu0 0
  %1745 = vmatpush1.bf16.msra.mxu0 0
  %1746 = vmatprep.subr.bf16.mxu0 0
  %1747 = vmatpush1.bf16.msra.mxu0 0
  %1748 = vmatprep.subr.bf16.mxu0 0
  %1749 = vmatpush1.bf16.msra.mxu0 0
  %1750 = vmatprep.subr.bf16.mxu0 0
  %1751 = vmatpush1.bf16.msra.mxu0 0
  %1752 = vmatprep.subr.bf16.mxu0 0
  %1753 = vmatpush1.bf16.msra.mxu0 0
  %1754 = vmatprep.subr.bf16.mxu0 0
  %1755 = vmatpush1.bf16.msra.mxu0 0
  %1756 = vmatprep.subr.bf16.mxu0 0
  %1757 = vmatpush1.bf16.msra.mxu0 0
  %1758 = vmatprep.mubr.bf16.mxu0 0
  %1759 = vmatmul.mubr.bf16.gmra.mrb[0].mxu0 %v1724
  %v1760 = vpop.f32.mrb[0].mxu0
  %v1761 = vadd.f32 0.0, %v1760
  %v1762 = vpop.f32.mrb[0].mxu0
  %v1763 = vpop.f32.mrb[0].mxu0
  %v1764 = vadd.f32 0.0, %v1763
  %v1765 = vpop.f32.mrb[0].mxu0
  %1766 = vdwg.mxu0
  %v1768 = vsel %vm1329, %v1716, 0
  %1770 = vmatprep.subr.bf16.mxu0 0
  %1771 = vmatpush1.bf16.msra.mxu0 %v513
  %1772 = vmatprep.subr.bf16.mxu0 0
  %1773 = vmatpush1.bf16.msra.mxu0 0
  %1774 = vmatprep.subr.bf16.mxu0 0
  %1775 = vmatpush1.bf16.msra.mxu0 0
  %1776 = vmatprep.subr.bf16.mxu0 0
  %1777 = vmatpush1.bf16.msra.mxu0 0
  %1778 = vmatprep.subr.bf16.mxu0 0
  %1779 = vmatpush1.bf16.msra.mxu0 0
  %1780 = vmatprep.subr.bf16.mxu0 0
  %1781 = vmatpush1.bf16.msra.mxu0 0
  %1782 = vmatprep.subr.bf16.mxu0 0
  %1783 = vmatpush1.bf16.msra.mxu0 0
  %1784 = vmatprep.subr.bf16.mxu0 0
  %1785 = vmatpush1.bf16.msra.mxu0 0
  %1786 = vmatprep.subr.bf16.mxu0 0
  %1787 = vmatpush1.bf16.msra.mxu0 0
  %1788 = vmatprep.subr.bf16.mxu0 0
  %1789 = vmatpush1.bf16.msra.mxu0 0
  %1790 = vmatprep.subr.bf16.mxu0 0
  %1791 = vmatpush1.bf16.msra.mxu0 0
  %1792 = vmatprep.subr.bf16.mxu0 0
  %1793 = vmatpush1.bf16.msra.mxu0 0
  %1794 = vmatprep.subr.bf16.mxu0 0
  %1795 = vmatpush1.bf16.msra.mxu0 0
  %1796 = vmatprep.subr.bf16.mxu0 0
  %1797 = vmatpush1.bf16.msra.mxu0 0
  %1798 = vmatprep.subr.bf16.mxu0 0
  %1799 = vmatpush1.bf16.msra.mxu0 0
  %1800 = vmatprep.subr.bf16.mxu0 0
  %1801 = vmatpush1.bf16.msra.mxu0 0
  %1802 = vmatprep.mubr.bf16.mxu0 0
  %1803 = vmatmul.mubr.bf16.gmra.mrb[0].mxu0 %v1768
  %v1804 = vpop.f32.mrb[0].mxu0
  %v1805 = vadd.f32 0.0, %v1804
  %v1806 = vpop.f32.mrb[0].mxu0
  %v1807 = vpop.f32.mrb[0].mxu0
  %v1808 = vadd.f32 0.0, %v1807
  %v1809 = vpop.f32.mrb[0].mxu0
  %1810 = vdwg.mxu0
  %v1812 = vsel %vm1329, %v1717, 0
  %1814 = vmatprep.subr.bf16.mxu0 0
  %1815 = vmatpush1.bf16.msra.mxu0 %v514
  %1816 = vmatprep.subr.bf16.mxu0 0
  %1817 = vmatpush1.bf16.msra.mxu0 0
  %1818 = vmatprep.subr.bf16.mxu0 0
  %1819 = vmatpush1.bf16.msra.mxu0 0
  %1820 = vmatprep.subr.bf16.mxu0 0
  %1821 = vmatpush1.bf16.msra.mxu0 0
  %1822 = vmatprep.subr.bf16.mxu0 0
  %1823 = vmatpush1.bf16.msra.mxu0 0
  %1824 = vmatprep.subr.bf16.mxu0 0
  %1825 = vmatpush1.bf16.msra.mxu0 0
  %1826 = vmatprep.subr.bf16.mxu0 0
  %1827 = vmatpush1.bf16.msra.mxu0 0
  %1828 = vmatprep.subr.bf16.mxu0 0
  %1829 = vmatpush1.bf16.msra.mxu0 0
  %1830 = vmatprep.subr.bf16.mxu0 0
  %1831 = vmatpush1.bf16.msra.mxu0 0
  %1832 = vmatprep.subr.bf16.mxu0 0
  %1833 = vmatpush1.bf16.msra.mxu0 0
  %1834 = vmatprep.subr.bf16.mxu0 0
  %1835 = vmatpush1.bf16.msra.mxu0 0
  %1836 = vmatprep.subr.bf16.mxu0 0
  %1837 = vmatpush1.bf16.msra.mxu0 0
  %1838 = vmatprep.subr.bf16.mxu0 0
  %1839 = vmatpush1.bf16.msra.mxu0 0
  %1840 = vmatprep.subr.bf16.mxu0 0
  %1841 = vmatpush1.bf16.msra.mxu0 0
  %1842 = vmatprep.subr.bf16.mxu0 0
  %1843 = vmatpush1.bf16.msra.mxu0 0
  %1844 = vmatprep.subr.bf16.mxu0 0
  %1845 = vmatpush1.bf16.msra.mxu0 0
  %1846 = vmatprep.mubr.bf16.mxu0 0
  %1847 = vmatmul.mubr.bf16.gmra.mrb[0].mxu0 %v1812
  %v1848 = vpop.f32.mrb[0].mxu0
  %v1849 = vadd.f32 0.0, %v1848
  %v1850 = vpop.f32.mrb[0].mxu0
  %v1851 = vpop.f32.mrb[0].mxu0
  %v1852 = vadd.f32 0.0, %v1851
  %v1853 = vpop.f32.mrb[0].mxu0
  %1854 = vdwg.mxu0
  %v1856 = vsel %vm1329, %v1718, 0
  %1858 = vmatprep.subr.bf16.mxu0 0
  %1859 = vmatpush1.bf16.msra.mxu0 %v515
  %1860 = vmatprep.subr.bf16.mxu0 0
  %1861 = vmatpush1.bf16.msra.mxu0 0
  %1862 = vmatprep.subr.bf16.mxu0 0
  %1863 = vmatpush1.bf16.msra.mxu0 0
  %1864 = vmatprep.subr.bf16.mxu0 0
  %1865 = vmatpush1.bf16.msra.mxu0 0
  %1866 = vmatprep.subr.bf16.mxu0 0
  %1867 = vmatpush1.bf16.msra.mxu0 0
  %1868 = vmatprep.subr.bf16.mxu0 0
  %1869 = vmatpush1.bf16.msra.mxu0 0
  %1870 = vmatprep.subr.bf16.mxu0 0
  %1871 = vmatpush1.bf16.msra.mxu0 0
  %1872 = vmatprep.subr.bf16.mxu0 0
  %1873 = vmatpush1.bf16.msra.mxu0 0
  %1874 = vmatprep.subr.bf16.mxu0 0
  %1875 = vmatpush1.bf16.msra.mxu0 0
  %1876 = vmatprep.subr.bf16.mxu0 0
  %1877 = vmatpush1.bf16.msra.mxu0 0
  %1878 = vmatprep.subr.bf16.mxu0 0
  %1879 = vmatpush1.bf16.msra.mxu0 0
  %1880 = vmatprep.subr.bf16.mxu0 0
  %1881 = vmatpush1.bf16.msra.mxu0 0
  %1882 = vmatprep.subr.bf16.mxu0 0
  %1883 = vmatpush1.bf16.msra.mxu0 0
  %1884 = vmatprep.subr.bf16.mxu0 0
  %1885 = vmatpush1.bf16.msra.mxu0 0
  %1886 = vmatprep.subr.bf16.mxu0 0
  %1887 = vmatpush1.bf16.msra.mxu0 0
  %1888 = vmatprep.subr.bf16.mxu0 0
  %1889 = vmatpush1.bf16.msra.mxu0 0
  %1890 = vmatprep.mubr.bf16.mxu0 0
  %1891 = vmatmul.mubr.bf16.gmra.mrb[0].mxu0 %v1856
  %v1892 = vpop.f32.mrb[0].mxu0
  %v1893 = vadd.f32 0.0, %v1892
  %v1894 = vpop.f32.mrb[0].mxu0
  %v1895 = vpop.f32.mrb[0].mxu0
  %v1896 = vadd.f32 0.0, %v1895
  %v1897 = vpop.f32.mrb[0].mxu0
  %1898 = vdwg.mxu0
  %v1900 = vsel %vm1329, %v1719, 0
  %1902 = vmatprep.subr.bf16.mxu0 0
  %1903 = vmatpush1.bf16.msra.mxu0 %v516
  %1904 = vmatprep.subr.bf16.mxu0 0
  %1905 = vmatpush1.bf16.msra.mxu0 0
  %1906 = vmatprep.subr.bf16.mxu0 0
  %1907 = vmatpush1.bf16.msra.mxu0 0
  %1908 = vmatprep.subr.bf16.mxu0 0
  %1909 = vmatpush1.bf16.msra.mxu0 0
  %1910 = vmatprep.subr.bf16.mxu0 0
  %1911 = vmatpush1.bf16.msra.mxu0 0
  %1912 = vmatprep.subr.bf16.mxu0 0
  %1913 = vmatpush1.bf16.msra.mxu0 0
  %1914 = vmatprep.subr.bf16.mxu0 0
  %1915 = vmatpush1.bf16.msra.mxu0 0
  %1916 = vmatprep.subr.bf16.mxu0 0
  %1917 = vmatpush1.bf16.msra.mxu0 0
  %1918 = vmatprep.subr.bf16.mxu0 0
  %1919 = vmatpush1.bf16.msra.mxu0 0
  %1920 = vmatprep.subr.bf16.mxu0 0
  %1921 = vmatpush1.bf16.msra.mxu0 0
  %1922 = vmatprep.subr.bf16.mxu0 0
  %1923 = vmatpush1.bf16.msra.mxu0 0
  %1924 = vmatprep.subr.bf16.mxu0 0
  %1925 = vmatpush1.bf16.msra.mxu0 0
  %1926 = vmatprep.subr.bf16.mxu0 0
  %1927 = vmatpush1.bf16.msra.mxu0 0
  %1928 = vmatprep.subr.bf16.mxu0 0
  %1929 = vmatpush1.bf16.msra.mxu0 0
  %1930 = vmatprep.subr.bf16.mxu0 0
  %1931 = vmatpush1.bf16.msra.mxu0 0
  %1932 = vmatprep.subr.bf16.mxu0 0
  %1933 = vmatpush1.bf16.msra.mxu0 0
  %1934 = vmatprep.mubr.bf16.mxu0 0
  %1935 = vmatmul.mubr.bf16.gmra.mrb[0].mxu0 %v1900
  %v1936 = vpop.f32.mrb[0].mxu0
  %v1937 = vadd.f32 0.0, %v1936
  %v1938 = vpop.f32.mrb[0].mxu0
  %v1939 = vpop.f32.mrb[0].mxu0
  %v1940 = vadd.f32 0.0, %v1939
  %v1941 = vpop.f32.mrb[0].mxu0
  %1942 = vdwg.mxu0
  %v1944 = vsel %vm1329, %v1720, 0
  %1946 = vmatprep.subr.bf16.mxu0 0
  %1947 = vmatpush1.bf16.msra.mxu0 %v517
  %1948 = vmatprep.subr.bf16.mxu0 0
  %1949 = vmatpush1.bf16.msra.mxu0 0
  %1950 = vmatprep.subr.bf16.mxu0 0
  %1951 = vmatpush1.bf16.msra.mxu0 0
  %1952 = vmatprep.subr.bf16.mxu0 0
  %1953 = vmatpush1.bf16.msra.mxu0 0
  %1954 = vmatprep.subr.bf16.mxu0 0
  %1955 = vmatpush1.bf16.msra.mxu0 0
  %1956 = vmatprep.subr.bf16.mxu0 0
  %1957 = vmatpush1.bf16.msra.mxu0 0
  %1958 = vmatprep.subr.bf16.mxu0 0
  %1959 = vmatpush1.bf16.msra.mxu0 0
  %1960 = vmatprep.subr.bf16.mxu0 0
  %1961 = vmatpush1.bf16.msra.mxu0 0
  %1962 = vmatprep.subr.bf16.mxu0 0
  %1963 = vmatpush1.bf16.msra.mxu0 0
  %1964 = vmatprep.subr.bf16.mxu0 0
  %1965 = vmatpush1.bf16.msra.mxu0 0
  %1966 = vmatprep.subr.bf16.mxu0 0
  %1967 = vmatpush1.bf16.msra.mxu0 0
  %1968 = vmatprep.subr.bf16.mxu0 0
  %1969 = vmatpush1.bf16.msra.mxu0 0
  %1970 = vmatprep.subr.bf16.mxu0 0
  %1971 = vmatpush1.bf16.msra.mxu0 0
  %1972 = vmatprep.subr.bf16.mxu0 0
  %1973 = vmatpush1.bf16.msra.mxu0 0
  %1974 = vmatprep.subr.bf16.mxu0 0
  %1975 = vmatpush1.bf16.msra.mxu0 0
  %1976 = vmatprep.subr.bf16.mxu0 0
  %1977 = vmatpush1.bf16.msra.mxu0 0
  %1978 = vmatprep.mubr.bf16.mxu0 0
  %1979 = vmatmul.mubr.bf16.gmra.mrb[0].mxu0 %v1944
  %v1980 = vpop.f32.mrb[0].mxu0
  %v1981 = vadd.f32 0.0, %v1980
  %v1982 = vpop.f32.mrb[0].mxu0
  %v1983 = vpop.f32.mrb[0].mxu0
  %v1984 = vadd.f32 0.0, %v1983
  %v1985 = vpop.f32.mrb[0].mxu0
  %1986 = vdwg.mxu0
  %v1988 = vsel %vm1329, %v1721, 0
  %1990 = vmatprep.subr.bf16.mxu0 0
  %1991 = vmatpush1.bf16.msra.mxu0 %v518
  %1992 = vmatprep.subr.bf16.mxu0 0
  %1993 = vmatpush1.bf16.msra.mxu0 0
  %1994 = vmatprep.subr.bf16.mxu0 0
  %1995 = vmatpush1.bf16.msra.mxu0 0
  %1996 = vmatprep.subr.bf16.mxu0 0
  %1997 = vmatpush1.bf16.msra.mxu0 0
  %1998 = vmatprep.subr.bf16.mxu0 0
  %1999 = vmatpush1.bf16.msra.mxu0 0
  %2000 = vmatprep.subr.bf16.mxu0 0
  %2001 = vmatpush1.bf16.msra.mxu0 0
  %2002 = vmatprep.subr.bf16.mxu0 0
  %2003 = vmatpush1.bf16.msra.mxu0 0
  %2004 = vmatprep.subr.bf16.mxu0 0
  %2005 = vmatpush1.bf16.msra.mxu0 0
  %2006 = vmatprep.subr.bf16.mxu0 0
  %2007 = vmatpush1.bf16.msra.mxu0 0
  %2008 = vmatprep.subr.bf16.mxu0 0
  %2009 = vmatpush1.bf16.msra.mxu0 0
  %2010 = vmatprep.subr.bf16.mxu0 0
  %2011 = vmatpush1.bf16.msra.mxu0 0
  %2012 = vmatprep.subr.bf16.mxu0 0
  %2013 = vmatpush1.bf16.msra.mxu0 0
  %2014 = vmatprep.subr.bf16.mxu0 0
  %2015 = vmatpush1.bf16.msra.mxu0 0
  %2016 = vmatprep.subr.bf16.mxu0 0
  %2017 = vmatpush1.bf16.msra.mxu0 0
  %2018 = vmatprep.subr.bf16.mxu0 0
  %2019 = vmatpush1.bf16.msra.mxu0 0
  %2020 = vmatprep.subr.bf16.mxu0 0
  %2021 = vmatpush1.bf16.msra.mxu0 0
  %2022 = vmatprep.mubr.bf16.mxu0 0
  %2023 = vmatmul.mubr.bf16.gmra.mrb[0].mxu0 %v1988
  %v2024 = vpop.f32.mrb[0].mxu0
  %v2025 = vadd.f32 0.0, %v2024
  %v2026 = vpop.f32.mrb[0].mxu0
  %v2027 = vpop.f32.mrb[0].mxu0
  %v2028 = vadd.f32 0.0, %v2027
  %v2029 = vpop.f32.mrb[0].mxu0
  %2030 = vdwg.mxu0
  %v2032 = vsel %vm1329, %v1722, 0
  %2034 = vmatprep.subr.bf16.mxu0 0
  %2035 = vmatpush1.bf16.msra.mxu0 %v519
  %2036 = vmatprep.subr.bf16.mxu0 0
  %2037 = vmatpush1.bf16.msra.mxu0 0
  %2038 = vmatprep.subr.bf16.mxu0 0
  %2039 = vmatpush1.bf16.msra.mxu0 0
  %2040 = vmatprep.subr.bf16.mxu0 0
  %2041 = vmatpush1.bf16.msra.mxu0 0
  %2042 = vmatprep.subr.bf16.mxu0 0
  %2043 = vmatpush1.bf16.msra.mxu0 0
  %2044 = vmatprep.subr.bf16.mxu0 0
  %2045 = vmatpush1.bf16.msra.mxu0 0
  %2046 = vmatprep.subr.bf16.mxu0 0
  %2047 = vmatpush1.bf16.msra.mxu0 0
  %2048 = vmatprep.subr.bf16.mxu0 0
  %2049 = vmatpush1.bf16.msra.mxu0 0
  %2050 = vmatprep.subr.bf16.mxu0 0
  %2051 = vmatpush1.bf16.msra.mxu0 0
  %2052 = vmatprep.subr.bf16.mxu0 0
  %2053 = vmatpush1.bf16.msra.mxu0 0
  %2054 = vmatprep.subr.bf16.mxu0 0
  %2055 = vmatpush1.bf16.msra.mxu0 0
  %2056 = vmatprep.subr.bf16.mxu0 0
  %2057 = vmatpush1.bf16.msra.mxu0 0
  %2058 = vmatprep.subr.bf16.mxu0 0
  %2059 = vmatpush1.bf16.msra.mxu0 0
  %2060 = vmatprep.subr.bf16.mxu0 0
  %2061 = vmatpush1.bf16.msra.mxu0 0
  %2062 = vmatprep.subr.bf16.mxu0 0
  %2063 = vmatpush1.bf16.msra.mxu0 0
  %2064 = vmatprep.subr.bf16.mxu0 0
  %2065 = vmatpush1.bf16.msra.mxu0 0
  %2066 = vmatprep.mubr.bf16.mxu0 0
  %2067 = vmatmul.mubr.bf16.gmra.mrb[0].mxu0 %v2032
  %v2068 = vpop.f32.mrb[0].mxu0
  %v2069 = vadd.f32 0.0, %v2068
  %v2070 = vpop.f32.mrb[0].mxu0
  %v2071 = vpop.f32.mrb[0].mxu0
  %v2072 = vadd.f32 0.0, %v2071
  %v2073 = vpop.f32.mrb[0].mxu0
  %2074 = vdwg.mxu0
  %v2075 = vsel %vm1329, %v1761, 0.0
  %2076 = vadd.xlane.f32.xlu0 %v2075
  %v2077 = vpop.xlane.xlu0 %2076
  %v2078 = vsel %vm1329, %v1764, 0.0
  %2079 = vadd.xlane.f32.xlu0 %v2078
  %v2080 = vpop.xlane.xlu0 %2079
  %v2081 = vsel %vm1329, %v1805, 0.0
  %2082 = vadd.xlane.f32.xlu0 %v2081
  %v2083 = vpop.xlane.xlu0 %2082
  %v2084 = vsel %vm1329, %v1808, 0.0
  %2085 = vadd.xlane.f32.xlu0 %v2084
  %v2086 = vpop.xlane.xlu0 %2085
  %v2087 = vsel %vm1329, %v1849, 0.0
  %2088 = vadd.xlane.f32.xlu0 %v2087
  %v2089 = vpop.xlane.xlu0 %2088
  %v2090 = vsel %vm1329, %v1852, 0.0
  %2091 = vadd.xlane.f32.xlu0 %v2090
  %v2092 = vpop.xlane.xlu0 %2091
  %v2093 = vsel %vm1329, %v1893, 0.0
  %2094 = vadd.xlane.f32.xlu0 %v2093
  %v2095 = vpop.xlane.xlu0 %2094
  %v2096 = vsel %vm1329, %v1896, 0.0
  %2097 = vadd.xlane.f32.xlu0 %v2096
  %v2098 = vpop.xlane.xlu0 %2097
  %v2099 = vsel %vm1329, %v1937, 0.0
  %2100 = vadd.xlane.f32.xlu0 %v2099
  %v2101 = vpop.xlane.xlu0 %2100
  %v2102 = vsel %vm1329, %v1940, 0.0
  %2103 = vadd.xlane.f32.xlu0 %v2102
  %v2104 = vpop.xlane.xlu0 %2103
  %v2105 = vsel %vm1329, %v1981, 0.0
  %2106 = vadd.xlane.f32.xlu0 %v2105
  %v2107 = vpop.xlane.xlu0 %2106
  %v2108 = vsel %vm1329, %v1984, 0.0
  %2109 = vadd.xlane.f32.xlu0 %v2108
  %v2110 = vpop.xlane.xlu0 %2109
  %v2111 = vsel %vm1329, %v2025, 0.0
  %2112 = vadd.xlane.f32.xlu0 %v2111
  %v2113 = vpop.xlane.xlu0 %2112
  %v2114 = vsel %vm1329, %v2028, 0.0
  %2115 = vadd.xlane.f32.xlu0 %v2114
  %v2116 = vpop.xlane.xlu0 %2115
  %v2117 = vsel %vm1329, %v2069, 0.0
  %2118 = vadd.xlane.f32.xlu0 %v2117
  %v2119 = vpop.xlane.xlu0 %2118
  %v2120 = vsel %vm1329, %v2072, 0.0
  %2121 = vadd.xlane.f32.xlu0 %v2120
  %v2122 = vpop.xlane.xlu0 %2121
  %v2123 = vrcp.pop 16.0
  %v2124 = vmul.f32 %v2077, %v2123
  %v2125 = vmul.f32 %v2080, %v2123
  %v2126 = vmul.f32 %v2083, %v2123
  %v2127 = vmul.f32 %v2086, %v2123
  %v2128 = vmul.f32 %v2089, %v2123
  %v2129 = vmul.f32 %v2092, %v2123
  %v2130 = vmul.f32 %v2095, %v2123
  %v2131 = vmul.f32 %v2098, %v2123
  %v2132 = vmul.f32 %v2101, %v2123
  %v2133 = vmul.f32 %v2104, %v2123
  %v2134 = vmul.f32 %v2107, %v2123
  %v2135 = vmul.f32 %v2110, %v2123
  %v2136 = vmul.f32 %v2113, %v2123
  %v2137 = vmul.f32 %v2116, %v2123
  %v2138 = vmul.f32 %v2119, %v2123
  %v2139 = vmul.f32 %v2122, %v2123
  %v2140 = vsub.f32 %v1761, %v2124
  %v2141 = vsub.f32 %v1764, %v2125
  %v2142 = vsub.f32 %v1805, %v2126
  %v2143 = vsub.f32 %v1808, %v2127
  %v2144 = vsub.f32 %v1849, %v2128
  %v2145 = vsub.f32 %v1852, %v2129
  %v2146 = vsub.f32 %v1893, %v2130
  %v2147 = vsub.f32 %v1896, %v2131
  %v2148 = vsub.f32 %v1937, %v2132
  %v2149 = vsub.f32 %v1940, %v2133
  %v2150 = vsub.f32 %v1981, %v2134
  %v2151 = vsub.f32 %v1984, %v2135
  %v2152 = vsub.f32 %v2025, %v2136
  %v2153 = vsub.f32 %v2028, %v2137
  %v2154 = vsub.f32 %v2069, %v2138
  %v2155 = vsub.f32 %v2072, %v2139
  %v2156 = vmul.f32 %v2140, %v2140
  %v2157 = vmul.f32 %v2141, %v2141
  %v2158 = vmul.f32 %v2142, %v2142
  %v2159 = vmul.f32 %v2143, %v2143
  %v2160 = vmul.f32 %v2144, %v2144
  %v2161 = vmul.f32 %v2145, %v2145
  %v2162 = vmul.f32 %v2146, %v2146
  %v2163 = vmul.f32 %v2147, %v2147
  %v2164 = vmul.f32 %v2148, %v2148
  %v2165 = vmul.f32 %v2149, %v2149
  %v2166 = vmul.f32 %v2150, %v2150
  %v2167 = vmul.f32 %v2151, %v2151
  %v2168 = vmul.f32 %v2152, %v2152
  %v2169 = vmul.f32 %v2153, %v2153
  %v2170 = vmul.f32 %v2154, %v2154
  %v2171 = vmul.f32 %v2155, %v2155
  %v2172 = vsel %vm1329, %v2156, 0.0
  %2173 = vadd.xlane.f32.xlu0 %v2172
  %v2174 = vpop.xlane.xlu0 %2173
  %v2175 = vsel %vm1329, %v2157, 0.0
  %2176 = vadd.xlane.f32.xlu0 %v2175
  %v2177 = vpop.xlane.xlu0 %2176
  %v2178 = vsel %vm1329, %v2158, 0.0
  %2179 = vadd.xlane.f32.xlu0 %v2178
  %v2180 = vpop.xlane.xlu0 %2179
  %v2181 = vsel %vm1329, %v2159, 0.0
  %2182 = vadd.xlane.f32.xlu0 %v2181
  %v2183 = vpop.xlane.xlu0 %2182
  %v2184 = vsel %vm1329, %v2160, 0.0
  %2185 = vadd.xlane.f32.xlu0 %v2184
  %v2186 = vpop.xlane.xlu0 %2185
  %v2187 = vsel %vm1329, %v2161, 0.0
  %2188 = vadd.xlane.f32.xlu0 %v2187
  %v2189 = vpop.xlane.xlu0 %2188
  %v2190 = vsel %vm1329, %v2162, 0.0
  %2191 = vadd.xlane.f32.xlu0 %v2190
  %v2192 = vpop.xlane.xlu0 %2191
  %v2193 = vsel %vm1329, %v2163, 0.0
  %2194 = vadd.xlane.f32.xlu0 %v2193
  %v2195 = vpop.xlane.xlu0 %2194
  %v2196 = vsel %vm1329, %v2164, 0.0
  %2197 = vadd.xlane.f32.xlu0 %v2196
  %v2198 = vpop.xlane.xlu0 %2197
  %v2199 = vsel %vm1329, %v2165, 0.0
  %2200 = vadd.xlane.f32.xlu0 %v2199
  %v2201 = vpop.xlane.xlu0 %2200
  %v2202 = vsel %vm1329, %v2166, 0.0
  %2203 = vadd.xlane.f32.xlu0 %v2202
  %v2204 = vpop.xlane.xlu0 %2203
  %v2205 = vsel %vm1329, %v2167, 0.0
  %2206 = vadd.xlane.f32.xlu0 %v2205
  %v2207 = vpop.xlane.xlu0 %2206
  %v2208 = vsel %vm1329, %v2168, 0.0
  %2209 = vadd.xlane.f32.xlu0 %v2208
  %v2210 = vpop.xlane.xlu0 %2209
  %v2211 = vsel %vm1329, %v2169, 0.0
  %2212 = vadd.xlane.f32.xlu0 %v2211
  %v2213 = vpop.xlane.xlu0 %2212
  %v2214 = vsel %vm1329, %v2170, 0.0
  %2215 = vadd.xlane.f32.xlu0 %v2214
  %v2216 = vpop.xlane.xlu0 %2215
  %v2217 = vsel %vm1329, %v2171, 0.0
  %2218 = vadd.xlane.f32.xlu0 %v2217
  %v2219 = vpop.xlane.xlu0 %2218
  %v2220 = vmul.f32 %v2174, %v2123
  %v2221 = vmul.f32 %v2177, %v2123
  %v2222 = vmul.f32 %v2180, %v2123
  %v2223 = vmul.f32 %v2183, %v2123
  %v2224 = vmul.f32 %v2186, %v2123
  %v2225 = vmul.f32 %v2189, %v2123
  %v2226 = vmul.f32 %v2192, %v2123
  %v2227 = vmul.f32 %v2195, %v2123
  %v2228 = vmul.f32 %v2198, %v2123
  %v2229 = vmul.f32 %v2201, %v2123
  %v2230 = vmul.f32 %v2204, %v2123
  %v2231 = vmul.f32 %v2207, %v2123
  %v2232 = vmul.f32 %v2210, %v2123
  %v2233 = vmul.f32 %v2213, %v2123
  %v2234 = vmul.f32 %v2216, %v2123
  %v2235 = vmul.f32 %v2219, %v2123
  %v2236 = vadd.f32 %v2220, 1e-05
  %v2237 = vadd.f32 %v2221, 1e-05
  %v2238 = vadd.f32 %v2222, 1e-05
  %v2239 = vadd.f32 %v2223, 1e-05
  %v2240 = vadd.f32 %v2224, 1e-05
  %v2241 = vadd.f32 %v2225, 1e-05
  %v2242 = vadd.f32 %v2226, 1e-05
  %v2243 = vadd.f32 %v2227, 1e-05
  %v2244 = vadd.f32 %v2228, 1e-05
  %v2245 = vadd.f32 %v2229, 1e-05
  %v2246 = vadd.f32 %v2230, 1e-05
  %v2247 = vadd.f32 %v2231, 1e-05
  %v2248 = vadd.f32 %v2232, 1e-05
  %v2249 = vadd.f32 %v2233, 1e-05
  %v2250 = vadd.f32 %v2234, 1e-05
  %v2251 = vadd.f32 %v2235, 1e-05
  %v2252 = vrsqrt.pop %v2236
  %v2253 = vrsqrt.pop %v2237
  %v2254 = vrsqrt.pop %v2238
  %v2255 = vrsqrt.pop %v2239
  %v2256 = vrsqrt.pop %v2240
  %v2257 = vrsqrt.pop %v2241
  %v2258 = vrsqrt.pop %v2242
  %v2259 = vrsqrt.pop %v2243
  %v2260 = vrsqrt.pop %v2244
  %v2261 = vrsqrt.pop %v2245
  %v2262 = vrsqrt.pop %v2246
  %v2263 = vrsqrt.pop %v2247
  %v2264 = vrsqrt.pop %v2248
  %v2265 = vrsqrt.pop %v2249
  %v2266 = vrsqrt.pop %v2250
  %v2267 = vrsqrt.pop %v2251
  %v2268 = vmul.f32 %v2140, %v2252
  %v2269 = vmul.f32 %v2141, %v2253
  %v2270 = vmul.f32 %v2142, %v2254
  %v2271 = vmul.f32 %v2143, %v2255
  %v2272 = vmul.f32 %v2144, %v2256
  %v2273 = vmul.f32 %v2145, %v2257
  %v2274 = vmul.f32 %v2146, %v2258
  %v2275 = vmul.f32 %v2147, %v2259
  %v2276 = vmul.f32 %v2148, %v2260
  %v2277 = vmul.f32 %v2149, %v2261
  %v2278 = vmul.f32 %v2150, %v2262
  %v2279 = vmul.f32 %v2151, %v2263
  %v2280 = vmul.f32 %v2152, %v2264
  %v2281 = vmul.f32 %v2153, %v2265
  %v2282 = vmul.f32 %v2154, %v2266
  %v2283 = vmul.f32 %v2155, %v2267
  %v2285 = vlaneseq
  %v2286 = vshrl.u32 %v2285, 7
  %v2287 = vsub.s32 0, %v2286
  %v2288 = vrot.slane %v502, %v2287
  %v2290 = vmul.f32 %v2268, %v2288
  %v2291 = vmul.f32 %v2269, %v2288
  %v2292 = vmul.f32 %v2270, %v2288
  %v2293 = vmul.f32 %v2271, %v2288
  %v2294 = vmul.f32 %v2272, %v2288
  %v2295 = vmul.f32 %v2273, %v2288
  %v2296 = vmul.f32 %v2274, %v2288
  %v2297 = vmul.f32 %v2275, %v2288
  %v2298 = vmul.f32 %v2276, %v2288
  %v2299 = vmul.f32 %v2277, %v2288
  %v2300 = vmul.f32 %v2278, %v2288
  %v2301 = vmul.f32 %v2279, %v2288
  %v2302 = vmul.f32 %v2280, %v2288
  %v2303 = vmul.f32 %v2281, %v2288
  %v2304 = vmul.f32 %v2282, %v2288
  %v2305 = vmul.f32 %v2283, %v2288
  %v2307 = vlaneseq
  %v2308 = vshrl.u32 %v2307, 7
  %v2309 = vsub.s32 0, %v2308
  %v2310 = vrot.slane %v503, %v2309
  %v2312 = vadd.f32 %v2290, %v2310
  %v2313 = vadd.f32 %v2291, %v2310
  %v2314 = vadd.f32 %v2292, %v2310
  %v2315 = vadd.f32 %v2293, %v2310
  %v2316 = vadd.f32 %v2294, %v2310
  %v2317 = vadd.f32 %v2295, %v2310
  %v2318 = vadd.f32 %v2296, %v2310
  %v2319 = vadd.f32 %v2297, %v2310
  %v2320 = vadd.f32 %v2298, %v2310
  %v2321 = vadd.f32 %v2299, %v2310
  %v2322 = vadd.f32 %v2300, %v2310
  %v2323 = vadd.f32 %v2301, %v2310
  %v2324 = vadd.f32 %v2302, %v2310
  %v2325 = vadd.f32 %v2303, %v2310
  %v2326 = vadd.f32 %v2304, %v2310
  %v2327 = vadd.f32 %v2305, %v2310
  %v2328 = vmul.f32 %v2312, 0.64449096
  %v2329 = vmul.f32 %v2313, 0.64449096
  %v2330 = vmul.f32 %v2314, 0.64449096
  %v2331 = vmul.f32 %v2315, 0.64449096
  %v2332 = vmul.f32 %v2316, 0.64449096
  %v2333 = vmul.f32 %v2317, 0.64449096
  %v2334 = vmul.f32 %v2318, 0.64449096
  %v2335 = vmul.f32 %v2319, 0.64449096
  %v2336 = vmul.f32 %v2320, 0.64449096
  %v2337 = vmul.f32 %v2321, 0.64449096
  %v2338 = vmul.f32 %v2322, 0.64449096
  %v2339 = vmul.f32 %v2323, 0.64449096
  %v2340 = vmul.f32 %v2324, 0.64449096
  %v2341 = vmul.f32 %v2325, 0.64449096
  %v2342 = vmul.f32 %v2326, 0.64449096
  %v2343 = vmul.f32 %v2327, 0.64449096
  %2344 = vrot.lane.b32.xlu0 %v504, 112
  %v2345 = vpop.permute.xlu0 %2344
  %2346 = vrot.lane.b32.xlu0 %v504, 48
  %v2347 = vpop.permute.xlu0 %2346
  %v2349 = vsel %vm523, %v2345, 0
  %v2352 = vsel %vm523, %v2347, 0
  %2354 = vmatprep.subr.bf16.mxu0 0
  %2355 = vmatpush1.bf16.xpose.msra.mxu0 %v2352
  %2356 = vmatprep.subr.bf16.mxu0 0
  %2357 = vmatpush1.bf16.xpose.msra.mxu0 0
  %2358 = vmatprep.subr.bf16.mxu0 0
  %2359 = vmatpush1.bf16.xpose.msra.mxu0 0
  %2360 = vmatprep.subr.bf16.mxu0 0
  %2361 = vmatpush1.bf16.xpose.msra.mxu0 0
  %2362 = vmatprep.subr.bf16.mxu0 0
  %2363 = vmatpush1.bf16.xpose.msra.mxu0 0
  %2364 = vmatprep.subr.bf16.mxu0 0
  %2365 = vmatpush1.bf16.xpose.msra.mxu0 0
  %2366 = vmatprep.subr.bf16.mxu0 0
  %2367 = vmatpush1.bf16.xpose.msra.mxu0 0
  %2368 = vmatprep.subr.bf16.mxu0 0
  %2369 = vmatpush1.bf16.xpose.msra.mxu0 0
  %2370 = vmatprep.subr.bf16.mxu0 0
  %2371 = vmatpush1.bf16.xpose.msra.mxu0 0
  %2372 = vmatprep.subr.bf16.mxu0 0
  %2373 = vmatpush1.bf16.xpose.msra.mxu0 0
  %2374 = vmatprep.subr.bf16.mxu0 0
  %2375 = vmatpush1.bf16.xpose.msra.mxu0 0
  %2376 = vmatprep.subr.bf16.mxu0 0
  %2377 = vmatpush1.bf16.xpose.msra.mxu0 0
  %2378 = vmatprep.subr.bf16.mxu0 0
  %2379 = vmatpush1.bf16.xpose.msra.mxu0 0
  %2380 = vmatprep.subr.bf16.mxu0 0
  %2381 = vmatpush1.bf16.xpose.msra.mxu0 0
  %2382 = vmatprep.subr.bf16.mxu0 0
  %2383 = vmatpush1.bf16.xpose.msra.mxu0 0
  %2384 = vmatprep.subr.bf16.mxu0 0
  %2385 = vmatpush1.bf16.xpose.msra.mxu0 0
  %2386 = vmatprep.mubr.bf16.mxu0 0
  %2387 = vmatmul.mubr.bf16.gmra.mrb[0].mxu0 %v2349
  %v2388 = vpop.f32.mrb[0].mxu0
  %v2389 = vadd.f32 0.0, %v2388
  %v2390 = vpop.f32.mrb[0].mxu0
  %v2391 = vpop.f32.mrb[0].mxu0
  %v2392 = vadd.f32 0.0, %v2391
  %v2393 = vpop.f32.mrb[0].mxu0
  %2394 = vdwg.mxu0
  %2395 = vrot.lane.b32.xlu0 %v505, 112
  %v2396 = vpop.permute.xlu0 %2395
  %2397 = vrot.lane.b32.xlu0 %v505, 48
  %v2398 = vpop.permute.xlu0 %2397
  %v2400 = vsel %vm523, %v2396, 0
  %v2403 = vsel %vm523, %v2398, 0
  %2405 = vmatprep.subr.bf16.mxu0 0
  %2406 = vmatpush1.bf16.xpose.msra.mxu0 %v2403
  %2407 = vmatprep.subr.bf16.mxu0 0
  %2408 = vmatpush1.bf16.xpose.msra.mxu0 0
  %2409 = vmatprep.subr.bf16.mxu0 0
  %2410 = vmatpush1.bf16.xpose.msra.mxu0 0
  %2411 = vmatprep.subr.bf16.mxu0 0
  %2412 = vmatpush1.bf16.xpose.msra.mxu0 0
  %2413 = vmatprep.subr.bf16.mxu0 0
  %2414 = vmatpush1.bf16.xpose.msra.mxu0 0
  %2415 = vmatprep.subr.bf16.mxu0 0
  %2416 = vmatpush1.bf16.xpose.msra.mxu0 0
  %2417 = vmatprep.subr.bf16.mxu0 0
  %2418 = vmatpush1.bf16.xpose.msra.mxu0 0
  %2419 = vmatprep.subr.bf16.mxu0 0
  %2420 = vmatpush1.bf16.xpose.msra.mxu0 0
  %2421 = vmatprep.subr.bf16.mxu0 0
  %2422 = vmatpush1.bf16.xpose.msra.mxu0 0
  %2423 = vmatprep.subr.bf16.mxu0 0
  %2424 = vmatpush1.bf16.xpose.msra.mxu0 0
  %2425 = vmatprep.subr.bf16.mxu0 0
  %2426 = vmatpush1.bf16.xpose.msra.mxu0 0
  %2427 = vmatprep.subr.bf16.mxu0 0
  %2428 = vmatpush1.bf16.xpose.msra.mxu0 0
  %2429 = vmatprep.subr.bf16.mxu0 0
  %2430 = vmatpush1.bf16.xpose.msra.mxu0 0
  %2431 = vmatprep.subr.bf16.mxu0 0
  %2432 = vmatpush1.bf16.xpose.msra.mxu0 0
  %2433 = vmatprep.subr.bf16.mxu0 0
  %2434 = vmatpush1.bf16.xpose.msra.mxu0 0
  %2435 = vmatprep.subr.bf16.mxu0 0
  %2436 = vmatpush1.bf16.xpose.msra.mxu0 0
  %2437 = vmatprep.mubr.bf16.mxu0 0
  %2438 = vmatmul.mubr.bf16.gmra.mrb[0].mxu0 %v2400
  %v2439 = vpop.f32.mrb[0].mxu0
  %v2440 = vadd.f32 0.0, %v2439
  %v2441 = vpop.f32.mrb[0].mxu0
  %v2442 = vpop.f32.mrb[0].mxu0
  %v2443 = vadd.f32 0.0, %v2442
  %v2444 = vpop.f32.mrb[0].mxu0
  %2445 = vdwg.mxu0
  %2446 = vrot.lane.b32.xlu0 %v506, 112
  %v2447 = vpop.permute.xlu0 %2446
  %2448 = vrot.lane.b32.xlu0 %v506, 48
  %v2449 = vpop.permute.xlu0 %2448
  %v2451 = vsel %vm523, %v2447, 0
  %v2454 = vsel %vm523, %v2449, 0
  %2456 = vmatprep.subr.bf16.mxu0 0
  %2457 = vmatpush1.bf16.xpose.msra.mxu0 %v2454
  %2458 = vmatprep.subr.bf16.mxu0 0
  %2459 = vmatpush1.bf16.xpose.msra.mxu0 0
  %2460 = vmatprep.subr.bf16.mxu0 0
  %2461 = vmatpush1.bf16.xpose.msra.mxu0 0
  %2462 = vmatprep.subr.bf16.mxu0 0
  %2463 = vmatpush1.bf16.xpose.msra.mxu0 0
  %2464 = vmatprep.subr.bf16.mxu0 0
  %2465 = vmatpush1.bf16.xpose.msra.mxu0 0
  %2466 = vmatprep.subr.bf16.mxu0 0
  %2467 = vmatpush1.bf16.xpose.msra.mxu0 0
  %2468 = vmatprep.subr.bf16.mxu0 0
  %2469 = vmatpush1.bf16.xpose.msra.mxu0 0
  %2470 = vmatprep.subr.bf16.mxu0 0
  %2471 = vmatpush1.bf16.xpose.msra.mxu0 0
  %2472 = vmatprep.subr.bf16.mxu0 0
  %2473 = vmatpush1.bf16.xpose.msra.mxu0 0
  %2474 = vmatprep.subr.bf16.mxu0 0
  %2475 = vmatpush1.bf16.xpose.msra.mxu0 0
  %2476 = vmatprep.subr.bf16.mxu0 0
  %2477 = vmatpush1.bf16.xpose.msra.mxu0 0
  %2478 = vmatprep.subr.bf16.mxu0 0
  %2479 = vmatpush1.bf16.xpose.msra.mxu0 0
  %2480 = vmatprep.subr.bf16.mxu0 0
  %2481 = vmatpush1.bf16.xpose.msra.mxu0 0
  %2482 = vmatprep.subr.bf16.mxu0 0
  %2483 = vmatpush1.bf16.xpose.msra.mxu0 0
  %2484 = vmatprep.subr.bf16.mxu0 0
  %2485 = vmatpush1.bf16.xpose.msra.mxu0 0
  %2486 = vmatprep.subr.bf16.mxu0 0
  %2487 = vmatpush1.bf16.xpose.msra.mxu0 0
  %2488 = vmatprep.mubr.bf16.mxu0 0
  %2489 = vmatmul.mubr.bf16.gmra.mrb[0].mxu0 %v2451
  %v2490 = vpop.f32.mrb[0].mxu0
  %v2491 = vadd.f32 0.0, %v2490
  %v2492 = vpop.f32.mrb[0].mxu0
  %v2493 = vpop.f32.mrb[0].mxu0
  %v2494 = vadd.f32 0.0, %v2493
  %v2495 = vpop.f32.mrb[0].mxu0
  %2496 = vdwg.mxu0
  %2497 = vrot.lane.b32.xlu0 %v507, 112
  %v2498 = vpop.permute.xlu0 %2497
  %2499 = vrot.lane.b32.xlu0 %v507, 48
  %v2500 = vpop.permute.xlu0 %2499
  %v2502 = vsel %vm523, %v2498, 0
  %v2505 = vsel %vm523, %v2500, 0
  %2507 = vmatprep.subr.bf16.mxu0 0
  %2508 = vmatpush1.bf16.xpose.msra.mxu0 %v2505
  %2509 = vmatprep.subr.bf16.mxu0 0
  %2510 = vmatpush1.bf16.xpose.msra.mxu0 0
  %2511 = vmatprep.subr.bf16.mxu0 0
  %2512 = vmatpush1.bf16.xpose.msra.mxu0 0
  %2513 = vmatprep.subr.bf16.mxu0 0
  %2514 = vmatpush1.bf16.xpose.msra.mxu0 0
  %2515 = vmatprep.subr.bf16.mxu0 0
  %2516 = vmatpush1.bf16.xpose.msra.mxu0 0
  %2517 = vmatprep.subr.bf16.mxu0 0
  %2518 = vmatpush1.bf16.xpose.msra.mxu0 0
  %2519 = vmatprep.subr.bf16.mxu0 0
  %2520 = vmatpush1.bf16.xpose.msra.mxu0 0
  %2521 = vmatprep.subr.bf16.mxu0 0
  %2522 = vmatpush1.bf16.xpose.msra.mxu0 0
  %2523 = vmatprep.subr.bf16.mxu0 0
  %2524 = vmatpush1.bf16.xpose.msra.mxu0 0
  %2525 = vmatprep.subr.bf16.mxu0 0
  %2526 = vmatpush1.bf16.xpose.msra.mxu0 0
  %2527 = vmatprep.subr.bf16.mxu0 0
  %2528 = vmatpush1.bf16.xpose.msra.mxu0 0
  %2529 = vmatprep.subr.bf16.mxu0 0
  %2530 = vmatpush1.bf16.xpose.msra.mxu0 0
  %2531 = vmatprep.subr.bf16.mxu0 0
  %2532 = vmatpush1.bf16.xpose.msra.mxu0 0
  %2533 = vmatprep.subr.bf16.mxu0 0
  %2534 = vmatpush1.bf16.xpose.msra.mxu0 0
  %2535 = vmatprep.subr.bf16.mxu0 0
  %2536 = vmatpush1.bf16.xpose.msra.mxu0 0
  %2537 = vmatprep.subr.bf16.mxu0 0
  %2538 = vmatpush1.bf16.xpose.msra.mxu0 0
  %2539 = vmatprep.mubr.bf16.mxu0 0
  %2540 = vmatmul.mubr.bf16.gmra.mrb[0].mxu0 %v2502
  %v2541 = vpop.f32.mrb[0].mxu0
  %v2542 = vadd.f32 0.0, %v2541
  %v2543 = vpop.f32.mrb[0].mxu0
  %v2544 = vpop.f32.mrb[0].mxu0
  %v2545 = vadd.f32 0.0, %v2544
  %v2546 = vpop.f32.mrb[0].mxu0
  %2547 = vdwg.mxu0
  %2548 = vrot.lane.b32.xlu0 %v508, 112
  %v2549 = vpop.permute.xlu0 %2548
  %2550 = vrot.lane.b32.xlu0 %v508, 48
  %v2551 = vpop.permute.xlu0 %2550
  %v2553 = vsel %vm523, %v2549, 0
  %v2556 = vsel %vm523, %v2551, 0
  %2558 = vmatprep.subr.bf16.mxu0 0
  %2559 = vmatpush1.bf16.xpose.msra.mxu0 %v2556
  %2560 = vmatprep.subr.bf16.mxu0 0
  %2561 = vmatpush1.bf16.xpose.msra.mxu0 0
  %2562 = vmatprep.subr.bf16.mxu0 0
  %2563 = vmatpush1.bf16.xpose.msra.mxu0 0
  %2564 = vmatprep.subr.bf16.mxu0 0
  %2565 = vmatpush1.bf16.xpose.msra.mxu0 0
  %2566 = vmatprep.subr.bf16.mxu0 0
  %2567 = vmatpush1.bf16.xpose.msra.mxu0 0
  %2568 = vmatprep.subr.bf16.mxu0 0
  %2569 = vmatpush1.bf16.xpose.msra.mxu0 0
  %2570 = vmatprep.subr.bf16.mxu0 0
  %2571 = vmatpush1.bf16.xpose.msra.mxu0 0
  %2572 = vmatprep.subr.bf16.mxu0 0
  %2573 = vmatpush1.bf16.xpose.msra.mxu0 0
  %2574 = vmatprep.subr.bf16.mxu0 0
  %2575 = vmatpush1.bf16.xpose.msra.mxu0 0
  %2576 = vmatprep.subr.bf16.mxu0 0
  %2577 = vmatpush1.bf16.xpose.msra.mxu0 0
  %2578 = vmatprep.subr.bf16.mxu0 0
  %2579 = vmatpush1.bf16.xpose.msra.mxu0 0
  %2580 = vmatprep.subr.bf16.mxu0 0
  %2581 = vmatpush1.bf16.xpose.msra.mxu0 0
  %2582 = vmatprep.subr.bf16.mxu0 0
  %2583 = vmatpush1.bf16.xpose.msra.mxu0 0
  %2584 = vmatprep.subr.bf16.mxu0 0
  %2585 = vmatpush1.bf16.xpose.msra.mxu0 0
  %2586 = vmatprep.subr.bf16.mxu0 0
  %2587 = vmatpush1.bf16.xpose.msra.mxu0 0
  %2588 = vmatprep.subr.bf16.mxu0 0
  %2589 = vmatpush1.bf16.xpose.msra.mxu0 0
  %2590 = vmatprep.mubr.bf16.mxu0 0
  %2591 = vmatmul.mubr.bf16.gmra.mrb[0].mxu0 %v2553
  %v2592 = vpop.f32.mrb[0].mxu0
  %v2593 = vadd.f32 0.0, %v2592
  %v2594 = vpop.f32.mrb[0].mxu0
  %v2595 = vpop.f32.mrb[0].mxu0
  %v2596 = vadd.f32 0.0, %v2595
  %v2597 = vpop.f32.mrb[0].mxu0
  %2598 = vdwg.mxu0
  %2599 = vrot.lane.b32.xlu0 %v509, 112
  %v2600 = vpop.permute.xlu0 %2599
  %2601 = vrot.lane.b32.xlu0 %v509, 48
  %v2602 = vpop.permute.xlu0 %2601
  %v2604 = vsel %vm523, %v2600, 0
  %v2607 = vsel %vm523, %v2602, 0
  %2609 = vmatprep.subr.bf16.mxu0 0
  %2610 = vmatpush1.bf16.xpose.msra.mxu0 %v2607
  %2611 = vmatprep.subr.bf16.mxu0 0
  %2612 = vmatpush1.bf16.xpose.msra.mxu0 0
  %2613 = vmatprep.subr.bf16.mxu0 0
  %2614 = vmatpush1.bf16.xpose.msra.mxu0 0
  %2615 = vmatprep.subr.bf16.mxu0 0
  %2616 = vmatpush1.bf16.xpose.msra.mxu0 0
  %2617 = vmatprep.subr.bf16.mxu0 0
  %2618 = vmatpush1.bf16.xpose.msra.mxu0 0
  %2619 = vmatprep.subr.bf16.mxu0 0
  %2620 = vmatpush1.bf16.xpose.msra.mxu0 0
  %2621 = vmatprep.subr.bf16.mxu0 0
  %2622 = vmatpush1.bf16.xpose.msra.mxu0 0
  %2623 = vmatprep.subr.bf16.mxu0 0
  %2624 = vmatpush1.bf16.xpose.msra.mxu0 0
  %2625 = vmatprep.subr.bf16.mxu0 0
  %2626 = vmatpush1.bf16.xpose.msra.mxu0 0
  %2627 = vmatprep.subr.bf16.mxu0 0
  %2628 = vmatpush1.bf16.xpose.msra.mxu0 0
  %2629 = vmatprep.subr.bf16.mxu0 0
  %2630 = vmatpush1.bf16.xpose.msra.mxu0 0
  %2631 = vmatprep.subr.bf16.mxu0 0
  %2632 = vmatpush1.bf16.xpose.msra.mxu0 0
  %2633 = vmatprep.subr.bf16.mxu0 0
  %2634 = vmatpush1.bf16.xpose.msra.mxu0 0
  %2635 = vmatprep.subr.bf16.mxu0 0
  %2636 = vmatpush1.bf16.xpose.msra.mxu0 0
  %2637 = vmatprep.subr.bf16.mxu0 0
  %2638 = vmatpush1.bf16.xpose.msra.mxu0 0
  %2639 = vmatprep.subr.bf16.mxu0 0
  %2640 = vmatpush1.bf16.xpose.msra.mxu0 0
  %2641 = vmatprep.mubr.bf16.mxu0 0
  %2642 = vmatmul.mubr.bf16.gmra.mrb[0].mxu0 %v2604
  %v2643 = vpop.f32.mrb[0].mxu0
  %v2644 = vadd.f32 0.0, %v2643
  %v2645 = vpop.f32.mrb[0].mxu0
  %v2646 = vpop.f32.mrb[0].mxu0
  %v2647 = vadd.f32 0.0, %v2646
  %v2648 = vpop.f32.mrb[0].mxu0
  %2649 = vdwg.mxu0
  %2650 = vrot.lane.b32.xlu0 %v510, 112
  %v2651 = vpop.permute.xlu0 %2650
  %2652 = vrot.lane.b32.xlu0 %v510, 48
  %v2653 = vpop.permute.xlu0 %2652
  %v2655 = vsel %vm523, %v2651, 0
  %v2658 = vsel %vm523, %v2653, 0
  %2660 = vmatprep.subr.bf16.mxu0 0
  %2661 = vmatpush1.bf16.xpose.msra.mxu0 %v2658
  %2662 = vmatprep.subr.bf16.mxu0 0
  %2663 = vmatpush1.bf16.xpose.msra.mxu0 0
  %2664 = vmatprep.subr.bf16.mxu0 0
  %2665 = vmatpush1.bf16.xpose.msra.mxu0 0
  %2666 = vmatprep.subr.bf16.mxu0 0
  %2667 = vmatpush1.bf16.xpose.msra.mxu0 0
  %2668 = vmatprep.subr.bf16.mxu0 0
  %2669 = vmatpush1.bf16.xpose.msra.mxu0 0
  %2670 = vmatprep.subr.bf16.mxu0 0
  %2671 = vmatpush1.bf16.xpose.msra.mxu0 0
  %2672 = vmatprep.subr.bf16.mxu0 0
  %2673 = vmatpush1.bf16.xpose.msra.mxu0 0
  %2674 = vmatprep.subr.bf16.mxu0 0
  %2675 = vmatpush1.bf16.xpose.msra.mxu0 0
  %2676 = vmatprep.subr.bf16.mxu0 0
  %2677 = vmatpush1.bf16.xpose.msra.mxu0 0
  %2678 = vmatprep.subr.bf16.mxu0 0
  %2679 = vmatpush1.bf16.xpose.msra.mxu0 0
  %2680 = vmatprep.subr.bf16.mxu0 0
  %2681 = vmatpush1.bf16.xpose.msra.mxu0 0
  %2682 = vmatprep.subr.bf16.mxu0 0
  %2683 = vmatpush1.bf16.xpose.msra.mxu0 0
  %2684 = vmatprep.subr.bf16.mxu0 0
  %2685 = vmatpush1.bf16.xpose.msra.mxu0 0
  %2686 = vmatprep.subr.bf16.mxu0 0
  %2687 = vmatpush1.bf16.xpose.msra.mxu0 0
  %2688 = vmatprep.subr.bf16.mxu0 0
  %2689 = vmatpush1.bf16.xpose.msra.mxu0 0
  %2690 = vmatprep.subr.bf16.mxu0 0
  %2691 = vmatpush1.bf16.xpose.msra.mxu0 0
  %2692 = vmatprep.mubr.bf16.mxu0 0
  %2693 = vmatmul.mubr.bf16.gmra.mrb[0].mxu0 %v2655
  %v2694 = vpop.f32.mrb[0].mxu0
  %v2695 = vadd.f32 0.0, %v2694
  %v2696 = vpop.f32.mrb[0].mxu0
  %v2697 = vpop.f32.mrb[0].mxu0
  %v2698 = vadd.f32 0.0, %v2697
  %v2699 = vpop.f32.mrb[0].mxu0
  %2700 = vdwg.mxu0
  %2701 = vrot.lane.b32.xlu0 %v511, 112
  %v2702 = vpop.permute.xlu0 %2701
  %2703 = vrot.lane.b32.xlu0 %v511, 48
  %v2704 = vpop.permute.xlu0 %2703
  %v2706 = vsel %vm523, %v2702, 0
  %v2709 = vsel %vm523, %v2704, 0
  %2711 = vmatprep.subr.bf16.mxu0 0
  %2712 = vmatpush1.bf16.xpose.msra.mxu0 %v2709
  %2713 = vmatprep.subr.bf16.mxu0 0
  %2714 = vmatpush1.bf16.xpose.msra.mxu0 0
  %2715 = vmatprep.subr.bf16.mxu0 0
  %2716 = vmatpush1.bf16.xpose.msra.mxu0 0
  %2717 = vmatprep.subr.bf16.mxu0 0
  %2718 = vmatpush1.bf16.xpose.msra.mxu0 0
  %2719 = vmatprep.subr.bf16.mxu0 0
  %2720 = vmatpush1.bf16.xpose.msra.mxu0 0
  %2721 = vmatprep.subr.bf16.mxu0 0
  %2722 = vmatpush1.bf16.xpose.msra.mxu0 0
  %2723 = vmatprep.subr.bf16.mxu0 0
  %2724 = vmatpush1.bf16.xpose.msra.mxu0 0
  %2725 = vmatprep.subr.bf16.mxu0 0
  %2726 = vmatpush1.bf16.xpose.msra.mxu0 0
  %2727 = vmatprep.subr.bf16.mxu0 0
  %2728 = vmatpush1.bf16.xpose.msra.mxu0 0
  %2729 = vmatprep.subr.bf16.mxu0 0
  %2730 = vmatpush1.bf16.xpose.msra.mxu0 0
  %2731 = vmatprep.subr.bf16.mxu0 0
  %2732 = vmatpush1.bf16.xpose.msra.mxu0 0
  %2733 = vmatprep.subr.bf16.mxu0 0
  %2734 = vmatpush1.bf16.xpose.msra.mxu0 0
  %2735 = vmatprep.subr.bf16.mxu0 0
  %2736 = vmatpush1.bf16.xpose.msra.mxu0 0
  %2737 = vmatprep.subr.bf16.mxu0 0
  %2738 = vmatpush1.bf16.xpose.msra.mxu0 0
  %2739 = vmatprep.subr.bf16.mxu0 0
  %2740 = vmatpush1.bf16.xpose.msra.mxu0 0
  %2741 = vmatprep.subr.bf16.mxu0 0
  %2742 = vmatpush1.bf16.xpose.msra.mxu0 0
  %2743 = vmatprep.mubr.bf16.mxu0 0
  %2744 = vmatmul.mubr.bf16.gmra.mrb[0].mxu0 %v2706
  %v2745 = vpop.f32.mrb[0].mxu0
  %v2746 = vadd.f32 0.0, %v2745
  %v2747 = vpop.f32.mrb[0].mxu0
  %v2748 = vpop.f32.mrb[0].mxu0
  %v2749 = vadd.f32 0.0, %v2748
  %v2750 = vpop.f32.mrb[0].mxu0
  %2751 = vdwg.mxu0
  %2752 = vrot.lane.b32.xlu0 %v504, 104
  %v2753 = vpop.permute.xlu0 %2752
  %2754 = vrot.lane.b32.xlu0 %v504, 40
  %v2755 = vpop.permute.xlu0 %2754
  %v2757 = vsel %vm523, %v2753, 0
  %v2760 = vsel %vm523, %v2755, 0
  %2762 = vmatprep.subr.bf16.mxu0 0
  %2763 = vmatpush1.bf16.xpose.msra.mxu0 %v2760
  %2764 = vmatprep.subr.bf16.mxu0 0
  %2765 = vmatpush1.bf16.xpose.msra.mxu0 0
  %2766 = vmatprep.subr.bf16.mxu0 0
  %2767 = vmatpush1.bf16.xpose.msra.mxu0 0
  %2768 = vmatprep.subr.bf16.mxu0 0
  %2769 = vmatpush1.bf16.xpose.msra.mxu0 0
  %2770 = vmatprep.subr.bf16.mxu0 0
  %2771 = vmatpush1.bf16.xpose.msra.mxu0 0
  %2772 = vmatprep.subr.bf16.mxu0 0
  %2773 = vmatpush1.bf16.xpose.msra.mxu0 0
  %2774 = vmatprep.subr.bf16.mxu0 0
  %2775 = vmatpush1.bf16.xpose.msra.mxu0 0
  %2776 = vmatprep.subr.bf16.mxu0 0
  %2777 = vmatpush1.bf16.xpose.msra.mxu0 0
  %2778 = vmatprep.subr.bf16.mxu0 0
  %2779 = vmatpush1.bf16.xpose.msra.mxu0 0
  %2780 = vmatprep.subr.bf16.mxu0 0
  %2781 = vmatpush1.bf16.xpose.msra.mxu0 0
  %2782 = vmatprep.subr.bf16.mxu0 0
  %2783 = vmatpush1.bf16.xpose.msra.mxu0 0
  %2784 = vmatprep.subr.bf16.mxu0 0
  %2785 = vmatpush1.bf16.xpose.msra.mxu0 0
  %2786 = vmatprep.subr.bf16.mxu0 0
  %2787 = vmatpush1.bf16.xpose.msra.mxu0 0
  %2788 = vmatprep.subr.bf16.mxu0 0
  %2789 = vmatpush1.bf16.xpose.msra.mxu0 0
  %2790 = vmatprep.subr.bf16.mxu0 0
  %2791 = vmatpush1.bf16.xpose.msra.mxu0 0
  %2792 = vmatprep.subr.bf16.mxu0 0
  %2793 = vmatpush1.bf16.xpose.msra.mxu0 0
  %2794 = vmatprep.mubr.bf16.mxu0 0
  %2795 = vmatmul.mubr.bf16.gmra.mrb[0].mxu0 %v2757
  %v2796 = vpop.f32.mrb[0].mxu0
  %v2797 = vadd.f32 0.0, %v2796
  %v2798 = vpop.f32.mrb[0].mxu0
  %v2799 = vpop.f32.mrb[0].mxu0
  %v2800 = vadd.f32 0.0, %v2799
  %v2801 = vpop.f32.mrb[0].mxu0
  %2802 = vdwg.mxu0
  %2803 = vrot.lane.b32.xlu0 %v505, 104
  %v2804 = vpop.permute.xlu0 %2803
  %2805 = vrot.lane.b32.xlu0 %v505, 40
  %v2806 = vpop.permute.xlu0 %2805
  %v2808 = vsel %vm523, %v2804, 0
  %v2811 = vsel %vm523, %v2806, 0
  %2813 = vmatprep.subr.bf16.mxu0 0
  %2814 = vmatpush1.bf16.xpose.msra.mxu0 %v2811
  %2815 = vmatprep.subr.bf16.mxu0 0
  %2816 = vmatpush1.bf16.xpose.msra.mxu0 0
  %2817 = vmatprep.subr.bf16.mxu0 0
  %2818 = vmatpush1.bf16.xpose.msra.mxu0 0
  %2819 = vmatprep.subr.bf16.mxu0 0
  %2820 = vmatpush1.bf16.xpose.msra.mxu0 0
  %2821 = vmatprep.subr.bf16.mxu0 0
  %2822 = vmatpush1.bf16.xpose.msra.mxu0 0
  %2823 = vmatprep.subr.bf16.mxu0 0
  %2824 = vmatpush1.bf16.xpose.msra.mxu0 0
  %2825 = vmatprep.subr.bf16.mxu0 0
  %2826 = vmatpush1.bf16.xpose.msra.mxu0 0
  %2827 = vmatprep.subr.bf16.mxu0 0
  %2828 = vmatpush1.bf16.xpose.msra.mxu0 0
  %2829 = vmatprep.subr.bf16.mxu0 0
  %2830 = vmatpush1.bf16.xpose.msra.mxu0 0
  %2831 = vmatprep.subr.bf16.mxu0 0
  %2832 = vmatpush1.bf16.xpose.msra.mxu0 0
  %2833 = vmatprep.subr.bf16.mxu0 0
  %2834 = vmatpush1.bf16.xpose.msra.mxu0 0
  %2835 = vmatprep.subr.bf16.mxu0 0
  %2836 = vmatpush1.bf16.xpose.msra.mxu0 0
  %2837 = vmatprep.subr.bf16.mxu0 0
  %2838 = vmatpush1.bf16.xpose.msra.mxu0 0
  %2839 = vmatprep.subr.bf16.mxu0 0
  %2840 = vmatpush1.bf16.xpose.msra.mxu0 0
  %2841 = vmatprep.subr.bf16.mxu0 0
  %2842 = vmatpush1.bf16.xpose.msra.mxu0 0
  %2843 = vmatprep.subr.bf16.mxu0 0
  %2844 = vmatpush1.bf16.xpose.msra.mxu0 0
  %2845 = vmatprep.mubr.bf16.mxu0 0
  %2846 = vmatmul.mubr.bf16.gmra.mrb[0].mxu0 %v2808
  %v2847 = vpop.f32.mrb[0].mxu0
  %v2848 = vadd.f32 0.0, %v2847
  %v2849 = vpop.f32.mrb[0].mxu0
  %v2850 = vpop.f32.mrb[0].mxu0
  %v2851 = vadd.f32 0.0, %v2850
  %v2852 = vpop.f32.mrb[0].mxu0
  %2853 = vdwg.mxu0
  %2854 = vrot.lane.b32.xlu0 %v506, 104
  %v2855 = vpop.permute.xlu0 %2854
  %2856 = vrot.lane.b32.xlu0 %v506, 40
  %v2857 = vpop.permute.xlu0 %2856
  %v2859 = vsel %vm523, %v2855, 0
  %v2862 = vsel %vm523, %v2857, 0
  %2864 = vmatprep.subr.bf16.mxu0 0
  %2865 = vmatpush1.bf16.xpose.msra.mxu0 %v2862
  %2866 = vmatprep.subr.bf16.mxu0 0
  %2867 = vmatpush1.bf16.xpose.msra.mxu0 0
  %2868 = vmatprep.subr.bf16.mxu0 0
  %2869 = vmatpush1.bf16.xpose.msra.mxu0 0
  %2870 = vmatprep.subr.bf16.mxu0 0
  %2871 = vmatpush1.bf16.xpose.msra.mxu0 0
  %2872 = vmatprep.subr.bf16.mxu0 0
  %2873 = vmatpush1.bf16.xpose.msra.mxu0 0
  %2874 = vmatprep.subr.bf16.mxu0 0
  %2875 = vmatpush1.bf16.xpose.msra.mxu0 0
  %2876 = vmatprep.subr.bf16.mxu0 0
  %2877 = vmatpush1.bf16.xpose.msra.mxu0 0
  %2878 = vmatprep.subr.bf16.mxu0 0
  %2879 = vmatpush1.bf16.xpose.msra.mxu0 0
  %2880 = vmatprep.subr.bf16.mxu0 0
  %2881 = vmatpush1.bf16.xpose.msra.mxu0 0
  %2882 = vmatprep.subr.bf16.mxu0 0
  %2883 = vmatpush1.bf16.xpose.msra.mxu0 0
  %2884 = vmatprep.subr.bf16.mxu0 0
  %2885 = vmatpush1.bf16.xpose.msra.mxu0 0
  %2886 = vmatprep.subr.bf16.mxu0 0
  %2887 = vmatpush1.bf16.xpose.msra.mxu0 0
  %2888 = vmatprep.subr.bf16.mxu0 0
  %2889 = vmatpush1.bf16.xpose.msra.mxu0 0
  %2890 = vmatprep.subr.bf16.mxu0 0
  %2891 = vmatpush1.bf16.xpose.msra.mxu0 0
  %2892 = vmatprep.subr.bf16.mxu0 0
  %2893 = vmatpush1.bf16.xpose.msra.mxu0 0
  %2894 = vmatprep.subr.bf16.mxu0 0
  %2895 = vmatpush1.bf16.xpose.msra.mxu0 0
  %2896 = vmatprep.mubr.bf16.mxu0 0
  %2897 = vmatmul.mubr.bf16.gmra.mrb[0].mxu0 %v2859
  %v2898 = vpop.f32.mrb[0].mxu0
  %v2899 = vadd.f32 0.0, %v2898
  %v2900 = vpop.f32.mrb[0].mxu0
  %v2901 = vpop.f32.mrb[0].mxu0
  %v2902 = vadd.f32 0.0, %v2901
  %v2903 = vpop.f32.mrb[0].mxu0
  %2904 = vdwg.mxu0
  %2905 = vrot.lane.b32.xlu0 %v507, 104
  %v2906 = vpop.permute.xlu0 %2905
  %2907 = vrot.lane.b32.xlu0 %v507, 40
  %v2908 = vpop.permute.xlu0 %2907
  %v2910 = vsel %vm523, %v2906, 0
  %v2913 = vsel %vm523, %v2908, 0
  %2915 = vmatprep.subr.bf16.mxu0 0
  %2916 = vmatpush1.bf16.xpose.msra.mxu0 %v2913
  %2917 = vmatprep.subr.bf16.mxu0 0
  %2918 = vmatpush1.bf16.xpose.msra.mxu0 0
  %2919 = vmatprep.subr.bf16.mxu0 0
  %2920 = vmatpush1.bf16.xpose.msra.mxu0 0
  %2921 = vmatprep.subr.bf16.mxu0 0
  %2922 = vmatpush1.bf16.xpose.msra.mxu0 0
  %2923 = vmatprep.subr.bf16.mxu0 0
  %2924 = vmatpush1.bf16.xpose.msra.mxu0 0
  %2925 = vmatprep.subr.bf16.mxu0 0
  %2926 = vmatpush1.bf16.xpose.msra.mxu0 0
  %2927 = vmatprep.subr.bf16.mxu0 0
  %2928 = vmatpush1.bf16.xpose.msra.mxu0 0
  %2929 = vmatprep.subr.bf16.mxu0 0
  %2930 = vmatpush1.bf16.xpose.msra.mxu0 0
  %2931 = vmatprep.subr.bf16.mxu0 0
  %2932 = vmatpush1.bf16.xpose.msra.mxu0 0
  %2933 = vmatprep.subr.bf16.mxu0 0
  %2934 = vmatpush1.bf16.xpose.msra.mxu0 0
  %2935 = vmatprep.subr.bf16.mxu0 0
  %2936 = vmatpush1.bf16.xpose.msra.mxu0 0
  %2937 = vmatprep.subr.bf16.mxu0 0
  %2938 = vmatpush1.bf16.xpose.msra.mxu0 0
  %2939 = vmatprep.subr.bf16.mxu0 0
  %2940 = vmatpush1.bf16.xpose.msra.mxu0 0
  %2941 = vmatprep.subr.bf16.mxu0 0
  %2942 = vmatpush1.bf16.xpose.msra.mxu0 0
  %2943 = vmatprep.subr.bf16.mxu0 0
  %2944 = vmatpush1.bf16.xpose.msra.mxu0 0
  %2945 = vmatprep.subr.bf16.mxu0 0
  %2946 = vmatpush1.bf16.xpose.msra.mxu0 0
  %2947 = vmatprep.mubr.bf16.mxu0 0
  %2948 = vmatmul.mubr.bf16.gmra.mrb[0].mxu0 %v2910
  %v2949 = vpop.f32.mrb[0].mxu0
  %v2950 = vadd.f32 0.0, %v2949
  %v2951 = vpop.f32.mrb[0].mxu0
  %v2952 = vpop.f32.mrb[0].mxu0
  %v2953 = vadd.f32 0.0, %v2952
  %v2954 = vpop.f32.mrb[0].mxu0
  %2955 = vdwg.mxu0
  %2956 = vrot.lane.b32.xlu0 %v508, 104
  %v2957 = vpop.permute.xlu0 %2956
  %2958 = vrot.lane.b32.xlu0 %v508, 40
  %v2959 = vpop.permute.xlu0 %2958
  %v2961 = vsel %vm523, %v2957, 0
  %v2964 = vsel %vm523, %v2959, 0
  %2966 = vmatprep.subr.bf16.mxu0 0
  %2967 = vmatpush1.bf16.xpose.msra.mxu0 %v2964
  %2968 = vmatprep.subr.bf16.mxu0 0
  %2969 = vmatpush1.bf16.xpose.msra.mxu0 0
  %2970 = vmatprep.subr.bf16.mxu0 0
  %2971 = vmatpush1.bf16.xpose.msra.mxu0 0
  %2972 = vmatprep.subr.bf16.mxu0 0
  %2973 = vmatpush1.bf16.xpose.msra.mxu0 0
  %2974 = vmatprep.subr.bf16.mxu0 0
  %2975 = vmatpush1.bf16.xpose.msra.mxu0 0
  %2976 = vmatprep.subr.bf16.mxu0 0
  %2977 = vmatpush1.bf16.xpose.msra.mxu0 0
  %2978 = vmatprep.subr.bf16.mxu0 0
  %2979 = vmatpush1.bf16.xpose.msra.mxu0 0
  %2980 = vmatprep.subr.bf16.mxu0 0
  %2981 = vmatpush1.bf16.xpose.msra.mxu0 0
  %2982 = vmatprep.subr.bf16.mxu0 0
  %2983 = vmatpush1.bf16.xpose.msra.mxu0 0
  %2984 = vmatprep.subr.bf16.mxu0 0
  %2985 = vmatpush1.bf16.xpose.msra.mxu0 0
  %2986 = vmatprep.subr.bf16.mxu0 0
  %2987 = vmatpush1.bf16.xpose.msra.mxu0 0
  %2988 = vmatprep.subr.bf16.mxu0 0
  %2989 = vmatpush1.bf16.xpose.msra.mxu0 0
  %2990 = vmatprep.subr.bf16.mxu0 0
  %2991 = vmatpush1.bf16.xpose.msra.mxu0 0
  %2992 = vmatprep.subr.bf16.mxu0 0
  %2993 = vmatpush1.bf16.xpose.msra.mxu0 0
  %2994 = vmatprep.subr.bf16.mxu0 0
  %2995 = vmatpush1.bf16.xpose.msra.mxu0 0
  %2996 = vmatprep.subr.bf16.mxu0 0
  %2997 = vmatpush1.bf16.xpose.msra.mxu0 0
  %2998 = vmatprep.mubr.bf16.mxu0 0
  %2999 = vmatmul.mubr.bf16.gmra.mrb[0].mxu0 %v2961
  %v3000 = vpop.f32.mrb[0].mxu0
  %v3001 = vadd.f32 0.0, %v3000
  %v3002 = vpop.f32.mrb[0].mxu0
  %v3003 = vpop.f32.mrb[0].mxu0
  %v3004 = vadd.f32 0.0, %v3003
  %v3005 = vpop.f32.mrb[0].mxu0
  %3006 = vdwg.mxu0
  %3007 = vrot.lane.b32.xlu0 %v509, 104
  %v3008 = vpop.permute.xlu0 %3007
  %3009 = vrot.lane.b32.xlu0 %v509, 40
  %v3010 = vpop.permute.xlu0 %3009
  %v3012 = vsel %vm523, %v3008, 0
  %v3015 = vsel %vm523, %v3010, 0
  %3017 = vmatprep.subr.bf16.mxu0 0
  %3018 = vmatpush1.bf16.xpose.msra.mxu0 %v3015
  %3019 = vmatprep.subr.bf16.mxu0 0
  %3020 = vmatpush1.bf16.xpose.msra.mxu0 0
  %3021 = vmatprep.subr.bf16.mxu0 0
  %3022 = vmatpush1.bf16.xpose.msra.mxu0 0
  %3023 = vmatprep.subr.bf16.mxu0 0
  %3024 = vmatpush1.bf16.xpose.msra.mxu0 0
  %3025 = vmatprep.subr.bf16.mxu0 0
  %3026 = vmatpush1.bf16.xpose.msra.mxu0 0
  %3027 = vmatprep.subr.bf16.mxu0 0
  %3028 = vmatpush1.bf16.xpose.msra.mxu0 0
  %3029 = vmatprep.subr.bf16.mxu0 0
  %3030 = vmatpush1.bf16.xpose.msra.mxu0 0
  %3031 = vmatprep.subr.bf16.mxu0 0
  %3032 = vmatpush1.bf16.xpose.msra.mxu0 0
  %3033 = vmatprep.subr.bf16.mxu0 0
  %3034 = vmatpush1.bf16.xpose.msra.mxu0 0
  %3035 = vmatprep.subr.bf16.mxu0 0
  %3036 = vmatpush1.bf16.xpose.msra.mxu0 0
  %3037 = vmatprep.subr.bf16.mxu0 0
  %3038 = vmatpush1.bf16.xpose.msra.mxu0 0
  %3039 = vmatprep.subr.bf16.mxu0 0
  %3040 = vmatpush1.bf16.xpose.msra.mxu0 0
  %3041 = vmatprep.subr.bf16.mxu0 0
  %3042 = vmatpush1.bf16.xpose.msra.mxu0 0
  %3043 = vmatprep.subr.bf16.mxu0 0
  %3044 = vmatpush1.bf16.xpose.msra.mxu0 0
  %3045 = vmatprep.subr.bf16.mxu0 0
  %3046 = vmatpush1.bf16.xpose.msra.mxu0 0
  %3047 = vmatprep.subr.bf16.mxu0 0
  %3048 = vmatpush1.bf16.xpose.msra.mxu0 0
  %3049 = vmatprep.mubr.bf16.mxu0 0
  %3050 = vmatmul.mubr.bf16.gmra.mrb[0].mxu0 %v3012
  %v3051 = vpop.f32.mrb[0].mxu0
  %v3052 = vadd.f32 0.0, %v3051
  %v3053 = vpop.f32.mrb[0].mxu0
  %v3054 = vpop.f32.mrb[0].mxu0
  %v3055 = vadd.f32 0.0, %v3054
  %v3056 = vpop.f32.mrb[0].mxu0
  %3057 = vdwg.mxu0
  %3058 = vrot.lane.b32.xlu0 %v510, 104
  %v3059 = vpop.permute.xlu0 %3058
  %3060 = vrot.lane.b32.xlu0 %v510, 40
  %v3061 = vpop.permute.xlu0 %3060
  %v3063 = vsel %vm523, %v3059, 0
  %v3066 = vsel %vm523, %v3061, 0
  %3068 = vmatprep.subr.bf16.mxu0 0
  %3069 = vmatpush1.bf16.xpose.msra.mxu0 %v3066
  %3070 = vmatprep.subr.bf16.mxu0 0
  %3071 = vmatpush1.bf16.xpose.msra.mxu0 0
  %3072 = vmatprep.subr.bf16.mxu0 0
  %3073 = vmatpush1.bf16.xpose.msra.mxu0 0
  %3074 = vmatprep.subr.bf16.mxu0 0
  %3075 = vmatpush1.bf16.xpose.msra.mxu0 0
  %3076 = vmatprep.subr.bf16.mxu0 0
  %3077 = vmatpush1.bf16.xpose.msra.mxu0 0
  %3078 = vmatprep.subr.bf16.mxu0 0
  %3079 = vmatpush1.bf16.xpose.msra.mxu0 0
  %3080 = vmatprep.subr.bf16.mxu0 0
  %3081 = vmatpush1.bf16.xpose.msra.mxu0 0
  %3082 = vmatprep.subr.bf16.mxu0 0
  %3083 = vmatpush1.bf16.xpose.msra.mxu0 0
  %3084 = vmatprep.subr.bf16.mxu0 0
  %3085 = vmatpush1.bf16.xpose.msra.mxu0 0
  %3086 = vmatprep.subr.bf16.mxu0 0
  %3087 = vmatpush1.bf16.xpose.msra.mxu0 0
  %3088 = vmatprep.subr.bf16.mxu0 0
  %3089 = vmatpush1.bf16.xpose.msra.mxu0 0
  %3090 = vmatprep.subr.bf16.mxu0 0
  %3091 = vmatpush1.bf16.xpose.msra.mxu0 0
  %3092 = vmatprep.subr.bf16.mxu0 0
  %3093 = vmatpush1.bf16.xpose.msra.mxu0 0
  %3094 = vmatprep.subr.bf16.mxu0 0
  %3095 = vmatpush1.bf16.xpose.msra.mxu0 0
  %3096 = vmatprep.subr.bf16.mxu0 0
  %3097 = vmatpush1.bf16.xpose.msra.mxu0 0
  %3098 = vmatprep.subr.bf16.mxu0 0
  %3099 = vmatpush1.bf16.xpose.msra.mxu0 0
  %3100 = vmatprep.mubr.bf16.mxu0 0
  %3101 = vmatmul.mubr.bf16.gmra.mrb[0].mxu0 %v3063
  %v3102 = vpop.f32.mrb[0].mxu0
  %v3103 = vadd.f32 0.0, %v3102
  %v3104 = vpop.f32.mrb[0].mxu0
  %v3105 = vpop.f32.mrb[0].mxu0
  %v3106 = vadd.f32 0.0, %v3105
  %v3107 = vpop.f32.mrb[0].mxu0
  %3108 = vdwg.mxu0
  %3109 = vrot.lane.b32.xlu0 %v511, 104
  %v3110 = vpop.permute.xlu0 %3109
  %3111 = vrot.lane.b32.xlu0 %v511, 40
  %v3112 = vpop.permute.xlu0 %3111
  %v3114 = vsel %vm523, %v3110, 0
  %v3117 = vsel %vm523, %v3112, 0
  %3119 = vmatprep.subr.bf16.mxu0 0
  %3120 = vmatpush1.bf16.xpose.msra.mxu0 %v3117
  %3121 = vmatprep.subr.bf16.mxu0 0
  %3122 = vmatpush1.bf16.xpose.msra.mxu0 0
  %3123 = vmatprep.subr.bf16.mxu0 0
  %3124 = vmatpush1.bf16.xpose.msra.mxu0 0
  %3125 = vmatprep.subr.bf16.mxu0 0
  %3126 = vmatpush1.bf16.xpose.msra.mxu0 0
  %3127 = vmatprep.subr.bf16.mxu0 0
  %3128 = vmatpush1.bf16.xpose.msra.mxu0 0
  %3129 = vmatprep.subr.bf16.mxu0 0
  %3130 = vmatpush1.bf16.xpose.msra.mxu0 0
  %3131 = vmatprep.subr.bf16.mxu0 0
  %3132 = vmatpush1.bf16.xpose.msra.mxu0 0
  %3133 = vmatprep.subr.bf16.mxu0 0
  %3134 = vmatpush1.bf16.xpose.msra.mxu0 0
  %3135 = vmatprep.subr.bf16.mxu0 0
  %3136 = vmatpush1.bf16.xpose.msra.mxu0 0
  %3137 = vmatprep.subr.bf16.mxu0 0
  %3138 = vmatpush1.bf16.xpose.msra.mxu0 0
  %3139 = vmatprep.subr.bf16.mxu0 0
  %3140 = vmatpush1.bf16.xpose.msra.mxu0 0
  %3141 = vmatprep.subr.bf16.mxu0 0
  %3142 = vmatpush1.bf16.xpose.msra.mxu0 0
  %3143 = vmatprep.subr.bf16.mxu0 0
  %3144 = vmatpush1.bf16.xpose.msra.mxu0 0
  %3145 = vmatprep.subr.bf16.mxu0 0
  %3146 = vmatpush1.bf16.xpose.msra.mxu0 0
  %3147 = vmatprep.subr.bf16.mxu0 0
  %3148 = vmatpush1.bf16.xpose.msra.mxu0 0
  %3149 = vmatprep.subr.bf16.mxu0 0
  %3150 = vmatpush1.bf16.xpose.msra.mxu0 0
  %3151 = vmatprep.mubr.bf16.mxu0 0
  %3152 = vmatmul.mubr.bf16.gmra.mrb[0].mxu0 %v3114
  %v3153 = vpop.f32.mrb[0].mxu0
  %v3154 = vadd.f32 0.0, %v3153
  %v3155 = vpop.f32.mrb[0].mxu0
  %v3156 = vpop.f32.mrb[0].mxu0
  %v3157 = vadd.f32 0.0, %v3156
  %v3158 = vpop.f32.mrb[0].mxu0
  %3159 = vdwg.mxu0
  %v3160 = vsel %vm1329, %v2389, -inf
  %3161 = vmax.xlane.f32.xlu0 %v3160
  %v3162 = vpop.xlane.xlu0 %3161
  %v3163 = vsel %vm1329, %v2392, -inf
  %3164 = vmax.xlane.f32.xlu0 %v3163
  %v3165 = vpop.xlane.xlu0 %3164
  %v3166 = vsel %vm1329, %v2440, -inf
  %3167 = vmax.xlane.f32.xlu0 %v3166
  %v3168 = vpop.xlane.xlu0 %3167
  %v3169 = vsel %vm1329, %v2443, -inf
  %3170 = vmax.xlane.f32.xlu0 %v3169
  %v3171 = vpop.xlane.xlu0 %3170
  %v3172 = vsel %vm1329, %v2491, -inf
  %3173 = vmax.xlane.f32.xlu0 %v3172
  %v3174 = vpop.xlane.xlu0 %3173
  %v3175 = vsel %vm1329, %v2494, -inf
  %3176 = vmax.xlane.f32.xlu0 %v3175
  %v3177 = vpop.xlane.xlu0 %3176
  %v3178 = vsel %vm1329, %v2542, -inf
  %3179 = vmax.xlane.f32.xlu0 %v3178
  %v3180 = vpop.xlane.xlu0 %3179
  %v3181 = vsel %vm1329, %v2545, -inf
  %3182 = vmax.xlane.f32.xlu0 %v3181
  %v3183 = vpop.xlane.xlu0 %3182
  %v3184 = vsel %vm1329, %v2593, -inf
  %3185 = vmax.xlane.f32.xlu0 %v3184
  %v3186 = vpop.xlane.xlu0 %3185
  %v3187 = vsel %vm1329, %v2596, -inf
  %3188 = vmax.xlane.f32.xlu0 %v3187
  %v3189 = vpop.xlane.xlu0 %3188
  %v3190 = vsel %vm1329, %v2644, -inf
  %3191 = vmax.xlane.f32.xlu0 %v3190
  %v3192 = vpop.xlane.xlu0 %3191
  %v3193 = vsel %vm1329, %v2647, -inf
  %3194 = vmax.xlane.f32.xlu0 %v3193
  %v3195 = vpop.xlane.xlu0 %3194
  %v3196 = vsel %vm1329, %v2695, -inf
  %3197 = vmax.xlane.f32.xlu0 %v3196
  %v3198 = vpop.xlane.xlu0 %3197
  %v3199 = vsel %vm1329, %v2698, -inf
  %3200 = vmax.xlane.f32.xlu0 %v3199
  %v3201 = vpop.xlane.xlu0 %3200
  %v3202 = vsel %vm1329, %v2746, -inf
  %3203 = vmax.xlane.f32.xlu0 %v3202
  %v3204 = vpop.xlane.xlu0 %3203
  %v3205 = vsel %vm1329, %v2749, -inf
  %3206 = vmax.xlane.f32.xlu0 %v3205
  %v3207 = vpop.xlane.xlu0 %3206
  %v3208 = vsub.f32 %v2389, %v3162
  %v3209 = vsub.f32 %v2392, %v3165
  %v3210 = vsub.f32 %v2440, %v3168
  %v3211 = vsub.f32 %v2443, %v3171
  %v3212 = vsub.f32 %v2491, %v3174
  %v3213 = vsub.f32 %v2494, %v3177
  %v3214 = vsub.f32 %v2542, %v3180
  %v3215 = vsub.f32 %v2545, %v3183
  %v3216 = vsub.f32 %v2593, %v3186
  %v3217 = vsub.f32 %v2596, %v3189
  %v3218 = vsub.f32 %v2644, %v3192
  %v3219 = vsub.f32 %v2647, %v3195
  %v3220 = vsub.f32 %v2695, %v3198
  %v3221 = vsub.f32 %v2698, %v3201
  %v3222 = vsub.f32 %v2746, %v3204
  %v3223 = vsub.f32 %v2749, %v3207
  %v3224 = vmul.f32 %v3208, 1.442695
  %v3225 = vpow.pop %v3224
  %v3226 = vmul.f32 %v3209, 1.442695
  %v3227 = vpow.pop %v3226
  %v3228 = vmul.f32 %v3210, 1.442695
  %v3229 = vpow.pop %v3228
  %v3230 = vmul.f32 %v3211, 1.442695
  %v3231 = vpow.pop %v3230
  %v3232 = vmul.f32 %v3212, 1.442695
  %v3233 = vpow.pop %v3232
  %v3234 = vmul.f32 %v3213, 1.442695
  %v3235 = vpow.pop %v3234
  %v3236 = vmul.f32 %v3214, 1.442695
  %v3237 = vpow.pop %v3236
  %v3238 = vmul.f32 %v3215, 1.442695
  %v3239 = vpow.pop %v3238
  %v3240 = vmul.f32 %v3216, 1.442695
  %v3241 = vpow.pop %v3240
  %v3242 = vmul.f32 %v3217, 1.442695
  %v3243 = vpow.pop %v3242
  %v3244 = vmul.f32 %v3218, 1.442695
  %v3245 = vpow.pop %v3244
  %v3246 = vmul.f32 %v3219, 1.442695
  %v3247 = vpow.pop %v3246
  %v3248 = vmul.f32 %v3220, 1.442695
  %v3249 = vpow.pop %v3248
  %v3250 = vmul.f32 %v3221, 1.442695
  %v3251 = vpow.pop %v3250
  %v3252 = vmul.f32 %v3222, 1.442695
  %v3253 = vpow.pop %v3252
  %v3254 = vmul.f32 %v3223, 1.442695
  %v3255 = vpow.pop %v3254
  %v3256 = vsel %vm1329, %v3225, 0.0
  %3257 = vadd.xlane.f32.xlu0 %v3256
  %v3258 = vpop.xlane.xlu0 %3257
  %v3259 = vsel %vm1329, %v3227, 0.0
  %3260 = vadd.xlane.f32.xlu0 %v3259
  %v3261 = vpop.xlane.xlu0 %3260
  %v3262 = vsel %vm1329, %v3229, 0.0
  %3263 = vadd.xlane.f32.xlu0 %v3262
  %v3264 = vpop.xlane.xlu0 %3263
  %v3265 = vsel %vm1329, %v3231, 0.0
  %3266 = vadd.xlane.f32.xlu0 %v3265
  %v3267 = vpop.xlane.xlu0 %3266
  %v3268 = vsel %vm1329, %v3233, 0.0
  %3269 = vadd.xlane.f32.xlu0 %v3268
  %v3270 = vpop.xlane.xlu0 %3269
  %v3271 = vsel %vm1329, %v3235, 0.0
  %3272 = vadd.xlane.f32.xlu0 %v3271
  %v3273 = vpop.xlane.xlu0 %3272
  %v3274 = vsel %vm1329, %v3237, 0.0
  %3275 = vadd.xlane.f32.xlu0 %v3274
  %v3276 = vpop.xlane.xlu0 %3275
  %v3277 = vsel %vm1329, %v3239, 0.0
  %3278 = vadd.xlane.f32.xlu0 %v3277
  %v3279 = vpop.xlane.xlu0 %3278
  %v3280 = vsel %vm1329, %v3241, 0.0
  %3281 = vadd.xlane.f32.xlu0 %v3280
  %v3282 = vpop.xlane.xlu0 %3281
  %v3283 = vsel %vm1329, %v3243, 0.0
  %3284 = vadd.xlane.f32.xlu0 %v3283
  %v3285 = vpop.xlane.xlu0 %3284
  %v3286 = vsel %vm1329, %v3245, 0.0
  %3287 = vadd.xlane.f32.xlu0 %v3286
  %v3288 = vpop.xlane.xlu0 %3287
  %v3289 = vsel %vm1329, %v3247, 0.0
  %3290 = vadd.xlane.f32.xlu0 %v3289
  %v3291 = vpop.xlane.xlu0 %3290
  %v3292 = vsel %vm1329, %v3249, 0.0
  %3293 = vadd.xlane.f32.xlu0 %v3292
  %v3294 = vpop.xlane.xlu0 %3293
  %v3295 = vsel %vm1329, %v3251, 0.0
  %3296 = vadd.xlane.f32.xlu0 %v3295
  %v3297 = vpop.xlane.xlu0 %3296
  %v3298 = vsel %vm1329, %v3253, 0.0
  %3299 = vadd.xlane.f32.xlu0 %v3298
  %v3300 = vpop.xlane.xlu0 %3299
  %v3301 = vsel %vm1329, %v3255, 0.0
  %3302 = vadd.xlane.f32.xlu0 %v3301
  %v3303 = vpop.xlane.xlu0 %3302
  %v3304 = vrcp.pop %v3258
  %v3305 = vmul.f32 %v3225, %v3304
  %v3306 = vrcp.pop %v3261
  %v3307 = vmul.f32 %v3227, %v3306
  %v3308 = vrcp.pop %v3264
  %v3309 = vmul.f32 %v3229, %v3308
  %v3310 = vrcp.pop %v3267
  %v3311 = vmul.f32 %v3231, %v3310
  %v3312 = vrcp.pop %v3270
  %v3313 = vmul.f32 %v3233, %v3312
  %v3314 = vrcp.pop %v3273
  %v3315 = vmul.f32 %v3235, %v3314
  %v3316 = vrcp.pop %v3276
  %v3317 = vmul.f32 %v3237, %v3316
  %v3318 = vrcp.pop %v3279
  %v3319 = vmul.f32 %v3239, %v3318
  %v3320 = vrcp.pop %v3282
  %v3321 = vmul.f32 %v3241, %v3320
  %v3322 = vrcp.pop %v3285
  %v3323 = vmul.f32 %v3243, %v3322
  %v3324 = vrcp.pop %v3288
  %v3325 = vmul.f32 %v3245, %v3324
  %v3326 = vrcp.pop %v3291
  %v3327 = vmul.f32 %v3247, %v3326
  %v3328 = vrcp.pop %v3294
  %v3329 = vmul.f32 %v3249, %v3328
  %v3330 = vrcp.pop %v3297
  %v3331 = vmul.f32 %v3251, %v3330
  %v3332 = vrcp.pop %v3300
  %v3333 = vmul.f32 %v3253, %v3332
  %v3334 = vrcp.pop %v3303
  %v3335 = vmul.f32 %v3255, %v3334
  %v3336 = vsel %vm1329, %v2797, -inf
  %3337 = vmax.xlane.f32.xlu0 %v3336
  %v3338 = vpop.xlane.xlu0 %3337
  %v3339 = vsel %vm1329, %v2800, -inf
  %3340 = vmax.xlane.f32.xlu0 %v3339
  %v3341 = vpop.xlane.xlu0 %3340
  %v3342 = vsel %vm1329, %v2848, -inf
  %3343 = vmax.xlane.f32.xlu0 %v3342
  %v3344 = vpop.xlane.xlu0 %3343
  %v3345 = vsel %vm1329, %v2851, -inf
  %3346 = vmax.xlane.f32.xlu0 %v3345
  %v3347 = vpop.xlane.xlu0 %3346
  %v3348 = vsel %vm1329, %v2899, -inf
  %3349 = vmax.xlane.f32.xlu0 %v3348
  %v3350 = vpop.xlane.xlu0 %3349
  %v3351 = vsel %vm1329, %v2902, -inf
  %3352 = vmax.xlane.f32.xlu0 %v3351
  %v3353 = vpop.xlane.xlu0 %3352
  %v3354 = vsel %vm1329, %v2950, -inf
  %3355 = vmax.xlane.f32.xlu0 %v3354
  %v3356 = vpop.xlane.xlu0 %3355
  %v3357 = vsel %vm1329, %v2953, -inf
  %3358 = vmax.xlane.f32.xlu0 %v3357
  %v3359 = vpop.xlane.xlu0 %3358
  %v3360 = vsel %vm1329, %v3001, -inf
  %3361 = vmax.xlane.f32.xlu0 %v3360
  %v3362 = vpop.xlane.xlu0 %3361
  %v3363 = vsel %vm1329, %v3004, -inf
  %3364 = vmax.xlane.f32.xlu0 %v3363
  %v3365 = vpop.xlane.xlu0 %3364
  %v3366 = vsel %vm1329, %v3052, -inf
  %3367 = vmax.xlane.f32.xlu0 %v3366
  %v3368 = vpop.xlane.xlu0 %3367
  %v3369 = vsel %vm1329, %v3055, -inf
  %3370 = vmax.xlane.f32.xlu0 %v3369
  %v3371 = vpop.xlane.xlu0 %3370
  %v3372 = vsel %vm1329, %v3103, -inf
  %3373 = vmax.xlane.f32.xlu0 %v3372
  %v3374 = vpop.xlane.xlu0 %3373
  %v3375 = vsel %vm1329, %v3106, -inf
  %3376 = vmax.xlane.f32.xlu0 %v3375
  %v3377 = vpop.xlane.xlu0 %3376
  %v3378 = vsel %vm1329, %v3154, -inf
  %3379 = vmax.xlane.f32.xlu0 %v3378
  %v3380 = vpop.xlane.xlu0 %3379
  %v3381 = vsel %vm1329, %v3157, -inf
  %3382 = vmax.xlane.f32.xlu0 %v3381
  %v3383 = vpop.xlane.xlu0 %3382
  %v3384 = vsub.f32 %v2797, %v3338
  %v3385 = vsub.f32 %v2800, %v3341
  %v3386 = vsub.f32 %v2848, %v3344
  %v3387 = vsub.f32 %v2851, %v3347
  %v3388 = vsub.f32 %v2899, %v3350
  %v3389 = vsub.f32 %v2902, %v3353
  %v3390 = vsub.f32 %v2950, %v3356
  %v3391 = vsub.f32 %v2953, %v3359
  %v3392 = vsub.f32 %v3001, %v3362
  %v3393 = vsub.f32 %v3004, %v3365
  %v3394 = vsub.f32 %v3052, %v3368
  %v3395 = vsub.f32 %v3055, %v3371
  %v3396 = vsub.f32 %v3103, %v3374
  %v3397 = vsub.f32 %v3106, %v3377
  %v3398 = vsub.f32 %v3154, %v3380
  %v3399 = vsub.f32 %v3157, %v3383
  %v3400 = vmul.f32 %v3384, 1.442695
  %v3401 = vpow.pop %v3400
  %v3402 = vmul.f32 %v3385, 1.442695
  %v3403 = vpow.pop %v3402
  %v3404 = vmul.f32 %v3386, 1.442695
  %v3405 = vpow.pop %v3404
  %v3406 = vmul.f32 %v3387, 1.442695
  %v3407 = vpow.pop %v3406
  %v3408 = vmul.f32 %v3388, 1.442695
  %v3409 = vpow.pop %v3408
  %v3410 = vmul.f32 %v3389, 1.442695
  %v3411 = vpow.pop %v3410
  %v3412 = vmul.f32 %v3390, 1.442695
  %v3413 = vpow.pop %v3412
  %v3414 = vmul.f32 %v3391, 1.442695
  %v3415 = vpow.pop %v3414
  %v3416 = vmul.f32 %v3392, 1.442695
  %v3417 = vpow.pop %v3416
  %v3418 = vmul.f32 %v3393, 1.442695
  %v3419 = vpow.pop %v3418
  %v3420 = vmul.f32 %v3394, 1.442695
  %v3421 = vpow.pop %v3420
  %v3422 = vmul.f32 %v3395, 1.442695
  %v3423 = vpow.pop %v3422
  %v3424 = vmul.f32 %v3396, 1.442695
  %v3425 = vpow.pop %v3424
  %v3426 = vmul.f32 %v3397, 1.442695
  %v3427 = vpow.pop %v3426
  %v3428 = vmul.f32 %v3398, 1.442695
  %v3429 = vpow.pop %v3428
  %v3430 = vmul.f32 %v3399, 1.442695
  %v3431 = vpow.pop %v3430
  %v3432 = vsel %vm1329, %v3401, 0.0
  %3433 = vadd.xlane.f32.xlu0 %v3432
  %v3434 = vpop.xlane.xlu0 %3433
  %v3435 = vsel %vm1329, %v3403, 0.0
  %3436 = vadd.xlane.f32.xlu0 %v3435
  %v3437 = vpop.xlane.xlu0 %3436
  %v3438 = vsel %vm1329, %v3405, 0.0
  %3439 = vadd.xlane.f32.xlu0 %v3438
  %v3440 = vpop.xlane.xlu0 %3439
  %v3441 = vsel %vm1329, %v3407, 0.0
  %3442 = vadd.xlane.f32.xlu0 %v3441
  %v3443 = vpop.xlane.xlu0 %3442
  %v3444 = vsel %vm1329, %v3409, 0.0
  %3445 = vadd.xlane.f32.xlu0 %v3444
  %v3446 = vpop.xlane.xlu0 %3445
  %v3447 = vsel %vm1329, %v3411, 0.0
  %3448 = vadd.xlane.f32.xlu0 %v3447
  %v3449 = vpop.xlane.xlu0 %3448
  %v3450 = vsel %vm1329, %v3413, 0.0
  %3451 = vadd.xlane.f32.xlu0 %v3450
  %v3452 = vpop.xlane.xlu0 %3451
  %v3453 = vsel %vm1329, %v3415, 0.0
  %3454 = vadd.xlane.f32.xlu0 %v3453
  %v3455 = vpop.xlane.xlu0 %3454
  %v3456 = vsel %vm1329, %v3417, 0.0
  %3457 = vadd.xlane.f32.xlu0 %v3456
  %v3458 = vpop.xlane.xlu0 %3457
  %v3459 = vsel %vm1329, %v3419, 0.0
  %3460 = vadd.xlane.f32.xlu0 %v3459
  %v3461 = vpop.xlane.xlu0 %3460
  %v3462 = vsel %vm1329, %v3421, 0.0
  %3463 = vadd.xlane.f32.xlu0 %v3462
  %v3464 = vpop.xlane.xlu0 %3463
  %v3465 = vsel %vm1329, %v3423, 0.0
  %3466 = vadd.xlane.f32.xlu0 %v3465
  %v3467 = vpop.xlane.xlu0 %3466
  %v3468 = vsel %vm1329, %v3425, 0.0
  %3469 = vadd.xlane.f32.xlu0 %v3468
  %v3470 = vpop.xlane.xlu0 %3469
  %v3471 = vsel %vm1329, %v3427, 0.0
  %3472 = vadd.xlane.f32.xlu0 %v3471
  %v3473 = vpop.xlane.xlu0 %3472
  %v3474 = vsel %vm1329, %v3429, 0.0
  %3475 = vadd.xlane.f32.xlu0 %v3474
  %v3476 = vpop.xlane.xlu0 %3475
  %v3477 = vsel %vm1329, %v3431, 0.0
  %3478 = vadd.xlane.f32.xlu0 %v3477
  %v3479 = vpop.xlane.xlu0 %3478
  %v3480 = vrcp.pop %v3434
  %v3481 = vmul.f32 %v3401, %v3480
  %v3482 = vrcp.pop %v3437
  %v3483 = vmul.f32 %v3403, %v3482
  %v3484 = vrcp.pop %v3440
  %v3485 = vmul.f32 %v3405, %v3484
  %v3486 = vrcp.pop %v3443
  %v3487 = vmul.f32 %v3407, %v3486
  %v3488 = vrcp.pop %v3446
  %v3489 = vmul.f32 %v3409, %v3488
  %v3490 = vrcp.pop %v3449
  %v3491 = vmul.f32 %v3411, %v3490
  %v3492 = vrcp.pop %v3452
  %v3493 = vmul.f32 %v3413, %v3492
  %v3494 = vrcp.pop %v3455
  %v3495 = vmul.f32 %v3415, %v3494
  %v3496 = vrcp.pop %v3458
  %v3497 = vmul.f32 %v3417, %v3496
  %v3498 = vrcp.pop %v3461
  %v3499 = vmul.f32 %v3419, %v3498
  %v3500 = vrcp.pop %v3464
  %v3501 = vmul.f32 %v3421, %v3500
  %v3502 = vrcp.pop %v3467
  %v3503 = vmul.f32 %v3423, %v3502
  %v3504 = vrcp.pop %v3470
  %v3505 = vmul.f32 %v3425, %v3504
  %v3506 = vrcp.pop %v3473
  %v3507 = vmul.f32 %v3427, %v3506
  %v3508 = vrcp.pop %v3476
  %v3509 = vmul.f32 %v3429, %v3508
  %v3510 = vrcp.pop %v3479
  %v3511 = vmul.f32 %v3431, %v3510
  %v3512 = vmul.f32 %v1682, %v3481
  %v3513 = vmul.f32 %v1682, %v3483
  %v3514 = vmul.f32 %v1682, %v3485
  %v3515 = vmul.f32 %v1682, %v3487
  %v3516 = vmul.f32 %v1682, %v3489
  %v3517 = vmul.f32 %v1682, %v3491
  %v3518 = vmul.f32 %v1682, %v3493
  %v3519 = vmul.f32 %v1682, %v3495
  %v3520 = vmul.f32 %v1682, %v3497
  %v3521 = vmul.f32 %v1682, %v3499
  %v3522 = vmul.f32 %v1682, %v3501
  %v3523 = vmul.f32 %v1682, %v3503
  %v3524 = vmul.f32 %v1682, %v3505
  %v3525 = vmul.f32 %v1682, %v3507
  %v3526 = vmul.f32 %v1682, %v3509
  %v3527 = vmul.f32 %v1682, %v3511
  %v3528 = vsub.f32 %v3305, %v3512
  %v3529 = vsub.f32 %v3307, %v3513
  %v3530 = vsub.f32 %v3309, %v3514
  %v3531 = vsub.f32 %v3311, %v3515
  %v3532 = vsub.f32 %v3313, %v3516
  %v3533 = vsub.f32 %v3315, %v3517
  %v3534 = vsub.f32 %v3317, %v3518
  %v3535 = vsub.f32 %v3319, %v3519
  %v3536 = vsub.f32 %v3321, %v3520
  %v3537 = vsub.f32 %v3323, %v3521
  %v3538 = vsub.f32 %v3325, %v3522
  %v3539 = vsub.f32 %v3327, %v3523
  %v3540 = vsub.f32 %v3329, %v3524
  %v3541 = vsub.f32 %v3331, %v3525
  %v3542 = vsub.f32 %v3333, %v3526
  %v3543 = vsub.f32 %v3335, %v3527
  %v3544 = vpack.c.bf16 %v3529, %v3528
  %v3545 = vpack.c.bf16 %v3531, %v3530
  %v3546 = vpack.c.bf16 %v3533, %v3532
  %v3547 = vpack.c.bf16 %v3535, %v3534
  %v3548 = vpack.c.bf16 %v3537, %v3536
  %v3549 = vpack.c.bf16 %v3539, %v3538
  %v3550 = vpack.c.bf16 %v3541, %v3540
  %v3551 = vpack.c.bf16 %v3543, %v3542
  %3553 = vrot.lane.b32.xlu0 %v512, 112
  %v3554 = vpop.permute.xlu0 %3553
  %v3557 = vsel %vm1329, %v3544, 0
  %3559 = vmatprep.subr.bf16.mxu0 0
  %3560 = vmatpush1.bf16.msra.mxu0 %v3554
  %3561 = vmatprep.subr.bf16.mxu0 0
  %3562 = vmatpush1.bf16.msra.mxu0 0
  %3563 = vmatprep.subr.bf16.mxu0 0
  %3564 = vmatpush1.bf16.msra.mxu0 0
  %3565 = vmatprep.subr.bf16.mxu0 0
  %3566 = vmatpush1.bf16.msra.mxu0 0
  %3567 = vmatprep.subr.bf16.mxu0 0
  %3568 = vmatpush1.bf16.msra.mxu0 0
  %3569 = vmatprep.subr.bf16.mxu0 0
  %3570 = vmatpush1.bf16.msra.mxu0 0
  %3571 = vmatprep.subr.bf16.mxu0 0
  %3572 = vmatpush1.bf16.msra.mxu0 0
  %3573 = vmatprep.subr.bf16.mxu0 0
  %3574 = vmatpush1.bf16.msra.mxu0 0
  %3575 = vmatprep.subr.bf16.mxu0 0
  %3576 = vmatpush1.bf16.msra.mxu0 0
  %3577 = vmatprep.subr.bf16.mxu0 0
  %3578 = vmatpush1.bf16.msra.mxu0 0
  %3579 = vmatprep.subr.bf16.mxu0 0
  %3580 = vmatpush1.bf16.msra.mxu0 0
  %3581 = vmatprep.subr.bf16.mxu0 0
  %3582 = vmatpush1.bf16.msra.mxu0 0
  %3583 = vmatprep.subr.bf16.mxu0 0
  %3584 = vmatpush1.bf16.msra.mxu0 0
  %3585 = vmatprep.subr.bf16.mxu0 0
  %3586 = vmatpush1.bf16.msra.mxu0 0
  %3587 = vmatprep.subr.bf16.mxu0 0
  %3588 = vmatpush1.bf16.msra.mxu0 0
  %3589 = vmatprep.subr.bf16.mxu0 0
  %3590 = vmatpush1.bf16.msra.mxu0 0
  %3591 = vmatprep.mubr.bf16.mxu0 0
  %3592 = vmatmul.mubr.bf16.gmra.mrb[0].mxu0 %v3557
  %v3593 = vpop.f32.mrb[0].mxu0
  %v3594 = vadd.f32 0.0, %v3593
  %v3595 = vpop.f32.mrb[0].mxu0
  %v3596 = vpop.f32.mrb[0].mxu0
  %v3597 = vadd.f32 0.0, %v3596
  %v3598 = vpop.f32.mrb[0].mxu0
  %3599 = vdwg.mxu0
  %3601 = vrot.lane.b32.xlu0 %v513, 112
  %v3602 = vpop.permute.xlu0 %3601
  %v3605 = vsel %vm1329, %v3545, 0
  %3607 = vmatprep.subr.bf16.mxu0 0
  %3608 = vmatpush1.bf16.msra.mxu0 %v3602
  %3609 = vmatprep.subr.bf16.mxu0 0
  %3610 = vmatpush1.bf16.msra.mxu0 0
  %3611 = vmatprep.subr.bf16.mxu0 0
  %3612 = vmatpush1.bf16.msra.mxu0 0
  %3613 = vmatprep.subr.bf16.mxu0 0
  %3614 = vmatpush1.bf16.msra.mxu0 0
  %3615 = vmatprep.subr.bf16.mxu0 0
  %3616 = vmatpush1.bf16.msra.mxu0 0
  %3617 = vmatprep.subr.bf16.mxu0 0
  %3618 = vmatpush1.bf16.msra.mxu0 0
  %3619 = vmatprep.subr.bf16.mxu0 0
  %3620 = vmatpush1.bf16.msra.mxu0 0
  %3621 = vmatprep.subr.bf16.mxu0 0
  %3622 = vmatpush1.bf16.msra.mxu0 0
  %3623 = vmatprep.subr.bf16.mxu0 0
  %3624 = vmatpush1.bf16.msra.mxu0 0
  %3625 = vmatprep.subr.bf16.mxu0 0
  %3626 = vmatpush1.bf16.msra.mxu0 0
  %3627 = vmatprep.subr.bf16.mxu0 0
  %3628 = vmatpush1.bf16.msra.mxu0 0
  %3629 = vmatprep.subr.bf16.mxu0 0
  %3630 = vmatpush1.bf16.msra.mxu0 0
  %3631 = vmatprep.subr.bf16.mxu0 0
  %3632 = vmatpush1.bf16.msra.mxu0 0
  %3633 = vmatprep.subr.bf16.mxu0 0
  %3634 = vmatpush1.bf16.msra.mxu0 0
  %3635 = vmatprep.subr.bf16.mxu0 0
  %3636 = vmatpush1.bf16.msra.mxu0 0
  %3637 = vmatprep.subr.bf16.mxu0 0
  %3638 = vmatpush1.bf16.msra.mxu0 0
  %3639 = vmatprep.mubr.bf16.mxu0 0
  %3640 = vmatmul.mubr.bf16.gmra.mrb[0].mxu0 %v3605
  %v3641 = vpop.f32.mrb[0].mxu0
  %v3642 = vadd.f32 0.0, %v3641
  %v3643 = vpop.f32.mrb[0].mxu0
  %v3644 = vpop.f32.mrb[0].mxu0
  %v3645 = vadd.f32 0.0, %v3644
  %v3646 = vpop.f32.mrb[0].mxu0
  %3647 = vdwg.mxu0
  %3649 = vrot.lane.b32.xlu0 %v514, 112
  %v3650 = vpop.permute.xlu0 %3649
  %v3653 = vsel %vm1329, %v3546, 0
  %3655 = vmatprep.subr.bf16.mxu0 0
  %3656 = vmatpush1.bf16.msra.mxu0 %v3650
  %3657 = vmatprep.subr.bf16.mxu0 0
  %3658 = vmatpush1.bf16.msra.mxu0 0
  %3659 = vmatprep.subr.bf16.mxu0 0
  %3660 = vmatpush1.bf16.msra.mxu0 0
  %3661 = vmatprep.subr.bf16.mxu0 0
  %3662 = vmatpush1.bf16.msra.mxu0 0
  %3663 = vmatprep.subr.bf16.mxu0 0
  %3664 = vmatpush1.bf16.msra.mxu0 0
  %3665 = vmatprep.subr.bf16.mxu0 0
  %3666 = vmatpush1.bf16.msra.mxu0 0
  %3667 = vmatprep.subr.bf16.mxu0 0
  %3668 = vmatpush1.bf16.msra.mxu0 0
  %3669 = vmatprep.subr.bf16.mxu0 0
  %3670 = vmatpush1.bf16.msra.mxu0 0
  %3671 = vmatprep.subr.bf16.mxu0 0
  %3672 = vmatpush1.bf16.msra.mxu0 0
  %3673 = vmatprep.subr.bf16.mxu0 0
  %3674 = vmatpush1.bf16.msra.mxu0 0
  %3675 = vmatprep.subr.bf16.mxu0 0
  %3676 = vmatpush1.bf16.msra.mxu0 0
  %3677 = vmatprep.subr.bf16.mxu0 0
  %3678 = vmatpush1.bf16.msra.mxu0 0
  %3679 = vmatprep.subr.bf16.mxu0 0
  %3680 = vmatpush1.bf16.msra.mxu0 0
  %3681 = vmatprep.subr.bf16.mxu0 0
  %3682 = vmatpush1.bf16.msra.mxu0 0
  %3683 = vmatprep.subr.bf16.mxu0 0
  %3684 = vmatpush1.bf16.msra.mxu0 0
  %3685 = vmatprep.subr.bf16.mxu0 0
  %3686 = vmatpush1.bf16.msra.mxu0 0
  %3687 = vmatprep.mubr.bf16.mxu0 0
  %3688 = vmatmul.mubr.bf16.gmra.mrb[0].mxu0 %v3653
  %v3689 = vpop.f32.mrb[0].mxu0
  %v3690 = vadd.f32 0.0, %v3689
  %v3691 = vpop.f32.mrb[0].mxu0
  %v3692 = vpop.f32.mrb[0].mxu0
  %v3693 = vadd.f32 0.0, %v3692
  %v3694 = vpop.f32.mrb[0].mxu0
  %3695 = vdwg.mxu0
  %3697 = vrot.lane.b32.xlu0 %v515, 112
  %v3698 = vpop.permute.xlu0 %3697
  %v3701 = vsel %vm1329, %v3547, 0
  %3703 = vmatprep.subr.bf16.mxu0 0
  %3704 = vmatpush1.bf16.msra.mxu0 %v3698
  %3705 = vmatprep.subr.bf16.mxu0 0
  %3706 = vmatpush1.bf16.msra.mxu0 0
  %3707 = vmatprep.subr.bf16.mxu0 0
  %3708 = vmatpush1.bf16.msra.mxu0 0
  %3709 = vmatprep.subr.bf16.mxu0 0
  %3710 = vmatpush1.bf16.msra.mxu0 0
  %3711 = vmatprep.subr.bf16.mxu0 0
  %3712 = vmatpush1.bf16.msra.mxu0 0
  %3713 = vmatprep.subr.bf16.mxu0 0
  %3714 = vmatpush1.bf16.msra.mxu0 0
  %3715 = vmatprep.subr.bf16.mxu0 0
  %3716 = vmatpush1.bf16.msra.mxu0 0
  %3717 = vmatprep.subr.bf16.mxu0 0
  %3718 = vmatpush1.bf16.msra.mxu0 0
  %3719 = vmatprep.subr.bf16.mxu0 0
  %3720 = vmatpush1.bf16.msra.mxu0 0
  %3721 = vmatprep.subr.bf16.mxu0 0
  %3722 = vmatpush1.bf16.msra.mxu0 0
  %3723 = vmatprep.subr.bf16.mxu0 0
  %3724 = vmatpush1.bf16.msra.mxu0 0
  %3725 = vmatprep.subr.bf16.mxu0 0
  %3726 = vmatpush1.bf16.msra.mxu0 0
  %3727 = vmatprep.subr.bf16.mxu0 0
  %3728 = vmatpush1.bf16.msra.mxu0 0
  %3729 = vmatprep.subr.bf16.mxu0 0
  %3730 = vmatpush1.bf16.msra.mxu0 0
  %3731 = vmatprep.subr.bf16.mxu0 0
  %3732 = vmatpush1.bf16.msra.mxu0 0
  %3733 = vmatprep.subr.bf16.mxu0 0
  %3734 = vmatpush1.bf16.msra.mxu0 0
  %3735 = vmatprep.mubr.bf16.mxu0 0
  %3736 = vmatmul.mubr.bf16.gmra.mrb[0].mxu0 %v3701
  %v3737 = vpop.f32.mrb[0].mxu0
  %v3738 = vadd.f32 0.0, %v3737
  %v3739 = vpop.f32.mrb[0].mxu0
  %v3740 = vpop.f32.mrb[0].mxu0
  %v3741 = vadd.f32 0.0, %v3740
  %v3742 = vpop.f32.mrb[0].mxu0
  %3743 = vdwg.mxu0
  %3745 = vrot.lane.b32.xlu0 %v516, 112
  %v3746 = vpop.permute.xlu0 %3745
  %v3749 = vsel %vm1329, %v3548, 0
  %3751 = vmatprep.subr.bf16.mxu0 0
  %3752 = vmatpush1.bf16.msra.mxu0 %v3746
  %3753 = vmatprep.subr.bf16.mxu0 0
  %3754 = vmatpush1.bf16.msra.mxu0 0
  %3755 = vmatprep.subr.bf16.mxu0 0
  %3756 = vmatpush1.bf16.msra.mxu0 0
  %3757 = vmatprep.subr.bf16.mxu0 0
  %3758 = vmatpush1.bf16.msra.mxu0 0
  %3759 = vmatprep.subr.bf16.mxu0 0
  %3760 = vmatpush1.bf16.msra.mxu0 0
  %3761 = vmatprep.subr.bf16.mxu0 0
  %3762 = vmatpush1.bf16.msra.mxu0 0
  %3763 = vmatprep.subr.bf16.mxu0 0
  %3764 = vmatpush1.bf16.msra.mxu0 0
  %3765 = vmatprep.subr.bf16.mxu0 0
  %3766 = vmatpush1.bf16.msra.mxu0 0
  %3767 = vmatprep.subr.bf16.mxu0 0
  %3768 = vmatpush1.bf16.msra.mxu0 0
  %3769 = vmatprep.subr.bf16.mxu0 0
  %3770 = vmatpush1.bf16.msra.mxu0 0
  %3771 = vmatprep.subr.bf16.mxu0 0
  %3772 = vmatpush1.bf16.msra.mxu0 0
  %3773 = vmatprep.subr.bf16.mxu0 0
  %3774 = vmatpush1.bf16.msra.mxu0 0
  %3775 = vmatprep.subr.bf16.mxu0 0
  %3776 = vmatpush1.bf16.msra.mxu0 0
  %3777 = vmatprep.subr.bf16.mxu0 0
  %3778 = vmatpush1.bf16.msra.mxu0 0
  %3779 = vmatprep.subr.bf16.mxu0 0
  %3780 = vmatpush1.bf16.msra.mxu0 0
  %3781 = vmatprep.subr.bf16.mxu0 0
  %3782 = vmatpush1.bf16.msra.mxu0 0
  %3783 = vmatprep.mubr.bf16.mxu0 0
  %3784 = vmatmul.mubr.bf16.gmra.mrb[0].mxu0 %v3749
  %v3785 = vpop.f32.mrb[0].mxu0
  %v3786 = vadd.f32 0.0, %v3785
  %v3787 = vpop.f32.mrb[0].mxu0
  %v3788 = vpop.f32.mrb[0].mxu0
  %v3789 = vadd.f32 0.0, %v3788
  %v3790 = vpop.f32.mrb[0].mxu0
  %3791 = vdwg.mxu0
  %3793 = vrot.lane.b32.xlu0 %v517, 112
  %v3794 = vpop.permute.xlu0 %3793
  %v3797 = vsel %vm1329, %v3549, 0
  %3799 = vmatprep.subr.bf16.mxu0 0
  %3800 = vmatpush1.bf16.msra.mxu0 %v3794
  %3801 = vmatprep.subr.bf16.mxu0 0
  %3802 = vmatpush1.bf16.msra.mxu0 0
  %3803 = vmatprep.subr.bf16.mxu0 0
  %3804 = vmatpush1.bf16.msra.mxu0 0
  %3805 = vmatprep.subr.bf16.mxu0 0
  %3806 = vmatpush1.bf16.msra.mxu0 0
  %3807 = vmatprep.subr.bf16.mxu0 0
  %3808 = vmatpush1.bf16.msra.mxu0 0
  %3809 = vmatprep.subr.bf16.mxu0 0
  %3810 = vmatpush1.bf16.msra.mxu0 0
  %3811 = vmatprep.subr.bf16.mxu0 0
  %3812 = vmatpush1.bf16.msra.mxu0 0
  %3813 = vmatprep.subr.bf16.mxu0 0
  %3814 = vmatpush1.bf16.msra.mxu0 0
  %3815 = vmatprep.subr.bf16.mxu0 0
  %3816 = vmatpush1.bf16.msra.mxu0 0
  %3817 = vmatprep.subr.bf16.mxu0 0
  %3818 = vmatpush1.bf16.msra.mxu0 0
  %3819 = vmatprep.subr.bf16.mxu0 0
  %3820 = vmatpush1.bf16.msra.mxu0 0
  %3821 = vmatprep.subr.bf16.mxu0 0
  %3822 = vmatpush1.bf16.msra.mxu0 0
  %3823 = vmatprep.subr.bf16.mxu0 0
  %3824 = vmatpush1.bf16.msra.mxu0 0
  %3825 = vmatprep.subr.bf16.mxu0 0
  %3826 = vmatpush1.bf16.msra.mxu0 0
  %3827 = vmatprep.subr.bf16.mxu0 0
  %3828 = vmatpush1.bf16.msra.mxu0 0
  %3829 = vmatprep.subr.bf16.mxu0 0
  %3830 = vmatpush1.bf16.msra.mxu0 0
  %3831 = vmatprep.mubr.bf16.mxu0 0
  %3832 = vmatmul.mubr.bf16.gmra.mrb[0].mxu0 %v3797
  %v3833 = vpop.f32.mrb[0].mxu0
  %v3834 = vadd.f32 0.0, %v3833
  %v3835 = vpop.f32.mrb[0].mxu0
  %v3836 = vpop.f32.mrb[0].mxu0
  %v3837 = vadd.f32 0.0, %v3836
  %v3838 = vpop.f32.mrb[0].mxu0
  %3839 = vdwg.mxu0
  %3841 = vrot.lane.b32.xlu0 %v518, 112
  %v3842 = vpop.permute.xlu0 %3841
  %v3845 = vsel %vm1329, %v3550, 0
  %3847 = vmatprep.subr.bf16.mxu0 0
  %3848 = vmatpush1.bf16.msra.mxu0 %v3842
  %3849 = vmatprep.subr.bf16.mxu0 0
  %3850 = vmatpush1.bf16.msra.mxu0 0
  %3851 = vmatprep.subr.bf16.mxu0 0
  %3852 = vmatpush1.bf16.msra.mxu0 0
  %3853 = vmatprep.subr.bf16.mxu0 0
  %3854 = vmatpush1.bf16.msra.mxu0 0
  %3855 = vmatprep.subr.bf16.mxu0 0
  %3856 = vmatpush1.bf16.msra.mxu0 0
  %3857 = vmatprep.subr.bf16.mxu0 0
  %3858 = vmatpush1.bf16.msra.mxu0 0
  %3859 = vmatprep.subr.bf16.mxu0 0
  %3860 = vmatpush1.bf16.msra.mxu0 0
  %3861 = vmatprep.subr.bf16.mxu0 0
  %3862 = vmatpush1.bf16.msra.mxu0 0
  %3863 = vmatprep.subr.bf16.mxu0 0
  %3864 = vmatpush1.bf16.msra.mxu0 0
  %3865 = vmatprep.subr.bf16.mxu0 0
  %3866 = vmatpush1.bf16.msra.mxu0 0
  %3867 = vmatprep.subr.bf16.mxu0 0
  %3868 = vmatpush1.bf16.msra.mxu0 0
  %3869 = vmatprep.subr.bf16.mxu0 0
  %3870 = vmatpush1.bf16.msra.mxu0 0
  %3871 = vmatprep.subr.bf16.mxu0 0
  %3872 = vmatpush1.bf16.msra.mxu0 0
  %3873 = vmatprep.subr.bf16.mxu0 0
  %3874 = vmatpush1.bf16.msra.mxu0 0
  %3875 = vmatprep.subr.bf16.mxu0 0
  %3876 = vmatpush1.bf16.msra.mxu0 0
  %3877 = vmatprep.subr.bf16.mxu0 0
  %3878 = vmatpush1.bf16.msra.mxu0 0
  %3879 = vmatprep.mubr.bf16.mxu0 0
  %3880 = vmatmul.mubr.bf16.gmra.mrb[0].mxu0 %v3845
  %v3881 = vpop.f32.mrb[0].mxu0
  %v3882 = vadd.f32 0.0, %v3881
  %v3883 = vpop.f32.mrb[0].mxu0
  %v3884 = vpop.f32.mrb[0].mxu0
  %v3885 = vadd.f32 0.0, %v3884
  %v3886 = vpop.f32.mrb[0].mxu0
  %3887 = vdwg.mxu0
  %3889 = vrot.lane.b32.xlu0 %v519, 112
  %v3890 = vpop.permute.xlu0 %3889
  %v3893 = vsel %vm1329, %v3551, 0
  %3895 = vmatprep.subr.bf16.mxu0 0
  %3896 = vmatpush1.bf16.msra.mxu0 %v3890
  %3897 = vmatprep.subr.bf16.mxu0 0
  %3898 = vmatpush1.bf16.msra.mxu0 0
  %3899 = vmatprep.subr.bf16.mxu0 0
  %3900 = vmatpush1.bf16.msra.mxu0 0
  %3901 = vmatprep.subr.bf16.mxu0 0
  %3902 = vmatpush1.bf16.msra.mxu0 0
  %3903 = vmatprep.subr.bf16.mxu0 0
  %3904 = vmatpush1.bf16.msra.mxu0 0
  %3905 = vmatprep.subr.bf16.mxu0 0
  %3906 = vmatpush1.bf16.msra.mxu0 0
  %3907 = vmatprep.subr.bf16.mxu0 0
  %3908 = vmatpush1.bf16.msra.mxu0 0
  %3909 = vmatprep.subr.bf16.mxu0 0
  %3910 = vmatpush1.bf16.msra.mxu0 0
  %3911 = vmatprep.subr.bf16.mxu0 0
  %3912 = vmatpush1.bf16.msra.mxu0 0
  %3913 = vmatprep.subr.bf16.mxu0 0
  %3914 = vmatpush1.bf16.msra.mxu0 0
  %3915 = vmatprep.subr.bf16.mxu0 0
  %3916 = vmatpush1.bf16.msra.mxu0 0
  %3917 = vmatprep.subr.bf16.mxu0 0
  %3918 = vmatpush1.bf16.msra.mxu0 0
  %3919 = vmatprep.subr.bf16.mxu0 0
  %3920 = vmatpush1.bf16.msra.mxu0 0
  %3921 = vmatprep.subr.bf16.mxu0 0
  %3922 = vmatpush1.bf16.msra.mxu0 0
  %3923 = vmatprep.subr.bf16.mxu0 0
  %3924 = vmatpush1.bf16.msra.mxu0 0
  %3925 = vmatprep.subr.bf16.mxu0 0
  %3926 = vmatpush1.bf16.msra.mxu0 0
  %3927 = vmatprep.mubr.bf16.mxu0 0
  %3928 = vmatmul.mubr.bf16.gmra.mrb[0].mxu0 %v3893
  %v3929 = vpop.f32.mrb[0].mxu0
  %v3930 = vadd.f32 0.0, %v3929
  %v3931 = vpop.f32.mrb[0].mxu0
  %v3932 = vpop.f32.mrb[0].mxu0
  %v3933 = vadd.f32 0.0, %v3932
  %v3934 = vpop.f32.mrb[0].mxu0
  %3935 = vdwg.mxu0
  %v3936 = vsel %vm1329, %v3594, 0.0
  %3937 = vadd.xlane.f32.xlu0 %v3936
  %v3938 = vpop.xlane.xlu0 %3937
  %v3939 = vsel %vm1329, %v3597, 0.0
  %3940 = vadd.xlane.f32.xlu0 %v3939
  %v3941 = vpop.xlane.xlu0 %3940
  %v3942 = vsel %vm1329, %v3642, 0.0
  %3943 = vadd.xlane.f32.xlu0 %v3942
  %v3944 = vpop.xlane.xlu0 %3943
  %v3945 = vsel %vm1329, %v3645, 0.0
  %3946 = vadd.xlane.f32.xlu0 %v3945
  %v3947 = vpop.xlane.xlu0 %3946
  %v3948 = vsel %vm1329, %v3690, 0.0
  %3949 = vadd.xlane.f32.xlu0 %v3948
  %v3950 = vpop.xlane.xlu0 %3949
  %v3951 = vsel %vm1329, %v3693, 0.0
  %3952 = vadd.xlane.f32.xlu0 %v3951
  %v3953 = vpop.xlane.xlu0 %3952
  %v3954 = vsel %vm1329, %v3738, 0.0
  %3955 = vadd.xlane.f32.xlu0 %v3954
  %v3956 = vpop.xlane.xlu0 %3955
  %v3957 = vsel %vm1329, %v3741, 0.0
  %3958 = vadd.xlane.f32.xlu0 %v3957
  %v3959 = vpop.xlane.xlu0 %3958
  %v3960 = vsel %vm1329, %v3786, 0.0
  %3961 = vadd.xlane.f32.xlu0 %v3960
  %v3962 = vpop.xlane.xlu0 %3961
  %v3963 = vsel %vm1329, %v3789, 0.0
  %3964 = vadd.xlane.f32.xlu0 %v3963
  %v3965 = vpop.xlane.xlu0 %3964
  %v3966 = vsel %vm1329, %v3834, 0.0
  %3967 = vadd.xlane.f32.xlu0 %v3966
  %v3968 = vpop.xlane.xlu0 %3967
  %v3969 = vsel %vm1329, %v3837, 0.0
  %3970 = vadd.xlane.f32.xlu0 %v3969
  %v3971 = vpop.xlane.xlu0 %3970
  %v3972 = vsel %vm1329, %v3882, 0.0
  %3973 = vadd.xlane.f32.xlu0 %v3972
  %v3974 = vpop.xlane.xlu0 %3973
  %v3975 = vsel %vm1329, %v3885, 0.0
  %3976 = vadd.xlane.f32.xlu0 %v3975
  %v3977 = vpop.xlane.xlu0 %3976
  %v3978 = vsel %vm1329, %v3930, 0.0
  %3979 = vadd.xlane.f32.xlu0 %v3978
  %v3980 = vpop.xlane.xlu0 %3979
  %v3981 = vsel %vm1329, %v3933, 0.0
  %3982 = vadd.xlane.f32.xlu0 %v3981
  %v3983 = vpop.xlane.xlu0 %3982
  %v3984 = vmul.f32 %v3938, %v2123
  %v3985 = vmul.f32 %v3941, %v2123
  %v3986 = vmul.f32 %v3944, %v2123
  %v3987 = vmul.f32 %v3947, %v2123
  %v3988 = vmul.f32 %v3950, %v2123
  %v3989 = vmul.f32 %v3953, %v2123
  %v3990 = vmul.f32 %v3956, %v2123
  %v3991 = vmul.f32 %v3959, %v2123
  %v3992 = vmul.f32 %v3962, %v2123
  %v3993 = vmul.f32 %v3965, %v2123
  %v3994 = vmul.f32 %v3968, %v2123
  %v3995 = vmul.f32 %v3971, %v2123
  %v3996 = vmul.f32 %v3974, %v2123
  %v3997 = vmul.f32 %v3977, %v2123
  %v3998 = vmul.f32 %v3980, %v2123
  %v3999 = vmul.f32 %v3983, %v2123
  %v4000 = vsub.f32 %v3594, %v3984
  %v4001 = vsub.f32 %v3597, %v3985
  %v4002 = vsub.f32 %v3642, %v3986
  %v4003 = vsub.f32 %v3645, %v3987
  %v4004 = vsub.f32 %v3690, %v3988
  %v4005 = vsub.f32 %v3693, %v3989
  %v4006 = vsub.f32 %v3738, %v3990
  %v4007 = vsub.f32 %v3741, %v3991
  %v4008 = vsub.f32 %v3786, %v3992
  %v4009 = vsub.f32 %v3789, %v3993
  %v4010 = vsub.f32 %v3834, %v3994
  %v4011 = vsub.f32 %v3837, %v3995
  %v4012 = vsub.f32 %v3882, %v3996
  %v4013 = vsub.f32 %v3885, %v3997
  %v4014 = vsub.f32 %v3930, %v3998
  %v4015 = vsub.f32 %v3933, %v3999
  %v4016 = vmul.f32 %v4000, %v4000
  %v4017 = vmul.f32 %v4001, %v4001
  %v4018 = vmul.f32 %v4002, %v4002
  %v4019 = vmul.f32 %v4003, %v4003
  %v4020 = vmul.f32 %v4004, %v4004
  %v4021 = vmul.f32 %v4005, %v4005
  %v4022 = vmul.f32 %v4006, %v4006
  %v4023 = vmul.f32 %v4007, %v4007
  %v4024 = vmul.f32 %v4008, %v4008
  %v4025 = vmul.f32 %v4009, %v4009
  %v4026 = vmul.f32 %v4010, %v4010
  %v4027 = vmul.f32 %v4011, %v4011
  %v4028 = vmul.f32 %v4012, %v4012
  %v4029 = vmul.f32 %v4013, %v4013
  %v4030 = vmul.f32 %v4014, %v4014
  %v4031 = vmul.f32 %v4015, %v4015
  %v4032 = vsel %vm1329, %v4016, 0.0
  %4033 = vadd.xlane.f32.xlu0 %v4032
  %v4034 = vpop.xlane.xlu0 %4033
  %v4035 = vsel %vm1329, %v4017, 0.0
  %4036 = vadd.xlane.f32.xlu0 %v4035
  %v4037 = vpop.xlane.xlu0 %4036
  %v4038 = vsel %vm1329, %v4018, 0.0
  %4039 = vadd.xlane.f32.xlu0 %v4038
  %v4040 = vpop.xlane.xlu0 %4039
  %v4041 = vsel %vm1329, %v4019, 0.0
  %4042 = vadd.xlane.f32.xlu0 %v4041
  %v4043 = vpop.xlane.xlu0 %4042
  %v4044 = vsel %vm1329, %v4020, 0.0
  %4045 = vadd.xlane.f32.xlu0 %v4044
  %v4046 = vpop.xlane.xlu0 %4045
  %v4047 = vsel %vm1329, %v4021, 0.0
  %4048 = vadd.xlane.f32.xlu0 %v4047
  %v4049 = vpop.xlane.xlu0 %4048
  %v4050 = vsel %vm1329, %v4022, 0.0
  %4051 = vadd.xlane.f32.xlu0 %v4050
  %v4052 = vpop.xlane.xlu0 %4051
  %v4053 = vsel %vm1329, %v4023, 0.0
  %4054 = vadd.xlane.f32.xlu0 %v4053
  %v4055 = vpop.xlane.xlu0 %4054
  %v4056 = vsel %vm1329, %v4024, 0.0
  %4057 = vadd.xlane.f32.xlu0 %v4056
  %v4058 = vpop.xlane.xlu0 %4057
  %v4059 = vsel %vm1329, %v4025, 0.0
  %4060 = vadd.xlane.f32.xlu0 %v4059
  %v4061 = vpop.xlane.xlu0 %4060
  %v4062 = vsel %vm1329, %v4026, 0.0
  %4063 = vadd.xlane.f32.xlu0 %v4062
  %v4064 = vpop.xlane.xlu0 %4063
  %v4065 = vsel %vm1329, %v4027, 0.0
  %4066 = vadd.xlane.f32.xlu0 %v4065
  %v4067 = vpop.xlane.xlu0 %4066
  %v4068 = vsel %vm1329, %v4028, 0.0
  %4069 = vadd.xlane.f32.xlu0 %v4068
  %v4070 = vpop.xlane.xlu0 %4069
  %v4071 = vsel %vm1329, %v4029, 0.0
  %4072 = vadd.xlane.f32.xlu0 %v4071
  %v4073 = vpop.xlane.xlu0 %4072
  %v4074 = vsel %vm1329, %v4030, 0.0
  %4075 = vadd.xlane.f32.xlu0 %v4074
  %v4076 = vpop.xlane.xlu0 %4075
  %v4077 = vsel %vm1329, %v4031, 0.0
  %4078 = vadd.xlane.f32.xlu0 %v4077
  %v4079 = vpop.xlane.xlu0 %4078
  %v4080 = vmul.f32 %v4034, %v2123
  %v4081 = vmul.f32 %v4037, %v2123
  %v4082 = vmul.f32 %v4040, %v2123
  %v4083 = vmul.f32 %v4043, %v2123
  %v4084 = vmul.f32 %v4046, %v2123
  %v4085 = vmul.f32 %v4049, %v2123
  %v4086 = vmul.f32 %v4052, %v2123
  %v4087 = vmul.f32 %v4055, %v2123
  %v4088 = vmul.f32 %v4058, %v2123
  %v4089 = vmul.f32 %v4061, %v2123
  %v4090 = vmul.f32 %v4064, %v2123
  %v4091 = vmul.f32 %v4067, %v2123
  %v4092 = vmul.f32 %v4070, %v2123
  %v4093 = vmul.f32 %v4073, %v2123
  %v4094 = vmul.f32 %v4076, %v2123
  %v4095 = vmul.f32 %v4079, %v2123
  %v4096 = vadd.f32 %v4080, 1e-05
  %v4097 = vadd.f32 %v4081, 1e-05
  %v4098 = vadd.f32 %v4082, 1e-05
  %v4099 = vadd.f32 %v4083, 1e-05
  %v4100 = vadd.f32 %v4084, 1e-05
  %v4101 = vadd.f32 %v4085, 1e-05
  %v4102 = vadd.f32 %v4086, 1e-05
  %v4103 = vadd.f32 %v4087, 1e-05
  %v4104 = vadd.f32 %v4088, 1e-05
  %v4105 = vadd.f32 %v4089, 1e-05
  %v4106 = vadd.f32 %v4090, 1e-05
  %v4107 = vadd.f32 %v4091, 1e-05
  %v4108 = vadd.f32 %v4092, 1e-05
  %v4109 = vadd.f32 %v4093, 1e-05
  %v4110 = vadd.f32 %v4094, 1e-05
  %v4111 = vadd.f32 %v4095, 1e-05
  %v4112 = vrsqrt.pop %v4096
  %v4113 = vrsqrt.pop %v4097
  %v4114 = vrsqrt.pop %v4098
  %v4115 = vrsqrt.pop %v4099
  %v4116 = vrsqrt.pop %v4100
  %v4117 = vrsqrt.pop %v4101
  %v4118 = vrsqrt.pop %v4102
  %v4119 = vrsqrt.pop %v4103
  %v4120 = vrsqrt.pop %v4104
  %v4121 = vrsqrt.pop %v4105
  %v4122 = vrsqrt.pop %v4106
  %v4123 = vrsqrt.pop %v4107
  %v4124 = vrsqrt.pop %v4108
  %v4125 = vrsqrt.pop %v4109
  %v4126 = vrsqrt.pop %v4110
  %v4127 = vrsqrt.pop %v4111
  %v4128 = vmul.f32 %v4000, %v4112
  %v4129 = vmul.f32 %v4001, %v4113
  %v4130 = vmul.f32 %v4002, %v4114
  %v4131 = vmul.f32 %v4003, %v4115
  %v4132 = vmul.f32 %v4004, %v4116
  %v4133 = vmul.f32 %v4005, %v4117
  %v4134 = vmul.f32 %v4006, %v4118
  %v4135 = vmul.f32 %v4007, %v4119
  %v4136 = vmul.f32 %v4008, %v4120
  %v4137 = vmul.f32 %v4009, %v4121
  %v4138 = vmul.f32 %v4010, %v4122
  %v4139 = vmul.f32 %v4011, %v4123
  %v4140 = vmul.f32 %v4012, %v4124
  %v4141 = vmul.f32 %v4013, %v4125
  %v4142 = vmul.f32 %v4014, %v4126
  %v4143 = vmul.f32 %v4015, %v4127
  %v4144 = vmul.f32 %v4128, %v2288
  %v4145 = vmul.f32 %v4129, %v2288
  %v4146 = vmul.f32 %v4130, %v2288
  %v4147 = vmul.f32 %v4131, %v2288
  %v4148 = vmul.f32 %v4132, %v2288
  %v4149 = vmul.f32 %v4133, %v2288
  %v4150 = vmul.f32 %v4134, %v2288
  %v4151 = vmul.f32 %v4135, %v2288
  %v4152 = vmul.f32 %v4136, %v2288
  %v4153 = vmul.f32 %v4137, %v2288
  %v4154 = vmul.f32 %v4138, %v2288
  %v4155 = vmul.f32 %v4139, %v2288
  %v4156 = vmul.f32 %v4140, %v2288
  %v4157 = vmul.f32 %v4141, %v2288
  %v4158 = vmul.f32 %v4142, %v2288
  %v4159 = vmul.f32 %v4143, %v2288
  %v4160 = vadd.f32 %v4144, %v2310
  %v4161 = vadd.f32 %v4145, %v2310
  %v4162 = vadd.f32 %v4146, %v2310
  %v4163 = vadd.f32 %v4147, %v2310
  %v4164 = vadd.f32 %v4148, %v2310
  %v4165 = vadd.f32 %v4149, %v2310
  %v4166 = vadd.f32 %v4150, %v2310
  %v4167 = vadd.f32 %v4151, %v2310
  %v4168 = vadd.f32 %v4152, %v2310
  %v4169 = vadd.f32 %v4153, %v2310
  %v4170 = vadd.f32 %v4154, %v2310
  %v4171 = vadd.f32 %v4155, %v2310
  %v4172 = vadd.f32 %v4156, %v2310
  %v4173 = vadd.f32 %v4157, %v2310
  %v4174 = vadd.f32 %v4158, %v2310
  %v4175 = vadd.f32 %v4159, %v2310
  %v4176 = vmul.f32 %v4160, 0.64449096
  %v4177 = vmul.f32 %v4161, 0.64449096
  %v4178 = vmul.f32 %v4162, 0.64449096
  %v4179 = vmul.f32 %v4163, 0.64449096
  %v4180 = vmul.f32 %v4164, 0.64449096
  %v4181 = vmul.f32 %v4165, 0.64449096
  %v4182 = vmul.f32 %v4166, 0.64449096
  %v4183 = vmul.f32 %v4167, 0.64449096
  %v4184 = vmul.f32 %v4168, 0.64449096
  %v4185 = vmul.f32 %v4169, 0.64449096
  %v4186 = vmul.f32 %v4170, 0.64449096
  %v4187 = vmul.f32 %v4171, 0.64449096
  %v4188 = vmul.f32 %v4172, 0.64449096
  %v4189 = vmul.f32 %v4173, 0.64449096
  %v4190 = vmul.f32 %v4174, 0.64449096
  %v4191 = vmul.f32 %v4175, 0.64449096
  %4192 = vrot.lane.b32.xlu0 %v504, 96
  %v4193 = vpop.permute.xlu0 %4192
  %4194 = vrot.lane.b32.xlu0 %v504, 32
  %v4195 = vpop.permute.xlu0 %4194
  %v4197 = vsel %vm523, %v4193, 0
  %v4200 = vsel %vm523, %v4195, 0
  %4202 = vmatprep.subr.bf16.mxu0 0
  %4203 = vmatpush1.bf16.xpose.msra.mxu0 %v4200
  %4204 = vmatprep.subr.bf16.mxu0 0
  %4205 = vmatpush1.bf16.xpose.msra.mxu0 0
  %4206 = vmatprep.subr.bf16.mxu0 0
  %4207 = vmatpush1.bf16.xpose.msra.mxu0 0
  %4208 = vmatprep.subr.bf16.mxu0 0
  %4209 = vmatpush1.bf16.xpose.msra.mxu0 0
  %4210 = vmatprep.subr.bf16.mxu0 0
  %4211 = vmatpush1.bf16.xpose.msra.mxu0 0
  %4212 = vmatprep.subr.bf16.mxu0 0
  %4213 = vmatpush1.bf16.xpose.msra.mxu0 0
  %4214 = vmatprep.subr.bf16.mxu0 0
  %4215 = vmatpush1.bf16.xpose.msra.mxu0 0
  %4216 = vmatprep.subr.bf16.mxu0 0
  %4217 = vmatpush1.bf16.xpose.msra.mxu0 0
  %4218 = vmatprep.subr.bf16.mxu0 0
  %4219 = vmatpush1.bf16.xpose.msra.mxu0 0
  %4220 = vmatprep.subr.bf16.mxu0 0
  %4221 = vmatpush1.bf16.xpose.msra.mxu0 0
  %4222 = vmatprep.subr.bf16.mxu0 0
  %4223 = vmatpush1.bf16.xpose.msra.mxu0 0
  %4224 = vmatprep.subr.bf16.mxu0 0
  %4225 = vmatpush1.bf16.xpose.msra.mxu0 0
  %4226 = vmatprep.subr.bf16.mxu0 0
  %4227 = vmatpush1.bf16.xpose.msra.mxu0 0
  %4228 = vmatprep.subr.bf16.mxu0 0
  %4229 = vmatpush1.bf16.xpose.msra.mxu0 0
  %4230 = vmatprep.subr.bf16.mxu0 0
  %4231 = vmatpush1.bf16.xpose.msra.mxu0 0
  %4232 = vmatprep.subr.bf16.mxu0 0
  %4233 = vmatpush1.bf16.xpose.msra.mxu0 0
  %4234 = vmatprep.mubr.bf16.mxu0 0
  %4235 = vmatmul.mubr.bf16.gmra.mrb[0].mxu0 %v4197
  %v4236 = vpop.f32.mrb[0].mxu0
  %v4237 = vadd.f32 0.0, %v4236
  %v4238 = vpop.f32.mrb[0].mxu0
  %v4239 = vpop.f32.mrb[0].mxu0
  %v4240 = vadd.f32 0.0, %v4239
  %v4241 = vpop.f32.mrb[0].mxu0
  %4242 = vdwg.mxu0
  %4243 = vrot.lane.b32.xlu0 %v505, 96
  %v4244 = vpop.permute.xlu0 %4243
  %4245 = vrot.lane.b32.xlu0 %v505, 32
  %v4246 = vpop.permute.xlu0 %4245
  %v4248 = vsel %vm523, %v4244, 0
  %v4251 = vsel %vm523, %v4246, 0
  %4253 = vmatprep.subr.bf16.mxu0 0
  %4254 = vmatpush1.bf16.xpose.msra.mxu0 %v4251
  %4255 = vmatprep.subr.bf16.mxu0 0
  %4256 = vmatpush1.bf16.xpose.msra.mxu0 0
  %4257 = vmatprep.subr.bf16.mxu0 0
  %4258 = vmatpush1.bf16.xpose.msra.mxu0 0
  %4259 = vmatprep.subr.bf16.mxu0 0
  %4260 = vmatpush1.bf16.xpose.msra.mxu0 0
  %4261 = vmatprep.subr.bf16.mxu0 0
  %4262 = vmatpush1.bf16.xpose.msra.mxu0 0
  %4263 = vmatprep.subr.bf16.mxu0 0
  %4264 = vmatpush1.bf16.xpose.msra.mxu0 0
  %4265 = vmatprep.subr.bf16.mxu0 0
  %4266 = vmatpush1.bf16.xpose.msra.mxu0 0
  %4267 = vmatprep.subr.bf16.mxu0 0
  %4268 = vmatpush1.bf16.xpose.msra.mxu0 0
  %4269 = vmatprep.subr.bf16.mxu0 0
  %4270 = vmatpush1.bf16.xpose.msra.mxu0 0
  %4271 = vmatprep.subr.bf16.mxu0 0
  %4272 = vmatpush1.bf16.xpose.msra.mxu0 0
  %4273 = vmatprep.subr.bf16.mxu0 0
  %4274 = vmatpush1.bf16.xpose.msra.mxu0 0
  %4275 = vmatprep.subr.bf16.mxu0 0
  %4276 = vmatpush1.bf16.xpose.msra.mxu0 0
  %4277 = vmatprep.subr.bf16.mxu0 0
  %4278 = vmatpush1.bf16.xpose.msra.mxu0 0
  %4279 = vmatprep.subr.bf16.mxu0 0
  %4280 = vmatpush1.bf16.xpose.msra.mxu0 0
  %4281 = vmatprep.subr.bf16.mxu0 0
  %4282 = vmatpush1.bf16.xpose.msra.mxu0 0
  %4283 = vmatprep.subr.bf16.mxu0 0
  %4284 = vmatpush1.bf16.xpose.msra.mxu0 0
  %4285 = vmatprep.mubr.bf16.mxu0 0
  %4286 = vmatmul.mubr.bf16.gmra.mrb[0].mxu0 %v4248
  %v4287 = vpop.f32.mrb[0].mxu0
  %v4288 = vadd.f32 0.0, %v4287
  %v4289 = vpop.f32.mrb[0].mxu0
  %v4290 = vpop.f32.mrb[0].mxu0
  %v4291 = vadd.f32 0.0, %v4290
  %v4292 = vpop.f32.mrb[0].mxu0
  %4293 = vdwg.mxu0
  %4294 = vrot.lane.b32.xlu0 %v506, 96
  %v4295 = vpop.permute.xlu0 %4294
  %4296 = vrot.lane.b32.xlu0 %v506, 32
  %v4297 = vpop.permute.xlu0 %4296
  %v4299 = vsel %vm523, %v4295, 0
  %v4302 = vsel %vm523, %v4297, 0
  %4304 = vmatprep.subr.bf16.mxu0 0
  %4305 = vmatpush1.bf16.xpose.msra.mxu0 %v4302
  %4306 = vmatprep.subr.bf16.mxu0 0
  %4307 = vmatpush1.bf16.xpose.msra.mxu0 0
  %4308 = vmatprep.subr.bf16.mxu0 0
  %4309 = vmatpush1.bf16.xpose.msra.mxu0 0
  %4310 = vmatprep.subr.bf16.mxu0 0
  %4311 = vmatpush1.bf16.xpose.msra.mxu0 0
  %4312 = vmatprep.subr.bf16.mxu0 0
  %4313 = vmatpush1.bf16.xpose.msra.mxu0 0
  %4314 = vmatprep.subr.bf16.mxu0 0
  %4315 = vmatpush1.bf16.xpose.msra.mxu0 0
  %4316 = vmatprep.subr.bf16.mxu0 0
  %4317 = vmatpush1.bf16.xpose.msra.mxu0 0
  %4318 = vmatprep.subr.bf16.mxu0 0
  %4319 = vmatpush1.bf16.xpose.msra.mxu0 0
  %4320 = vmatprep.subr.bf16.mxu0 0
  %4321 = vmatpush1.bf16.xpose.msra.mxu0 0
  %4322 = vmatprep.subr.bf16.mxu0 0
  %4323 = vmatpush1.bf16.xpose.msra.mxu0 0
  %4324 = vmatprep.subr.bf16.mxu0 0
  %4325 = vmatpush1.bf16.xpose.msra.mxu0 0
  %4326 = vmatprep.subr.bf16.mxu0 0
  %4327 = vmatpush1.bf16.xpose.msra.mxu0 0
  %4328 = vmatprep.subr.bf16.mxu0 0
  %4329 = vmatpush1.bf16.xpose.msra.mxu0 0
  %4330 = vmatprep.subr.bf16.mxu0 0
  %4331 = vmatpush1.bf16.xpose.msra.mxu0 0
  %4332 = vmatprep.subr.bf16.mxu0 0
  %4333 = vmatpush1.bf16.xpose.msra.mxu0 0
  %4334 = vmatprep.subr.bf16.mxu0 0
  %4335 = vmatpush1.bf16.xpose.msra.mxu0 0
  %4336 = vmatprep.mubr.bf16.mxu0 0
  %4337 = vmatmul.mubr.bf16.gmra.mrb[0].mxu0 %v4299
  %v4338 = vpop.f32.mrb[0].mxu0
  %v4339 = vadd.f32 0.0, %v4338
  %v4340 = vpop.f32.mrb[0].mxu0
  %v4341 = vpop.f32.mrb[0].mxu0
  %v4342 = vadd.f32 0.0, %v4341
  %v4343 = vpop.f32.mrb[0].mxu0
  %4344 = vdwg.mxu0
  %4345 = vrot.lane.b32.xlu0 %v507, 96
  %v4346 = vpop.permute.xlu0 %4345
  %4347 = vrot.lane.b32.xlu0 %v507, 32
  %v4348 = vpop.permute.xlu0 %4347
  %v4350 = vsel %vm523, %v4346, 0
  %v4353 = vsel %vm523, %v4348, 0
  %4355 = vmatprep.subr.bf16.mxu0 0
  %4356 = vmatpush1.bf16.xpose.msra.mxu0 %v4353
  %4357 = vmatprep.subr.bf16.mxu0 0
  %4358 = vmatpush1.bf16.xpose.msra.mxu0 0
  %4359 = vmatprep.subr.bf16.mxu0 0
  %4360 = vmatpush1.bf16.xpose.msra.mxu0 0
  %4361 = vmatprep.subr.bf16.mxu0 0
  %4362 = vmatpush1.bf16.xpose.msra.mxu0 0
  %4363 = vmatprep.subr.bf16.mxu0 0
  %4364 = vmatpush1.bf16.xpose.msra.mxu0 0
  %4365 = vmatprep.subr.bf16.mxu0 0
  %4366 = vmatpush1.bf16.xpose.msra.mxu0 0
  %4367 = vmatprep.subr.bf16.mxu0 0
  %4368 = vmatpush1.bf16.xpose.msra.mxu0 0
  %4369 = vmatprep.subr.bf16.mxu0 0
  %4370 = vmatpush1.bf16.xpose.msra.mxu0 0
  %4371 = vmatprep.subr.bf16.mxu0 0
  %4372 = vmatpush1.bf16.xpose.msra.mxu0 0
  %4373 = vmatprep.subr.bf16.mxu0 0
  %4374 = vmatpush1.bf16.xpose.msra.mxu0 0
  %4375 = vmatprep.subr.bf16.mxu0 0
  %4376 = vmatpush1.bf16.xpose.msra.mxu0 0
  %4377 = vmatprep.subr.bf16.mxu0 0
  %4378 = vmatpush1.bf16.xpose.msra.mxu0 0
  %4379 = vmatprep.subr.bf16.mxu0 0
  %4380 = vmatpush1.bf16.xpose.msra.mxu0 0
  %4381 = vmatprep.subr.bf16.mxu0 0
  %4382 = vmatpush1.bf16.xpose.msra.mxu0 0
  %4383 = vmatprep.subr.bf16.mxu0 0
  %4384 = vmatpush1.bf16.xpose.msra.mxu0 0
  %4385 = vmatprep.subr.bf16.mxu0 0
  %4386 = vmatpush1.bf16.xpose.msra.mxu0 0
  %4387 = vmatprep.mubr.bf16.mxu0 0
  %4388 = vmatmul.mubr.bf16.gmra.mrb[0].mxu0 %v4350
  %v4389 = vpop.f32.mrb[0].mxu0
  %v4390 = vadd.f32 0.0, %v4389
  %v4391 = vpop.f32.mrb[0].mxu0
  %v4392 = vpop.f32.mrb[0].mxu0
  %v4393 = vadd.f32 0.0, %v4392
  %v4394 = vpop.f32.mrb[0].mxu0
  %4395 = vdwg.mxu0
  %4396 = vrot.lane.b32.xlu0 %v508, 96
  %v4397 = vpop.permute.xlu0 %4396
  %4398 = vrot.lane.b32.xlu0 %v508, 32
  %v4399 = vpop.permute.xlu0 %4398
  %v4401 = vsel %vm523, %v4397, 0
  %v4404 = vsel %vm523, %v4399, 0
  %4406 = vmatprep.subr.bf16.mxu0 0
  %4407 = vmatpush1.bf16.xpose.msra.mxu0 %v4404
  %4408 = vmatprep.subr.bf16.mxu0 0
  %4409 = vmatpush1.bf16.xpose.msra.mxu0 0
  %4410 = vmatprep.subr.bf16.mxu0 0
  %4411 = vmatpush1.bf16.xpose.msra.mxu0 0
  %4412 = vmatprep.subr.bf16.mxu0 0
  %4413 = vmatpush1.bf16.xpose.msra.mxu0 0
  %4414 = vmatprep.subr.bf16.mxu0 0
  %4415 = vmatpush1.bf16.xpose.msra.mxu0 0
  %4416 = vmatprep.subr.bf16.mxu0 0
  %4417 = vmatpush1.bf16.xpose.msra.mxu0 0
  %4418 = vmatprep.subr.bf16.mxu0 0
  %4419 = vmatpush1.bf16.xpose.msra.mxu0 0
  %4420 = vmatprep.subr.bf16.mxu0 0
  %4421 = vmatpush1.bf16.xpose.msra.mxu0 0
  %4422 = vmatprep.subr.bf16.mxu0 0
  %4423 = vmatpush1.bf16.xpose.msra.mxu0 0
  %4424 = vmatprep.subr.bf16.mxu0 0
  %4425 = vmatpush1.bf16.xpose.msra.mxu0 0
  %4426 = vmatprep.subr.bf16.mxu0 0
  %4427 = vmatpush1.bf16.xpose.msra.mxu0 0
  %4428 = vmatprep.subr.bf16.mxu0 0
  %4429 = vmatpush1.bf16.xpose.msra.mxu0 0
  %4430 = vmatprep.subr.bf16.mxu0 0
  %4431 = vmatpush1.bf16.xpose.msra.mxu0 0
  %4432 = vmatprep.subr.bf16.mxu0 0
  %4433 = vmatpush1.bf16.xpose.msra.mxu0 0
  %4434 = vmatprep.subr.bf16.mxu0 0
  %4435 = vmatpush1.bf16.xpose.msra.mxu0 0
  %4436 = vmatprep.subr.bf16.mxu0 0
  %4437 = vmatpush1.bf16.xpose.msra.mxu0 0
  %4438 = vmatprep.mubr.bf16.mxu0 0
  %4439 = vmatmul.mubr.bf16.gmra.mrb[0].mxu0 %v4401
  %v4440 = vpop.f32.mrb[0].mxu0
  %v4441 = vadd.f32 0.0, %v4440
  %v4442 = vpop.f32.mrb[0].mxu0
  %v4443 = vpop.f32.mrb[0].mxu0
  %v4444 = vadd.f32 0.0, %v4443
  %v4445 = vpop.f32.mrb[0].mxu0
  %4446 = vdwg.mxu0
  %4447 = vrot.lane.b32.xlu0 %v509, 96
  %v4448 = vpop.permute.xlu0 %4447
  %4449 = vrot.lane.b32.xlu0 %v509, 32
  %v4450 = vpop.permute.xlu0 %4449
  %v4452 = vsel %vm523, %v4448, 0
  %v4455 = vsel %vm523, %v4450, 0
  %4457 = vmatprep.subr.bf16.mxu0 0
  %4458 = vmatpush1.bf16.xpose.msra.mxu0 %v4455
  %4459 = vmatprep.subr.bf16.mxu0 0
  %4460 = vmatpush1.bf16.xpose.msra.mxu0 0
  %4461 = vmatprep.subr.bf16.mxu0 0
  %4462 = vmatpush1.bf16.xpose.msra.mxu0 0
  %4463 = vmatprep.subr.bf16.mxu0 0
  %4464 = vmatpush1.bf16.xpose.msra.mxu0 0
  %4465 = vmatprep.subr.bf16.mxu0 0
  %4466 = vmatpush1.bf16.xpose.msra.mxu0 0
  %4467 = vmatprep.subr.bf16.mxu0 0
  %4468 = vmatpush1.bf16.xpose.msra.mxu0 0
  %4469 = vmatprep.subr.bf16.mxu0 0
  %4470 = vmatpush1.bf16.xpose.msra.mxu0 0
  %4471 = vmatprep.subr.bf16.mxu0 0
  %4472 = vmatpush1.bf16.xpose.msra.mxu0 0
  %4473 = vmatprep.subr.bf16.mxu0 0
  %4474 = vmatpush1.bf16.xpose.msra.mxu0 0
  %4475 = vmatprep.subr.bf16.mxu0 0
  %4476 = vmatpush1.bf16.xpose.msra.mxu0 0
  %4477 = vmatprep.subr.bf16.mxu0 0
  %4478 = vmatpush1.bf16.xpose.msra.mxu0 0
  %4479 = vmatprep.subr.bf16.mxu0 0
  %4480 = vmatpush1.bf16.xpose.msra.mxu0 0
  %4481 = vmatprep.subr.bf16.mxu0 0
  %4482 = vmatpush1.bf16.xpose.msra.mxu0 0
  %4483 = vmatprep.subr.bf16.mxu0 0
  %4484 = vmatpush1.bf16.xpose.msra.mxu0 0
  %4485 = vmatprep.subr.bf16.mxu0 0
  %4486 = vmatpush1.bf16.xpose.msra.mxu0 0
  %4487 = vmatprep.subr.bf16.mxu0 0
  %4488 = vmatpush1.bf16.xpose.msra.mxu0 0
  %4489 = vmatprep.mubr.bf16.mxu0 0
  %4490 = vmatmul.mubr.bf16.gmra.mrb[0].mxu0 %v4452
  %v4491 = vpop.f32.mrb[0].mxu0
  %v4492 = vadd.f32 0.0, %v4491
  %v4493 = vpop.f32.mrb[0].mxu0
  %v4494 = vpop.f32.mrb[0].mxu0
  %v4495 = vadd.f32 0.0, %v4494
  %v4496 = vpop.f32.mrb[0].mxu0
  %4497 = vdwg.mxu0
  %4498 = vrot.lane.b32.xlu0 %v510, 96
  %v4499 = vpop.permute.xlu0 %4498
  %4500 = vrot.lane.b32.xlu0 %v510, 32
  %v4501 = vpop.permute.xlu0 %4500
  %v4503 = vsel %vm523, %v4499, 0
  %v4506 = vsel %vm523, %v4501, 0
  %4508 = vmatprep.subr.bf16.mxu0 0
  %4509 = vmatpush1.bf16.xpose.msra.mxu0 %v4506
  %4510 = vmatprep.subr.bf16.mxu0 0
  %4511 = vmatpush1.bf16.xpose.msra.mxu0 0
  %4512 = vmatprep.subr.bf16.mxu0 0
  %4513 = vmatpush1.bf16.xpose.msra.mxu0 0
  %4514 = vmatprep.subr.bf16.mxu0 0
  %4515 = vmatpush1.bf16.xpose.msra.mxu0 0
  %4516 = vmatprep.subr.bf16.mxu0 0
  %4517 = vmatpush1.bf16.xpose.msra.mxu0 0
  %4518 = vmatprep.subr.bf16.mxu0 0
  %4519 = vmatpush1.bf16.xpose.msra.mxu0 0
  %4520 = vmatprep.subr.bf16.mxu0 0
  %4521 = vmatpush1.bf16.xpose.msra.mxu0 0
  %4522 = vmatprep.subr.bf16.mxu0 0
  %4523 = vmatpush1.bf16.xpose.msra.mxu0 0
  %4524 = vmatprep.subr.bf16.mxu0 0
  %4525 = vmatpush1.bf16.xpose.msra.mxu0 0
  %4526 = vmatprep.subr.bf16.mxu0 0
  %4527 = vmatpush1.bf16.xpose.msra.mxu0 0
  %4528 = vmatprep.subr.bf16.mxu0 0
  %4529 = vmatpush1.bf16.xpose.msra.mxu0 0
  %4530 = vmatprep.subr.bf16.mxu0 0
  %4531 = vmatpush1.bf16.xpose.msra.mxu0 0
  %4532 = vmatprep.subr.bf16.mxu0 0
  %4533 = vmatpush1.bf16.xpose.msra.mxu0 0
  %4534 = vmatprep.subr.bf16.mxu0 0
  %4535 = vmatpush1.bf16.xpose.msra.mxu0 0
  %4536 = vmatprep.subr.bf16.mxu0 0
  %4537 = vmatpush1.bf16.xpose.msra.mxu0 0
  %4538 = vmatprep.subr.bf16.mxu0 0
  %4539 = vmatpush1.bf16.xpose.msra.mxu0 0
  %4540 = vmatprep.mubr.bf16.mxu0 0
  %4541 = vmatmul.mubr.bf16.gmra.mrb[0].mxu0 %v4503
  %v4542 = vpop.f32.mrb[0].mxu0
  %v4543 = vadd.f32 0.0, %v4542
  %v4544 = vpop.f32.mrb[0].mxu0
  %v4545 = vpop.f32.mrb[0].mxu0
  %v4546 = vadd.f32 0.0, %v4545
  %v4547 = vpop.f32.mrb[0].mxu0
  %4548 = vdwg.mxu0
  %4549 = vrot.lane.b32.xlu0 %v511, 96
  %v4550 = vpop.permute.xlu0 %4549
  %4551 = vrot.lane.b32.xlu0 %v511, 32
  %v4552 = vpop.permute.xlu0 %4551
  %v4554 = vsel %vm523, %v4550, 0
  %v4557 = vsel %vm523, %v4552, 0
  %4559 = vmatprep.subr.bf16.mxu0 0
  %4560 = vmatpush1.bf16.xpose.msra.mxu0 %v4557
  %4561 = vmatprep.subr.bf16.mxu0 0
  %4562 = vmatpush1.bf16.xpose.msra.mxu0 0
  %4563 = vmatprep.subr.bf16.mxu0 0
  %4564 = vmatpush1.bf16.xpose.msra.mxu0 0
  %4565 = vmatprep.subr.bf16.mxu0 0
  %4566 = vmatpush1.bf16.xpose.msra.mxu0 0
  %4567 = vmatprep.subr.bf16.mxu0 0
  %4568 = vmatpush1.bf16.xpose.msra.mxu0 0
  %4569 = vmatprep.subr.bf16.mxu0 0
  %4570 = vmatpush1.bf16.xpose.msra.mxu0 0
  %4571 = vmatprep.subr.bf16.mxu0 0
  %4572 = vmatpush1.bf16.xpose.msra.mxu0 0
  %4573 = vmatprep.subr.bf16.mxu0 0
  %4574 = vmatpush1.bf16.xpose.msra.mxu0 0
  %4575 = vmatprep.subr.bf16.mxu0 0
  %4576 = vmatpush1.bf16.xpose.msra.mxu0 0
  %4577 = vmatprep.subr.bf16.mxu0 0
  %4578 = vmatpush1.bf16.xpose.msra.mxu0 0
  %4579 = vmatprep.subr.bf16.mxu0 0
  %4580 = vmatpush1.bf16.xpose.msra.mxu0 0
  %4581 = vmatprep.subr.bf16.mxu0 0
  %4582 = vmatpush1.bf16.xpose.msra.mxu0 0
  %4583 = vmatprep.subr.bf16.mxu0 0
  %4584 = vmatpush1.bf16.xpose.msra.mxu0 0
  %4585 = vmatprep.subr.bf16.mxu0 0
  %4586 = vmatpush1.bf16.xpose.msra.mxu0 0
  %4587 = vmatprep.subr.bf16.mxu0 0
  %4588 = vmatpush1.bf16.xpose.msra.mxu0 0
  %4589 = vmatprep.subr.bf16.mxu0 0
  %4590 = vmatpush1.bf16.xpose.msra.mxu0 0
  %4591 = vmatprep.mubr.bf16.mxu0 0
  %4592 = vmatmul.mubr.bf16.gmra.mrb[0].mxu0 %v4554
  %v4593 = vpop.f32.mrb[0].mxu0
  %v4594 = vadd.f32 0.0, %v4593
  %v4595 = vpop.f32.mrb[0].mxu0
  %v4596 = vpop.f32.mrb[0].mxu0
  %v4597 = vadd.f32 0.0, %v4596
  %v4598 = vpop.f32.mrb[0].mxu0
  %4599 = vdwg.mxu0
  %4600 = vrot.lane.b32.xlu0 %v504, 88
  %v4601 = vpop.permute.xlu0 %4600
  %4602 = vrot.lane.b32.xlu0 %v504, 24
  %v4603 = vpop.permute.xlu0 %4602
  %v4605 = vsel %vm523, %v4601, 0
  %v4608 = vsel %vm523, %v4603, 0
  %4610 = vmatprep.subr.bf16.mxu0 0
  %4611 = vmatpush1.bf16.xpose.msra.mxu0 %v4608
  %4612 = vmatprep.subr.bf16.mxu0 0
  %4613 = vmatpush1.bf16.xpose.msra.mxu0 0
  %4614 = vmatprep.subr.bf16.mxu0 0
  %4615 = vmatpush1.bf16.xpose.msra.mxu0 0
  %4616 = vmatprep.subr.bf16.mxu0 0
  %4617 = vmatpush1.bf16.xpose.msra.mxu0 0
  %4618 = vmatprep.subr.bf16.mxu0 0
  %4619 = vmatpush1.bf16.xpose.msra.mxu0 0
  %4620 = vmatprep.subr.bf16.mxu0 0
  %4621 = vmatpush1.bf16.xpose.msra.mxu0 0
  %4622 = vmatprep.subr.bf16.mxu0 0
  %4623 = vmatpush1.bf16.xpose.msra.mxu0 0
  %4624 = vmatprep.subr.bf16.mxu0 0
  %4625 = vmatpush1.bf16.xpose.msra.mxu0 0
  %4626 = vmatprep.subr.bf16.mxu0 0
  %4627 = vmatpush1.bf16.xpose.msra.mxu0 0
  %4628 = vmatprep.subr.bf16.mxu0 0
  %4629 = vmatpush1.bf16.xpose.msra.mxu0 0
  %4630 = vmatprep.subr.bf16.mxu0 0
  %4631 = vmatpush1.bf16.xpose.msra.mxu0 0
  %4632 = vmatprep.subr.bf16.mxu0 0
  %4633 = vmatpush1.bf16.xpose.msra.mxu0 0
  %4634 = vmatprep.subr.bf16.mxu0 0
  %4635 = vmatpush1.bf16.xpose.msra.mxu0 0
  %4636 = vmatprep.subr.bf16.mxu0 0
  %4637 = vmatpush1.bf16.xpose.msra.mxu0 0
  %4638 = vmatprep.subr.bf16.mxu0 0
  %4639 = vmatpush1.bf16.xpose.msra.mxu0 0
  %4640 = vmatprep.subr.bf16.mxu0 0
  %4641 = vmatpush1.bf16.xpose.msra.mxu0 0
  %4642 = vmatprep.mubr.bf16.mxu0 0
  %4643 = vmatmul.mubr.bf16.gmra.mrb[0].mxu0 %v4605
  %v4644 = vpop.f32.mrb[0].mxu0
  %v4645 = vadd.f32 0.0, %v4644
  %v4646 = vpop.f32.mrb[0].mxu0
  %v4647 = vpop.f32.mrb[0].mxu0
  %v4648 = vadd.f32 0.0, %v4647
  %v4649 = vpop.f32.mrb[0].mxu0
  %4650 = vdwg.mxu0
  %4651 = vrot.lane.b32.xlu0 %v505, 88
  %v4652 = vpop.permute.xlu0 %4651
  %4653 = vrot.lane.b32.xlu0 %v505, 24
  %v4654 = vpop.permute.xlu0 %4653
  %v4656 = vsel %vm523, %v4652, 0
  %v4659 = vsel %vm523, %v4654, 0
  %4661 = vmatprep.subr.bf16.mxu0 0
  %4662 = vmatpush1.bf16.xpose.msra.mxu0 %v4659
  %4663 = vmatprep.subr.bf16.mxu0 0
  %4664 = vmatpush1.bf16.xpose.msra.mxu0 0
  %4665 = vmatprep.subr.bf16.mxu0 0
  %4666 = vmatpush1.bf16.xpose.msra.mxu0 0
  %4667 = vmatprep.subr.bf16.mxu0 0
  %4668 = vmatpush1.bf16.xpose.msra.mxu0 0
  %4669 = vmatprep.subr.bf16.mxu0 0
  %4670 = vmatpush1.bf16.xpose.msra.mxu0 0
  %4671 = vmatprep.subr.bf16.mxu0 0
  %4672 = vmatpush1.bf16.xpose.msra.mxu0 0
  %4673 = vmatprep.subr.bf16.mxu0 0
  %4674 = vmatpush1.bf16.xpose.msra.mxu0 0
  %4675 = vmatprep.subr.bf16.mxu0 0
  %4676 = vmatpush1.bf16.xpose.msra.mxu0 0
  %4677 = vmatprep.subr.bf16.mxu0 0
  %4678 = vmatpush1.bf16.xpose.msra.mxu0 0
  %4679 = vmatprep.subr.bf16.mxu0 0
  %4680 = vmatpush1.bf16.xpose.msra.mxu0 0
  %4681 = vmatprep.subr.bf16.mxu0 0
  %4682 = vmatpush1.bf16.xpose.msra.mxu0 0
  %4683 = vmatprep.subr.bf16.mxu0 0
  %4684 = vmatpush1.bf16.xpose.msra.mxu0 0
  %4685 = vmatprep.subr.bf16.mxu0 0
  %4686 = vmatpush1.bf16.xpose.msra.mxu0 0
  %4687 = vmatprep.subr.bf16.mxu0 0
  %4688 = vmatpush1.bf16.xpose.msra.mxu0 0
  %4689 = vmatprep.subr.bf16.mxu0 0
  %4690 = vmatpush1.bf16.xpose.msra.mxu0 0
  %4691 = vmatprep.subr.bf16.mxu0 0
  %4692 = vmatpush1.bf16.xpose.msra.mxu0 0
  %4693 = vmatprep.mubr.bf16.mxu0 0
  %4694 = vmatmul.mubr.bf16.gmra.mrb[0].mxu0 %v4656
  %v4695 = vpop.f32.mrb[0].mxu0
  %v4696 = vadd.f32 0.0, %v4695
  %v4697 = vpop.f32.mrb[0].mxu0
  %v4698 = vpop.f32.mrb[0].mxu0
  %v4699 = vadd.f32 0.0, %v4698
  %v4700 = vpop.f32.mrb[0].mxu0
  %4701 = vdwg.mxu0
  %4702 = vrot.lane.b32.xlu0 %v506, 88
  %v4703 = vpop.permute.xlu0 %4702
  %4704 = vrot.lane.b32.xlu0 %v506, 24
  %v4705 = vpop.permute.xlu0 %4704
  %v4707 = vsel %vm523, %v4703, 0
  %v4710 = vsel %vm523, %v4705, 0
  %4712 = vmatprep.subr.bf16.mxu0 0
  %4713 = vmatpush1.bf16.xpose.msra.mxu0 %v4710
  %4714 = vmatprep.subr.bf16.mxu0 0
  %4715 = vmatpush1.bf16.xpose.msra.mxu0 0
  %4716 = vmatprep.subr.bf16.mxu0 0
  %4717 = vmatpush1.bf16.xpose.msra.mxu0 0
  %4718 = vmatprep.subr.bf16.mxu0 0
  %4719 = vmatpush1.bf16.xpose.msra.mxu0 0
  %4720 = vmatprep.subr.bf16.mxu0 0
  %4721 = vmatpush1.bf16.xpose.msra.mxu0 0
  %4722 = vmatprep.subr.bf16.mxu0 0
  %4723 = vmatpush1.bf16.xpose.msra.mxu0 0
  %4724 = vmatprep.subr.bf16.mxu0 0
  %4725 = vmatpush1.bf16.xpose.msra.mxu0 0
  %4726 = vmatprep.subr.bf16.mxu0 0
  %4727 = vmatpush1.bf16.xpose.msra.mxu0 0
  %4728 = vmatprep.subr.bf16.mxu0 0
  %4729 = vmatpush1.bf16.xpose.msra.mxu0 0
  %4730 = vmatprep.subr.bf16.mxu0 0
  %4731 = vmatpush1.bf16.xpose.msra.mxu0 0
  %4732 = vmatprep.subr.bf16.mxu0 0
  %4733 = vmatpush1.bf16.xpose.msra.mxu0 0
  %4734 = vmatprep.subr.bf16.mxu0 0
  %4735 = vmatpush1.bf16.xpose.msra.mxu0 0
  %4736 = vmatprep.subr.bf16.mxu0 0
  %4737 = vmatpush1.bf16.xpose.msra.mxu0 0
  %4738 = vmatprep.subr.bf16.mxu0 0
  %4739 = vmatpush1.bf16.xpose.msra.mxu0 0
  %4740 = vmatprep.subr.bf16.mxu0 0
  %4741 = vmatpush1.bf16.xpose.msra.mxu0 0
  %4742 = vmatprep.subr.bf16.mxu0 0
  %4743 = vmatpush1.bf16.xpose.msra.mxu0 0
  %4744 = vmatprep.mubr.bf16.mxu0 0
  %4745 = vmatmul.mubr.bf16.gmra.mrb[0].mxu0 %v4707
  %v4746 = vpop.f32.mrb[0].mxu0
  %v4747 = vadd.f32 0.0, %v4746
  %v4748 = vpop.f32.mrb[0].mxu0
  %v4749 = vpop.f32.mrb[0].mxu0
  %v4750 = vadd.f32 0.0, %v4749
  %v4751 = vpop.f32.mrb[0].mxu0
  %4752 = vdwg.mxu0
  %4753 = vrot.lane.b32.xlu0 %v507, 88
  %v4754 = vpop.permute.xlu0 %4753
  %4755 = vrot.lane.b32.xlu0 %v507, 24
  %v4756 = vpop.permute.xlu0 %4755
  %v4758 = vsel %vm523, %v4754, 0
  %v4761 = vsel %vm523, %v4756, 0
  %4763 = vmatprep.subr.bf16.mxu0 0
  %4764 = vmatpush1.bf16.xpose.msra.mxu0 %v4761
  %4765 = vmatprep.subr.bf16.mxu0 0
  %4766 = vmatpush1.bf16.xpose.msra.mxu0 0
  %4767 = vmatprep.subr.bf16.mxu0 0
  %4768 = vmatpush1.bf16.xpose.msra.mxu0 0
  %4769 = vmatprep.subr.bf16.mxu0 0
  %4770 = vmatpush1.bf16.xpose.msra.mxu0 0
  %4771 = vmatprep.subr.bf16.mxu0 0
  %4772 = vmatpush1.bf16.xpose.msra.mxu0 0
  %4773 = vmatprep.subr.bf16.mxu0 0
  %4774 = vmatpush1.bf16.xpose.msra.mxu0 0
  %4775 = vmatprep.subr.bf16.mxu0 0
  %4776 = vmatpush1.bf16.xpose.msra.mxu0 0
  %4777 = vmatprep.subr.bf16.mxu0 0
  %4778 = vmatpush1.bf16.xpose.msra.mxu0 0
  %4779 = vmatprep.subr.bf16.mxu0 0
  %4780 = vmatpush1.bf16.xpose.msra.mxu0 0
  %4781 = vmatprep.subr.bf16.mxu0 0
  %4782 = vmatpush1.bf16.xpose.msra.mxu0 0
  %4783 = vmatprep.subr.bf16.mxu0 0
  %4784 = vmatpush1.bf16.xpose.msra.mxu0 0
  %4785 = vmatprep.subr.bf16.mxu0 0
  %4786 = vmatpush1.bf16.xpose.msra.mxu0 0
  %4787 = vmatprep.subr.bf16.mxu0 0
  %4788 = vmatpush1.bf16.xpose.msra.mxu0 0
  %4789 = vmatprep.subr.bf16.mxu0 0
  %4790 = vmatpush1.bf16.xpose.msra.mxu0 0
  %4791 = vmatprep.subr.bf16.mxu0 0
  %4792 = vmatpush1.bf16.xpose.msra.mxu0 0
  %4793 = vmatprep.subr.bf16.mxu0 0
  %4794 = vmatpush1.bf16.xpose.msra.mxu0 0
  %4795 = vmatprep.mubr.bf16.mxu0 0
  %4796 = vmatmul.mubr.bf16.gmra.mrb[0].mxu0 %v4758
  %v4797 = vpop.f32.mrb[0].mxu0
  %v4798 = vadd.f32 0.0, %v4797
  %v4799 = vpop.f32.mrb[0].mxu0
  %v4800 = vpop.f32.mrb[0].mxu0
  %v4801 = vadd.f32 0.0, %v4800
  %v4802 = vpop.f32.mrb[0].mxu0
  %4803 = vdwg.mxu0
  %4804 = vrot.lane.b32.xlu0 %v508, 88
  %v4805 = vpop.permute.xlu0 %4804
  %4806 = vrot.lane.b32.xlu0 %v508, 24
  %v4807 = vpop.permute.xlu0 %4806
  %v4809 = vsel %vm523, %v4805, 0
  %v4812 = vsel %vm523, %v4807, 0
  %4814 = vmatprep.subr.bf16.mxu0 0
  %4815 = vmatpush1.bf16.xpose.msra.mxu0 %v4812
  %4816 = vmatprep.subr.bf16.mxu0 0
  %4817 = vmatpush1.bf16.xpose.msra.mxu0 0
  %4818 = vmatprep.subr.bf16.mxu0 0
  %4819 = vmatpush1.bf16.xpose.msra.mxu0 0
  %4820 = vmatprep.subr.bf16.mxu0 0
  %4821 = vmatpush1.bf16.xpose.msra.mxu0 0
  %4822 = vmatprep.subr.bf16.mxu0 0
  %4823 = vmatpush1.bf16.xpose.msra.mxu0 0
  %4824 = vmatprep.subr.bf16.mxu0 0
  %4825 = vmatpush1.bf16.xpose.msra.mxu0 0
  %4826 = vmatprep.subr.bf16.mxu0 0
  %4827 = vmatpush1.bf16.xpose.msra.mxu0 0
  %4828 = vmatprep.subr.bf16.mxu0 0
  %4829 = vmatpush1.bf16.xpose.msra.mxu0 0
  %4830 = vmatprep.subr.bf16.mxu0 0
  %4831 = vmatpush1.bf16.xpose.msra.mxu0 0
  %4832 = vmatprep.subr.bf16.mxu0 0
  %4833 = vmatpush1.bf16.xpose.msra.mxu0 0
  %4834 = vmatprep.subr.bf16.mxu0 0
  %4835 = vmatpush1.bf16.xpose.msra.mxu0 0
  %4836 = vmatprep.subr.bf16.mxu0 0
  %4837 = vmatpush1.bf16.xpose.msra.mxu0 0
  %4838 = vmatprep.subr.bf16.mxu0 0
  %4839 = vmatpush1.bf16.xpose.msra.mxu0 0
  %4840 = vmatprep.subr.bf16.mxu0 0
  %4841 = vmatpush1.bf16.xpose.msra.mxu0 0
  %4842 = vmatprep.subr.bf16.mxu0 0
  %4843 = vmatpush1.bf16.xpose.msra.mxu0 0
  %4844 = vmatprep.subr.bf16.mxu0 0
  %4845 = vmatpush1.bf16.xpose.msra.mxu0 0
  %4846 = vmatprep.mubr.bf16.mxu0 0
  %4847 = vmatmul.mubr.bf16.gmra.mrb[0].mxu0 %v4809
  %v4848 = vpop.f32.mrb[0].mxu0
  %v4849 = vadd.f32 0.0, %v4848
  %v4850 = vpop.f32.mrb[0].mxu0
  %v4851 = vpop.f32.mrb[0].mxu0
  %v4852 = vadd.f32 0.0, %v4851
  %v4853 = vpop.f32.mrb[0].mxu0
  %4854 = vdwg.mxu0
  %4855 = vrot.lane.b32.xlu0 %v509, 88
  %v4856 = vpop.permute.xlu0 %4855
  %4857 = vrot.lane.b32.xlu0 %v509, 24
  %v4858 = vpop.permute.xlu0 %4857
  %v4860 = vsel %vm523, %v4856, 0
  %v4863 = vsel %vm523, %v4858, 0
  %4865 = vmatprep.subr.bf16.mxu0 0
  %4866 = vmatpush1.bf16.xpose.msra.mxu0 %v4863
  %4867 = vmatprep.subr.bf16.mxu0 0
  %4868 = vmatpush1.bf16.xpose.msra.mxu0 0
  %4869 = vmatprep.subr.bf16.mxu0 0
  %4870 = vmatpush1.bf16.xpose.msra.mxu0 0
  %4871 = vmatprep.subr.bf16.mxu0 0
  %4872 = vmatpush1.bf16.xpose.msra.mxu0 0
  %4873 = vmatprep.subr.bf16.mxu0 0
  %4874 = vmatpush1.bf16.xpose.msra.mxu0 0
  %4875 = vmatprep.subr.bf16.mxu0 0
  %4876 = vmatpush1.bf16.xpose.msra.mxu0 0
  %4877 = vmatprep.subr.bf16.mxu0 0
  %4878 = vmatpush1.bf16.xpose.msra.mxu0 0
  %4879 = vmatprep.subr.bf16.mxu0 0
  %4880 = vmatpush1.bf16.xpose.msra.mxu0 0
  %4881 = vmatprep.subr.bf16.mxu0 0
  %4882 = vmatpush1.bf16.xpose.msra.mxu0 0
  %4883 = vmatprep.subr.bf16.mxu0 0
  %4884 = vmatpush1.bf16.xpose.msra.mxu0 0
  %4885 = vmatprep.subr.bf16.mxu0 0
  %4886 = vmatpush1.bf16.xpose.msra.mxu0 0
  %4887 = vmatprep.subr.bf16.mxu0 0
  %4888 = vmatpush1.bf16.xpose.msra.mxu0 0
  %4889 = vmatprep.subr.bf16.mxu0 0
  %4890 = vmatpush1.bf16.xpose.msra.mxu0 0
  %4891 = vmatprep.subr.bf16.mxu0 0
  %4892 = vmatpush1.bf16.xpose.msra.mxu0 0
  %4893 = vmatprep.subr.bf16.mxu0 0
  %4894 = vmatpush1.bf16.xpose.msra.mxu0 0
  %4895 = vmatprep.subr.bf16.mxu0 0
  %4896 = vmatpush1.bf16.xpose.msra.mxu0 0
  %4897 = vmatprep.mubr.bf16.mxu0 0
  %4898 = vmatmul.mubr.bf16.gmra.mrb[0].mxu0 %v4860
  %v4899 = vpop.f32.mrb[0].mxu0
  %v4900 = vadd.f32 0.0, %v4899
  %v4901 = vpop.f32.mrb[0].mxu0
  %v4902 = vpop.f32.mrb[0].mxu0
  %v4903 = vadd.f32 0.0, %v4902
  %v4904 = vpop.f32.mrb[0].mxu0
  %4905 = vdwg.mxu0
  %4906 = vrot.lane.b32.xlu0 %v510, 88
  %v4907 = vpop.permute.xlu0 %4906
  %4908 = vrot.lane.b32.xlu0 %v510, 24
  %v4909 = vpop.permute.xlu0 %4908
  %v4911 = vsel %vm523, %v4907, 0
  %v4914 = vsel %vm523, %v4909, 0
  %4916 = vmatprep.subr.bf16.mxu0 0
  %4917 = vmatpush1.bf16.xpose.msra.mxu0 %v4914
  %4918 = vmatprep.subr.bf16.mxu0 0
  %4919 = vmatpush1.bf16.xpose.msra.mxu0 0
  %4920 = vmatprep.subr.bf16.mxu0 0
  %4921 = vmatpush1.bf16.xpose.msra.mxu0 0
  %4922 = vmatprep.subr.bf16.mxu0 0
  %4923 = vmatpush1.bf16.xpose.msra.mxu0 0
  %4924 = vmatprep.subr.bf16.mxu0 0
  %4925 = vmatpush1.bf16.xpose.msra.mxu0 0
  %4926 = vmatprep.subr.bf16.mxu0 0
  %4927 = vmatpush1.bf16.xpose.msra.mxu0 0
  %4928 = vmatprep.subr.bf16.mxu0 0
  %4929 = vmatpush1.bf16.xpose.msra.mxu0 0
  %4930 = vmatprep.subr.bf16.mxu0 0
  %4931 = vmatpush1.bf16.xpose.msra.mxu0 0
  %4932 = vmatprep.subr.bf16.mxu0 0
  %4933 = vmatpush1.bf16.xpose.msra.mxu0 0
  %4934 = vmatprep.subr.bf16.mxu0 0
  %4935 = vmatpush1.bf16.xpose.msra.mxu0 0
  %4936 = vmatprep.subr.bf16.mxu0 0
  %4937 = vmatpush1.bf16.xpose.msra.mxu0 0
  %4938 = vmatprep.subr.bf16.mxu0 0
  %4939 = vmatpush1.bf16.xpose.msra.mxu0 0
  %4940 = vmatprep.subr.bf16.mxu0 0
  %4941 = vmatpush1.bf16.xpose.msra.mxu0 0
  %4942 = vmatprep.subr.bf16.mxu0 0
  %4943 = vmatpush1.bf16.xpose.msra.mxu0 0
  %4944 = vmatprep.subr.bf16.mxu0 0
  %4945 = vmatpush1.bf16.xpose.msra.mxu0 0
  %4946 = vmatprep.subr.bf16.mxu0 0
  %4947 = vmatpush1.bf16.xpose.msra.mxu0 0
  %4948 = vmatprep.mubr.bf16.mxu0 0
  %4949 = vmatmul.mubr.bf16.gmra.mrb[0].mxu0 %v4911
  %v4950 = vpop.f32.mrb[0].mxu0
  %v4951 = vadd.f32 0.0, %v4950
  %v4952 = vpop.f32.mrb[0].mxu0
  %v4953 = vpop.f32.mrb[0].mxu0
  %v4954 = vadd.f32 0.0, %v4953
  %v4955 = vpop.f32.mrb[0].mxu0
  %4956 = vdwg.mxu0
  %4957 = vrot.lane.b32.xlu0 %v511, 88
  %v4958 = vpop.permute.xlu0 %4957
  %4959 = vrot.lane.b32.xlu0 %v511, 24
  %v4960 = vpop.permute.xlu0 %4959
  %v4962 = vsel %vm523, %v4958, 0
  %v4965 = vsel %vm523, %v4960, 0
  %4967 = vmatprep.subr.bf16.mxu0 0
  %4968 = vmatpush1.bf16.xpose.msra.mxu0 %v4965
  %4969 = vmatprep.subr.bf16.mxu0 0
  %4970 = vmatpush1.bf16.xpose.msra.mxu0 0
  %4971 = vmatprep.subr.bf16.mxu0 0
  %4972 = vmatpush1.bf16.xpose.msra.mxu0 0
  %4973 = vmatprep.subr.bf16.mxu0 0
  %4974 = vmatpush1.bf16.xpose.msra.mxu0 0
  %4975 = vmatprep.subr.bf16.mxu0 0
  %4976 = vmatpush1.bf16.xpose.msra.mxu0 0
  %4977 = vmatprep.subr.bf16.mxu0 0
  %4978 = vmatpush1.bf16.xpose.msra.mxu0 0
  %4979 = vmatprep.subr.bf16.mxu0 0
  %4980 = vmatpush1.bf16.xpose.msra.mxu0 0
  %4981 = vmatprep.subr.bf16.mxu0 0
  %4982 = vmatpush1.bf16.xpose.msra.mxu0 0
  %4983 = vmatprep.subr.bf16.mxu0 0
  %4984 = vmatpush1.bf16.xpose.msra.mxu0 0
  %4985 = vmatprep.subr.bf16.mxu0 0
  %4986 = vmatpush1.bf16.xpose.msra.mxu0 0
  %4987 = vmatprep.subr.bf16.mxu0 0
  %4988 = vmatpush1.bf16.xpose.msra.mxu0 0
  %4989 = vmatprep.subr.bf16.mxu0 0
  %4990 = vmatpush1.bf16.xpose.msra.mxu0 0
  %4991 = vmatprep.subr.bf16.mxu0 0
  %4992 = vmatpush1.bf16.xpose.msra.mxu0 0
  %4993 = vmatprep.subr.bf16.mxu0 0
  %4994 = vmatpush1.bf16.xpose.msra.mxu0 0
  %4995 = vmatprep.subr.bf16.mxu0 0
  %4996 = vmatpush1.bf16.xpose.msra.mxu0 0
  %4997 = vmatprep.subr.bf16.mxu0 0
  %4998 = vmatpush1.bf16.xpose.msra.mxu0 0
  %4999 = vmatprep.mubr.bf16.mxu0 0
  %5000 = vmatmul.mubr.bf16.gmra.mrb[0].mxu0 %v4962
  %v5001 = vpop.f32.mrb[0].mxu0
  %v5002 = vadd.f32 0.0, %v5001
  %v5003 = vpop.f32.mrb[0].mxu0
  %v5004 = vpop.f32.mrb[0].mxu0
  %v5005 = vadd.f32 0.0, %v5004
  %v5006 = vpop.f32.mrb[0].mxu0
  %5007 = vdwg.mxu0
  %v5008 = vsel %vm1329, %v4237, -inf
  %5009 = vmax.xlane.f32.xlu0 %v5008
  %v5010 = vpop.xlane.xlu0 %5009
  %v5011 = vsel %vm1329, %v4240, -inf
  %5012 = vmax.xlane.f32.xlu0 %v5011
  %v5013 = vpop.xlane.xlu0 %5012
  %v5014 = vsel %vm1329, %v4288, -inf
  %5015 = vmax.xlane.f32.xlu0 %v5014
  %v5016 = vpop.xlane.xlu0 %5015
  %v5017 = vsel %vm1329, %v4291, -inf
  %5018 = vmax.xlane.f32.xlu0 %v5017
  %v5019 = vpop.xlane.xlu0 %5018
  %v5020 = vsel %vm1329, %v4339, -inf
  %5021 = vmax.xlane.f32.xlu0 %v5020
  %v5022 = vpop.xlane.xlu0 %5021
  %v5023 = vsel %vm1329, %v4342, -inf
  %5024 = vmax.xlane.f32.xlu0 %v5023
  %v5025 = vpop.xlane.xlu0 %5024
  %v5026 = vsel %vm1329, %v4390, -inf
  %5027 = vmax.xlane.f32.xlu0 %v5026
  %v5028 = vpop.xlane.xlu0 %5027
  %v5029 = vsel %vm1329, %v4393, -inf
  %5030 = vmax.xlane.f32.xlu0 %v5029
  %v5031 = vpop.xlane.xlu0 %5030
  %v5032 = vsel %vm1329, %v4441, -inf
  %5033 = vmax.xlane.f32.xlu0 %v5032
  %v5034 = vpop.xlane.xlu0 %5033
  %v5035 = vsel %vm1329, %v4444, -inf
  %5036 = vmax.xlane.f32.xlu0 %v5035
  %v5037 = vpop.xlane.xlu0 %5036
  %v5038 = vsel %vm1329, %v4492, -inf
  %5039 = vmax.xlane.f32.xlu0 %v5038
  %v5040 = vpop.xlane.xlu0 %5039
  %v5041 = vsel %vm1329, %v4495, -inf
  %5042 = vmax.xlane.f32.xlu0 %v5041
  %v5043 = vpop.xlane.xlu0 %5042
  %v5044 = vsel %vm1329, %v4543, -inf
  %5045 = vmax.xlane.f32.xlu0 %v5044
  %v5046 = vpop.xlane.xlu0 %5045
  %v5047 = vsel %vm1329, %v4546, -inf
  %5048 = vmax.xlane.f32.xlu0 %v5047
  %v5049 = vpop.xlane.xlu0 %5048
  %v5050 = vsel %vm1329, %v4594, -inf
  %5051 = vmax.xlane.f32.xlu0 %v5050
  %v5052 = vpop.xlane.xlu0 %5051
  %v5053 = vsel %vm1329, %v4597, -inf
  %5054 = vmax.xlane.f32.xlu0 %v5053
  %v5055 = vpop.xlane.xlu0 %5054
  %v5056 = vsub.f32 %v4237, %v5010
  %v5057 = vsub.f32 %v4240, %v5013
  %v5058 = vsub.f32 %v4288, %v5016
  %v5059 = vsub.f32 %v4291, %v5019
  %v5060 = vsub.f32 %v4339, %v5022
  %v5061 = vsub.f32 %v4342, %v5025
  %v5062 = vsub.f32 %v4390, %v5028
  %v5063 = vsub.f32 %v4393, %v5031
  %v5064 = vsub.f32 %v4441, %v5034
  %v5065 = vsub.f32 %v4444, %v5037
  %v5066 = vsub.f32 %v4492, %v5040
  %v5067 = vsub.f32 %v4495, %v5043
  %v5068 = vsub.f32 %v4543, %v5046
  %v5069 = vsub.f32 %v4546, %v5049
  %v5070 = vsub.f32 %v4594, %v5052
  %v5071 = vsub.f32 %v4597, %v5055
  %v5072 = vmul.f32 %v5056, 1.442695
  %v5073 = vpow.pop %v5072
  %v5074 = vmul.f32 %v5057, 1.442695
  %v5075 = vpow.pop %v5074
  %v5076 = vmul.f32 %v5058, 1.442695
  %v5077 = vpow.pop %v5076
  %v5078 = vmul.f32 %v5059, 1.442695
  %v5079 = vpow.pop %v5078
  %v5080 = vmul.f32 %v5060, 1.442695
  %v5081 = vpow.pop %v5080
  %v5082 = vmul.f32 %v5061, 1.442695
  %v5083 = vpow.pop %v5082
  %v5084 = vmul.f32 %v5062, 1.442695
  %v5085 = vpow.pop %v5084
  %v5086 = vmul.f32 %v5063, 1.442695
  %v5087 = vpow.pop %v5086
  %v5088 = vmul.f32 %v5064, 1.442695
  %v5089 = vpow.pop %v5088
  %v5090 = vmul.f32 %v5065, 1.442695
  %v5091 = vpow.pop %v5090
  %v5092 = vmul.f32 %v5066, 1.442695
  %v5093 = vpow.pop %v5092
  %v5094 = vmul.f32 %v5067, 1.442695
  %v5095 = vpow.pop %v5094
  %v5096 = vmul.f32 %v5068, 1.442695
  %v5097 = vpow.pop %v5096
  %v5098 = vmul.f32 %v5069, 1.442695
  %v5099 = vpow.pop %v5098
  %v5100 = vmul.f32 %v5070, 1.442695
  %v5101 = vpow.pop %v5100
  %v5102 = vmul.f32 %v5071, 1.442695
  %v5103 = vpow.pop %v5102
  %v5104 = vsel %vm1329, %v5073, 0.0
  %5105 = vadd.xlane.f32.xlu0 %v5104
  %v5106 = vpop.xlane.xlu0 %5105
  %v5107 = vsel %vm1329, %v5075, 0.0
  %5108 = vadd.xlane.f32.xlu0 %v5107
  %v5109 = vpop.xlane.xlu0 %5108
  %v5110 = vsel %vm1329, %v5077, 0.0
  %5111 = vadd.xlane.f32.xlu0 %v5110
  %v5112 = vpop.xlane.xlu0 %5111
  %v5113 = vsel %vm1329, %v5079, 0.0
  %5114 = vadd.xlane.f32.xlu0 %v5113
  %v5115 = vpop.xlane.xlu0 %5114
  %v5116 = vsel %vm1329, %v5081, 0.0
  %5117 = vadd.xlane.f32.xlu0 %v5116
  %v5118 = vpop.xlane.xlu0 %5117
  %v5119 = vsel %vm1329, %v5083, 0.0
  %5120 = vadd.xlane.f32.xlu0 %v5119
  %v5121 = vpop.xlane.xlu0 %5120
  %v5122 = vsel %vm1329, %v5085, 0.0
  %5123 = vadd.xlane.f32.xlu0 %v5122
  %v5124 = vpop.xlane.xlu0 %5123
  %v5125 = vsel %vm1329, %v5087, 0.0
  %5126 = vadd.xlane.f32.xlu0 %v5125
  %v5127 = vpop.xlane.xlu0 %5126
  %v5128 = vsel %vm1329, %v5089, 0.0
  %5129 = vadd.xlane.f32.xlu0 %v5128
  %v5130 = vpop.xlane.xlu0 %5129
  %v5131 = vsel %vm1329, %v5091, 0.0
  %5132 = vadd.xlane.f32.xlu0 %v5131
  %v5133 = vpop.xlane.xlu0 %5132
  %v5134 = vsel %vm1329, %v5093, 0.0
  %5135 = vadd.xlane.f32.xlu0 %v5134
  %v5136 = vpop.xlane.xlu0 %5135
  %v5137 = vsel %vm1329, %v5095, 0.0
  %5138 = vadd.xlane.f32.xlu0 %v5137
  %v5139 = vpop.xlane.xlu0 %5138
  %v5140 = vsel %vm1329, %v5097, 0.0
  %5141 = vadd.xlane.f32.xlu0 %v5140
  %v5142 = vpop.xlane.xlu0 %5141
  %v5143 = vsel %vm1329, %v5099, 0.0
  %5144 = vadd.xlane.f32.xlu0 %v5143
  %v5145 = vpop.xlane.xlu0 %5144
  %v5146 = vsel %vm1329, %v5101, 0.0
  %5147 = vadd.xlane.f32.xlu0 %v5146
  %v5148 = vpop.xlane.xlu0 %5147
  %v5149 = vsel %vm1329, %v5103, 0.0
  %5150 = vadd.xlane.f32.xlu0 %v5149
  %v5151 = vpop.xlane.xlu0 %5150
  %v5152 = vrcp.pop %v5106
  %v5153 = vmul.f32 %v5073, %v5152
  %v5154 = vrcp.pop %v5109
  %v5155 = vmul.f32 %v5075, %v5154
  %v5156 = vrcp.pop %v5112
  %v5157 = vmul.f32 %v5077, %v5156
  %v5158 = vrcp.pop %v5115
  %v5159 = vmul.f32 %v5079, %v5158
  %v5160 = vrcp.pop %v5118
  %v5161 = vmul.f32 %v5081, %v5160
  %v5162 = vrcp.pop %v5121
  %v5163 = vmul.f32 %v5083, %v5162
  %v5164 = vrcp.pop %v5124
  %v5165 = vmul.f32 %v5085, %v5164
  %v5166 = vrcp.pop %v5127
  %v5167 = vmul.f32 %v5087, %v5166
  %v5168 = vrcp.pop %v5130
  %v5169 = vmul.f32 %v5089, %v5168
  %v5170 = vrcp.pop %v5133
  %v5171 = vmul.f32 %v5091, %v5170
  %v5172 = vrcp.pop %v5136
  %v5173 = vmul.f32 %v5093, %v5172
  %v5174 = vrcp.pop %v5139
  %v5175 = vmul.f32 %v5095, %v5174
  %v5176 = vrcp.pop %v5142
  %v5177 = vmul.f32 %v5097, %v5176
  %v5178 = vrcp.pop %v5145
  %v5179 = vmul.f32 %v5099, %v5178
  %v5180 = vrcp.pop %v5148
  %v5181 = vmul.f32 %v5101, %v5180
  %v5182 = vrcp.pop %v5151
  %v5183 = vmul.f32 %v5103, %v5182
  %v5184 = vsel %vm1329, %v4645, -inf
  %5185 = vmax.xlane.f32.xlu0 %v5184
  %v5186 = vpop.xlane.xlu0 %5185
  %v5187 = vsel %vm1329, %v4648, -inf
  %5188 = vmax.xlane.f32.xlu0 %v5187
  %v5189 = vpop.xlane.xlu0 %5188
  %v5190 = vsel %vm1329, %v4696, -inf
  %5191 = vmax.xlane.f32.xlu0 %v5190
  %v5192 = vpop.xlane.xlu0 %5191
  %v5193 = vsel %vm1329, %v4699, -inf
  %5194 = vmax.xlane.f32.xlu0 %v5193
  %v5195 = vpop.xlane.xlu0 %5194
  %v5196 = vsel %vm1329, %v4747, -inf
  %5197 = vmax.xlane.f32.xlu0 %v5196
  %v5198 = vpop.xlane.xlu0 %5197
  %v5199 = vsel %vm1329, %v4750, -inf
  %5200 = vmax.xlane.f32.xlu0 %v5199
  %v5201 = vpop.xlane.xlu0 %5200
  %v5202 = vsel %vm1329, %v4798, -inf
  %5203 = vmax.xlane.f32.xlu0 %v5202
  %v5204 = vpop.xlane.xlu0 %5203
  %v5205 = vsel %vm1329, %v4801, -inf
  %5206 = vmax.xlane.f32.xlu0 %v5205
  %v5207 = vpop.xlane.xlu0 %5206
  %v5208 = vsel %vm1329, %v4849, -inf
  %5209 = vmax.xlane.f32.xlu0 %v5208
  %v5210 = vpop.xlane.xlu0 %5209
  %v5211 = vsel %vm1329, %v4852, -inf
  %5212 = vmax.xlane.f32.xlu0 %v5211
  %v5213 = vpop.xlane.xlu0 %5212
  %v5214 = vsel %vm1329, %v4900, -inf
  %5215 = vmax.xlane.f32.xlu0 %v5214
  %v5216 = vpop.xlane.xlu0 %5215
  %v5217 = vsel %vm1329, %v4903, -inf
  %5218 = vmax.xlane.f32.xlu0 %v5217
  %v5219 = vpop.xlane.xlu0 %5218
  %v5220 = vsel %vm1329, %v4951, -inf
  %5221 = vmax.xlane.f32.xlu0 %v5220
  %v5222 = vpop.xlane.xlu0 %5221
  %v5223 = vsel %vm1329, %v4954, -inf
  %5224 = vmax.xlane.f32.xlu0 %v5223
  %v5225 = vpop.xlane.xlu0 %5224
  %v5226 = vsel %vm1329, %v5002, -inf
  %5227 = vmax.xlane.f32.xlu0 %v5226
  %v5228 = vpop.xlane.xlu0 %5227
  %v5229 = vsel %vm1329, %v5005, -inf
  %5230 = vmax.xlane.f32.xlu0 %v5229
  %v5231 = vpop.xlane.xlu0 %5230
  %v5232 = vsub.f32 %v4645, %v5186
  %v5233 = vsub.f32 %v4648, %v5189
  %v5234 = vsub.f32 %v4696, %v5192
  %v5235 = vsub.f32 %v4699, %v5195
  %v5236 = vsub.f32 %v4747, %v5198
  %v5237 = vsub.f32 %v4750, %v5201
  %v5238 = vsub.f32 %v4798, %v5204
  %v5239 = vsub.f32 %v4801, %v5207
  %v5240 = vsub.f32 %v4849, %v5210
  %v5241 = vsub.f32 %v4852, %v5213
  %v5242 = vsub.f32 %v4900, %v5216
  %v5243 = vsub.f32 %v4903, %v5219
  %v5244 = vsub.f32 %v4951, %v5222
  %v5245 = vsub.f32 %v4954, %v5225
  %v5246 = vsub.f32 %v5002, %v5228
  %v5247 = vsub.f32 %v5005, %v5231
  %v5248 = vmul.f32 %v5232, 1.442695
  %v5249 = vpow.pop %v5248
  %v5250 = vmul.f32 %v5233, 1.442695
  %v5251 = vpow.pop %v5250
  %v5252 = vmul.f32 %v5234, 1.442695
  %v5253 = vpow.pop %v5252
  %v5254 = vmul.f32 %v5235, 1.442695
  %v5255 = vpow.pop %v5254
  %v5256 = vmul.f32 %v5236, 1.442695
  %v5257 = vpow.pop %v5256
  %v5258 = vmul.f32 %v5237, 1.442695
  %v5259 = vpow.pop %v5258
  %v5260 = vmul.f32 %v5238, 1.442695
  %v5261 = vpow.pop %v5260
  %v5262 = vmul.f32 %v5239, 1.442695
  %v5263 = vpow.pop %v5262
  %v5264 = vmul.f32 %v5240, 1.442695
  %v5265 = vpow.pop %v5264
  %v5266 = vmul.f32 %v5241, 1.442695
  %v5267 = vpow.pop %v5266
  %v5268 = vmul.f32 %v5242, 1.442695
  %v5269 = vpow.pop %v5268
  %v5270 = vmul.f32 %v5243, 1.442695
  %v5271 = vpow.pop %v5270
  %v5272 = vmul.f32 %v5244, 1.442695
  %v5273 = vpow.pop %v5272
  %v5274 = vmul.f32 %v5245, 1.442695
  %v5275 = vpow.pop %v5274
  %v5276 = vmul.f32 %v5246, 1.442695
  %v5277 = vpow.pop %v5276
  %v5278 = vmul.f32 %v5247, 1.442695
  %v5279 = vpow.pop %v5278
  %v5280 = vsel %vm1329, %v5249, 0.0
  %5281 = vadd.xlane.f32.xlu0 %v5280
  %v5282 = vpop.xlane.xlu0 %5281
  %v5283 = vsel %vm1329, %v5251, 0.0
  %5284 = vadd.xlane.f32.xlu0 %v5283
  %v5285 = vpop.xlane.xlu0 %5284
  %v5286 = vsel %vm1329, %v5253, 0.0
  %5287 = vadd.xlane.f32.xlu0 %v5286
  %v5288 = vpop.xlane.xlu0 %5287
  %v5289 = vsel %vm1329, %v5255, 0.0
  %5290 = vadd.xlane.f32.xlu0 %v5289
  %v5291 = vpop.xlane.xlu0 %5290
  %v5292 = vsel %vm1329, %v5257, 0.0
  %5293 = vadd.xlane.f32.xlu0 %v5292
  %v5294 = vpop.xlane.xlu0 %5293
  %v5295 = vsel %vm1329, %v5259, 0.0
  %5296 = vadd.xlane.f32.xlu0 %v5295
  %v5297 = vpop.xlane.xlu0 %5296
  %v5298 = vsel %vm1329, %v5261, 0.0
  %5299 = vadd.xlane.f32.xlu0 %v5298
  %v5300 = vpop.xlane.xlu0 %5299
  %v5301 = vsel %vm1329, %v5263, 0.0
  %5302 = vadd.xlane.f32.xlu0 %v5301
  %v5303 = vpop.xlane.xlu0 %5302
  %v5304 = vsel %vm1329, %v5265, 0.0
  %5305 = vadd.xlane.f32.xlu0 %v5304
  %v5306 = vpop.xlane.xlu0 %5305
  %v5307 = vsel %vm1329, %v5267, 0.0
  %5308 = vadd.xlane.f32.xlu0 %v5307
  %v5309 = vpop.xlane.xlu0 %5308
  %v5310 = vsel %vm1329, %v5269, 0.0
  %5311 = vadd.xlane.f32.xlu0 %v5310
  %v5312 = vpop.xlane.xlu0 %5311
  %v5313 = vsel %vm1329, %v5271, 0.0
  %5314 = vadd.xlane.f32.xlu0 %v5313
  %v5315 = vpop.xlane.xlu0 %5314
  %v5316 = vsel %vm1329, %v5273, 0.0
  %5317 = vadd.xlane.f32.xlu0 %v5316
  %v5318 = vpop.xlane.xlu0 %5317
  %v5319 = vsel %vm1329, %v5275, 0.0
  %5320 = vadd.xlane.f32.xlu0 %v5319
  %v5321 = vpop.xlane.xlu0 %5320
  %v5322 = vsel %vm1329, %v5277, 0.0
  %5323 = vadd.xlane.f32.xlu0 %v5322
  %v5324 = vpop.xlane.xlu0 %5323
  %v5325 = vsel %vm1329, %v5279, 0.0
  %5326 = vadd.xlane.f32.xlu0 %v5325
  %v5327 = vpop.xlane.xlu0 %5326
  %v5328 = vrcp.pop %v5282
  %v5329 = vmul.f32 %v5249, %v5328
  %v5330 = vrcp.pop %v5285
  %v5331 = vmul.f32 %v5251, %v5330
  %v5332 = vrcp.pop %v5288
  %v5333 = vmul.f32 %v5253, %v5332
  %v5334 = vrcp.pop %v5291
  %v5335 = vmul.f32 %v5255, %v5334
  %v5336 = vrcp.pop %v5294
  %v5337 = vmul.f32 %v5257, %v5336
  %v5338 = vrcp.pop %v5297
  %v5339 = vmul.f32 %v5259, %v5338
  %v5340 = vrcp.pop %v5300
  %v5341 = vmul.f32 %v5261, %v5340
  %v5342 = vrcp.pop %v5303
  %v5343 = vmul.f32 %v5263, %v5342
  %v5344 = vrcp.pop %v5306
  %v5345 = vmul.f32 %v5265, %v5344
  %v5346 = vrcp.pop %v5309
  %v5347 = vmul.f32 %v5267, %v5346
  %v5348 = vrcp.pop %v5312
  %v5349 = vmul.f32 %v5269, %v5348
  %v5350 = vrcp.pop %v5315
  %v5351 = vmul.f32 %v5271, %v5350
  %v5352 = vrcp.pop %v5318
  %v5353 = vmul.f32 %v5273, %v5352
  %v5354 = vrcp.pop %v5321
  %v5355 = vmul.f32 %v5275, %v5354
  %v5356 = vrcp.pop %v5324
  %v5357 = vmul.f32 %v5277, %v5356
  %v5358 = vrcp.pop %v5327
  %v5359 = vmul.f32 %v5279, %v5358
  %v5360 = vmul.f32 %v1682, %v5329
  %v5361 = vmul.f32 %v1682, %v5331
  %v5362 = vmul.f32 %v1682, %v5333
  %v5363 = vmul.f32 %v1682, %v5335
  %v5364 = vmul.f32 %v1682, %v5337
  %v5365 = vmul.f32 %v1682, %v5339
  %v5366 = vmul.f32 %v1682, %v5341
  %v5367 = vmul.f32 %v1682, %v5343
  %v5368 = vmul.f32 %v1682, %v5345
  %v5369 = vmul.f32 %v1682, %v5347
  %v5370 = vmul.f32 %v1682, %v5349
  %v5371 = vmul.f32 %v1682, %v5351
  %v5372 = vmul.f32 %v1682, %v5353
  %v5373 = vmul.f32 %v1682, %v5355
  %v5374 = vmul.f32 %v1682, %v5357
  %v5375 = vmul.f32 %v1682, %v5359
  %v5376 = vsub.f32 %v5153, %v5360
  %v5377 = vsub.f32 %v5155, %v5361
  %v5378 = vsub.f32 %v5157, %v5362
  %v5379 = vsub.f32 %v5159, %v5363
  %v5380 = vsub.f32 %v5161, %v5364
  %v5381 = vsub.f32 %v5163, %v5365
  %v5382 = vsub.f32 %v5165, %v5366
  %v5383 = vsub.f32 %v5167, %v5367
  %v5384 = vsub.f32 %v5169, %v5368
  %v5385 = vsub.f32 %v5171, %v5369
  %v5386 = vsub.f32 %v5173, %v5370
  %v5387 = vsub.f32 %v5175, %v5371
  %v5388 = vsub.f32 %v5177, %v5372
  %v5389 = vsub.f32 %v5179, %v5373
  %v5390 = vsub.f32 %v5181, %v5374
  %v5391 = vsub.f32 %v5183, %v5375
  %v5392 = vpack.c.bf16 %v5377, %v5376
  %v5393 = vpack.c.bf16 %v5379, %v5378
  %v5394 = vpack.c.bf16 %v5381, %v5380
  %v5395 = vpack.c.bf16 %v5383, %v5382
  %v5396 = vpack.c.bf16 %v5385, %v5384
  %v5397 = vpack.c.bf16 %v5387, %v5386
  %v5398 = vpack.c.bf16 %v5389, %v5388
  %v5399 = vpack.c.bf16 %v5391, %v5390
  %5400 = vrot.lane.b32.xlu0 %v512, 96
  %v5401 = vpop.permute.xlu0 %5400
  %v5404 = vsel %vm1329, %v5392, 0
  %5406 = vmatprep.subr.bf16.mxu0 0
  %5407 = vmatpush1.bf16.msra.mxu0 %v5401
  %5408 = vmatprep.subr.bf16.mxu0 0
  %5409 = vmatpush1.bf16.msra.mxu0 0
  %5410 = vmatprep.subr.bf16.mxu0 0
  %5411 = vmatpush1.bf16.msra.mxu0 0
  %5412 = vmatprep.subr.bf16.mxu0 0
  %5413 = vmatpush1.bf16.msra.mxu0 0
  %5414 = vmatprep.subr.bf16.mxu0 0
  %5415 = vmatpush1.bf16.msra.mxu0 0
  %5416 = vmatprep.subr.bf16.mxu0 0
  %5417 = vmatpush1.bf16.msra.mxu0 0
  %5418 = vmatprep.subr.bf16.mxu0 0
  %5419 = vmatpush1.bf16.msra.mxu0 0
  %5420 = vmatprep.subr.bf16.mxu0 0
  %5421 = vmatpush1.bf16.msra.mxu0 0
  %5422 = vmatprep.subr.bf16.mxu0 0
  %5423 = vmatpush1.bf16.msra.mxu0 0
  %5424 = vmatprep.subr.bf16.mxu0 0
  %5425 = vmatpush1.bf16.msra.mxu0 0
  %5426 = vmatprep.subr.bf16.mxu0 0
  %5427 = vmatpush1.bf16.msra.mxu0 0
  %5428 = vmatprep.subr.bf16.mxu0 0
  %5429 = vmatpush1.bf16.msra.mxu0 0
  %5430 = vmatprep.subr.bf16.mxu0 0
  %5431 = vmatpush1.bf16.msra.mxu0 0
  %5432 = vmatprep.subr.bf16.mxu0 0
  %5433 = vmatpush1.bf16.msra.mxu0 0
  %5434 = vmatprep.subr.bf16.mxu0 0
  %5435 = vmatpush1.bf16.msra.mxu0 0
  %5436 = vmatprep.subr.bf16.mxu0 0
  %5437 = vmatpush1.bf16.msra.mxu0 0
  %5438 = vmatprep.mubr.bf16.mxu0 0
  %5439 = vmatmul.mubr.bf16.gmra.mrb[0].mxu0 %v5404
  %v5440 = vpop.f32.mrb[0].mxu0
  %v5441 = vadd.f32 0.0, %v5440
  %v5442 = vpop.f32.mrb[0].mxu0
  %v5443 = vpop.f32.mrb[0].mxu0
  %v5444 = vadd.f32 0.0, %v5443
  %v5445 = vpop.f32.mrb[0].mxu0
  %5446 = vdwg.mxu0
  %5447 = vrot.lane.b32.xlu0 %v513, 96
  %v5448 = vpop.permute.xlu0 %5447
  %v5451 = vsel %vm1329, %v5393, 0
  %5453 = vmatprep.subr.bf16.mxu0 0
  %5454 = vmatpush1.bf16.msra.mxu0 %v5448
  %5455 = vmatprep.subr.bf16.mxu0 0
  %5456 = vmatpush1.bf16.msra.mxu0 0
  %5457 = vmatprep.subr.bf16.mxu0 0
  %5458 = vmatpush1.bf16.msra.mxu0 0
  %5459 = vmatprep.subr.bf16.mxu0 0
  %5460 = vmatpush1.bf16.msra.mxu0 0
  %5461 = vmatprep.subr.bf16.mxu0 0
  %5462 = vmatpush1.bf16.msra.mxu0 0
  %5463 = vmatprep.subr.bf16.mxu0 0
  %5464 = vmatpush1.bf16.msra.mxu0 0
  %5465 = vmatprep.subr.bf16.mxu0 0
  %5466 = vmatpush1.bf16.msra.mxu0 0
  %5467 = vmatprep.subr.bf16.mxu0 0
  %5468 = vmatpush1.bf16.msra.mxu0 0
  %5469 = vmatprep.subr.bf16.mxu0 0
  %5470 = vmatpush1.bf16.msra.mxu0 0
  %5471 = vmatprep.subr.bf16.mxu0 0
  %5472 = vmatpush1.bf16.msra.mxu0 0
  %5473 = vmatprep.subr.bf16.mxu0 0
  %5474 = vmatpush1.bf16.msra.mxu0 0
  %5475 = vmatprep.subr.bf16.mxu0 0
  %5476 = vmatpush1.bf16.msra.mxu0 0
  %5477 = vmatprep.subr.bf16.mxu0 0
  %5478 = vmatpush1.bf16.msra.mxu0 0
  %5479 = vmatprep.subr.bf16.mxu0 0
  %5480 = vmatpush1.bf16.msra.mxu0 0
  %5481 = vmatprep.subr.bf16.mxu0 0
  %5482 = vmatpush1.bf16.msra.mxu0 0
  %5483 = vmatprep.subr.bf16.mxu0 0
  %5484 = vmatpush1.bf16.msra.mxu0 0
  %5485 = vmatprep.mubr.bf16.mxu0 0
  %5486 = vmatmul.mubr.bf16.gmra.mrb[0].mxu0 %v5451
  %v5487 = vpop.f32.mrb[0].mxu0
  %v5488 = vadd.f32 0.0, %v5487
  %v5489 = vpop.f32.mrb[0].mxu0
  %v5490 = vpop.f32.mrb[0].mxu0
  %v5491 = vadd.f32 0.0, %v5490
  %v5492 = vpop.f32.mrb[0].mxu0
  %5493 = vdwg.mxu0
  %5494 = vrot.lane.b32.xlu0 %v514, 96
  %v5495 = vpop.permute.xlu0 %5494
  %v5498 = vsel %vm1329, %v5394, 0
  %5500 = vmatprep.subr.bf16.mxu0 0
  %5501 = vmatpush1.bf16.msra.mxu0 %v5495
  %5502 = vmatprep.subr.bf16.mxu0 0
  %5503 = vmatpush1.bf16.msra.mxu0 0
  %5504 = vmatprep.subr.bf16.mxu0 0
  %5505 = vmatpush1.bf16.msra.mxu0 0
  %5506 = vmatprep.subr.bf16.mxu0 0
  %5507 = vmatpush1.bf16.msra.mxu0 0
  %5508 = vmatprep.subr.bf16.mxu0 0
  %5509 = vmatpush1.bf16.msra.mxu0 0
  %5510 = vmatprep.subr.bf16.mxu0 0
  %5511 = vmatpush1.bf16.msra.mxu0 0
  %5512 = vmatprep.subr.bf16.mxu0 0
  %5513 = vmatpush1.bf16.msra.mxu0 0
  %5514 = vmatprep.subr.bf16.mxu0 0
  %5515 = vmatpush1.bf16.msra.mxu0 0
  %5516 = vmatprep.subr.bf16.mxu0 0
  %5517 = vmatpush1.bf16.msra.mxu0 0
  %5518 = vmatprep.subr.bf16.mxu0 0
  %5519 = vmatpush1.bf16.msra.mxu0 0
  %5520 = vmatprep.subr.bf16.mxu0 0
  %5521 = vmatpush1.bf16.msra.mxu0 0
  %5522 = vmatprep.subr.bf16.mxu0 0
  %5523 = vmatpush1.bf16.msra.mxu0 0
  %5524 = vmatprep.subr.bf16.mxu0 0
  %5525 = vmatpush1.bf16.msra.mxu0 0
  %5526 = vmatprep.subr.bf16.mxu0 0
  %5527 = vmatpush1.bf16.msra.mxu0 0
  %5528 = vmatprep.subr.bf16.mxu0 0
  %5529 = vmatpush1.bf16.msra.mxu0 0
  %5530 = vmatprep.subr.bf16.mxu0 0
  %5531 = vmatpush1.bf16.msra.mxu0 0
  %5532 = vmatprep.mubr.bf16.mxu0 0
  %5533 = vmatmul.mubr.bf16.gmra.mrb[0].mxu0 %v5498
  %v5534 = vpop.f32.mrb[0].mxu0
  %v5535 = vadd.f32 0.0, %v5534
  %v5536 = vpop.f32.mrb[0].mxu0
  %v5537 = vpop.f32.mrb[0].mxu0
  %v5538 = vadd.f32 0.0, %v5537
  %v5539 = vpop.f32.mrb[0].mxu0
  %5540 = vdwg.mxu0
  %5541 = vrot.lane.b32.xlu0 %v515, 96
  %v5542 = vpop.permute.xlu0 %5541
  %v5545 = vsel %vm1329, %v5395, 0
  %5547 = vmatprep.subr.bf16.mxu0 0
  %5548 = vmatpush1.bf16.msra.mxu0 %v5542
  %5549 = vmatprep.subr.bf16.mxu0 0
  %5550 = vmatpush1.bf16.msra.mxu0 0
  %5551 = vmatprep.subr.bf16.mxu0 0
  %5552 = vmatpush1.bf16.msra.mxu0 0
  %5553 = vmatprep.subr.bf16.mxu0 0
  %5554 = vmatpush1.bf16.msra.mxu0 0
  %5555 = vmatprep.subr.bf16.mxu0 0
  %5556 = vmatpush1.bf16.msra.mxu0 0
  %5557 = vmatprep.subr.bf16.mxu0 0
  %5558 = vmatpush1.bf16.msra.mxu0 0
  %5559 = vmatprep.subr.bf16.mxu0 0
  %5560 = vmatpush1.bf16.msra.mxu0 0
  %5561 = vmatprep.subr.bf16.mxu0 0
  %5562 = vmatpush1.bf16.msra.mxu0 0
  %5563 = vmatprep.subr.bf16.mxu0 0
  %5564 = vmatpush1.bf16.msra.mxu0 0
  %5565 = vmatprep.subr.bf16.mxu0 0
  %5566 = vmatpush1.bf16.msra.mxu0 0
  %5567 = vmatprep.subr.bf16.mxu0 0
  %5568 = vmatpush1.bf16.msra.mxu0 0
  %5569 = vmatprep.subr.bf16.mxu0 0
  %5570 = vmatpush1.bf16.msra.mxu0 0
  %5571 = vmatprep.subr.bf16.mxu0 0
  %5572 = vmatpush1.bf16.msra.mxu0 0
  %5573 = vmatprep.subr.bf16.mxu0 0
  %5574 = vmatpush1.bf16.msra.mxu0 0
  %5575 = vmatprep.subr.bf16.mxu0 0
  %5576 = vmatpush1.bf16.msra.mxu0 0
  %5577 = vmatprep.subr.bf16.mxu0 0
  %5578 = vmatpush1.bf16.msra.mxu0 0
  %5579 = vmatprep.mubr.bf16.mxu0 0
  %5580 = vmatmul.mubr.bf16.gmra.mrb[0].mxu0 %v5545
  %v5581 = vpop.f32.mrb[0].mxu0
  %v5582 = vadd.f32 0.0, %v5581
  %v5583 = vpop.f32.mrb[0].mxu0
  %v5584 = vpop.f32.mrb[0].mxu0
  %v5585 = vadd.f32 0.0, %v5584
  %v5586 = vpop.f32.mrb[0].mxu0
  %5587 = vdwg.mxu0
  %5588 = vrot.lane.b32.xlu0 %v516, 96
  %v5589 = vpop.permute.xlu0 %5588
  %v5592 = vsel %vm1329, %v5396, 0
  %5594 = vmatprep.subr.bf16.mxu0 0
  %5595 = vmatpush1.bf16.msra.mxu0 %v5589
  %5596 = vmatprep.subr.bf16.mxu0 0
  %5597 = vmatpush1.bf16.msra.mxu0 0
  %5598 = vmatprep.subr.bf16.mxu0 0
  %5599 = vmatpush1.bf16.msra.mxu0 0
  %5600 = vmatprep.subr.bf16.mxu0 0
  %5601 = vmatpush1.bf16.msra.mxu0 0
  %5602 = vmatprep.subr.bf16.mxu0 0
  %5603 = vmatpush1.bf16.msra.mxu0 0
  %5604 = vmatprep.subr.bf16.mxu0 0
  %5605 = vmatpush1.bf16.msra.mxu0 0
  %5606 = vmatprep.subr.bf16.mxu0 0
  %5607 = vmatpush1.bf16.msra.mxu0 0
  %5608 = vmatprep.subr.bf16.mxu0 0
  %5609 = vmatpush1.bf16.msra.mxu0 0
  %5610 = vmatprep.subr.bf16.mxu0 0
  %5611 = vmatpush1.bf16.msra.mxu0 0
  %5612 = vmatprep.subr.bf16.mxu0 0
  %5613 = vmatpush1.bf16.msra.mxu0 0
  %5614 = vmatprep.subr.bf16.mxu0 0
  %5615 = vmatpush1.bf16.msra.mxu0 0
  %5616 = vmatprep.subr.bf16.mxu0 0
  %5617 = vmatpush1.bf16.msra.mxu0 0
  %5618 = vmatprep.subr.bf16.mxu0 0
  %5619 = vmatpush1.bf16.msra.mxu0 0
  %5620 = vmatprep.subr.bf16.mxu0 0
  %5621 = vmatpush1.bf16.msra.mxu0 0
  %5622 = vmatprep.subr.bf16.mxu0 0
  %5623 = vmatpush1.bf16.msra.mxu0 0
  %5624 = vmatprep.subr.bf16.mxu0 0
  %5625 = vmatpush1.bf16.msra.mxu0 0
  %5626 = vmatprep.mubr.bf16.mxu0 0
  %5627 = vmatmul.mubr.bf16.gmra.mrb[0].mxu0 %v5592
  %v5628 = vpop.f32.mrb[0].mxu0
  %v5629 = vadd.f32 0.0, %v5628
  %v5630 = vpop.f32.mrb[0].mxu0
  %v5631 = vpop.f32.mrb[0].mxu0
  %v5632 = vadd.f32 0.0, %v5631
  %v5633 = vpop.f32.mrb[0].mxu0
  %5634 = vdwg.mxu0
  %5635 = vrot.lane.b32.xlu0 %v517, 96
  %v5636 = vpop.permute.xlu0 %5635
  %v5639 = vsel %vm1329, %v5397, 0
  %5641 = vmatprep.subr.bf16.mxu0 0
  %5642 = vmatpush1.bf16.msra.mxu0 %v5636
  %5643 = vmatprep.subr.bf16.mxu0 0
  %5644 = vmatpush1.bf16.msra.mxu0 0
  %5645 = vmatprep.subr.bf16.mxu0 0
  %5646 = vmatpush1.bf16.msra.mxu0 0
  %5647 = vmatprep.subr.bf16.mxu0 0
  %5648 = vmatpush1.bf16.msra.mxu0 0
  %5649 = vmatprep.subr.bf16.mxu0 0
  %5650 = vmatpush1.bf16.msra.mxu0 0
  %5651 = vmatprep.subr.bf16.mxu0 0
  %5652 = vmatpush1.bf16.msra.mxu0 0
  %5653 = vmatprep.subr.bf16.mxu0 0
  %5654 = vmatpush1.bf16.msra.mxu0 0
  %5655 = vmatprep.subr.bf16.mxu0 0
  %5656 = vmatpush1.bf16.msra.mxu0 0
  %5657 = vmatprep.subr.bf16.mxu0 0
  %5658 = vmatpush1.bf16.msra.mxu0 0
  %5659 = vmatprep.subr.bf16.mxu0 0
  %5660 = vmatpush1.bf16.msra.mxu0 0
  %5661 = vmatprep.subr.bf16.mxu0 0
  %5662 = vmatpush1.bf16.msra.mxu0 0
  %5663 = vmatprep.subr.bf16.mxu0 0
  %5664 = vmatpush1.bf16.msra.mxu0 0
  %5665 = vmatprep.subr.bf16.mxu0 0
  %5666 = vmatpush1.bf16.msra.mxu0 0
  %5667 = vmatprep.subr.bf16.mxu0 0
  %5668 = vmatpush1.bf16.msra.mxu0 0
  %5669 = vmatprep.subr.bf16.mxu0 0
  %5670 = vmatpush1.bf16.msra.mxu0 0
  %5671 = vmatprep.subr.bf16.mxu0 0
  %5672 = vmatpush1.bf16.msra.mxu0 0
  %5673 = vmatprep.mubr.bf16.mxu0 0
  %5674 = vmatmul.mubr.bf16.gmra.mrb[0].mxu0 %v5639
  %v5675 = vpop.f32.mrb[0].mxu0
  %v5676 = vadd.f32 0.0, %v5675
  %v5677 = vpop.f32.mrb[0].mxu0
  %v5678 = vpop.f32.mrb[0].mxu0
  %v5679 = vadd.f32 0.0, %v5678
  %v5680 = vpop.f32.mrb[0].mxu0
  %5681 = vdwg.mxu0
  %5682 = vrot.lane.b32.xlu0 %v518, 96
  %v5683 = vpop.permute.xlu0 %5682
  %v5686 = vsel %vm1329, %v5398, 0
  %5688 = vmatprep.subr.bf16.mxu0 0
  %5689 = vmatpush1.bf16.msra.mxu0 %v5683
  %5690 = vmatprep.subr.bf16.mxu0 0
  %5691 = vmatpush1.bf16.msra.mxu0 0
  %5692 = vmatprep.subr.bf16.mxu0 0
  %5693 = vmatpush1.bf16.msra.mxu0 0
  %5694 = vmatprep.subr.bf16.mxu0 0
  %5695 = vmatpush1.bf16.msra.mxu0 0
  %5696 = vmatprep.subr.bf16.mxu0 0
  %5697 = vmatpush1.bf16.msra.mxu0 0
  %5698 = vmatprep.subr.bf16.mxu0 0
  %5699 = vmatpush1.bf16.msra.mxu0 0
  %5700 = vmatprep.subr.bf16.mxu0 0
  %5701 = vmatpush1.bf16.msra.mxu0 0
  %5702 = vmatprep.subr.bf16.mxu0 0
  %5703 = vmatpush1.bf16.msra.mxu0 0
  %5704 = vmatprep.subr.bf16.mxu0 0
  %5705 = vmatpush1.bf16.msra.mxu0 0
  %5706 = vmatprep.subr.bf16.mxu0 0
  %5707 = vmatpush1.bf16.msra.mxu0 0
  %5708 = vmatprep.subr.bf16.mxu0 0
  %5709 = vmatpush1.bf16.msra.mxu0 0
  %5710 = vmatprep.subr.bf16.mxu0 0
  %5711 = vmatpush1.bf16.msra.mxu0 0
  %5712 = vmatprep.subr.bf16.mxu0 0
  %5713 = vmatpush1.bf16.msra.mxu0 0
  %5714 = vmatprep.subr.bf16.mxu0 0
  %5715 = vmatpush1.bf16.msra.mxu0 0
  %5716 = vmatprep.subr.bf16.mxu0 0
  %5717 = vmatpush1.bf16.msra.mxu0 0
  %5718 = vmatprep.subr.bf16.mxu0 0
  %5719 = vmatpush1.bf16.msra.mxu0 0
  %5720 = vmatprep.mubr.bf16.mxu0 0
  %5721 = vmatmul.mubr.bf16.gmra.mrb[0].mxu0 %v5686
  %v5722 = vpop.f32.mrb[0].mxu0
  %v5723 = vadd.f32 0.0, %v5722
  %v5724 = vpop.f32.mrb[0].mxu0
  %v5725 = vpop.f32.mrb[0].mxu0
  %v5726 = vadd.f32 0.0, %v5725
  %v5727 = vpop.f32.mrb[0].mxu0
  %5728 = vdwg.mxu0
  %5729 = vrot.lane.b32.xlu0 %v519, 96
  %v5730 = vpop.permute.xlu0 %5729
  %v5733 = vsel %vm1329, %v5399, 0
  %5735 = vmatprep.subr.bf16.mxu0 0
  %5736 = vmatpush1.bf16.msra.mxu0 %v5730
  %5737 = vmatprep.subr.bf16.mxu0 0
  %5738 = vmatpush1.bf16.msra.mxu0 0
  %5739 = vmatprep.subr.bf16.mxu0 0
  %5740 = vmatpush1.bf16.msra.mxu0 0
  %5741 = vmatprep.subr.bf16.mxu0 0
  %5742 = vmatpush1.bf16.msra.mxu0 0
  %5743 = vmatprep.subr.bf16.mxu0 0
  %5744 = vmatpush1.bf16.msra.mxu0 0
  %5745 = vmatprep.subr.bf16.mxu0 0
  %5746 = vmatpush1.bf16.msra.mxu0 0
  %5747 = vmatprep.subr.bf16.mxu0 0
  %5748 = vmatpush1.bf16.msra.mxu0 0
  %5749 = vmatprep.subr.bf16.mxu0 0
  %5750 = vmatpush1.bf16.msra.mxu0 0
  %5751 = vmatprep.subr.bf16.mxu0 0
  %5752 = vmatpush1.bf16.msra.mxu0 0
  %5753 = vmatprep.subr.bf16.mxu0 0
  %5754 = vmatpush1.bf16.msra.mxu0 0
  %5755 = vmatprep.subr.bf16.mxu0 0
  %5756 = vmatpush1.bf16.msra.mxu0 0
  %5757 = vmatprep.subr.bf16.mxu0 0
  %5758 = vmatpush1.bf16.msra.mxu0 0
  %5759 = vmatprep.subr.bf16.mxu0 0
  %5760 = vmatpush1.bf16.msra.mxu0 0
  %5761 = vmatprep.subr.bf16.mxu0 0
  %5762 = vmatpush1.bf16.msra.mxu0 0
  %5763 = vmatprep.subr.bf16.mxu0 0
  %5764 = vmatpush1.bf16.msra.mxu0 0
  %5765 = vmatprep.subr.bf16.mxu0 0
  %5766 = vmatpush1.bf16.msra.mxu0 0
  %5767 = vmatprep.mubr.bf16.mxu0 0
  %5768 = vmatmul.mubr.bf16.gmra.mrb[0].mxu0 %v5733
  %v5769 = vpop.f32.mrb[0].mxu0
  %v5770 = vadd.f32 0.0, %v5769
  %v5771 = vpop.f32.mrb[0].mxu0
  %v5772 = vpop.f32.mrb[0].mxu0
  %v5773 = vadd.f32 0.0, %v5772
  %v5774 = vpop.f32.mrb[0].mxu0
  %5775 = vdwg.mxu0
  %v5776 = vsel %vm1329, %v5441, 0.0
  %5777 = vadd.xlane.f32.xlu0 %v5776
  %v5778 = vpop.xlane.xlu0 %5777
  %v5779 = vsel %vm1329, %v5444, 0.0
  %5780 = vadd.xlane.f32.xlu0 %v5779
  %v5781 = vpop.xlane.xlu0 %5780
  %v5782 = vsel %vm1329, %v5488, 0.0
  %5783 = vadd.xlane.f32.xlu0 %v5782
  %v5784 = vpop.xlane.xlu0 %5783
  %v5785 = vsel %vm1329, %v5491, 0.0
  %5786 = vadd.xlane.f32.xlu0 %v5785
  %v5787 = vpop.xlane.xlu0 %5786
  %v5788 = vsel %vm1329, %v5535, 0.0
  %5789 = vadd.xlane.f32.xlu0 %v5788
  %v5790 = vpop.xlane.xlu0 %5789
  %v5791 = vsel %vm1329, %v5538, 0.0
  %5792 = vadd.xlane.f32.xlu0 %v5791
  %v5793 = vpop.xlane.xlu0 %5792
  %v5794 = vsel %vm1329, %v5582, 0.0
  %5795 = vadd.xlane.f32.xlu0 %v5794
  %v5796 = vpop.xlane.xlu0 %5795
  %v5797 = vsel %vm1329, %v5585, 0.0
  %5798 = vadd.xlane.f32.xlu0 %v5797
  %v5799 = vpop.xlane.xlu0 %5798
  %v5800 = vsel %vm1329, %v5629, 0.0
  %5801 = vadd.xlane.f32.xlu0 %v5800
  %v5802 = vpop.xlane.xlu0 %5801
  %v5803 = vsel %vm1329, %v5632, 0.0
  %5804 = vadd.xlane.f32.xlu0 %v5803
  %v5805 = vpop.xlane.xlu0 %5804
  %v5806 = vsel %vm1329, %v5676, 0.0
  %5807 = vadd.xlane.f32.xlu0 %v5806
  %v5808 = vpop.xlane.xlu0 %5807
  %v5809 = vsel %vm1329, %v5679, 0.0
  %5810 = vadd.xlane.f32.xlu0 %v5809
  %v5811 = vpop.xlane.xlu0 %5810
  %v5812 = vsel %vm1329, %v5723, 0.0
  %5813 = vadd.xlane.f32.xlu0 %v5812
  %v5814 = vpop.xlane.xlu0 %5813
  %v5815 = vsel %vm1329, %v5726, 0.0
  %5816 = vadd.xlane.f32.xlu0 %v5815
  %v5817 = vpop.xlane.xlu0 %5816
  %v5818 = vsel %vm1329, %v5770, 0.0
  %5819 = vadd.xlane.f32.xlu0 %v5818
  %v5820 = vpop.xlane.xlu0 %5819
  %v5821 = vsel %vm1329, %v5773, 0.0
  %5822 = vadd.xlane.f32.xlu0 %v5821
  %v5823 = vpop.xlane.xlu0 %5822
  %v5824 = vmul.f32 %v5778, %v2123
  %v5825 = vmul.f32 %v5781, %v2123
  %v5826 = vmul.f32 %v5784, %v2123
  %v5827 = vmul.f32 %v5787, %v2123
  %v5828 = vmul.f32 %v5790, %v2123
  %v5829 = vmul.f32 %v5793, %v2123
  %v5830 = vmul.f32 %v5796, %v2123
  %v5831 = vmul.f32 %v5799, %v2123
  %v5832 = vmul.f32 %v5802, %v2123
  %v5833 = vmul.f32 %v5805, %v2123
  %v5834 = vmul.f32 %v5808, %v2123
  %v5835 = vmul.f32 %v5811, %v2123
  %v5836 = vmul.f32 %v5814, %v2123
  %v5837 = vmul.f32 %v5817, %v2123
  %v5838 = vmul.f32 %v5820, %v2123
  %v5839 = vmul.f32 %v5823, %v2123
  %v5840 = vsub.f32 %v5441, %v5824
  %v5841 = vsub.f32 %v5444, %v5825
  %v5842 = vsub.f32 %v5488, %v5826
  %v5843 = vsub.f32 %v5491, %v5827
  %v5844 = vsub.f32 %v5535, %v5828
  %v5845 = vsub.f32 %v5538, %v5829
  %v5846 = vsub.f32 %v5582, %v5830
  %v5847 = vsub.f32 %v5585, %v5831
  %v5848 = vsub.f32 %v5629, %v5832
  %v5849 = vsub.f32 %v5632, %v5833
  %v5850 = vsub.f32 %v5676, %v5834
  %v5851 = vsub.f32 %v5679, %v5835
  %v5852 = vsub.f32 %v5723, %v5836
  %v5853 = vsub.f32 %v5726, %v5837
  %v5854 = vsub.f32 %v5770, %v5838
  %v5855 = vsub.f32 %v5773, %v5839
  %v5856 = vmul.f32 %v5840, %v5840
  %v5857 = vmul.f32 %v5841, %v5841
  %v5858 = vmul.f32 %v5842, %v5842
  %v5859 = vmul.f32 %v5843, %v5843
  %v5860 = vmul.f32 %v5844, %v5844
  %v5861 = vmul.f32 %v5845, %v5845
  %v5862 = vmul.f32 %v5846, %v5846
  %v5863 = vmul.f32 %v5847, %v5847
  %v5864 = vmul.f32 %v5848, %v5848
  %v5865 = vmul.f32 %v5849, %v5849
  %v5866 = vmul.f32 %v5850, %v5850
  %v5867 = vmul.f32 %v5851, %v5851
  %v5868 = vmul.f32 %v5852, %v5852
  %v5869 = vmul.f32 %v5853, %v5853
  %v5870 = vmul.f32 %v5854, %v5854
  %v5871 = vmul.f32 %v5855, %v5855
  %v5872 = vsel %vm1329, %v5856, 0.0
  %5873 = vadd.xlane.f32.xlu0 %v5872
  %v5874 = vpop.xlane.xlu0 %5873
  %v5875 = vsel %vm1329, %v5857, 0.0
  %5876 = vadd.xlane.f32.xlu0 %v5875
  %v5877 = vpop.xlane.xlu0 %5876
  %v5878 = vsel %vm1329, %v5858, 0.0
  %5879 = vadd.xlane.f32.xlu0 %v5878
  %v5880 = vpop.xlane.xlu0 %5879
  %v5881 = vsel %vm1329, %v5859, 0.0
  %5882 = vadd.xlane.f32.xlu0 %v5881
  %v5883 = vpop.xlane.xlu0 %5882
  %v5884 = vsel %vm1329, %v5860, 0.0
  %5885 = vadd.xlane.f32.xlu0 %v5884
  %v5886 = vpop.xlane.xlu0 %5885
  %v5887 = vsel %vm1329, %v5861, 0.0
  %5888 = vadd.xlane.f32.xlu0 %v5887
  %v5889 = vpop.xlane.xlu0 %5888
  %v5890 = vsel %vm1329, %v5862, 0.0
  %5891 = vadd.xlane.f32.xlu0 %v5890
  %v5892 = vpop.xlane.xlu0 %5891
  %v5893 = vsel %vm1329, %v5863, 0.0
  %5894 = vadd.xlane.f32.xlu0 %v5893
  %v5895 = vpop.xlane.xlu0 %5894
  %v5896 = vsel %vm1329, %v5864, 0.0
  %5897 = vadd.xlane.f32.xlu0 %v5896
  %v5898 = vpop.xlane.xlu0 %5897
  %v5899 = vsel %vm1329, %v5865, 0.0
  %5900 = vadd.xlane.f32.xlu0 %v5899
  %v5901 = vpop.xlane.xlu0 %5900
  %v5902 = vsel %vm1329, %v5866, 0.0
  %5903 = vadd.xlane.f32.xlu0 %v5902
  %v5904 = vpop.xlane.xlu0 %5903
  %v5905 = vsel %vm1329, %v5867, 0.0
  %5906 = vadd.xlane.f32.xlu0 %v5905
  %v5907 = vpop.xlane.xlu0 %5906
  %v5908 = vsel %vm1329, %v5868, 0.0
  %5909 = vadd.xlane.f32.xlu0 %v5908
  %v5910 = vpop.xlane.xlu0 %5909
  %v5911 = vsel %vm1329, %v5869, 0.0
  %5912 = vadd.xlane.f32.xlu0 %v5911
  %v5913 = vpop.xlane.xlu0 %5912
  %v5914 = vsel %vm1329, %v5870, 0.0
  %5915 = vadd.xlane.f32.xlu0 %v5914
  %v5916 = vpop.xlane.xlu0 %5915
  %v5917 = vsel %vm1329, %v5871, 0.0
  %5918 = vadd.xlane.f32.xlu0 %v5917
  %v5919 = vpop.xlane.xlu0 %5918
  %v5920 = vmul.f32 %v5874, %v2123
  %v5921 = vmul.f32 %v5877, %v2123
  %v5922 = vmul.f32 %v5880, %v2123
  %v5923 = vmul.f32 %v5883, %v2123
  %v5924 = vmul.f32 %v5886, %v2123
  %v5925 = vmul.f32 %v5889, %v2123
  %v5926 = vmul.f32 %v5892, %v2123
  %v5927 = vmul.f32 %v5895, %v2123
  %v5928 = vmul.f32 %v5898, %v2123
  %v5929 = vmul.f32 %v5901, %v2123
  %v5930 = vmul.f32 %v5904, %v2123
  %v5931 = vmul.f32 %v5907, %v2123
  %v5932 = vmul.f32 %v5910, %v2123
  %v5933 = vmul.f32 %v5913, %v2123
  %v5934 = vmul.f32 %v5916, %v2123
  %v5935 = vmul.f32 %v5919, %v2123
  %v5936 = vadd.f32 %v5920, 1e-05
  %v5937 = vadd.f32 %v5921, 1e-05
  %v5938 = vadd.f32 %v5922, 1e-05
  %v5939 = vadd.f32 %v5923, 1e-05
  %v5940 = vadd.f32 %v5924, 1e-05
  %v5941 = vadd.f32 %v5925, 1e-05
  %v5942 = vadd.f32 %v5926, 1e-05
  %v5943 = vadd.f32 %v5927, 1e-05
  %v5944 = vadd.f32 %v5928, 1e-05
  %v5945 = vadd.f32 %v5929, 1e-05
  %v5946 = vadd.f32 %v5930, 1e-05
  %v5947 = vadd.f32 %v5931, 1e-05
  %v5948 = vadd.f32 %v5932, 1e-05
  %v5949 = vadd.f32 %v5933, 1e-05
  %v5950 = vadd.f32 %v5934, 1e-05
  %v5951 = vadd.f32 %v5935, 1e-05
  %v5952 = vrsqrt.pop %v5936
  %v5953 = vrsqrt.pop %v5937
  %v5954 = vrsqrt.pop %v5938
  %v5955 = vrsqrt.pop %v5939
  %v5956 = vrsqrt.pop %v5940
  %v5957 = vrsqrt.pop %v5941
  %v5958 = vrsqrt.pop %v5942
  %v5959 = vrsqrt.pop %v5943
  %v5960 = vrsqrt.pop %v5944
  %v5961 = vrsqrt.pop %v5945
  %v5962 = vrsqrt.pop %v5946
  %v5963 = vrsqrt.pop %v5947
  %v5964 = vrsqrt.pop %v5948
  %v5965 = vrsqrt.pop %v5949
  %v5966 = vrsqrt.pop %v5950
  %v5967 = vrsqrt.pop %v5951
  %v5968 = vmul.f32 %v5840, %v5952
  %v5969 = vmul.f32 %v5841, %v5953
  %v5970 = vmul.f32 %v5842, %v5954
  %v5971 = vmul.f32 %v5843, %v5955
  %v5972 = vmul.f32 %v5844, %v5956
  %v5973 = vmul.f32 %v5845, %v5957
  %v5974 = vmul.f32 %v5846, %v5958
  %v5975 = vmul.f32 %v5847, %v5959
  %v5976 = vmul.f32 %v5848, %v5960
  %v5977 = vmul.f32 %v5849, %v5961
  %v5978 = vmul.f32 %v5850, %v5962
  %v5979 = vmul.f32 %v5851, %v5963
  %v5980 = vmul.f32 %v5852, %v5964
  %v5981 = vmul.f32 %v5853, %v5965
  %v5982 = vmul.f32 %v5854, %v5966
  %v5983 = vmul.f32 %v5855, %v5967
  %v5984 = vmul.f32 %v5968, %v2288
  %v5985 = vmul.f32 %v5969, %v2288
  %v5986 = vmul.f32 %v5970, %v2288
  %v5987 = vmul.f32 %v5971, %v2288
  %v5988 = vmul.f32 %v5972, %v2288
  %v5989 = vmul.f32 %v5973, %v2288
  %v5990 = vmul.f32 %v5974, %v2288
  %v5991 = vmul.f32 %v5975, %v2288
  %v5992 = vmul.f32 %v5976, %v2288
  %v5993 = vmul.f32 %v5977, %v2288
  %v5994 = vmul.f32 %v5978, %v2288
  %v5995 = vmul.f32 %v5979, %v2288
  %v5996 = vmul.f32 %v5980, %v2288
  %v5997 = vmul.f32 %v5981, %v2288
  %v5998 = vmul.f32 %v5982, %v2288
  %v5999 = vmul.f32 %v5983, %v2288
  %v6000 = vadd.f32 %v5984, %v2310
  %v6001 = vadd.f32 %v5985, %v2310
  %v6002 = vadd.f32 %v5986, %v2310
  %v6003 = vadd.f32 %v5987, %v2310
  %v6004 = vadd.f32 %v5988, %v2310
  %v6005 = vadd.f32 %v5989, %v2310
  %v6006 = vadd.f32 %v5990, %v2310
  %v6007 = vadd.f32 %v5991, %v2310
  %v6008 = vadd.f32 %v5992, %v2310
  %v6009 = vadd.f32 %v5993, %v2310
  %v6010 = vadd.f32 %v5994, %v2310
  %v6011 = vadd.f32 %v5995, %v2310
  %v6012 = vadd.f32 %v5996, %v2310
  %v6013 = vadd.f32 %v5997, %v2310
  %v6014 = vadd.f32 %v5998, %v2310
  %v6015 = vadd.f32 %v5999, %v2310
  %v6016 = vmul.f32 %v6000, 0.64449096
  %v6017 = vmul.f32 %v6001, 0.64449096
  %v6018 = vmul.f32 %v6002, 0.64449096
  %v6019 = vmul.f32 %v6003, 0.64449096
  %v6020 = vmul.f32 %v6004, 0.64449096
  %v6021 = vmul.f32 %v6005, 0.64449096
  %v6022 = vmul.f32 %v6006, 0.64449096
  %v6023 = vmul.f32 %v6007, 0.64449096
  %v6024 = vmul.f32 %v6008, 0.64449096
  %v6025 = vmul.f32 %v6009, 0.64449096
  %v6026 = vmul.f32 %v6010, 0.64449096
  %v6027 = vmul.f32 %v6011, 0.64449096
  %v6028 = vmul.f32 %v6012, 0.64449096
  %v6029 = vmul.f32 %v6013, 0.64449096
  %v6030 = vmul.f32 %v6014, 0.64449096
  %v6031 = vmul.f32 %v6015, 0.64449096
  %6032 = vrot.lane.b32.xlu0 %v504, 80
  %v6033 = vpop.permute.xlu0 %6032
  %6034 = vrot.lane.b32.xlu0 %v504, 16
  %v6035 = vpop.permute.xlu0 %6034
  %v6037 = vsel %vm523, %v6033, 0
  %v6040 = vsel %vm523, %v6035, 0
  %6042 = vmatprep.subr.bf16.mxu0 0
  %6043 = vmatpush1.bf16.xpose.msra.mxu0 %v6040
  %6044 = vmatprep.subr.bf16.mxu0 0
  %6045 = vmatpush1.bf16.xpose.msra.mxu0 0
  %6046 = vmatprep.subr.bf16.mxu0 0
  %6047 = vmatpush1.bf16.xpose.msra.mxu0 0
  %6048 = vmatprep.subr.bf16.mxu0 0
  %6049 = vmatpush1.bf16.xpose.msra.mxu0 0
  %6050 = vmatprep.subr.bf16.mxu0 0
  %6051 = vmatpush1.bf16.xpose.msra.mxu0 0
  %6052 = vmatprep.subr.bf16.mxu0 0
  %6053 = vmatpush1.bf16.xpose.msra.mxu0 0
  %6054 = vmatprep.subr.bf16.mxu0 0
  %6055 = vmatpush1.bf16.xpose.msra.mxu0 0
  %6056 = vmatprep.subr.bf16.mxu0 0
  %6057 = vmatpush1.bf16.xpose.msra.mxu0 0
  %6058 = vmatprep.subr.bf16.mxu0 0
  %6059 = vmatpush1.bf16.xpose.msra.mxu0 0
  %6060 = vmatprep.subr.bf16.mxu0 0
  %6061 = vmatpush1.bf16.xpose.msra.mxu0 0
  %6062 = vmatprep.subr.bf16.mxu0 0
  %6063 = vmatpush1.bf16.xpose.msra.mxu0 0
  %6064 = vmatprep.subr.bf16.mxu0 0
  %6065 = vmatpush1.bf16.xpose.msra.mxu0 0
  %6066 = vmatprep.subr.bf16.mxu0 0
  %6067 = vmatpush1.bf16.xpose.msra.mxu0 0
  %6068 = vmatprep.subr.bf16.mxu0 0
  %6069 = vmatpush1.bf16.xpose.msra.mxu0 0
  %6070 = vmatprep.subr.bf16.mxu0 0
  %6071 = vmatpush1.bf16.xpose.msra.mxu0 0
  %6072 = vmatprep.subr.bf16.mxu0 0
  %6073 = vmatpush1.bf16.xpose.msra.mxu0 0
  %6074 = vmatprep.mubr.bf16.mxu0 0
  %6075 = vmatmul.mubr.bf16.gmra.mrb[0].mxu0 %v6037
  %v6076 = vpop.f32.mrb[0].mxu0
  %v6077 = vadd.f32 0.0, %v6076
  %v6078 = vpop.f32.mrb[0].mxu0
  %v6079 = vpop.f32.mrb[0].mxu0
  %v6080 = vadd.f32 0.0, %v6079
  %v6081 = vpop.f32.mrb[0].mxu0
  %6082 = vdwg.mxu0
  %6083 = vrot.lane.b32.xlu0 %v505, 80
  %v6084 = vpop.permute.xlu0 %6083
  %6085 = vrot.lane.b32.xlu0 %v505, 16
  %v6086 = vpop.permute.xlu0 %6085
  %v6088 = vsel %vm523, %v6084, 0
  %v6091 = vsel %vm523, %v6086, 0
  %6093 = vmatprep.subr.bf16.mxu0 0
  %6094 = vmatpush1.bf16.xpose.msra.mxu0 %v6091
  %6095 = vmatprep.subr.bf16.mxu0 0
  %6096 = vmatpush1.bf16.xpose.msra.mxu0 0
  %6097 = vmatprep.subr.bf16.mxu0 0
  %6098 = vmatpush1.bf16.xpose.msra.mxu0 0
  %6099 = vmatprep.subr.bf16.mxu0 0
  %6100 = vmatpush1.bf16.xpose.msra.mxu0 0
  %6101 = vmatprep.subr.bf16.mxu0 0
  %6102 = vmatpush1.bf16.xpose.msra.mxu0 0
  %6103 = vmatprep.subr.bf16.mxu0 0
  %6104 = vmatpush1.bf16.xpose.msra.mxu0 0
  %6105 = vmatprep.subr.bf16.mxu0 0
  %6106 = vmatpush1.bf16.xpose.msra.mxu0 0
  %6107 = vmatprep.subr.bf16.mxu0 0
  %6108 = vmatpush1.bf16.xpose.msra.mxu0 0
  %6109 = vmatprep.subr.bf16.mxu0 0
  %6110 = vmatpush1.bf16.xpose.msra.mxu0 0
  %6111 = vmatprep.subr.bf16.mxu0 0
  %6112 = vmatpush1.bf16.xpose.msra.mxu0 0
  %6113 = vmatprep.subr.bf16.mxu0 0
  %6114 = vmatpush1.bf16.xpose.msra.mxu0 0
  %6115 = vmatprep.subr.bf16.mxu0 0
  %6116 = vmatpush1.bf16.xpose.msra.mxu0 0
  %6117 = vmatprep.subr.bf16.mxu0 0
  %6118 = vmatpush1.bf16.xpose.msra.mxu0 0
  %6119 = vmatprep.subr.bf16.mxu0 0
  %6120 = vmatpush1.bf16.xpose.msra.mxu0 0
  %6121 = vmatprep.subr.bf16.mxu0 0
  %6122 = vmatpush1.bf16.xpose.msra.mxu0 0
  %6123 = vmatprep.subr.bf16.mxu0 0
  %6124 = vmatpush1.bf16.xpose.msra.mxu0 0
  %6125 = vmatprep.mubr.bf16.mxu0 0
  %6126 = vmatmul.mubr.bf16.gmra.mrb[0].mxu0 %v6088
  %v6127 = vpop.f32.mrb[0].mxu0
  %v6128 = vadd.f32 0.0, %v6127
  %v6129 = vpop.f32.mrb[0].mxu0
  %v6130 = vpop.f32.mrb[0].mxu0
  %v6131 = vadd.f32 0.0, %v6130
  %v6132 = vpop.f32.mrb[0].mxu0
  %6133 = vdwg.mxu0
  %6134 = vrot.lane.b32.xlu0 %v506, 80
  %v6135 = vpop.permute.xlu0 %6134
  %6136 = vrot.lane.b32.xlu0 %v506, 16
  %v6137 = vpop.permute.xlu0 %6136
  %v6139 = vsel %vm523, %v6135, 0
  %v6142 = vsel %vm523, %v6137, 0
  %6144 = vmatprep.subr.bf16.mxu0 0
  %6145 = vmatpush1.bf16.xpose.msra.mxu0 %v6142
  %6146 = vmatprep.subr.bf16.mxu0 0
  %6147 = vmatpush1.bf16.xpose.msra.mxu0 0
  %6148 = vmatprep.subr.bf16.mxu0 0
  %6149 = vmatpush1.bf16.xpose.msra.mxu0 0
  %6150 = vmatprep.subr.bf16.mxu0 0
  %6151 = vmatpush1.bf16.xpose.msra.mxu0 0
  %6152 = vmatprep.subr.bf16.mxu0 0
  %6153 = vmatpush1.bf16.xpose.msra.mxu0 0
  %6154 = vmatprep.subr.bf16.mxu0 0
  %6155 = vmatpush1.bf16.xpose.msra.mxu0 0
  %6156 = vmatprep.subr.bf16.mxu0 0
  %6157 = vmatpush1.bf16.xpose.msra.mxu0 0
  %6158 = vmatprep.subr.bf16.mxu0 0
  %6159 = vmatpush1.bf16.xpose.msra.mxu0 0
  %6160 = vmatprep.subr.bf16.mxu0 0
  %6161 = vmatpush1.bf16.xpose.msra.mxu0 0
  %6162 = vmatprep.subr.bf16.mxu0 0
  %6163 = vmatpush1.bf16.xpose.msra.mxu0 0
  %6164 = vmatprep.subr.bf16.mxu0 0
  %6165 = vmatpush1.bf16.xpose.msra.mxu0 0
  %6166 = vmatprep.subr.bf16.mxu0 0
  %6167 = vmatpush1.bf16.xpose.msra.mxu0 0
  %6168 = vmatprep.subr.bf16.mxu0 0
  %6169 = vmatpush1.bf16.xpose.msra.mxu0 0
  %6170 = vmatprep.subr.bf16.mxu0 0
  %6171 = vmatpush1.bf16.xpose.msra.mxu0 0
  %6172 = vmatprep.subr.bf16.mxu0 0
  %6173 = vmatpush1.bf16.xpose.msra.mxu0 0
  %6174 = vmatprep.subr.bf16.mxu0 0
  %6175 = vmatpush1.bf16.xpose.msra.mxu0 0
  %6176 = vmatprep.mubr.bf16.mxu0 0
  %6177 = vmatmul.mubr.bf16.gmra.mrb[0].mxu0 %v6139
  %v6178 = vpop.f32.mrb[0].mxu0
  %v6179 = vadd.f32 0.0, %v6178
  %v6180 = vpop.f32.mrb[0].mxu0
  %v6181 = vpop.f32.mrb[0].mxu0
  %v6182 = vadd.f32 0.0, %v6181
  %v6183 = vpop.f32.mrb[0].mxu0
  %6184 = vdwg.mxu0
  %6185 = vrot.lane.b32.xlu0 %v507, 80
  %v6186 = vpop.permute.xlu0 %6185
  %6187 = vrot.lane.b32.xlu0 %v507, 16
  %v6188 = vpop.permute.xlu0 %6187
  %v6190 = vsel %vm523, %v6186, 0
  %v6193 = vsel %vm523, %v6188, 0
  %6195 = vmatprep.subr.bf16.mxu0 0
  %6196 = vmatpush1.bf16.xpose.msra.mxu0 %v6193
  %6197 = vmatprep.subr.bf16.mxu0 0
  %6198 = vmatpush1.bf16.xpose.msra.mxu0 0
  %6199 = vmatprep.subr.bf16.mxu0 0
  %6200 = vmatpush1.bf16.xpose.msra.mxu0 0
  %6201 = vmatprep.subr.bf16.mxu0 0
  %6202 = vmatpush1.bf16.xpose.msra.mxu0 0
  %6203 = vmatprep.subr.bf16.mxu0 0
  %6204 = vmatpush1.bf16.xpose.msra.mxu0 0
  %6205 = vmatprep.subr.bf16.mxu0 0
  %6206 = vmatpush1.bf16.xpose.msra.mxu0 0
  %6207 = vmatprep.subr.bf16.mxu0 0
  %6208 = vmatpush1.bf16.xpose.msra.mxu0 0
  %6209 = vmatprep.subr.bf16.mxu0 0
  %6210 = vmatpush1.bf16.xpose.msra.mxu0 0
  %6211 = vmatprep.subr.bf16.mxu0 0
  %6212 = vmatpush1.bf16.xpose.msra.mxu0 0
  %6213 = vmatprep.subr.bf16.mxu0 0
  %6214 = vmatpush1.bf16.xpose.msra.mxu0 0
  %6215 = vmatprep.subr.bf16.mxu0 0
  %6216 = vmatpush1.bf16.xpose.msra.mxu0 0
  %6217 = vmatprep.subr.bf16.mxu0 0
  %6218 = vmatpush1.bf16.xpose.msra.mxu0 0
  %6219 = vmatprep.subr.bf16.mxu0 0
  %6220 = vmatpush1.bf16.xpose.msra.mxu0 0
  %6221 = vmatprep.subr.bf16.mxu0 0
  %6222 = vmatpush1.bf16.xpose.msra.mxu0 0
  %6223 = vmatprep.subr.bf16.mxu0 0
  %6224 = vmatpush1.bf16.xpose.msra.mxu0 0
  %6225 = vmatprep.subr.bf16.mxu0 0
  %6226 = vmatpush1.bf16.xpose.msra.mxu0 0
  %6227 = vmatprep.mubr.bf16.mxu0 0
  %6228 = vmatmul.mubr.bf16.gmra.mrb[0].mxu0 %v6190
  %v6229 = vpop.f32.mrb[0].mxu0
  %v6230 = vadd.f32 0.0, %v6229
  %v6231 = vpop.f32.mrb[0].mxu0
  %v6232 = vpop.f32.mrb[0].mxu0
  %v6233 = vadd.f32 0.0, %v6232
  %v6234 = vpop.f32.mrb[0].mxu0
  %6235 = vdwg.mxu0
  %6236 = vrot.lane.b32.xlu0 %v508, 80
  %v6237 = vpop.permute.xlu0 %6236
  %6238 = vrot.lane.b32.xlu0 %v508, 16
  %v6239 = vpop.permute.xlu0 %6238
  %v6241 = vsel %vm523, %v6237, 0
  %v6244 = vsel %vm523, %v6239, 0
  %6246 = vmatprep.subr.bf16.mxu0 0
  %6247 = vmatpush1.bf16.xpose.msra.mxu0 %v6244
  %6248 = vmatprep.subr.bf16.mxu0 0
  %6249 = vmatpush1.bf16.xpose.msra.mxu0 0
  %6250 = vmatprep.subr.bf16.mxu0 0
  %6251 = vmatpush1.bf16.xpose.msra.mxu0 0
  %6252 = vmatprep.subr.bf16.mxu0 0
  %6253 = vmatpush1.bf16.xpose.msra.mxu0 0
  %6254 = vmatprep.subr.bf16.mxu0 0
  %6255 = vmatpush1.bf16.xpose.msra.mxu0 0
  %6256 = vmatprep.subr.bf16.mxu0 0
  %6257 = vmatpush1.bf16.xpose.msra.mxu0 0
  %6258 = vmatprep.subr.bf16.mxu0 0
  %6259 = vmatpush1.bf16.xpose.msra.mxu0 0
  %6260 = vmatprep.subr.bf16.mxu0 0
  %6261 = vmatpush1.bf16.xpose.msra.mxu0 0
  %6262 = vmatprep.subr.bf16.mxu0 0
  %6263 = vmatpush1.bf16.xpose.msra.mxu0 0
  %6264 = vmatprep.subr.bf16.mxu0 0
  %6265 = vmatpush1.bf16.xpose.msra.mxu0 0
  %6266 = vmatprep.subr.bf16.mxu0 0
  %6267 = vmatpush1.bf16.xpose.msra.mxu0 0
  %6268 = vmatprep.subr.bf16.mxu0 0
  %6269 = vmatpush1.bf16.xpose.msra.mxu0 0
  %6270 = vmatprep.subr.bf16.mxu0 0
  %6271 = vmatpush1.bf16.xpose.msra.mxu0 0
  %6272 = vmatprep.subr.bf16.mxu0 0
  %6273 = vmatpush1.bf16.xpose.msra.mxu0 0
  %6274 = vmatprep.subr.bf16.mxu0 0
  %6275 = vmatpush1.bf16.xpose.msra.mxu0 0
  %6276 = vmatprep.subr.bf16.mxu0 0
  %6277 = vmatpush1.bf16.xpose.msra.mxu0 0
  %6278 = vmatprep.mubr.bf16.mxu0 0
  %6279 = vmatmul.mubr.bf16.gmra.mrb[0].mxu0 %v6241
  %v6280 = vpop.f32.mrb[0].mxu0
  %v6281 = vadd.f32 0.0, %v6280
  %v6282 = vpop.f32.mrb[0].mxu0
  %v6283 = vpop.f32.mrb[0].mxu0
  %v6284 = vadd.f32 0.0, %v6283
  %v6285 = vpop.f32.mrb[0].mxu0
  %6286 = vdwg.mxu0
  %6287 = vrot.lane.b32.xlu0 %v509, 80
  %v6288 = vpop.permute.xlu0 %6287
  %6289 = vrot.lane.b32.xlu0 %v509, 16
  %v6290 = vpop.permute.xlu0 %6289
  %v6292 = vsel %vm523, %v6288, 0
  %v6295 = vsel %vm523, %v6290, 0
  %6297 = vmatprep.subr.bf16.mxu0 0
  %6298 = vmatpush1.bf16.xpose.msra.mxu0 %v6295
  %6299 = vmatprep.subr.bf16.mxu0 0
  %6300 = vmatpush1.bf16.xpose.msra.mxu0 0
  %6301 = vmatprep.subr.bf16.mxu0 0
  %6302 = vmatpush1.bf16.xpose.msra.mxu0 0
  %6303 = vmatprep.subr.bf16.mxu0 0
  %6304 = vmatpush1.bf16.xpose.msra.mxu0 0
  %6305 = vmatprep.subr.bf16.mxu0 0
  %6306 = vmatpush1.bf16.xpose.msra.mxu0 0
  %6307 = vmatprep.subr.bf16.mxu0 0
  %6308 = vmatpush1.bf16.xpose.msra.mxu0 0
  %6309 = vmatprep.subr.bf16.mxu0 0
  %6310 = vmatpush1.bf16.xpose.msra.mxu0 0
  %6311 = vmatprep.subr.bf16.mxu0 0
  %6312 = vmatpush1.bf16.xpose.msra.mxu0 0
  %6313 = vmatprep.subr.bf16.mxu0 0
  %6314 = vmatpush1.bf16.xpose.msra.mxu0 0
  %6315 = vmatprep.subr.bf16.mxu0 0
  %6316 = vmatpush1.bf16.xpose.msra.mxu0 0
  %6317 = vmatprep.subr.bf16.mxu0 0
  %6318 = vmatpush1.bf16.xpose.msra.mxu0 0
  %6319 = vmatprep.subr.bf16.mxu0 0
  %6320 = vmatpush1.bf16.xpose.msra.mxu0 0
  %6321 = vmatprep.subr.bf16.mxu0 0
  %6322 = vmatpush1.bf16.xpose.msra.mxu0 0
  %6323 = vmatprep.subr.bf16.mxu0 0
  %6324 = vmatpush1.bf16.xpose.msra.mxu0 0
  %6325 = vmatprep.subr.bf16.mxu0 0
  %6326 = vmatpush1.bf16.xpose.msra.mxu0 0
  %6327 = vmatprep.subr.bf16.mxu0 0
  %6328 = vmatpush1.bf16.xpose.msra.mxu0 0
  %6329 = vmatprep.mubr.bf16.mxu0 0
  %6330 = vmatmul.mubr.bf16.gmra.mrb[0].mxu0 %v6292
  %v6331 = vpop.f32.mrb[0].mxu0
  %v6332 = vadd.f32 0.0, %v6331
  %v6333 = vpop.f32.mrb[0].mxu0
  %v6334 = vpop.f32.mrb[0].mxu0
  %v6335 = vadd.f32 0.0, %v6334
  %v6336 = vpop.f32.mrb[0].mxu0
  %6337 = vdwg.mxu0
  %6338 = vrot.lane.b32.xlu0 %v510, 80
  %v6339 = vpop.permute.xlu0 %6338
  %6340 = vrot.lane.b32.xlu0 %v510, 16
  %v6341 = vpop.permute.xlu0 %6340
  %v6343 = vsel %vm523, %v6339, 0
  %v6346 = vsel %vm523, %v6341, 0
  %6348 = vmatprep.subr.bf16.mxu0 0
  %6349 = vmatpush1.bf16.xpose.msra.mxu0 %v6346
  %6350 = vmatprep.subr.bf16.mxu0 0
  %6351 = vmatpush1.bf16.xpose.msra.mxu0 0
  %6352 = vmatprep.subr.bf16.mxu0 0
  %6353 = vmatpush1.bf16.xpose.msra.mxu0 0
  %6354 = vmatprep.subr.bf16.mxu0 0
  %6355 = vmatpush1.bf16.xpose.msra.mxu0 0
  %6356 = vmatprep.subr.bf16.mxu0 0
  %6357 = vmatpush1.bf16.xpose.msra.mxu0 0
  %6358 = vmatprep.subr.bf16.mxu0 0
  %6359 = vmatpush1.bf16.xpose.msra.mxu0 0
  %6360 = vmatprep.subr.bf16.mxu0 0
  %6361 = vmatpush1.bf16.xpose.msra.mxu0 0
  %6362 = vmatprep.subr.bf16.mxu0 0
  %6363 = vmatpush1.bf16.xpose.msra.mxu0 0
  %6364 = vmatprep.subr.bf16.mxu0 0
  %6365 = vmatpush1.bf16.xpose.msra.mxu0 0
  %6366 = vmatprep.subr.bf16.mxu0 0
  %6367 = vmatpush1.bf16.xpose.msra.mxu0 0
  %6368 = vmatprep.subr.bf16.mxu0 0
  %6369 = vmatpush1.bf16.xpose.msra.mxu0 0
  %6370 = vmatprep.subr.bf16.mxu0 0
  %6371 = vmatpush1.bf16.xpose.msra.mxu0 0
  %6372 = vmatprep.subr.bf16.mxu0 0
  %6373 = vmatpush1.bf16.xpose.msra.mxu0 0
  %6374 = vmatprep.subr.bf16.mxu0 0
  %6375 = vmatpush1.bf16.xpose.msra.mxu0 0
  %6376 = vmatprep.subr.bf16.mxu0 0
  %6377 = vmatpush1.bf16.xpose.msra.mxu0 0
  %6378 = vmatprep.subr.bf16.mxu0 0
  %6379 = vmatpush1.bf16.xpose.msra.mxu0 0
  %6380 = vmatprep.mubr.bf16.mxu0 0
  %6381 = vmatmul.mubr.bf16.gmra.mrb[0].mxu0 %v6343
  %v6382 = vpop.f32.mrb[0].mxu0
  %v6383 = vadd.f32 0.0, %v6382
  %v6384 = vpop.f32.mrb[0].mxu0
  %v6385 = vpop.f32.mrb[0].mxu0
  %v6386 = vadd.f32 0.0, %v6385
  %v6387 = vpop.f32.mrb[0].mxu0
  %6388 = vdwg.mxu0
  %6389 = vrot.lane.b32.xlu0 %v511, 80
  %v6390 = vpop.permute.xlu0 %6389
  %6391 = vrot.lane.b32.xlu0 %v511, 16
  %v6392 = vpop.permute.xlu0 %6391
  %v6394 = vsel %vm523, %v6390, 0
  %v6397 = vsel %vm523, %v6392, 0
  %6399 = vmatprep.subr.bf16.mxu0 0
  %6400 = vmatpush1.bf16.xpose.msra.mxu0 %v6397
  %6401 = vmatprep.subr.bf16.mxu0 0
  %6402 = vmatpush1.bf16.xpose.msra.mxu0 0
  %6403 = vmatprep.subr.bf16.mxu0 0
  %6404 = vmatpush1.bf16.xpose.msra.mxu0 0
  %6405 = vmatprep.subr.bf16.mxu0 0
  %6406 = vmatpush1.bf16.xpose.msra.mxu0 0
  %6407 = vmatprep.subr.bf16.mxu0 0
  %6408 = vmatpush1.bf16.xpose.msra.mxu0 0
  %6409 = vmatprep.subr.bf16.mxu0 0
  %6410 = vmatpush1.bf16.xpose.msra.mxu0 0
  %6411 = vmatprep.subr.bf16.mxu0 0
  %6412 = vmatpush1.bf16.xpose.msra.mxu0 0
  %6413 = vmatprep.subr.bf16.mxu0 0
  %6414 = vmatpush1.bf16.xpose.msra.mxu0 0
  %6415 = vmatprep.subr.bf16.mxu0 0
  %6416 = vmatpush1.bf16.xpose.msra.mxu0 0
  %6417 = vmatprep.subr.bf16.mxu0 0
  %6418 = vmatpush1.bf16.xpose.msra.mxu0 0
  %6419 = vmatprep.subr.bf16.mxu0 0
  %6420 = vmatpush1.bf16.xpose.msra.mxu0 0
  %6421 = vmatprep.subr.bf16.mxu0 0
  %6422 = vmatpush1.bf16.xpose.msra.mxu0 0
  %6423 = vmatprep.subr.bf16.mxu0 0
  %6424 = vmatpush1.bf16.xpose.msra.mxu0 0
  %6425 = vmatprep.subr.bf16.mxu0 0
  %6426 = vmatpush1.bf16.xpose.msra.mxu0 0
  %6427 = vmatprep.subr.bf16.mxu0 0
  %6428 = vmatpush1.bf16.xpose.msra.mxu0 0
  %6429 = vmatprep.subr.bf16.mxu0 0
  %6430 = vmatpush1.bf16.xpose.msra.mxu0 0
  %6431 = vmatprep.mubr.bf16.mxu0 0
  %6432 = vmatmul.mubr.bf16.gmra.mrb[0].mxu0 %v6394
  %v6433 = vpop.f32.mrb[0].mxu0
  %v6434 = vadd.f32 0.0, %v6433
  %v6435 = vpop.f32.mrb[0].mxu0
  %v6436 = vpop.f32.mrb[0].mxu0
  %v6437 = vadd.f32 0.0, %v6436
  %v6438 = vpop.f32.mrb[0].mxu0
  %6439 = vdwg.mxu0
  %6440 = vrot.lane.b32.xlu0 %v504, 72
  %v6441 = vpop.permute.xlu0 %6440
  %6442 = vrot.lane.b32.xlu0 %v504, 8
  %v6443 = vpop.permute.xlu0 %6442
  %v6445 = vsel %vm523, %v6441, 0
  %v6448 = vsel %vm523, %v6443, 0
  %6450 = vmatprep.subr.bf16.mxu0 0
  %6451 = vmatpush1.bf16.xpose.msra.mxu0 %v6448
  %6452 = vmatprep.subr.bf16.mxu0 0
  %6453 = vmatpush1.bf16.xpose.msra.mxu0 0
  %6454 = vmatprep.subr.bf16.mxu0 0
  %6455 = vmatpush1.bf16.xpose.msra.mxu0 0
  %6456 = vmatprep.subr.bf16.mxu0 0
  %6457 = vmatpush1.bf16.xpose.msra.mxu0 0
  %6458 = vmatprep.subr.bf16.mxu0 0
  %6459 = vmatpush1.bf16.xpose.msra.mxu0 0
  %6460 = vmatprep.subr.bf16.mxu0 0
  %6461 = vmatpush1.bf16.xpose.msra.mxu0 0
  %6462 = vmatprep.subr.bf16.mxu0 0
  %6463 = vmatpush1.bf16.xpose.msra.mxu0 0
  %6464 = vmatprep.subr.bf16.mxu0 0
  %6465 = vmatpush1.bf16.xpose.msra.mxu0 0
  %6466 = vmatprep.subr.bf16.mxu0 0
  %6467 = vmatpush1.bf16.xpose.msra.mxu0 0
  %6468 = vmatprep.subr.bf16.mxu0 0
  %6469 = vmatpush1.bf16.xpose.msra.mxu0 0
  %6470 = vmatprep.subr.bf16.mxu0 0
  %6471 = vmatpush1.bf16.xpose.msra.mxu0 0
  %6472 = vmatprep.subr.bf16.mxu0 0
  %6473 = vmatpush1.bf16.xpose.msra.mxu0 0
  %6474 = vmatprep.subr.bf16.mxu0 0
  %6475 = vmatpush1.bf16.xpose.msra.mxu0 0
  %6476 = vmatprep.subr.bf16.mxu0 0
  %6477 = vmatpush1.bf16.xpose.msra.mxu0 0
  %6478 = vmatprep.subr.bf16.mxu0 0
  %6479 = vmatpush1.bf16.xpose.msra.mxu0 0
  %6480 = vmatprep.subr.bf16.mxu0 0
  %6481 = vmatpush1.bf16.xpose.msra.mxu0 0
  %6482 = vmatprep.mubr.bf16.mxu0 0
  %6483 = vmatmul.mubr.bf16.gmra.mrb[0].mxu0 %v6445
  %v6484 = vpop.f32.mrb[0].mxu0
  %v6485 = vadd.f32 0.0, %v6484
  %v6486 = vpop.f32.mrb[0].mxu0
  %v6487 = vpop.f32.mrb[0].mxu0
  %v6488 = vadd.f32 0.0, %v6487
  %v6489 = vpop.f32.mrb[0].mxu0
  %6490 = vdwg.mxu0
  %6491 = vrot.lane.b32.xlu0 %v505, 72
  %v6492 = vpop.permute.xlu0 %6491
  %6493 = vrot.lane.b32.xlu0 %v505, 8
  %v6494 = vpop.permute.xlu0 %6493
  %v6496 = vsel %vm523, %v6492, 0
  %v6499 = vsel %vm523, %v6494, 0
  %6501 = vmatprep.subr.bf16.mxu0 0
  %6502 = vmatpush1.bf16.xpose.msra.mxu0 %v6499
  %6503 = vmatprep.subr.bf16.mxu0 0
  %6504 = vmatpush1.bf16.xpose.msra.mxu0 0
  %6505 = vmatprep.subr.bf16.mxu0 0
  %6506 = vmatpush1.bf16.xpose.msra.mxu0 0
  %6507 = vmatprep.subr.bf16.mxu0 0
  %6508 = vmatpush1.bf16.xpose.msra.mxu0 0
  %6509 = vmatprep.subr.bf16.mxu0 0
  %6510 = vmatpush1.bf16.xpose.msra.mxu0 0
  %6511 = vmatprep.subr.bf16.mxu0 0
  %6512 = vmatpush1.bf16.xpose.msra.mxu0 0
  %6513 = vmatprep.subr.bf16.mxu0 0
  %6514 = vmatpush1.bf16.xpose.msra.mxu0 0
  %6515 = vmatprep.subr.bf16.mxu0 0
  %6516 = vmatpush1.bf16.xpose.msra.mxu0 0
  %6517 = vmatprep.subr.bf16.mxu0 0
  %6518 = vmatpush1.bf16.xpose.msra.mxu0 0
  %6519 = vmatprep.subr.bf16.mxu0 0
  %6520 = vmatpush1.bf16.xpose.msra.mxu0 0
  %6521 = vmatprep.subr.bf16.mxu0 0
  %6522 = vmatpush1.bf16.xpose.msra.mxu0 0
  %6523 = vmatprep.subr.bf16.mxu0 0
  %6524 = vmatpush1.bf16.xpose.msra.mxu0 0
  %6525 = vmatprep.subr.bf16.mxu0 0
  %6526 = vmatpush1.bf16.xpose.msra.mxu0 0
  %6527 = vmatprep.subr.bf16.mxu0 0
  %6528 = vmatpush1.bf16.xpose.msra.mxu0 0
  %6529 = vmatprep.subr.bf16.mxu0 0
  %6530 = vmatpush1.bf16.xpose.msra.mxu0 0
  %6531 = vmatprep.subr.bf16.mxu0 0
  %6532 = vmatpush1.bf16.xpose.msra.mxu0 0
  %6533 = vmatprep.mubr.bf16.mxu0 0
  %6534 = vmatmul.mubr.bf16.gmra.mrb[0].mxu0 %v6496
  %v6535 = vpop.f32.mrb[0].mxu0
  %v6536 = vadd.f32 0.0, %v6535
  %v6537 = vpop.f32.mrb[0].mxu0
  %v6538 = vpop.f32.mrb[0].mxu0
  %v6539 = vadd.f32 0.0, %v6538
  %v6540 = vpop.f32.mrb[0].mxu0
  %6541 = vdwg.mxu0
  %6542 = vrot.lane.b32.xlu0 %v506, 72
  %v6543 = vpop.permute.xlu0 %6542
  %6544 = vrot.lane.b32.xlu0 %v506, 8
  %v6545 = vpop.permute.xlu0 %6544
  %v6547 = vsel %vm523, %v6543, 0
  %v6550 = vsel %vm523, %v6545, 0
  %6552 = vmatprep.subr.bf16.mxu0 0
  %6553 = vmatpush1.bf16.xpose.msra.mxu0 %v6550
  %6554 = vmatprep.subr.bf16.mxu0 0
  %6555 = vmatpush1.bf16.xpose.msra.mxu0 0
  %6556 = vmatprep.subr.bf16.mxu0 0
  %6557 = vmatpush1.bf16.xpose.msra.mxu0 0
  %6558 = vmatprep.subr.bf16.mxu0 0
  %6559 = vmatpush1.bf16.xpose.msra.mxu0 0
  %6560 = vmatprep.subr.bf16.mxu0 0
  %6561 = vmatpush1.bf16.xpose.msra.mxu0 0
  %6562 = vmatprep.subr.bf16.mxu0 0
  %6563 = vmatpush1.bf16.xpose.msra.mxu0 0
  %6564 = vmatprep.subr.bf16.mxu0 0
  %6565 = vmatpush1.bf16.xpose.msra.mxu0 0
  %6566 = vmatprep.subr.bf16.mxu0 0
  %6567 = vmatpush1.bf16.xpose.msra.mxu0 0
  %6568 = vmatprep.subr.bf16.mxu0 0
  %6569 = vmatpush1.bf16.xpose.msra.mxu0 0
  %6570 = vmatprep.subr.bf16.mxu0 0
  %6571 = vmatpush1.bf16.xpose.msra.mxu0 0
  %6572 = vmatprep.subr.bf16.mxu0 0
  %6573 = vmatpush1.bf16.xpose.msra.mxu0 0
  %6574 = vmatprep.subr.bf16.mxu0 0
  %6575 = vmatpush1.bf16.xpose.msra.mxu0 0
  %6576 = vmatprep.subr.bf16.mxu0 0
  %6577 = vmatpush1.bf16.xpose.msra.mxu0 0
  %6578 = vmatprep.subr.bf16.mxu0 0
  %6579 = vmatpush1.bf16.xpose.msra.mxu0 0
  %6580 = vmatprep.subr.bf16.mxu0 0
  %6581 = vmatpush1.bf16.xpose.msra.mxu0 0
  %6582 = vmatprep.subr.bf16.mxu0 0
  %6583 = vmatpush1.bf16.xpose.msra.mxu0 0
  %6584 = vmatprep.mubr.bf16.mxu0 0
  %6585 = vmatmul.mubr.bf16.gmra.mrb[0].mxu0 %v6547
  %v6586 = vpop.f32.mrb[0].mxu0
  %v6587 = vadd.f32 0.0, %v6586
  %v6588 = vpop.f32.mrb[0].mxu0
  %v6589 = vpop.f32.mrb[0].mxu0
  %v6590 = vadd.f32 0.0, %v6589
  %v6591 = vpop.f32.mrb[0].mxu0
  %6592 = vdwg.mxu0
  %6593 = vrot.lane.b32.xlu0 %v507, 72
  %v6594 = vpop.permute.xlu0 %6593
  %6595 = vrot.lane.b32.xlu0 %v507, 8
  %v6596 = vpop.permute.xlu0 %6595
  %v6598 = vsel %vm523, %v6594, 0
  %v6601 = vsel %vm523, %v6596, 0
  %6603 = vmatprep.subr.bf16.mxu0 0
  %6604 = vmatpush1.bf16.xpose.msra.mxu0 %v6601
  %6605 = vmatprep.subr.bf16.mxu0 0
  %6606 = vmatpush1.bf16.xpose.msra.mxu0 0
  %6607 = vmatprep.subr.bf16.mxu0 0
  %6608 = vmatpush1.bf16.xpose.msra.mxu0 0
  %6609 = vmatprep.subr.bf16.mxu0 0
  %6610 = vmatpush1.bf16.xpose.msra.mxu0 0
  %6611 = vmatprep.subr.bf16.mxu0 0
  %6612 = vmatpush1.bf16.xpose.msra.mxu0 0
  %6613 = vmatprep.subr.bf16.mxu0 0
  %6614 = vmatpush1.bf16.xpose.msra.mxu0 0
  %6615 = vmatprep.subr.bf16.mxu0 0
  %6616 = vmatpush1.bf16.xpose.msra.mxu0 0
  %6617 = vmatprep.subr.bf16.mxu0 0
  %6618 = vmatpush1.bf16.xpose.msra.mxu0 0
  %6619 = vmatprep.subr.bf16.mxu0 0
  %6620 = vmatpush1.bf16.xpose.msra.mxu0 0
  %6621 = vmatprep.subr.bf16.mxu0 0
  %6622 = vmatpush1.bf16.xpose.msra.mxu0 0
  %6623 = vmatprep.subr.bf16.mxu0 0
  %6624 = vmatpush1.bf16.xpose.msra.mxu0 0
  %6625 = vmatprep.subr.bf16.mxu0 0
  %6626 = vmatpush1.bf16.xpose.msra.mxu0 0
  %6627 = vmatprep.subr.bf16.mxu0 0
  %6628 = vmatpush1.bf16.xpose.msra.mxu0 0
  %6629 = vmatprep.subr.bf16.mxu0 0
  %6630 = vmatpush1.bf16.xpose.msra.mxu0 0
  %6631 = vmatprep.subr.bf16.mxu0 0
  %6632 = vmatpush1.bf16.xpose.msra.mxu0 0
  %6633 = vmatprep.subr.bf16.mxu0 0
  %6634 = vmatpush1.bf16.xpose.msra.mxu0 0
  %6635 = vmatprep.mubr.bf16.mxu0 0
  %6636 = vmatmul.mubr.bf16.gmra.mrb[0].mxu0 %v6598
  %v6637 = vpop.f32.mrb[0].mxu0
  %v6638 = vadd.f32 0.0, %v6637
  %v6639 = vpop.f32.mrb[0].mxu0
  %v6640 = vpop.f32.mrb[0].mxu0
  %v6641 = vadd.f32 0.0, %v6640
  %v6642 = vpop.f32.mrb[0].mxu0
  %6643 = vdwg.mxu0
  %6644 = vrot.lane.b32.xlu0 %v508, 72
  %v6645 = vpop.permute.xlu0 %6644
  %6646 = vrot.lane.b32.xlu0 %v508, 8
  %v6647 = vpop.permute.xlu0 %6646
  %v6649 = vsel %vm523, %v6645, 0
  %v6652 = vsel %vm523, %v6647, 0
  %6654 = vmatprep.subr.bf16.mxu0 0
  %6655 = vmatpush1.bf16.xpose.msra.mxu0 %v6652
  %6656 = vmatprep.subr.bf16.mxu0 0
  %6657 = vmatpush1.bf16.xpose.msra.mxu0 0
  %6658 = vmatprep.subr.bf16.mxu0 0
  %6659 = vmatpush1.bf16.xpose.msra.mxu0 0
  %6660 = vmatprep.subr.bf16.mxu0 0
  %6661 = vmatpush1.bf16.xpose.msra.mxu0 0
  %6662 = vmatprep.subr.bf16.mxu0 0
  %6663 = vmatpush1.bf16.xpose.msra.mxu0 0
  %6664 = vmatprep.subr.bf16.mxu0 0
  %6665 = vmatpush1.bf16.xpose.msra.mxu0 0
  %6666 = vmatprep.subr.bf16.mxu0 0
  %6667 = vmatpush1.bf16.xpose.msra.mxu0 0
  %6668 = vmatprep.subr.bf16.mxu0 0
  %6669 = vmatpush1.bf16.xpose.msra.mxu0 0
  %6670 = vmatprep.subr.bf16.mxu0 0
  %6671 = vmatpush1.bf16.xpose.msra.mxu0 0
  %6672 = vmatprep.subr.bf16.mxu0 0
  %6673 = vmatpush1.bf16.xpose.msra.mxu0 0
  %6674 = vmatprep.subr.bf16.mxu0 0
  %6675 = vmatpush1.bf16.xpose.msra.mxu0 0
  %6676 = vmatprep.subr.bf16.mxu0 0
  %6677 = vmatpush1.bf16.xpose.msra.mxu0 0
  %6678 = vmatprep.subr.bf16.mxu0 0
  %6679 = vmatpush1.bf16.xpose.msra.mxu0 0
  %6680 = vmatprep.subr.bf16.mxu0 0
  %6681 = vmatpush1.bf16.xpose.msra.mxu0 0
  %6682 = vmatprep.subr.bf16.mxu0 0
  %6683 = vmatpush1.bf16.xpose.msra.mxu0 0
  %6684 = vmatprep.subr.bf16.mxu0 0
  %6685 = vmatpush1.bf16.xpose.msra.mxu0 0
  %6686 = vmatprep.mubr.bf16.mxu0 0
  %6687 = vmatmul.mubr.bf16.gmra.mrb[0].mxu0 %v6649
  %v6688 = vpop.f32.mrb[0].mxu0
  %v6689 = vadd.f32 0.0, %v6688
  %v6690 = vpop.f32.mrb[0].mxu0
  %v6691 = vpop.f32.mrb[0].mxu0
  %v6692 = vadd.f32 0.0, %v6691
  %v6693 = vpop.f32.mrb[0].mxu0
  %6694 = vdwg.mxu0
  %6695 = vrot.lane.b32.xlu0 %v509, 72
  %v6696 = vpop.permute.xlu0 %6695
  %6697 = vrot.lane.b32.xlu0 %v509, 8
  %v6698 = vpop.permute.xlu0 %6697
  %v6700 = vsel %vm523, %v6696, 0
  %v6703 = vsel %vm523, %v6698, 0
  %6705 = vmatprep.subr.bf16.mxu0 0
  %6706 = vmatpush1.bf16.xpose.msra.mxu0 %v6703
  %6707 = vmatprep.subr.bf16.mxu0 0
  %6708 = vmatpush1.bf16.xpose.msra.mxu0 0
  %6709 = vmatprep.subr.bf16.mxu0 0
  %6710 = vmatpush1.bf16.xpose.msra.mxu0 0
  %6711 = vmatprep.subr.bf16.mxu0 0
  %6712 = vmatpush1.bf16.xpose.msra.mxu0 0
  %6713 = vmatprep.subr.bf16.mxu0 0
  %6714 = vmatpush1.bf16.xpose.msra.mxu0 0
  %6715 = vmatprep.subr.bf16.mxu0 0
  %6716 = vmatpush1.bf16.xpose.msra.mxu0 0
  %6717 = vmatprep.subr.bf16.mxu0 0
  %6718 = vmatpush1.bf16.xpose.msra.mxu0 0
  %6719 = vmatprep.subr.bf16.mxu0 0
  %6720 = vmatpush1.bf16.xpose.msra.mxu0 0
  %6721 = vmatprep.subr.bf16.mxu0 0
  %6722 = vmatpush1.bf16.xpose.msra.mxu0 0
  %6723 = vmatprep.subr.bf16.mxu0 0
  %6724 = vmatpush1.bf16.xpose.msra.mxu0 0
  %6725 = vmatprep.subr.bf16.mxu0 0
  %6726 = vmatpush1.bf16.xpose.msra.mxu0 0
  %6727 = vmatprep.subr.bf16.mxu0 0
  %6728 = vmatpush1.bf16.xpose.msra.mxu0 0
  %6729 = vmatprep.subr.bf16.mxu0 0
  %6730 = vmatpush1.bf16.xpose.msra.mxu0 0
  %6731 = vmatprep.subr.bf16.mxu0 0
  %6732 = vmatpush1.bf16.xpose.msra.mxu0 0
  %6733 = vmatprep.subr.bf16.mxu0 0
  %6734 = vmatpush1.bf16.xpose.msra.mxu0 0
  %6735 = vmatprep.subr.bf16.mxu0 0
  %6736 = vmatpush1.bf16.xpose.msra.mxu0 0
  %6737 = vmatprep.mubr.bf16.mxu0 0
  %6738 = vmatmul.mubr.bf16.gmra.mrb[0].mxu0 %v6700
  %v6739 = vpop.f32.mrb[0].mxu0
  %v6740 = vadd.f32 0.0, %v6739
  %v6741 = vpop.f32.mrb[0].mxu0
  %v6742 = vpop.f32.mrb[0].mxu0
  %v6743 = vadd.f32 0.0, %v6742
  %v6744 = vpop.f32.mrb[0].mxu0
  %6745 = vdwg.mxu0
  %6746 = vrot.lane.b32.xlu0 %v510, 72
  %v6747 = vpop.permute.xlu0 %6746
  %6748 = vrot.lane.b32.xlu0 %v510, 8
  %v6749 = vpop.permute.xlu0 %6748
  %v6751 = vsel %vm523, %v6747, 0
  %v6754 = vsel %vm523, %v6749, 0
  %6756 = vmatprep.subr.bf16.mxu0 0
  %6757 = vmatpush1.bf16.xpose.msra.mxu0 %v6754
  %6758 = vmatprep.subr.bf16.mxu0 0
  %6759 = vmatpush1.bf16.xpose.msra.mxu0 0
  %6760 = vmatprep.subr.bf16.mxu0 0
  %6761 = vmatpush1.bf16.xpose.msra.mxu0 0
  %6762 = vmatprep.subr.bf16.mxu0 0
  %6763 = vmatpush1.bf16.xpose.msra.mxu0 0
  %6764 = vmatprep.subr.bf16.mxu0 0
  %6765 = vmatpush1.bf16.xpose.msra.mxu0 0
  %6766 = vmatprep.subr.bf16.mxu0 0
  %6767 = vmatpush1.bf16.xpose.msra.mxu0 0
  %6768 = vmatprep.subr.bf16.mxu0 0
  %6769 = vmatpush1.bf16.xpose.msra.mxu0 0
  %6770 = vmatprep.subr.bf16.mxu0 0
  %6771 = vmatpush1.bf16.xpose.msra.mxu0 0
  %6772 = vmatprep.subr.bf16.mxu0 0
  %6773 = vmatpush1.bf16.xpose.msra.mxu0 0
  %6774 = vmatprep.subr.bf16.mxu0 0
  %6775 = vmatpush1.bf16.xpose.msra.mxu0 0
  %6776 = vmatprep.subr.bf16.mxu0 0
  %6777 = vmatpush1.bf16.xpose.msra.mxu0 0
  %6778 = vmatprep.subr.bf16.mxu0 0
  %6779 = vmatpush1.bf16.xpose.msra.mxu0 0
  %6780 = vmatprep.subr.bf16.mxu0 0
  %6781 = vmatpush1.bf16.xpose.msra.mxu0 0
  %6782 = vmatprep.subr.bf16.mxu0 0
  %6783 = vmatpush1.bf16.xpose.msra.mxu0 0
  %6784 = vmatprep.subr.bf16.mxu0 0
  %6785 = vmatpush1.bf16.xpose.msra.mxu0 0
  %6786 = vmatprep.subr.bf16.mxu0 0
  %6787 = vmatpush1.bf16.xpose.msra.mxu0 0
  %6788 = vmatprep.mubr.bf16.mxu0 0
  %6789 = vmatmul.mubr.bf16.gmra.mrb[0].mxu0 %v6751
  %v6790 = vpop.f32.mrb[0].mxu0
  %v6791 = vadd.f32 0.0, %v6790
  %v6792 = vpop.f32.mrb[0].mxu0
  %v6793 = vpop.f32.mrb[0].mxu0
  %v6794 = vadd.f32 0.0, %v6793
  %v6795 = vpop.f32.mrb[0].mxu0
  %6796 = vdwg.mxu0
  %6797 = vrot.lane.b32.xlu0 %v511, 72
  %v6798 = vpop.permute.xlu0 %6797
  %6799 = vrot.lane.b32.xlu0 %v511, 8
  %v6800 = vpop.permute.xlu0 %6799
  %v6802 = vsel %vm523, %v6798, 0
  %v6805 = vsel %vm523, %v6800, 0
  %6807 = vmatprep.subr.bf16.mxu0 0
  %6808 = vmatpush1.bf16.xpose.msra.mxu0 %v6805
  %6809 = vmatprep.subr.bf16.mxu0 0
  %6810 = vmatpush1.bf16.xpose.msra.mxu0 0
  %6811 = vmatprep.subr.bf16.mxu0 0
  %6812 = vmatpush1.bf16.xpose.msra.mxu0 0
  %6813 = vmatprep.subr.bf16.mxu0 0
  %6814 = vmatpush1.bf16.xpose.msra.mxu0 0
  %6815 = vmatprep.subr.bf16.mxu0 0
  %6816 = vmatpush1.bf16.xpose.msra.mxu0 0
  %6817 = vmatprep.subr.bf16.mxu0 0
  %6818 = vmatpush1.bf16.xpose.msra.mxu0 0
  %6819 = vmatprep.subr.bf16.mxu0 0
  %6820 = vmatpush1.bf16.xpose.msra.mxu0 0
  %6821 = vmatprep.subr.bf16.mxu0 0
  %6822 = vmatpush1.bf16.xpose.msra.mxu0 0
  %6823 = vmatprep.subr.bf16.mxu0 0
  %6824 = vmatpush1.bf16.xpose.msra.mxu0 0
  %6825 = vmatprep.subr.bf16.mxu0 0
  %6826 = vmatpush1.bf16.xpose.msra.mxu0 0
  %6827 = vmatprep.subr.bf16.mxu0 0
  %6828 = vmatpush1.bf16.xpose.msra.mxu0 0
  %6829 = vmatprep.subr.bf16.mxu0 0
  %6830 = vmatpush1.bf16.xpose.msra.mxu0 0
  %6831 = vmatprep.subr.bf16.mxu0 0
  %6832 = vmatpush1.bf16.xpose.msra.mxu0 0
  %6833 = vmatprep.subr.bf16.mxu0 0
  %6834 = vmatpush1.bf16.xpose.msra.mxu0 0
  %6835 = vmatprep.subr.bf16.mxu0 0
  %6836 = vmatpush1.bf16.xpose.msra.mxu0 0
  %6837 = vmatprep.subr.bf16.mxu0 0
  %6838 = vmatpush1.bf16.xpose.msra.mxu0 0
  %6839 = vmatprep.mubr.bf16.mxu0 0
  %6840 = vmatmul.mubr.bf16.gmra.mrb[0].mxu0 %v6802
  %v6841 = vpop.f32.mrb[0].mxu0
  %v6842 = vadd.f32 0.0, %v6841
  %v6843 = vpop.f32.mrb[0].mxu0
  %v6844 = vpop.f32.mrb[0].mxu0
  %v6845 = vadd.f32 0.0, %v6844
  %v6846 = vpop.f32.mrb[0].mxu0
  %6847 = vdwg.mxu0
  %v6848 = vsel %vm1329, %v6077, -inf
  %6849 = vmax.xlane.f32.xlu0 %v6848
  %v6850 = vpop.xlane.xlu0 %6849
  %v6851 = vsel %vm1329, %v6080, -inf
  %6852 = vmax.xlane.f32.xlu0 %v6851
  %v6853 = vpop.xlane.xlu0 %6852
  %v6854 = vsel %vm1329, %v6128, -inf
  %6855 = vmax.xlane.f32.xlu0 %v6854
  %v6856 = vpop.xlane.xlu0 %6855
  %v6857 = vsel %vm1329, %v6131, -inf
  %6858 = vmax.xlane.f32.xlu0 %v6857
  %v6859 = vpop.xlane.xlu0 %6858
  %v6860 = vsel %vm1329, %v6179, -inf
  %6861 = vmax.xlane.f32.xlu0 %v6860
  %v6862 = vpop.xlane.xlu0 %6861
  %v6863 = vsel %vm1329, %v6182, -inf
  %6864 = vmax.xlane.f32.xlu0 %v6863
  %v6865 = vpop.xlane.xlu0 %6864
  %v6866 = vsel %vm1329, %v6230, -inf
  %6867 = vmax.xlane.f32.xlu0 %v6866
  %v6868 = vpop.xlane.xlu0 %6867
  %v6869 = vsel %vm1329, %v6233, -inf
  %6870 = vmax.xlane.f32.xlu0 %v6869
  %v6871 = vpop.xlane.xlu0 %6870
  %v6872 = vsel %vm1329, %v6281, -inf
  %6873 = vmax.xlane.f32.xlu0 %v6872
  %v6874 = vpop.xlane.xlu0 %6873
  %v6875 = vsel %vm1329, %v6284, -inf
  %6876 = vmax.xlane.f32.xlu0 %v6875
  %v6877 = vpop.xlane.xlu0 %6876
  %v6878 = vsel %vm1329, %v6332, -inf
  %6879 = vmax.xlane.f32.xlu0 %v6878
  %v6880 = vpop.xlane.xlu0 %6879
  %v6881 = vsel %vm1329, %v6335, -inf
  %6882 = vmax.xlane.f32.xlu0 %v6881
  %v6883 = vpop.xlane.xlu0 %6882
  %v6884 = vsel %vm1329, %v6383, -inf
  %6885 = vmax.xlane.f32.xlu0 %v6884
  %v6886 = vpop.xlane.xlu0 %6885
  %v6887 = vsel %vm1329, %v6386, -inf
  %6888 = vmax.xlane.f32.xlu0 %v6887
  %v6889 = vpop.xlane.xlu0 %6888
  %v6890 = vsel %vm1329, %v6434, -inf
  %6891 = vmax.xlane.f32.xlu0 %v6890
  %v6892 = vpop.xlane.xlu0 %6891
  %v6893 = vsel %vm1329, %v6437, -inf
  %6894 = vmax.xlane.f32.xlu0 %v6893
  %v6895 = vpop.xlane.xlu0 %6894
  %v6896 = vsub.f32 %v6077, %v6850
  %v6897 = vsub.f32 %v6080, %v6853
  %v6898 = vsub.f32 %v6128, %v6856
  %v6899 = vsub.f32 %v6131, %v6859
  %v6900 = vsub.f32 %v6179, %v6862
  %v6901 = vsub.f32 %v6182, %v6865
  %v6902 = vsub.f32 %v6230, %v6868
  %v6903 = vsub.f32 %v6233, %v6871
  %v6904 = vsub.f32 %v6281, %v6874
  %v6905 = vsub.f32 %v6284, %v6877
  %v6906 = vsub.f32 %v6332, %v6880
  %v6907 = vsub.f32 %v6335, %v6883
  %v6908 = vsub.f32 %v6383, %v6886
  %v6909 = vsub.f32 %v6386, %v6889
  %v6910 = vsub.f32 %v6434, %v6892
  %v6911 = vsub.f32 %v6437, %v6895
  %v6912 = vmul.f32 %v6896, 1.442695
  %v6913 = vpow.pop %v6912
  %v6914 = vmul.f32 %v6897, 1.442695
  %v6915 = vpow.pop %v6914
  %v6916 = vmul.f32 %v6898, 1.442695
  %v6917 = vpow.pop %v6916
  %v6918 = vmul.f32 %v6899, 1.442695
  %v6919 = vpow.pop %v6918
  %v6920 = vmul.f32 %v6900, 1.442695
  %v6921 = vpow.pop %v6920
  %v6922 = vmul.f32 %v6901, 1.442695
  %v6923 = vpow.pop %v6922
  %v6924 = vmul.f32 %v6902, 1.442695
  %v6925 = vpow.pop %v6924
  %v6926 = vmul.f32 %v6903, 1.442695
  %v6927 = vpow.pop %v6926
  %v6928 = vmul.f32 %v6904, 1.442695
  %v6929 = vpow.pop %v6928
  %v6930 = vmul.f32 %v6905, 1.442695
  %v6931 = vpow.pop %v6930
  %v6932 = vmul.f32 %v6906, 1.442695
  %v6933 = vpow.pop %v6932
  %v6934 = vmul.f32 %v6907, 1.442695
  %v6935 = vpow.pop %v6934
  %v6936 = vmul.f32 %v6908, 1.442695
  %v6937 = vpow.pop %v6936
  %v6938 = vmul.f32 %v6909, 1.442695
  %v6939 = vpow.pop %v6938
  %v6940 = vmul.f32 %v6910, 1.442695
  %v6941 = vpow.pop %v6940
  %v6942 = vmul.f32 %v6911, 1.442695
  %v6943 = vpow.pop %v6942
  %v6944 = vsel %vm1329, %v6913, 0.0
  %6945 = vadd.xlane.f32.xlu0 %v6944
  %v6946 = vpop.xlane.xlu0 %6945
  %v6947 = vsel %vm1329, %v6915, 0.0
  %6948 = vadd.xlane.f32.xlu0 %v6947
  %v6949 = vpop.xlane.xlu0 %6948
  %v6950 = vsel %vm1329, %v6917, 0.0
  %6951 = vadd.xlane.f32.xlu0 %v6950
  %v6952 = vpop.xlane.xlu0 %6951
  %v6953 = vsel %vm1329, %v6919, 0.0
  %6954 = vadd.xlane.f32.xlu0 %v6953
  %v6955 = vpop.xlane.xlu0 %6954
  %v6956 = vsel %vm1329, %v6921, 0.0
  %6957 = vadd.xlane.f32.xlu0 %v6956
  %v6958 = vpop.xlane.xlu0 %6957
  %v6959 = vsel %vm1329, %v6923, 0.0
  %6960 = vadd.xlane.f32.xlu0 %v6959
  %v6961 = vpop.xlane.xlu0 %6960
  %v6962 = vsel %vm1329, %v6925, 0.0
  %6963 = vadd.xlane.f32.xlu0 %v6962
  %v6964 = vpop.xlane.xlu0 %6963
  %v6965 = vsel %vm1329, %v6927, 0.0
  %6966 = vadd.xlane.f32.xlu0 %v6965
  %v6967 = vpop.xlane.xlu0 %6966
  %v6968 = vsel %vm1329, %v6929, 0.0
  %6969 = vadd.xlane.f32.xlu0 %v6968
  %v6970 = vpop.xlane.xlu0 %6969
  %v6971 = vsel %vm1329, %v6931, 0.0
  %6972 = vadd.xlane.f32.xlu0 %v6971
  %v6973 = vpop.xlane.xlu0 %6972
  %v6974 = vsel %vm1329, %v6933, 0.0
  %6975 = vadd.xlane.f32.xlu0 %v6974
  %v6976 = vpop.xlane.xlu0 %6975
  %v6977 = vsel %vm1329, %v6935, 0.0
  %6978 = vadd.xlane.f32.xlu0 %v6977
  %v6979 = vpop.xlane.xlu0 %6978
  %v6980 = vsel %vm1329, %v6937, 0.0
  %6981 = vadd.xlane.f32.xlu0 %v6980
  %v6982 = vpop.xlane.xlu0 %6981
  %v6983 = vsel %vm1329, %v6939, 0.0
  %6984 = vadd.xlane.f32.xlu0 %v6983
  %v6985 = vpop.xlane.xlu0 %6984
  %v6986 = vsel %vm1329, %v6941, 0.0
  %6987 = vadd.xlane.f32.xlu0 %v6986
  %v6988 = vpop.xlane.xlu0 %6987
  %v6989 = vsel %vm1329, %v6943, 0.0
  %6990 = vadd.xlane.f32.xlu0 %v6989
  %v6991 = vpop.xlane.xlu0 %6990
  %v6992 = vrcp.pop %v6946
  %v6993 = vmul.f32 %v6913, %v6992
  %v6994 = vrcp.pop %v6949
  %v6995 = vmul.f32 %v6915, %v6994
  %v6996 = vrcp.pop %v6952
  %v6997 = vmul.f32 %v6917, %v6996
  %v6998 = vrcp.pop %v6955
  %v6999 = vmul.f32 %v6919, %v6998
  %v7000 = vrcp.pop %v6958
  %v7001 = vmul.f32 %v6921, %v7000
  %v7002 = vrcp.pop %v6961
  %v7003 = vmul.f32 %v6923, %v7002
  %v7004 = vrcp.pop %v6964
  %v7005 = vmul.f32 %v6925, %v7004
  %v7006 = vrcp.pop %v6967
  %v7007 = vmul.f32 %v6927, %v7006
  %v7008 = vrcp.pop %v6970
  %v7009 = vmul.f32 %v6929, %v7008
  %v7010 = vrcp.pop %v6973
  %v7011 = vmul.f32 %v6931, %v7010
  %v7012 = vrcp.pop %v6976
  %v7013 = vmul.f32 %v6933, %v7012
  %v7014 = vrcp.pop %v6979
  %v7015 = vmul.f32 %v6935, %v7014
  %v7016 = vrcp.pop %v6982
  %v7017 = vmul.f32 %v6937, %v7016
  %v7018 = vrcp.pop %v6985
  %v7019 = vmul.f32 %v6939, %v7018
  %v7020 = vrcp.pop %v6988
  %v7021 = vmul.f32 %v6941, %v7020
  %v7022 = vrcp.pop %v6991
  %v7023 = vmul.f32 %v6943, %v7022
  %v7024 = vsel %vm1329, %v6485, -inf
  %7025 = vmax.xlane.f32.xlu0 %v7024
  %v7026 = vpop.xlane.xlu0 %7025
  %v7027 = vsel %vm1329, %v6488, -inf
  %7028 = vmax.xlane.f32.xlu0 %v7027
  %v7029 = vpop.xlane.xlu0 %7028
  %v7030 = vsel %vm1329, %v6536, -inf
  %7031 = vmax.xlane.f32.xlu0 %v7030
  %v7032 = vpop.xlane.xlu0 %7031
  %v7033 = vsel %vm1329, %v6539, -inf
  %7034 = vmax.xlane.f32.xlu0 %v7033
  %v7035 = vpop.xlane.xlu0 %7034
  %v7036 = vsel %vm1329, %v6587, -inf
  %7037 = vmax.xlane.f32.xlu0 %v7036
  %v7038 = vpop.xlane.xlu0 %7037
  %v7039 = vsel %vm1329, %v6590, -inf
  %7040 = vmax.xlane.f32.xlu0 %v7039
  %v7041 = vpop.xlane.xlu0 %7040
  %v7042 = vsel %vm1329, %v6638, -inf
  %7043 = vmax.xlane.f32.xlu0 %v7042
  %v7044 = vpop.xlane.xlu0 %7043
  %v7045 = vsel %vm1329, %v6641, -inf
  %7046 = vmax.xlane.f32.xlu0 %v7045
  %v7047 = vpop.xlane.xlu0 %7046
  %v7048 = vsel %vm1329, %v6689, -inf
  %7049 = vmax.xlane.f32.xlu0 %v7048
  %v7050 = vpop.xlane.xlu0 %7049
  %v7051 = vsel %vm1329, %v6692, -inf
  %7052 = vmax.xlane.f32.xlu0 %v7051
  %v7053 = vpop.xlane.xlu0 %7052
  %v7054 = vsel %vm1329, %v6740, -inf
  %7055 = vmax.xlane.f32.xlu0 %v7054
  %v7056 = vpop.xlane.xlu0 %7055
  %v7057 = vsel %vm1329, %v6743, -inf
  %7058 = vmax.xlane.f32.xlu0 %v7057
  %v7059 = vpop.xlane.xlu0 %7058
  %v7060 = vsel %vm1329, %v6791, -inf
  %7061 = vmax.xlane.f32.xlu0 %v7060
  %v7062 = vpop.xlane.xlu0 %7061
  %v7063 = vsel %vm1329, %v6794, -inf
  %7064 = vmax.xlane.f32.xlu0 %v7063
  %v7065 = vpop.xlane.xlu0 %7064
  %v7066 = vsel %vm1329, %v6842, -inf
  %7067 = vmax.xlane.f32.xlu0 %v7066
  %v7068 = vpop.xlane.xlu0 %7067
  %v7069 = vsel %vm1329, %v6845, -inf
  %7070 = vmax.xlane.f32.xlu0 %v7069
  %v7071 = vpop.xlane.xlu0 %7070
  %v7072 = vsub.f32 %v6485, %v7026
  %v7073 = vsub.f32 %v6488, %v7029
  %v7074 = vsub.f32 %v6536, %v7032
  %v7075 = vsub.f32 %v6539, %v7035
  %v7076 = vsub.f32 %v6587, %v7038
  %v7077 = vsub.f32 %v6590, %v7041
  %v7078 = vsub.f32 %v6638, %v7044
  %v7079 = vsub.f32 %v6641, %v7047
  %v7080 = vsub.f32 %v6689, %v7050
  %v7081 = vsub.f32 %v6692, %v7053
  %v7082 = vsub.f32 %v6740, %v7056
  %v7083 = vsub.f32 %v6743, %v7059
  %v7084 = vsub.f32 %v6791, %v7062
  %v7085 = vsub.f32 %v6794, %v7065
  %v7086 = vsub.f32 %v6842, %v7068
  %v7087 = vsub.f32 %v6845, %v7071
  %v7088 = vmul.f32 %v7072, 1.442695
  %v7089 = vpow.pop %v7088
  %v7090 = vmul.f32 %v7073, 1.442695
  %v7091 = vpow.pop %v7090
  %v7092 = vmul.f32 %v7074, 1.442695
  %v7093 = vpow.pop %v7092
  %v7094 = vmul.f32 %v7075, 1.442695
  %v7095 = vpow.pop %v7094
  %v7096 = vmul.f32 %v7076, 1.442695
  %v7097 = vpow.pop %v7096
  %v7098 = vmul.f32 %v7077, 1.442695
  %v7099 = vpow.pop %v7098
  %v7100 = vmul.f32 %v7078, 1.442695
  %v7101 = vpow.pop %v7100
  %v7102 = vmul.f32 %v7079, 1.442695
  %v7103 = vpow.pop %v7102
  %v7104 = vmul.f32 %v7080, 1.442695
  %v7105 = vpow.pop %v7104
  %v7106 = vmul.f32 %v7081, 1.442695
  %v7107 = vpow.pop %v7106
  %v7108 = vmul.f32 %v7082, 1.442695
  %v7109 = vpow.pop %v7108
  %v7110 = vmul.f32 %v7083, 1.442695
  %v7111 = vpow.pop %v7110
  %v7112 = vmul.f32 %v7084, 1.442695
  %v7113 = vpow.pop %v7112
  %v7114 = vmul.f32 %v7085, 1.442695
  %v7115 = vpow.pop %v7114
  %v7116 = vmul.f32 %v7086, 1.442695
  %v7117 = vpow.pop %v7116
  %v7118 = vmul.f32 %v7087, 1.442695
  %v7119 = vpow.pop %v7118
  %v7120 = vsel %vm1329, %v7089, 0.0
  %7121 = vadd.xlane.f32.xlu0 %v7120
  %v7122 = vpop.xlane.xlu0 %7121
  %v7123 = vsel %vm1329, %v7091, 0.0
  %7124 = vadd.xlane.f32.xlu0 %v7123
  %v7125 = vpop.xlane.xlu0 %7124
  %v7126 = vsel %vm1329, %v7093, 0.0
  %7127 = vadd.xlane.f32.xlu0 %v7126
  %v7128 = vpop.xlane.xlu0 %7127
  %v7129 = vsel %vm1329, %v7095, 0.0
  %7130 = vadd.xlane.f32.xlu0 %v7129
  %v7131 = vpop.xlane.xlu0 %7130
  %v7132 = vsel %vm1329, %v7097, 0.0
  %7133 = vadd.xlane.f32.xlu0 %v7132
  %v7134 = vpop.xlane.xlu0 %7133
  %v7135 = vsel %vm1329, %v7099, 0.0
  %7136 = vadd.xlane.f32.xlu0 %v7135
  %v7137 = vpop.xlane.xlu0 %7136
  %v7138 = vsel %vm1329, %v7101, 0.0
  %7139 = vadd.xlane.f32.xlu0 %v7138
  %v7140 = vpop.xlane.xlu0 %7139
  %v7141 = vsel %vm1329, %v7103, 0.0
  %7142 = vadd.xlane.f32.xlu0 %v7141
  %v7143 = vpop.xlane.xlu0 %7142
  %v7144 = vsel %vm1329, %v7105, 0.0
  %7145 = vadd.xlane.f32.xlu0 %v7144
  %v7146 = vpop.xlane.xlu0 %7145
  %v7147 = vsel %vm1329, %v7107, 0.0
  %7148 = vadd.xlane.f32.xlu0 %v7147
  %v7149 = vpop.xlane.xlu0 %7148
  %v7150 = vsel %vm1329, %v7109, 0.0
  %7151 = vadd.xlane.f32.xlu0 %v7150
  %v7152 = vpop.xlane.xlu0 %7151
  %v7153 = vsel %vm1329, %v7111, 0.0
  %7154 = vadd.xlane.f32.xlu0 %v7153
  %v7155 = vpop.xlane.xlu0 %7154
  %v7156 = vsel %vm1329, %v7113, 0.0
  %7157 = vadd.xlane.f32.xlu0 %v7156
  %v7158 = vpop.xlane.xlu0 %7157
  %v7159 = vsel %vm1329, %v7115, 0.0
  %7160 = vadd.xlane.f32.xlu0 %v7159
  %v7161 = vpop.xlane.xlu0 %7160
  %v7162 = vsel %vm1329, %v7117, 0.0
  %7163 = vadd.xlane.f32.xlu0 %v7162
  %v7164 = vpop.xlane.xlu0 %7163
  %v7165 = vsel %vm1329, %v7119, 0.0
  %7166 = vadd.xlane.f32.xlu0 %v7165
  %v7167 = vpop.xlane.xlu0 %7166
  %v7168 = vrcp.pop %v7122
  %v7169 = vmul.f32 %v7089, %v7168
  %v7170 = vrcp.pop %v7125
  %v7171 = vmul.f32 %v7091, %v7170
  %v7172 = vrcp.pop %v7128
  %v7173 = vmul.f32 %v7093, %v7172
  %v7174 = vrcp.pop %v7131
  %v7175 = vmul.f32 %v7095, %v7174
  %v7176 = vrcp.pop %v7134
  %v7177 = vmul.f32 %v7097, %v7176
  %v7178 = vrcp.pop %v7137
  %v7179 = vmul.f32 %v7099, %v7178
  %v7180 = vrcp.pop %v7140
  %v7181 = vmul.f32 %v7101, %v7180
  %v7182 = vrcp.pop %v7143
  %v7183 = vmul.f32 %v7103, %v7182
  %v7184 = vrcp.pop %v7146
  %v7185 = vmul.f32 %v7105, %v7184
  %v7186 = vrcp.pop %v7149
  %v7187 = vmul.f32 %v7107, %v7186
  %v7188 = vrcp.pop %v7152
  %v7189 = vmul.f32 %v7109, %v7188
  %v7190 = vrcp.pop %v7155
  %v7191 = vmul.f32 %v7111, %v7190
  %v7192 = vrcp.pop %v7158
  %v7193 = vmul.f32 %v7113, %v7192
  %v7194 = vrcp.pop %v7161
  %v7195 = vmul.f32 %v7115, %v7194
  %v7196 = vrcp.pop %v7164
  %v7197 = vmul.f32 %v7117, %v7196
  %v7198 = vrcp.pop %v7167
  %v7199 = vmul.f32 %v7119, %v7198
  %v7200 = vmul.f32 %v1682, %v7169
  %v7201 = vmul.f32 %v1682, %v7171
  %v7202 = vmul.f32 %v1682, %v7173
  %v7203 = vmul.f32 %v1682, %v7175
  %v7204 = vmul.f32 %v1682, %v7177
  %v7205 = vmul.f32 %v1682, %v7179
  %v7206 = vmul.f32 %v1682, %v7181
  %v7207 = vmul.f32 %v1682, %v7183
  %v7208 = vmul.f32 %v1682, %v7185
  %v7209 = vmul.f32 %v1682, %v7187
  %v7210 = vmul.f32 %v1682, %v7189
  %v7211 = vmul.f32 %v1682, %v7191
  %v7212 = vmul.f32 %v1682, %v7193
  %v7213 = vmul.f32 %v1682, %v7195
  %v7214 = vmul.f32 %v1682, %v7197
  %v7215 = vmul.f32 %v1682, %v7199
  %v7216 = vsub.f32 %v6993, %v7200
  %v7217 = vsub.f32 %v6995, %v7201
  %v7218 = vsub.f32 %v6997, %v7202
  %v7219 = vsub.f32 %v6999, %v7203
  %v7220 = vsub.f32 %v7001, %v7204
  %v7221 = vsub.f32 %v7003, %v7205
  %v7222 = vsub.f32 %v7005, %v7206
  %v7223 = vsub.f32 %v7007, %v7207
  %v7224 = vsub.f32 %v7009, %v7208
  %v7225 = vsub.f32 %v7011, %v7209
  %v7226 = vsub.f32 %v7013, %v7210
  %v7227 = vsub.f32 %v7015, %v7211
  %v7228 = vsub.f32 %v7017, %v7212
  %v7229 = vsub.f32 %v7019, %v7213
  %v7230 = vsub.f32 %v7021, %v7214
  %v7231 = vsub.f32 %v7023, %v7215
  %v7232 = vpack.c.bf16 %v7217, %v7216
  %v7233 = vpack.c.bf16 %v7219, %v7218
  %v7234 = vpack.c.bf16 %v7221, %v7220
  %v7235 = vpack.c.bf16 %v7223, %v7222
  %v7236 = vpack.c.bf16 %v7225, %v7224
  %v7237 = vpack.c.bf16 %v7227, %v7226
  %v7238 = vpack.c.bf16 %v7229, %v7228
  %v7239 = vpack.c.bf16 %v7231, %v7230
  %7240 = vrot.lane.b32.xlu0 %v512, 80
  %v7241 = vpop.permute.xlu0 %7240
  %v7244 = vsel %vm1329, %v7232, 0
  %7246 = vmatprep.subr.bf16.mxu0 0
  %7247 = vmatpush1.bf16.msra.mxu0 %v7241
  %7248 = vmatprep.subr.bf16.mxu0 0
  %7249 = vmatpush1.bf16.msra.mxu0 0
  %7250 = vmatprep.subr.bf16.mxu0 0
  %7251 = vmatpush1.bf16.msra.mxu0 0
  %7252 = vmatprep.subr.bf16.mxu0 0
  %7253 = vmatpush1.bf16.msra.mxu0 0
  %7254 = vmatprep.subr.bf16.mxu0 0
  %7255 = vmatpush1.bf16.msra.mxu0 0
  %7256 = vmatprep.subr.bf16.mxu0 0
  %7257 = vmatpush1.bf16.msra.mxu0 0
  %7258 = vmatprep.subr.bf16.mxu0 0
  %7259 = vmatpush1.bf16.msra.mxu0 0
  %7260 = vmatprep.subr.bf16.mxu0 0
  %7261 = vmatpush1.bf16.msra.mxu0 0
  %7262 = vmatprep.subr.bf16.mxu0 0
  %7263 = vmatpush1.bf16.msra.mxu0 0
  %7264 = vmatprep.subr.bf16.mxu0 0
  %7265 = vmatpush1.bf16.msra.mxu0 0
  %7266 = vmatprep.subr.bf16.mxu0 0
  %7267 = vmatpush1.bf16.msra.mxu0 0
  %7268 = vmatprep.subr.bf16.mxu0 0
  %7269 = vmatpush1.bf16.msra.mxu0 0
  %7270 = vmatprep.subr.bf16.mxu0 0
  %7271 = vmatpush1.bf16.msra.mxu0 0
  %7272 = vmatprep.subr.bf16.mxu0 0
  %7273 = vmatpush1.bf16.msra.mxu0 0
  %7274 = vmatprep.subr.bf16.mxu0 0
  %7275 = vmatpush1.bf16.msra.mxu0 0
  %7276 = vmatprep.subr.bf16.mxu0 0
  %7277 = vmatpush1.bf16.msra.mxu0 0
  %7278 = vmatprep.mubr.bf16.mxu0 0
  %7279 = vmatmul.mubr.bf16.gmra.mrb[0].mxu0 %v7244
  %v7280 = vpop.f32.mrb[0].mxu0
  %v7281 = vadd.f32 0.0, %v7280
  %v7282 = vpop.f32.mrb[0].mxu0
  %v7283 = vpop.f32.mrb[0].mxu0
  %v7284 = vadd.f32 0.0, %v7283
  %v7285 = vpop.f32.mrb[0].mxu0
  %7286 = vdwg.mxu0
  %7287 = vrot.lane.b32.xlu0 %v513, 80
  %v7288 = vpop.permute.xlu0 %7287
  %v7291 = vsel %vm1329, %v7233, 0
  %7293 = vmatprep.subr.bf16.mxu0 0
  %7294 = vmatpush1.bf16.msra.mxu0 %v7288
  %7295 = vmatprep.subr.bf16.mxu0 0
  %7296 = vmatpush1.bf16.msra.mxu0 0
  %7297 = vmatprep.subr.bf16.mxu0 0
  %7298 = vmatpush1.bf16.msra.mxu0 0
  %7299 = vmatprep.subr.bf16.mxu0 0
  %7300 = vmatpush1.bf16.msra.mxu0 0
  %7301 = vmatprep.subr.bf16.mxu0 0
  %7302 = vmatpush1.bf16.msra.mxu0 0
  %7303 = vmatprep.subr.bf16.mxu0 0
  %7304 = vmatpush1.bf16.msra.mxu0 0
  %7305 = vmatprep.subr.bf16.mxu0 0
  %7306 = vmatpush1.bf16.msra.mxu0 0
  %7307 = vmatprep.subr.bf16.mxu0 0
  %7308 = vmatpush1.bf16.msra.mxu0 0
  %7309 = vmatprep.subr.bf16.mxu0 0
  %7310 = vmatpush1.bf16.msra.mxu0 0
  %7311 = vmatprep.subr.bf16.mxu0 0
  %7312 = vmatpush1.bf16.msra.mxu0 0
  %7313 = vmatprep.subr.bf16.mxu0 0
  %7314 = vmatpush1.bf16.msra.mxu0 0
  %7315 = vmatprep.subr.bf16.mxu0 0
  %7316 = vmatpush1.bf16.msra.mxu0 0
  %7317 = vmatprep.subr.bf16.mxu0 0
  %7318 = vmatpush1.bf16.msra.mxu0 0
  %7319 = vmatprep.subr.bf16.mxu0 0
  %7320 = vmatpush1.bf16.msra.mxu0 0
  %7321 = vmatprep.subr.bf16.mxu0 0
  %7322 = vmatpush1.bf16.msra.mxu0 0
  %7323 = vmatprep.subr.bf16.mxu0 0
  %7324 = vmatpush1.bf16.msra.mxu0 0
  %7325 = vmatprep.mubr.bf16.mxu0 0
  %7326 = vmatmul.mubr.bf16.gmra.mrb[0].mxu0 %v7291
  %v7327 = vpop.f32.mrb[0].mxu0
  %v7328 = vadd.f32 0.0, %v7327
  %v7329 = vpop.f32.mrb[0].mxu0
  %v7330 = vpop.f32.mrb[0].mxu0
  %v7331 = vadd.f32 0.0, %v7330
  %v7332 = vpop.f32.mrb[0].mxu0
  %7333 = vdwg.mxu0
  %7334 = vrot.lane.b32.xlu0 %v514, 80
  %v7335 = vpop.permute.xlu0 %7334
  %v7338 = vsel %vm1329, %v7234, 0
  %7340 = vmatprep.subr.bf16.mxu0 0
  %7341 = vmatpush1.bf16.msra.mxu0 %v7335
  %7342 = vmatprep.subr.bf16.mxu0 0
  %7343 = vmatpush1.bf16.msra.mxu0 0
  %7344 = vmatprep.subr.bf16.mxu0 0
  %7345 = vmatpush1.bf16.msra.mxu0 0
  %7346 = vmatprep.subr.bf16.mxu0 0
  %7347 = vmatpush1.bf16.msra.mxu0 0
  %7348 = vmatprep.subr.bf16.mxu0 0
  %7349 = vmatpush1.bf16.msra.mxu0 0
  %7350 = vmatprep.subr.bf16.mxu0 0
  %7351 = vmatpush1.bf16.msra.mxu0 0
  %7352 = vmatprep.subr.bf16.mxu0 0
  %7353 = vmatpush1.bf16.msra.mxu0 0
  %7354 = vmatprep.subr.bf16.mxu0 0
  %7355 = vmatpush1.bf16.msra.mxu0 0
  %7356 = vmatprep.subr.bf16.mxu0 0
  %7357 = vmatpush1.bf16.msra.mxu0 0
  %7358 = vmatprep.subr.bf16.mxu0 0
  %7359 = vmatpush1.bf16.msra.mxu0 0
  %7360 = vmatprep.subr.bf16.mxu0 0
  %7361 = vmatpush1.bf16.msra.mxu0 0
  %7362 = vmatprep.subr.bf16.mxu0 0
  %7363 = vmatpush1.bf16.msra.mxu0 0
  %7364 = vmatprep.subr.bf16.mxu0 0
  %7365 = vmatpush1.bf16.msra.mxu0 0
  %7366 = vmatprep.subr.bf16.mxu0 0
  %7367 = vmatpush1.bf16.msra.mxu0 0
  %7368 = vmatprep.subr.bf16.mxu0 0
  %7369 = vmatpush1.bf16.msra.mxu0 0
  %7370 = vmatprep.subr.bf16.mxu0 0
  %7371 = vmatpush1.bf16.msra.mxu0 0
  %7372 = vmatprep.mubr.bf16.mxu0 0
  %7373 = vmatmul.mubr.bf16.gmra.mrb[0].mxu0 %v7338
  %v7374 = vpop.f32.mrb[0].mxu0
  %v7375 = vadd.f32 0.0, %v7374
  %v7376 = vpop.f32.mrb[0].mxu0
  %v7377 = vpop.f32.mrb[0].mxu0
  %v7378 = vadd.f32 0.0, %v7377
  %v7379 = vpop.f32.mrb[0].mxu0
  %7380 = vdwg.mxu0
  %7381 = vrot.lane.b32.xlu0 %v515, 80
  %v7382 = vpop.permute.xlu0 %7381
  %v7385 = vsel %vm1329, %v7235, 0
  %7387 = vmatprep.subr.bf16.mxu0 0
  %7388 = vmatpush1.bf16.msra.mxu0 %v7382
  %7389 = vmatprep.subr.bf16.mxu0 0
  %7390 = vmatpush1.bf16.msra.mxu0 0
  %7391 = vmatprep.subr.bf16.mxu0 0
  %7392 = vmatpush1.bf16.msra.mxu0 0
  %7393 = vmatprep.subr.bf16.mxu0 0
  %7394 = vmatpush1.bf16.msra.mxu0 0
  %7395 = vmatprep.subr.bf16.mxu0 0
  %7396 = vmatpush1.bf16.msra.mxu0 0
  %7397 = vmatprep.subr.bf16.mxu0 0
  %7398 = vmatpush1.bf16.msra.mxu0 0
  %7399 = vmatprep.subr.bf16.mxu0 0
  %7400 = vmatpush1.bf16.msra.mxu0 0
  %7401 = vmatprep.subr.bf16.mxu0 0
  %7402 = vmatpush1.bf16.msra.mxu0 0
  %7403 = vmatprep.subr.bf16.mxu0 0
  %7404 = vmatpush1.bf16.msra.mxu0 0
  %7405 = vmatprep.subr.bf16.mxu0 0
  %7406 = vmatpush1.bf16.msra.mxu0 0
  %7407 = vmatprep.subr.bf16.mxu0 0
  %7408 = vmatpush1.bf16.msra.mxu0 0
  %7409 = vmatprep.subr.bf16.mxu0 0
  %7410 = vmatpush1.bf16.msra.mxu0 0
  %7411 = vmatprep.subr.bf16.mxu0 0
  %7412 = vmatpush1.bf16.msra.mxu0 0
  %7413 = vmatprep.subr.bf16.mxu0 0
  %7414 = vmatpush1.bf16.msra.mxu0 0
  %7415 = vmatprep.subr.bf16.mxu0 0
  %7416 = vmatpush1.bf16.msra.mxu0 0
  %7417 = vmatprep.subr.bf16.mxu0 0
  %7418 = vmatpush1.bf16.msra.mxu0 0
  %7419 = vmatprep.mubr.bf16.mxu0 0
  %7420 = vmatmul.mubr.bf16.gmra.mrb[0].mxu0 %v7385
  %v7421 = vpop.f32.mrb[0].mxu0
  %v7422 = vadd.f32 0.0, %v7421
  %v7423 = vpop.f32.mrb[0].mxu0
  %v7424 = vpop.f32.mrb[0].mxu0
  %v7425 = vadd.f32 0.0, %v7424
  %v7426 = vpop.f32.mrb[0].mxu0
  %7427 = vdwg.mxu0
  %7428 = vrot.lane.b32.xlu0 %v516, 80
  %v7429 = vpop.permute.xlu0 %7428
  %v7432 = vsel %vm1329, %v7236, 0
  %7434 = vmatprep.subr.bf16.mxu0 0
  %7435 = vmatpush1.bf16.msra.mxu0 %v7429
  %7436 = vmatprep.subr.bf16.mxu0 0
  %7437 = vmatpush1.bf16.msra.mxu0 0
  %7438 = vmatprep.subr.bf16.mxu0 0
  %7439 = vmatpush1.bf16.msra.mxu0 0
  %7440 = vmatprep.subr.bf16.mxu0 0
  %7441 = vmatpush1.bf16.msra.mxu0 0
  %7442 = vmatprep.subr.bf16.mxu0 0
  %7443 = vmatpush1.bf16.msra.mxu0 0
  %7444 = vmatprep.subr.bf16.mxu0 0
  %7445 = vmatpush1.bf16.msra.mxu0 0
  %7446 = vmatprep.subr.bf16.mxu0 0
  %7447 = vmatpush1.bf16.msra.mxu0 0
  %7448 = vmatprep.subr.bf16.mxu0 0
  %7449 = vmatpush1.bf16.msra.mxu0 0
  %7450 = vmatprep.subr.bf16.mxu0 0
  %7451 = vmatpush1.bf16.msra.mxu0 0
  %7452 = vmatprep.subr.bf16.mxu0 0
  %7453 = vmatpush1.bf16.msra.mxu0 0
  %7454 = vmatprep.subr.bf16.mxu0 0
  %7455 = vmatpush1.bf16.msra.mxu0 0
  %7456 = vmatprep.subr.bf16.mxu0 0
  %7457 = vmatpush1.bf16.msra.mxu0 0
  %7458 = vmatprep.subr.bf16.mxu0 0
  %7459 = vmatpush1.bf16.msra.mxu0 0
  %7460 = vmatprep.subr.bf16.mxu0 0
  %7461 = vmatpush1.bf16.msra.mxu0 0
  %7462 = vmatprep.subr.bf16.mxu0 0
  %7463 = vmatpush1.bf16.msra.mxu0 0
  %7464 = vmatprep.subr.bf16.mxu0 0
  %7465 = vmatpush1.bf16.msra.mxu0 0
  %7466 = vmatprep.mubr.bf16.mxu0 0
  %7467 = vmatmul.mubr.bf16.gmra.mrb[0].mxu0 %v7432
  %v7468 = vpop.f32.mrb[0].mxu0
  %v7469 = vadd.f32 0.0, %v7468
  %v7470 = vpop.f32.mrb[0].mxu0
  %v7471 = vpop.f32.mrb[0].mxu0
  %v7472 = vadd.f32 0.0, %v7471
  %v7473 = vpop.f32.mrb[0].mxu0
  %7474 = vdwg.mxu0
  %7475 = vrot.lane.b32.xlu0 %v517, 80
  %v7476 = vpop.permute.xlu0 %7475
  %v7479 = vsel %vm1329, %v7237, 0
  %7481 = vmatprep.subr.bf16.mxu0 0
  %7482 = vmatpush1.bf16.msra.mxu0 %v7476
  %7483 = vmatprep.subr.bf16.mxu0 0
  %7484 = vmatpush1.bf16.msra.mxu0 0
  %7485 = vmatprep.subr.bf16.mxu0 0
  %7486 = vmatpush1.bf16.msra.mxu0 0
  %7487 = vmatprep.subr.bf16.mxu0 0
  %7488 = vmatpush1.bf16.msra.mxu0 0
  %7489 = vmatprep.subr.bf16.mxu0 0
  %7490 = vmatpush1.bf16.msra.mxu0 0
  %7491 = vmatprep.subr.bf16.mxu0 0
  %7492 = vmatpush1.bf16.msra.mxu0 0
  %7493 = vmatprep.subr.bf16.mxu0 0
  %7494 = vmatpush1.bf16.msra.mxu0 0
  %7495 = vmatprep.subr.bf16.mxu0 0
  %7496 = vmatpush1.bf16.msra.mxu0 0
  %7497 = vmatprep.subr.bf16.mxu0 0
  %7498 = vmatpush1.bf16.msra.mxu0 0
  %7499 = vmatprep.subr.bf16.mxu0 0
  %7500 = vmatpush1.bf16.msra.mxu0 0
  %7501 = vmatprep.subr.bf16.mxu0 0
  %7502 = vmatpush1.bf16.msra.mxu0 0
  %7503 = vmatprep.subr.bf16.mxu0 0
  %7504 = vmatpush1.bf16.msra.mxu0 0
  %7505 = vmatprep.subr.bf16.mxu0 0
  %7506 = vmatpush1.bf16.msra.mxu0 0
  %7507 = vmatprep.subr.bf16.mxu0 0
  %7508 = vmatpush1.bf16.msra.mxu0 0
  %7509 = vmatprep.subr.bf16.mxu0 0
  %7510 = vmatpush1.bf16.msra.mxu0 0
  %7511 = vmatprep.subr.bf16.mxu0 0
  %7512 = vmatpush1.bf16.msra.mxu0 0
  %7513 = vmatprep.mubr.bf16.mxu0 0
  %7514 = vmatmul.mubr.bf16.gmra.mrb[0].mxu0 %v7479
  %v7515 = vpop.f32.mrb[0].mxu0
  %v7516 = vadd.f32 0.0, %v7515
  %v7517 = vpop.f32.mrb[0].mxu0
  %v7518 = vpop.f32.mrb[0].mxu0
  %v7519 = vadd.f32 0.0, %v7518
  %v7520 = vpop.f32.mrb[0].mxu0
  %7521 = vdwg.mxu0
  %7522 = vrot.lane.b32.xlu0 %v518, 80
  %v7523 = vpop.permute.xlu0 %7522
  %v7526 = vsel %vm1329, %v7238, 0
  %7528 = vmatprep.subr.bf16.mxu0 0
  %7529 = vmatpush1.bf16.msra.mxu0 %v7523
  %7530 = vmatprep.subr.bf16.mxu0 0
  %7531 = vmatpush1.bf16.msra.mxu0 0
  %7532 = vmatprep.subr.bf16.mxu0 0
  %7533 = vmatpush1.bf16.msra.mxu0 0
  %7534 = vmatprep.subr.bf16.mxu0 0
  %7535 = vmatpush1.bf16.msra.mxu0 0
  %7536 = vmatprep.subr.bf16.mxu0 0
  %7537 = vmatpush1.bf16.msra.mxu0 0
  %7538 = vmatprep.subr.bf16.mxu0 0
  %7539 = vmatpush1.bf16.msra.mxu0 0
  %7540 = vmatprep.subr.bf16.mxu0 0
  %7541 = vmatpush1.bf16.msra.mxu0 0
  %7542 = vmatprep.subr.bf16.mxu0 0
  %7543 = vmatpush1.bf16.msra.mxu0 0
  %7544 = vmatprep.subr.bf16.mxu0 0
  %7545 = vmatpush1.bf16.msra.mxu0 0
  %7546 = vmatprep.subr.bf16.mxu0 0
  %7547 = vmatpush1.bf16.msra.mxu0 0
  %7548 = vmatprep.subr.bf16.mxu0 0
  %7549 = vmatpush1.bf16.msra.mxu0 0
  %7550 = vmatprep.subr.bf16.mxu0 0
  %7551 = vmatpush1.bf16.msra.mxu0 0
  %7552 = vmatprep.subr.bf16.mxu0 0
  %7553 = vmatpush1.bf16.msra.mxu0 0
  %7554 = vmatprep.subr.bf16.mxu0 0
  %7555 = vmatpush1.bf16.msra.mxu0 0
  %7556 = vmatprep.subr.bf16.mxu0 0
  %7557 = vmatpush1.bf16.msra.mxu0 0
  %7558 = vmatprep.subr.bf16.mxu0 0
  %7559 = vmatpush1.bf16.msra.mxu0 0
  %7560 = vmatprep.mubr.bf16.mxu0 0
  %7561 = vmatmul.mubr.bf16.gmra.mrb[0].mxu0 %v7526
  %v7562 = vpop.f32.mrb[0].mxu0
  %v7563 = vadd.f32 0.0, %v7562
  %v7564 = vpop.f32.mrb[0].mxu0
  %v7565 = vpop.f32.mrb[0].mxu0
  %v7566 = vadd.f32 0.0, %v7565
  %v7567 = vpop.f32.mrb[0].mxu0
  %7568 = vdwg.mxu0
  %7569 = vrot.lane.b32.xlu0 %v519, 80
  %v7570 = vpop.permute.xlu0 %7569
  %v7573 = vsel %vm1329, %v7239, 0
  %7575 = vmatprep.subr.bf16.mxu0 0
  %7576 = vmatpush1.bf16.msra.mxu0 %v7570
  %7577 = vmatprep.subr.bf16.mxu0 0
  %7578 = vmatpush1.bf16.msra.mxu0 0
  %7579 = vmatprep.subr.bf16.mxu0 0
  %7580 = vmatpush1.bf16.msra.mxu0 0
  %7581 = vmatprep.subr.bf16.mxu0 0
  %7582 = vmatpush1.bf16.msra.mxu0 0
  %7583 = vmatprep.subr.bf16.mxu0 0
  %7584 = vmatpush1.bf16.msra.mxu0 0
  %7585 = vmatprep.subr.bf16.mxu0 0
  %7586 = vmatpush1.bf16.msra.mxu0 0
  %7587 = vmatprep.subr.bf16.mxu0 0
  %7588 = vmatpush1.bf16.msra.mxu0 0
  %7589 = vmatprep.subr.bf16.mxu0 0
  %7590 = vmatpush1.bf16.msra.mxu0 0
  %7591 = vmatprep.subr.bf16.mxu0 0
  %7592 = vmatpush1.bf16.msra.mxu0 0
  %7593 = vmatprep.subr.bf16.mxu0 0
  %7594 = vmatpush1.bf16.msra.mxu0 0
  %7595 = vmatprep.subr.bf16.mxu0 0
  %7596 = vmatpush1.bf16.msra.mxu0 0
  %7597 = vmatprep.subr.bf16.mxu0 0
  %7598 = vmatpush1.bf16.msra.mxu0 0
  %7599 = vmatprep.subr.bf16.mxu0 0
  %7600 = vmatpush1.bf16.msra.mxu0 0
  %7601 = vmatprep.subr.bf16.mxu0 0
  %7602 = vmatpush1.bf16.msra.mxu0 0
  %7603 = vmatprep.subr.bf16.mxu0 0
  %7604 = vmatpush1.bf16.msra.mxu0 0
  %7605 = vmatprep.subr.bf16.mxu0 0
  %7606 = vmatpush1.bf16.msra.mxu0 0
  %7607 = vmatprep.mubr.bf16.mxu0 0
  %7608 = vmatmul.mubr.bf16.gmra.mrb[0].mxu0 %v7573
  %v7609 = vpop.f32.mrb[0].mxu0
  %v7610 = vadd.f32 0.0, %v7609
  %v7611 = vpop.f32.mrb[0].mxu0
  %v7612 = vpop.f32.mrb[0].mxu0
  %v7613 = vadd.f32 0.0, %v7612
  %v7614 = vpop.f32.mrb[0].mxu0
  %7615 = vdwg.mxu0
  %v7616 = vsel %vm1329, %v7281, 0.0
  %7617 = vadd.xlane.f32.xlu0 %v7616
  %v7618 = vpop.xlane.xlu0 %7617
  %v7619 = vsel %vm1329, %v7284, 0.0
  %7620 = vadd.xlane.f32.xlu0 %v7619
  %v7621 = vpop.xlane.xlu0 %7620
  %v7622 = vsel %vm1329, %v7328, 0.0
  %7623 = vadd.xlane.f32.xlu0 %v7622
  %v7624 = vpop.xlane.xlu0 %7623
  %v7625 = vsel %vm1329, %v7331, 0.0
  %7626 = vadd.xlane.f32.xlu0 %v7625
  %v7627 = vpop.xlane.xlu0 %7626
  %v7628 = vsel %vm1329, %v7375, 0.0
  %7629 = vadd.xlane.f32.xlu0 %v7628
  %v7630 = vpop.xlane.xlu0 %7629
  %v7631 = vsel %vm1329, %v7378, 0.0
  %7632 = vadd.xlane.f32.xlu0 %v7631
  %v7633 = vpop.xlane.xlu0 %7632
  %v7634 = vsel %vm1329, %v7422, 0.0
  %7635 = vadd.xlane.f32.xlu0 %v7634
  %v7636 = vpop.xlane.xlu0 %7635
  %v7637 = vsel %vm1329, %v7425, 0.0
  %7638 = vadd.xlane.f32.xlu0 %v7637
  %v7639 = vpop.xlane.xlu0 %7638
  %v7640 = vsel %vm1329, %v7469, 0.0
  %7641 = vadd.xlane.f32.xlu0 %v7640
  %v7642 = vpop.xlane.xlu0 %7641
  %v7643 = vsel %vm1329, %v7472, 0.0
  %7644 = vadd.xlane.f32.xlu0 %v7643
  %v7645 = vpop.xlane.xlu0 %7644
  %v7646 = vsel %vm1329, %v7516, 0.0
  %7647 = vadd.xlane.f32.xlu0 %v7646
  %v7648 = vpop.xlane.xlu0 %7647
  %v7649 = vsel %vm1329, %v7519, 0.0
  %7650 = vadd.xlane.f32.xlu0 %v7649
  %v7651 = vpop.xlane.xlu0 %7650
  %v7652 = vsel %vm1329, %v7563, 0.0
  %7653 = vadd.xlane.f32.xlu0 %v7652
  %v7654 = vpop.xlane.xlu0 %7653
  %v7655 = vsel %vm1329, %v7566, 0.0
  %7656 = vadd.xlane.f32.xlu0 %v7655
  %v7657 = vpop.xlane.xlu0 %7656
  %v7658 = vsel %vm1329, %v7610, 0.0
  %7659 = vadd.xlane.f32.xlu0 %v7658
  %v7660 = vpop.xlane.xlu0 %7659
  %v7661 = vsel %vm1329, %v7613, 0.0
  %7662 = vadd.xlane.f32.xlu0 %v7661
  %v7663 = vpop.xlane.xlu0 %7662
  %v7664 = vmul.f32 %v7618, %v2123
  %v7665 = vmul.f32 %v7621, %v2123
  %v7666 = vmul.f32 %v7624, %v2123
  %v7667 = vmul.f32 %v7627, %v2123
  %v7668 = vmul.f32 %v7630, %v2123
  %v7669 = vmul.f32 %v7633, %v2123
  %v7670 = vmul.f32 %v7636, %v2123
  %v7671 = vmul.f32 %v7639, %v2123
  %v7672 = vmul.f32 %v7642, %v2123
  %v7673 = vmul.f32 %v7645, %v2123
  %v7674 = vmul.f32 %v7648, %v2123
  %v7675 = vmul.f32 %v7651, %v2123
  %v7676 = vmul.f32 %v7654, %v2123
  %v7677 = vmul.f32 %v7657, %v2123
  %v7678 = vmul.f32 %v7660, %v2123
  %v7679 = vmul.f32 %v7663, %v2123
  %v7680 = vsub.f32 %v7281, %v7664
  %v7681 = vsub.f32 %v7284, %v7665
  %v7682 = vsub.f32 %v7328, %v7666
  %v7683 = vsub.f32 %v7331, %v7667
  %v7684 = vsub.f32 %v7375, %v7668
  %v7685 = vsub.f32 %v7378, %v7669
  %v7686 = vsub.f32 %v7422, %v7670
  %v7687 = vsub.f32 %v7425, %v7671
  %v7688 = vsub.f32 %v7469, %v7672
  %v7689 = vsub.f32 %v7472, %v7673
  %v7690 = vsub.f32 %v7516, %v7674
  %v7691 = vsub.f32 %v7519, %v7675
  %v7692 = vsub.f32 %v7563, %v7676
  %v7693 = vsub.f32 %v7566, %v7677
  %v7694 = vsub.f32 %v7610, %v7678
  %v7695 = vsub.f32 %v7613, %v7679
  %v7696 = vmul.f32 %v7680, %v7680
  %v7697 = vmul.f32 %v7681, %v7681
  %v7698 = vmul.f32 %v7682, %v7682
  %v7699 = vmul.f32 %v7683, %v7683
  %v7700 = vmul.f32 %v7684, %v7684
  %v7701 = vmul.f32 %v7685, %v7685
  %v7702 = vmul.f32 %v7686, %v7686
  %v7703 = vmul.f32 %v7687, %v7687
  %v7704 = vmul.f32 %v7688, %v7688
  %v7705 = vmul.f32 %v7689, %v7689
  %v7706 = vmul.f32 %v7690, %v7690
  %v7707 = vmul.f32 %v7691, %v7691
  %v7708 = vmul.f32 %v7692, %v7692
  %v7709 = vmul.f32 %v7693, %v7693
  %v7710 = vmul.f32 %v7694, %v7694
  %v7711 = vmul.f32 %v7695, %v7695
  %v7712 = vsel %vm1329, %v7696, 0.0
  %7713 = vadd.xlane.f32.xlu0 %v7712
  %v7714 = vpop.xlane.xlu0 %7713
  %v7715 = vsel %vm1329, %v7697, 0.0
  %7716 = vadd.xlane.f32.xlu0 %v7715
  %v7717 = vpop.xlane.xlu0 %7716
  %v7718 = vsel %vm1329, %v7698, 0.0
  %7719 = vadd.xlane.f32.xlu0 %v7718
  %v7720 = vpop.xlane.xlu0 %7719
  %v7721 = vsel %vm1329, %v7699, 0.0
  %7722 = vadd.xlane.f32.xlu0 %v7721
  %v7723 = vpop.xlane.xlu0 %7722
  %v7724 = vsel %vm1329, %v7700, 0.0
  %7725 = vadd.xlane.f32.xlu0 %v7724
  %v7726 = vpop.xlane.xlu0 %7725
  %v7727 = vsel %vm1329, %v7701, 0.0
  %7728 = vadd.xlane.f32.xlu0 %v7727
  %v7729 = vpop.xlane.xlu0 %7728
  %v7730 = vsel %vm1329, %v7702, 0.0
  %7731 = vadd.xlane.f32.xlu0 %v7730
  %v7732 = vpop.xlane.xlu0 %7731
  %v7733 = vsel %vm1329, %v7703, 0.0
  %7734 = vadd.xlane.f32.xlu0 %v7733
  %v7735 = vpop.xlane.xlu0 %7734
  %v7736 = vsel %vm1329, %v7704, 0.0
  %7737 = vadd.xlane.f32.xlu0 %v7736
  %v7738 = vpop.xlane.xlu0 %7737
  %v7739 = vsel %vm1329, %v7705, 0.0
  %7740 = vadd.xlane.f32.xlu0 %v7739
  %v7741 = vpop.xlane.xlu0 %7740
  %v7742 = vsel %vm1329, %v7706, 0.0
  %7743 = vadd.xlane.f32.xlu0 %v7742
  %v7744 = vpop.xlane.xlu0 %7743
  %v7745 = vsel %vm1329, %v7707, 0.0
  %7746 = vadd.xlane.f32.xlu0 %v7745
  %v7747 = vpop.xlane.xlu0 %7746
  %v7748 = vsel %vm1329, %v7708, 0.0
  %7749 = vadd.xlane.f32.xlu0 %v7748
  %v7750 = vpop.xlane.xlu0 %7749
  %v7751 = vsel %vm1329, %v7709, 0.0
  %7752 = vadd.xlane.f32.xlu0 %v7751
  %v7753 = vpop.xlane.xlu0 %7752
  %v7754 = vsel %vm1329, %v7710, 0.0
  %7755 = vadd.xlane.f32.xlu0 %v7754
  %v7756 = vpop.xlane.xlu0 %7755
  %v7757 = vsel %vm1329, %v7711, 0.0
  %7758 = vadd.xlane.f32.xlu0 %v7757
  %v7759 = vpop.xlane.xlu0 %7758
  %v7760 = vmul.f32 %v7714, %v2123
  %v7761 = vmul.f32 %v7717, %v2123
  %v7762 = vmul.f32 %v7720, %v2123
  %v7763 = vmul.f32 %v7723, %v2123
  %v7764 = vmul.f32 %v7726, %v2123
  %v7765 = vmul.f32 %v7729, %v2123
  %v7766 = vmul.f32 %v7732, %v2123
  %v7767 = vmul.f32 %v7735, %v2123
  %v7768 = vmul.f32 %v7738, %v2123
  %v7769 = vmul.f32 %v7741, %v2123
  %v7770 = vmul.f32 %v7744, %v2123
  %v7771 = vmul.f32 %v7747, %v2123
  %v7772 = vmul.f32 %v7750, %v2123
  %v7773 = vmul.f32 %v7753, %v2123
  %v7774 = vmul.f32 %v7756, %v2123
  %v7775 = vmul.f32 %v7759, %v2123
  %v7776 = vadd.f32 %v7760, 1e-05
  %v7777 = vadd.f32 %v7761, 1e-05
  %v7778 = vadd.f32 %v7762, 1e-05
  %v7779 = vadd.f32 %v7763, 1e-05
  %v7780 = vadd.f32 %v7764, 1e-05
  %v7781 = vadd.f32 %v7765, 1e-05
  %v7782 = vadd.f32 %v7766, 1e-05
  %v7783 = vadd.f32 %v7767, 1e-05
  %v7784 = vadd.f32 %v7768, 1e-05
  %v7785 = vadd.f32 %v7769, 1e-05
  %v7786 = vadd.f32 %v7770, 1e-05
  %v7787 = vadd.f32 %v7771, 1e-05
  %v7788 = vadd.f32 %v7772, 1e-05
  %v7789 = vadd.f32 %v7773, 1e-05
  %v7790 = vadd.f32 %v7774, 1e-05
  %v7791 = vadd.f32 %v7775, 1e-05
  %v7792 = vrsqrt.pop %v7776
  %v7793 = vrsqrt.pop %v7777
  %v7794 = vrsqrt.pop %v7778
  %v7795 = vrsqrt.pop %v7779
  %v7796 = vrsqrt.pop %v7780
  %v7797 = vrsqrt.pop %v7781
  %v7798 = vrsqrt.pop %v7782
  %v7799 = vrsqrt.pop %v7783
  %v7800 = vrsqrt.pop %v7784
  %v7801 = vrsqrt.pop %v7785
  %v7802 = vrsqrt.pop %v7786
  %v7803 = vrsqrt.pop %v7787
  %v7804 = vrsqrt.pop %v7788
  %v7805 = vrsqrt.pop %v7789
  %v7806 = vrsqrt.pop %v7790
  %v7807 = vrsqrt.pop %v7791
  %v7808 = vmul.f32 %v7680, %v7792
  %v7809 = vmul.f32 %v7681, %v7793
  %v7810 = vmul.f32 %v7682, %v7794
  %v7811 = vmul.f32 %v7683, %v7795
  %v7812 = vmul.f32 %v7684, %v7796
  %v7813 = vmul.f32 %v7685, %v7797
  %v7814 = vmul.f32 %v7686, %v7798
  %v7815 = vmul.f32 %v7687, %v7799
  %v7816 = vmul.f32 %v7688, %v7800
  %v7817 = vmul.f32 %v7689, %v7801
  %v7818 = vmul.f32 %v7690, %v7802
  %v7819 = vmul.f32 %v7691, %v7803
  %v7820 = vmul.f32 %v7692, %v7804
  %v7821 = vmul.f32 %v7693, %v7805
  %v7822 = vmul.f32 %v7694, %v7806
  %v7823 = vmul.f32 %v7695, %v7807
  %v7824 = vmul.f32 %v7808, %v2288
  %v7825 = vmul.f32 %v7809, %v2288
  %v7826 = vmul.f32 %v7810, %v2288
  %v7827 = vmul.f32 %v7811, %v2288
  %v7828 = vmul.f32 %v7812, %v2288
  %v7829 = vmul.f32 %v7813, %v2288
  %v7830 = vmul.f32 %v7814, %v2288
  %v7831 = vmul.f32 %v7815, %v2288
  %v7832 = vmul.f32 %v7816, %v2288
  %v7833 = vmul.f32 %v7817, %v2288
  %v7834 = vmul.f32 %v7818, %v2288
  %v7835 = vmul.f32 %v7819, %v2288
  %v7836 = vmul.f32 %v7820, %v2288
  %v7837 = vmul.f32 %v7821, %v2288
  %v7838 = vmul.f32 %v7822, %v2288
  %v7839 = vmul.f32 %v7823, %v2288
  %v7840 = vadd.f32 %v7824, %v2310
  %v7841 = vadd.f32 %v7825, %v2310
  %v7842 = vadd.f32 %v7826, %v2310
  %v7843 = vadd.f32 %v7827, %v2310
  %v7844 = vadd.f32 %v7828, %v2310
  %v7845 = vadd.f32 %v7829, %v2310
  %v7846 = vadd.f32 %v7830, %v2310
  %v7847 = vadd.f32 %v7831, %v2310
  %v7848 = vadd.f32 %v7832, %v2310
  %v7849 = vadd.f32 %v7833, %v2310
  %v7850 = vadd.f32 %v7834, %v2310
  %v7851 = vadd.f32 %v7835, %v2310
  %v7852 = vadd.f32 %v7836, %v2310
  %v7853 = vadd.f32 %v7837, %v2310
  %v7854 = vadd.f32 %v7838, %v2310
  %v7855 = vadd.f32 %v7839, %v2310
  %v7856 = vmul.f32 %v7840, 0.64449096
  %v7857 = vmul.f32 %v7841, 0.64449096
  %v7858 = vmul.f32 %v7842, 0.64449096
  %v7859 = vmul.f32 %v7843, 0.64449096
  %v7860 = vmul.f32 %v7844, 0.64449096
  %v7861 = vmul.f32 %v7845, 0.64449096
  %v7862 = vmul.f32 %v7846, 0.64449096
  %v7863 = vmul.f32 %v7847, 0.64449096
  %v7864 = vmul.f32 %v7848, 0.64449096
  %v7865 = vmul.f32 %v7849, 0.64449096
  %v7866 = vmul.f32 %v7850, 0.64449096
  %v7867 = vmul.f32 %v7851, 0.64449096
  %v7868 = vmul.f32 %v7852, 0.64449096
  %v7869 = vmul.f32 %v7853, 0.64449096
  %v7870 = vmul.f32 %v7854, 0.64449096
  %v7871 = vmul.f32 %v7855, 0.64449096
  %7888 = vrot.lane.b32.xlu0 %v4176, 16
  %v7889 = vpop.permute.xlu0 %7888
  %7890 = vrot.lane.b32.xlu0 %v4177, 16
  %v7891 = vpop.permute.xlu0 %7890
  %7892 = vrot.lane.b32.xlu0 %v4178, 16
  %v7893 = vpop.permute.xlu0 %7892
  %7894 = vrot.lane.b32.xlu0 %v4179, 16
  %v7895 = vpop.permute.xlu0 %7894
  %7896 = vrot.lane.b32.xlu0 %v4180, 16
  %v7897 = vpop.permute.xlu0 %7896
  %7898 = vrot.lane.b32.xlu0 %v4181, 16
  %v7899 = vpop.permute.xlu0 %7898
  %7900 = vrot.lane.b32.xlu0 %v4182, 16
  %v7901 = vpop.permute.xlu0 %7900
  %7902 = vrot.lane.b32.xlu0 %v4183, 16
  %v7903 = vpop.permute.xlu0 %7902
  %7904 = vrot.lane.b32.xlu0 %v4184, 16
  %v7905 = vpop.permute.xlu0 %7904
  %7906 = vrot.lane.b32.xlu0 %v4185, 16
  %v7907 = vpop.permute.xlu0 %7906
  %7908 = vrot.lane.b32.xlu0 %v4186, 16
  %v7909 = vpop.permute.xlu0 %7908
  %7910 = vrot.lane.b32.xlu0 %v4187, 16
  %v7911 = vpop.permute.xlu0 %7910
  %7912 = vrot.lane.b32.xlu0 %v4188, 16
  %v7913 = vpop.permute.xlu0 %7912
  %7914 = vrot.lane.b32.xlu0 %v4189, 16
  %v7915 = vpop.permute.xlu0 %7914
  %7916 = vrot.lane.b32.xlu0 %v4190, 16
  %v7917 = vpop.permute.xlu0 %7916
  %7918 = vrot.lane.b32.xlu0 %v4191, 16
  %v7919 = vpop.permute.xlu0 %7918
  %7952 = vrot.lane.b32.xlu0 %v6016, 32
  %v7953 = vpop.permute.xlu0 %7952
  %7954 = vrot.lane.b32.xlu0 %v6017, 32
  %v7955 = vpop.permute.xlu0 %7954
  %7956 = vrot.lane.b32.xlu0 %v6018, 32
  %v7957 = vpop.permute.xlu0 %7956
  %7958 = vrot.lane.b32.xlu0 %v6019, 32
  %v7959 = vpop.permute.xlu0 %7958
  %7960 = vrot.lane.b32.xlu0 %v6020, 32
  %v7961 = vpop.permute.xlu0 %7960
  %7962 = vrot.lane.b32.xlu0 %v6021, 32
  %v7963 = vpop.permute.xlu0 %7962
  %7964 = vrot.lane.b32.xlu0 %v6022, 32
  %v7965 = vpop.permute.xlu0 %7964
  %7966 = vrot.lane.b32.xlu0 %v6023, 32
  %v7967 = vpop.permute.xlu0 %7966
  %7968 = vrot.lane.b32.xlu0 %v6024, 32
  %v7969 = vpop.permute.xlu0 %7968
  %7970 = vrot.lane.b32.xlu0 %v6025, 32
  %v7971 = vpop.permute.xlu0 %7970
  %7972 = vrot.lane.b32.xlu0 %v6026, 32
  %v7973 = vpop.permute.xlu0 %7972
  %7974 = vrot.lane.b32.xlu0 %v6027, 32
  %v7975 = vpop.permute.xlu0 %7974
  %7976 = vrot.lane.b32.xlu0 %v6028, 32
  %v7977 = vpop.permute.xlu0 %7976
  %7978 = vrot.lane.b32.xlu0 %v6029, 32
  %v7979 = vpop.permute.xlu0 %7978
  %7980 = vrot.lane.b32.xlu0 %v6030, 32
  %v7981 = vpop.permute.xlu0 %7980
  %7982 = vrot.lane.b32.xlu0 %v6031, 32
  %v7983 = vpop.permute.xlu0 %7982
  %8016 = vrot.lane.b32.xlu0 %v7856, 48
  %v8017 = vpop.permute.xlu0 %8016
  %8018 = vrot.lane.b32.xlu0 %v7857, 48
  %v8019 = vpop.permute.xlu0 %8018
  %8020 = vrot.lane.b32.xlu0 %v7858, 48
  %v8021 = vpop.permute.xlu0 %8020
  %8022 = vrot.lane.b32.xlu0 %v7859, 48
  %v8023 = vpop.permute.xlu0 %8022
  %8024 = vrot.lane.b32.xlu0 %v7860, 48
  %v8025 = vpop.permute.xlu0 %8024
  %8026 = vrot.lane.b32.xlu0 %v7861, 48
  %v8027 = vpop.permute.xlu0 %8026
  %8028 = vrot.lane.b32.xlu0 %v7862, 48
  %v8029 = vpop.permute.xlu0 %8028
  %8030 = vrot.lane.b32.xlu0 %v7863, 48
  %v8031 = vpop.permute.xlu0 %8030
  %8032 = vrot.lane.b32.xlu0 %v7864, 48
  %v8033 = vpop.permute.xlu0 %8032
  %8034 = vrot.lane.b32.xlu0 %v7865, 48
  %v8035 = vpop.permute.xlu0 %8034
  %8036 = vrot.lane.b32.xlu0 %v7866, 48
  %v8037 = vpop.permute.xlu0 %8036
  %8038 = vrot.lane.b32.xlu0 %v7867, 48
  %v8039 = vpop.permute.xlu0 %8038
  %8040 = vrot.lane.b32.xlu0 %v7868, 48
  %v8041 = vpop.permute.xlu0 %8040
  %8042 = vrot.lane.b32.xlu0 %v7869, 48
  %v8043 = vpop.permute.xlu0 %8042
  %8044 = vrot.lane.b32.xlu0 %v7870, 48
  %v8045 = vpop.permute.xlu0 %8044
  %8046 = vrot.lane.b32.xlu0 %v7871, 48
  %v8047 = vpop.permute.xlu0 %8046
  %v8064 = vsel %vm1329, %v2328, %v7889
  %v8065 = vsel %vm1329, %v2329, %v7891
  %v8066 = vsel %vm1329, %v2330, %v7893
  %v8067 = vsel %vm1329, %v2331, %v7895
  %v8068 = vsel %vm1329, %v2332, %v7897
  %v8069 = vsel %vm1329, %v2333, %v7899
  %v8070 = vsel %vm1329, %v2334, %v7901
  %v8071 = vsel %vm1329, %v2335, %v7903
  %v8072 = vsel %vm1329, %v2336, %v7905
  %v8073 = vsel %vm1329, %v2337, %v7907
  %v8074 = vsel %vm1329, %v2338, %v7909
  %v8075 = vsel %vm1329, %v2339, %v7911
  %v8076 = vsel %vm1329, %v2340, %v7913
  %v8077 = vsel %vm1329, %v2341, %v7915
  %v8078 = vsel %vm1329, %v2342, %v7917
  %v8079 = vsel %vm1329, %v2343, %v7919
  %v8080 = vsel %vm54, %v8064, %v7953
  %v8081 = vsel %vm54, %v8065, %v7955
  %v8082 = vsel %vm54, %v8066, %v7957
  %v8083 = vsel %vm54, %v8067, %v7959
  %v8084 = vsel %vm54, %v8068, %v7961
  %v8085 = vsel %vm54, %v8069, %v7963
  %v8086 = vsel %vm54, %v8070, %v7965
  %v8087 = vsel %vm54, %v8071, %v7967
  %v8088 = vsel %vm54, %v8072, %v7969
  %v8089 = vsel %vm54, %v8073, %v7971
  %v8090 = vsel %vm54, %v8074, %v7973
  %v8091 = vsel %vm54, %v8075, %v7975
  %v8092 = vsel %vm54, %v8076, %v7977
  %v8093 = vsel %vm54, %v8077, %v7979
  %v8094 = vsel %vm54, %v8078, %v7981
  %v8095 = vsel %vm54, %v8079, %v7983
  %vm8096 = vcmask 392192
  %v8097 = vsel %vm8096, %v8080, %v8017
  %v8098 = vsel %vm8096, %v8081, %v8019
  %v8099 = vsel %vm8096, %v8082, %v8021
  %v8100 = vsel %vm8096, %v8083, %v8023
  %v8101 = vsel %vm8096, %v8084, %v8025
  %v8102 = vsel %vm8096, %v8085, %v8027
  %v8103 = vsel %vm8096, %v8086, %v8029
  %v8104 = vsel %vm8096, %v8087, %v8031
  %v8105 = vsel %vm8096, %v8088, %v8033
  %v8106 = vsel %vm8096, %v8089, %v8035
  %v8107 = vsel %vm8096, %v8090, %v8037
  %v8108 = vsel %vm8096, %v8091, %v8039
  %v8109 = vsel %vm8096, %v8092, %v8041
  %v8110 = vsel %vm8096, %v8093, %v8043
  %v8111 = vsel %vm8096, %v8094, %v8045
  %v8112 = vsel %vm8096, %v8095, %v8047
  %v8113 = vmul.f32 %v486, 0.5
  %v8114 = vmul.f32 %v487, 0.5
  %v8115 = vmul.f32 %v488, 0.5
  %v8116 = vmul.f32 %v489, 0.5
  %v8117 = vmul.f32 %v490, 0.5
  %v8118 = vmul.f32 %v491, 0.5
  %v8119 = vmul.f32 %v492, 0.5
  %v8120 = vmul.f32 %v493, 0.5
  %v8121 = vmul.f32 %v494, 0.5
  %v8122 = vmul.f32 %v495, 0.5
  %v8123 = vmul.f32 %v496, 0.5
  %v8124 = vmul.f32 %v497, 0.5
  %v8125 = vmul.f32 %v498, 0.5
  %v8126 = vmul.f32 %v499, 0.5
  %v8127 = vmul.f32 %v500, 0.5
  %v8128 = vmul.f32 %v501, 0.5
  %v8129 = vtanh.pop %v8113
  %v8130 = vtanh.pop %v8114
  %v8131 = vtanh.pop %v8115
  %v8132 = vtanh.pop %v8116
  %v8133 = vtanh.pop %v8117
  %v8134 = vtanh.pop %v8118
  %v8135 = vtanh.pop %v8119
  %v8136 = vtanh.pop %v8120
  %v8137 = vtanh.pop %v8121
  %v8138 = vtanh.pop %v8122
  %v8139 = vtanh.pop %v8123
  %v8140 = vtanh.pop %v8124
  %v8141 = vtanh.pop %v8125
  %v8142 = vtanh.pop %v8126
  %v8143 = vtanh.pop %v8127
  %v8144 = vtanh.pop %v8128
  %v8145 = vadd.f32 %v8129, 1.0
  %v8146 = vadd.f32 %v8130, 1.0
  %v8147 = vadd.f32 %v8131, 1.0
  %v8148 = vadd.f32 %v8132, 1.0
  %v8149 = vadd.f32 %v8133, 1.0
  %v8150 = vadd.f32 %v8134, 1.0
  %v8151 = vadd.f32 %v8135, 1.0
  %v8152 = vadd.f32 %v8136, 1.0
  %v8153 = vadd.f32 %v8137, 1.0
  %v8154 = vadd.f32 %v8138, 1.0
  %v8155 = vadd.f32 %v8139, 1.0
  %v8156 = vadd.f32 %v8140, 1.0
  %v8157 = vadd.f32 %v8141, 1.0
  %v8158 = vadd.f32 %v8142, 1.0
  %v8159 = vadd.f32 %v8143, 1.0
  %v8160 = vadd.f32 %v8144, 1.0
  %v8161 = vmul.f32 %v8145, 0.5
  %v8162 = vmul.f32 %v8146, 0.5
  %v8163 = vmul.f32 %v8147, 0.5
  %v8164 = vmul.f32 %v8148, 0.5
  %v8165 = vmul.f32 %v8149, 0.5
  %v8166 = vmul.f32 %v8150, 0.5
  %v8167 = vmul.f32 %v8151, 0.5
  %v8168 = vmul.f32 %v8152, 0.5
  %v8169 = vmul.f32 %v8153, 0.5
  %v8170 = vmul.f32 %v8154, 0.5
  %v8171 = vmul.f32 %v8155, 0.5
  %v8172 = vmul.f32 %v8156, 0.5
  %v8173 = vmul.f32 %v8157, 0.5
  %v8174 = vmul.f32 %v8158, 0.5
  %v8175 = vmul.f32 %v8159, 0.5
  %v8176 = vmul.f32 %v8160, 0.5
  %8193 = vrot.lane.b32.xlu0 %v8161, 64
  %v8194 = vpop.permute.xlu0 %8193
  %8195 = vrot.lane.b32.xlu0 %v8162, 64
  %v8196 = vpop.permute.xlu0 %8195
  %8197 = vrot.lane.b32.xlu0 %v8163, 64
  %v8198 = vpop.permute.xlu0 %8197
  %8199 = vrot.lane.b32.xlu0 %v8164, 64
  %v8200 = vpop.permute.xlu0 %8199
  %8201 = vrot.lane.b32.xlu0 %v8165, 64
  %v8202 = vpop.permute.xlu0 %8201
  %8203 = vrot.lane.b32.xlu0 %v8166, 64
  %v8204 = vpop.permute.xlu0 %8203
  %8205 = vrot.lane.b32.xlu0 %v8167, 64
  %v8206 = vpop.permute.xlu0 %8205
  %8207 = vrot.lane.b32.xlu0 %v8168, 64
  %v8208 = vpop.permute.xlu0 %8207
  %8209 = vrot.lane.b32.xlu0 %v8169, 64
  %v8210 = vpop.permute.xlu0 %8209
  %8211 = vrot.lane.b32.xlu0 %v8170, 64
  %v8212 = vpop.permute.xlu0 %8211
  %8213 = vrot.lane.b32.xlu0 %v8171, 64
  %v8214 = vpop.permute.xlu0 %8213
  %8215 = vrot.lane.b32.xlu0 %v8172, 64
  %v8216 = vpop.permute.xlu0 %8215
  %8217 = vrot.lane.b32.xlu0 %v8173, 64
  %v8218 = vpop.permute.xlu0 %8217
  %8219 = vrot.lane.b32.xlu0 %v8174, 64
  %v8220 = vpop.permute.xlu0 %8219
  %8221 = vrot.lane.b32.xlu0 %v8175, 64
  %v8222 = vpop.permute.xlu0 %8221
  %8223 = vrot.lane.b32.xlu0 %v8176, 64
  %v8224 = vpop.permute.xlu0 %8223
  %v8241 = vmul.f32 %v8097, %v8194
  %v8242 = vmul.f32 %v8098, %v8196
  %v8243 = vmul.f32 %v8099, %v8198
  %v8244 = vmul.f32 %v8100, %v8200
  %v8245 = vmul.f32 %v8101, %v8202
  %v8246 = vmul.f32 %v8102, %v8204
  %v8247 = vmul.f32 %v8103, %v8206
  %v8248 = vmul.f32 %v8104, %v8208
  %v8249 = vmul.f32 %v8105, %v8210
  %v8250 = vmul.f32 %v8106, %v8212
  %v8251 = vmul.f32 %v8107, %v8214
  %v8252 = vmul.f32 %v8108, %v8216
  %v8253 = vmul.f32 %v8109, %v8218
  %v8254 = vmul.f32 %v8110, %v8220
  %v8255 = vmul.f32 %v8111, %v8222
  %v8256 = vmul.f32 %v8112, %v8224
  %v8257 = vpack.c.bf16 %v8242, %v8241
  %v8258 = vpack.c.bf16 %v8244, %v8243
  %v8259 = vpack.c.bf16 %v8246, %v8245
  %v8260 = vpack.c.bf16 %v8248, %v8247
  %v8261 = vpack.c.bf16 %v8250, %v8249
  %v8262 = vpack.c.bf16 %v8252, %v8251
  %v8263 = vpack.c.bf16 %v8254, %v8253
  %v8264 = vpack.c.bf16 %v8256, %v8255
  %v8265 = vld [vmem:[%s8] sm:$0xf]
  %v8266 = vld [vmem:[%s8 + $0x4] sm:$0xf]
  %v8267 = vld [vmem:[%s8 + $0x8] sm:$0xf]
  %v8268 = vld [vmem:[%s8 + $0xc] sm:$0xf]
  %v8269 = vld [vmem:[%s8 + $0x10] sm:$0xf]
  %v8270 = vld [vmem:[%s8 + $0x14] sm:$0xf]
  %v8271 = vld [vmem:[%s8 + $0x18] sm:$0xf]
  %v8272 = vld [vmem:[%s8 + $0x1c] sm:$0xf]
  %v8273 = vld [vmem:[%s9] sm:$0x1]
  %v8275 = vlaneseq
  %v8276 = vshrl.u32 %v8275, 7
  %v8277 = vsub.s32 0, %v8276
  %v8278 = vrot.slane %v8273, %v8277
  %v8288 = vunpack.c.l.b16 %v8265
  %v8289 = vunpack.c.l.b16 %v8266
  %v8290 = vunpack.c.l.b16 %v8267
  %v8291 = vunpack.c.l.b16 %v8268
  %v8292 = vunpack.c.l.b16 %v8269
  %v8293 = vunpack.c.l.b16 %v8270
  %v8294 = vunpack.c.l.b16 %v8271
  %v8295 = vunpack.c.l.b16 %v8272
  %v8296 = vpack.c.b16 %v8289, %v8288
  %v8297 = vpack.c.b16 %v8291, %v8290
  %v8298 = vpack.c.b16 %v8293, %v8292
  %v8299 = vpack.c.b16 %v8295, %v8294
  %vm8304 = vcmask 523264
  %v8306 = vsel %vm8304, %v8257, 0
  %v8309 = vsel %vm8304, %v8258, 0
  %v8312 = vsel %vm8304, %v8259, 0
  %v8315 = vsel %vm8304, %v8260, 0
  %v8318 = vsel %vm8304, %v8261, 0
  %v8321 = vsel %vm8304, %v8262, 0
  %v8324 = vsel %vm8304, %v8263, 0
  %v8327 = vsel %vm8304, %v8264, 0
  %8329 = vmatprep.subr.bf16.mxu0 0
  %8330 = vmatpush1.bf16.msra.mxu0 %v8296
  %8331 = vmatprep.subr.bf16.mxu0 0
  %8332 = vmatpush1.bf16.msra.mxu0 %v8297
  %8333 = vmatprep.subr.bf16.mxu0 0
  %8334 = vmatpush1.bf16.msra.mxu0 %v8298
  %8335 = vmatprep.subr.bf16.mxu0 0
  %8336 = vmatpush1.bf16.msra.mxu0 %v8299
  %8337 = vmatprep.subr.bf16.mxu0 0
  %8338 = vmatpush1.bf16.msra.mxu0 0
  %8339 = vmatprep.subr.bf16.mxu0 0
  %8340 = vmatpush1.bf16.msra.mxu0 0
  %8341 = vmatprep.subr.bf16.mxu0 0
  %8342 = vmatpush1.bf16.msra.mxu0 0
  %8343 = vmatprep.subr.bf16.mxu0 0
  %8344 = vmatpush1.bf16.msra.mxu0 0
  %8345 = vmatprep.subr.bf16.mxu0 0
  %8346 = vmatpush1.bf16.msra.mxu0 0
  %8347 = vmatprep.subr.bf16.mxu0 0
  %8348 = vmatpush1.bf16.msra.mxu0 0
  %8349 = vmatprep.subr.bf16.mxu0 0
  %8350 = vmatpush1.bf16.msra.mxu0 0
  %8351 = vmatprep.subr.bf16.mxu0 0
  %8352 = vmatpush1.bf16.msra.mxu0 0
  %8353 = vmatprep.subr.bf16.mxu0 0
  %8354 = vmatpush1.bf16.msra.mxu0 0
  %8355 = vmatprep.subr.bf16.mxu0 0
  %8356 = vmatpush1.bf16.msra.mxu0 0
  %8357 = vmatprep.subr.bf16.mxu0 0
  %8358 = vmatpush1.bf16.msra.mxu0 0
  %8359 = vmatprep.subr.bf16.mxu0 0
  %8360 = vmatpush1.bf16.msra.mxu0 0
  %8361 = vmatprep.mubr.bf16.mxu0 0
  %8362 = vmatmul.mubr.bf16.gmra.mrb[0].mxu0 %v8306
  %v8363 = vpop.f32.mrb[0].mxu0
  %v8364 = vadd.f32 %v8278, %v8363
  %v8365 = vpop.f32.mrb[0].mxu0
  %v8366 = vpop.f32.mrb[0].mxu0
  %v8367 = vadd.f32 %v8278, %v8366
  %v8368 = vpop.f32.mrb[0].mxu0
  %8369 = vmatprep.mubr.bf16.mxu0 0
  %8370 = vmatmul.mubr.bf16.gmra.mrb[0].mxu0 %v8309
  %v8371 = vpop.f32.mrb[0].mxu0
  %v8372 = vadd.f32 %v8278, %v8371
  %v8373 = vpop.f32.mrb[0].mxu0
  %v8374 = vpop.f32.mrb[0].mxu0
  %v8375 = vadd.f32 %v8278, %v8374
  %v8376 = vpop.f32.mrb[0].mxu0
  %8377 = vmatprep.mubr.bf16.mxu0 0
  %8378 = vmatmul.mubr.bf16.gmra.mrb[0].mxu0 %v8312
  %v8379 = vpop.f32.mrb[0].mxu0
  %v8380 = vadd.f32 %v8278, %v8379
  %v8381 = vpop.f32.mrb[0].mxu0
  %v8382 = vpop.f32.mrb[0].mxu0
  %v8383 = vadd.f32 %v8278, %v8382
  %v8384 = vpop.f32.mrb[0].mxu0
  %8385 = vmatprep.mubr.bf16.mxu0 0
  %8386 = vmatmul.mubr.bf16.gmra.mrb[0].mxu0 %v8315
  %v8387 = vpop.f32.mrb[0].mxu0
  %v8388 = vadd.f32 %v8278, %v8387
  %v8389 = vpop.f32.mrb[0].mxu0
  %v8390 = vpop.f32.mrb[0].mxu0
  %v8391 = vadd.f32 %v8278, %v8390
  %v8392 = vpop.f32.mrb[0].mxu0
  %8393 = vmatprep.mubr.bf16.mxu0 0
  %8394 = vmatmul.mubr.bf16.gmra.mrb[0].mxu0 %v8318
  %v8395 = vpop.f32.mrb[0].mxu0
  %v8396 = vadd.f32 %v8278, %v8395
  %v8397 = vpop.f32.mrb[0].mxu0
  %v8398 = vpop.f32.mrb[0].mxu0
  %v8399 = vadd.f32 %v8278, %v8398
  %v8400 = vpop.f32.mrb[0].mxu0
  %8401 = vmatprep.mubr.bf16.mxu0 0
  %8402 = vmatmul.mubr.bf16.gmra.mrb[0].mxu0 %v8321
  %v8403 = vpop.f32.mrb[0].mxu0
  %v8404 = vadd.f32 %v8278, %v8403
  %v8405 = vpop.f32.mrb[0].mxu0
  %v8406 = vpop.f32.mrb[0].mxu0
  %v8407 = vadd.f32 %v8278, %v8406
  %v8408 = vpop.f32.mrb[0].mxu0
  %8409 = vmatprep.mubr.bf16.mxu0 0
  %8410 = vmatmul.mubr.bf16.gmra.mrb[0].mxu0 %v8324
  %v8411 = vpop.f32.mrb[0].mxu0
  %v8412 = vadd.f32 %v8278, %v8411
  %v8413 = vpop.f32.mrb[0].mxu0
  %v8414 = vpop.f32.mrb[0].mxu0
  %v8415 = vadd.f32 %v8278, %v8414
  %v8416 = vpop.f32.mrb[0].mxu0
  %8417 = vmatprep.mubr.bf16.mxu0 0
  %8418 = vmatmul.mubr.bf16.gmra.mrb[0].mxu0 %v8327
  %v8419 = vpop.f32.mrb[0].mxu0
  %v8420 = vadd.f32 %v8278, %v8419
  %v8421 = vpop.f32.mrb[0].mxu0
  %v8422 = vpop.f32.mrb[0].mxu0
  %v8423 = vadd.f32 %v8278, %v8422
  %v8424 = vpop.f32.mrb[0].mxu0
  %8425 = vdwg.mxu0
  %8426 = vst.msk [vmem:[%s10] sm:$0xff] %vm54, %v8364
  %8427 = vst.msk [vmem:[%s10 + $0x8] sm:$0xff] %vm54, %v8367
  %8428 = vst.msk [vmem:[%s10 + $0x10] sm:$0xff] %vm54, %v8372
  %8429 = vst.msk [vmem:[%s10 + $0x18] sm:$0xff] %vm54, %v8375
  %8430 = vst.msk [vmem:[%s10 + $0x20] sm:$0xff] %vm54, %v8380
  %8431 = vst.msk [vmem:[%s10 + $0x28] sm:$0xff] %vm54, %v8383
  %8432 = vst.msk [vmem:[%s10 + $0x30] sm:$0xff] %vm54, %v8388
  %8433 = vst.msk [vmem:[%s10 + $0x38] sm:$0xff] %vm54, %v8391
  %8434 = vst.msk [vmem:[%s10 + $0x40] sm:$0xff] %vm54, %v8396
  %8435 = vst.msk [vmem:[%s10 + $0x48] sm:$0xff] %vm54, %v8399
  %8436 = vst.msk [vmem:[%s10 + $0x50] sm:$0xff] %vm54, %v8404
  %8437 = vst.msk [vmem:[%s10 + $0x58] sm:$0xff] %vm54, %v8407
  %8438 = vst.msk [vmem:[%s10 + $0x60] sm:$0xff] %vm54, %v8412
  %8439 = vst.msk [vmem:[%s10 + $0x68] sm:$0xff] %vm54, %v8415
  %8440 = vst.msk [vmem:[%s10 + $0x70] sm:$0xff] %vm54, %v8420
  %8441 = vst.msk [vmem:[%s10 + $0x78] sm:$0xff] %vm54, %v8423
  // Predicated region
  $region38: #{tpu_custom_call.1} parent=0 // pred_check
    _
  $region39: #{tpu_custom_call.1} parent=0 // pred_check_branch
    %8443 = sbr.rel (0) target = $region41
  $region40: #{tpu_custom_call.1} parent=0 // pred_region
    _
  $region41: #{tpu_custom_call.1} parent=0 // pred_fallthru
    _
  // Predicated region
  $region42: #{tpu_custom_call.1} parent=0 // pred_check
    _
  $region43: #{tpu_custom_call.1} parent=0 // pred_check_branch
    %8445 = sbr.rel (0) target = $region45
  $region44: #{tpu_custom_call.1} parent=0 // pred_region
    _
  $region45: #{tpu_custom_call.1} parent=0 // pred_fallthru
    _

</llo_original>
